<compile_context>
chip_gen: v5e
topology: v5e:2x2
jax: 0.10.0
libtpu: 0.0.40
codegen_flags: <defaults>
</compile_context>

<pallas_src>
import math

import jax
import jax.numpy as jnp
from jax.experimental import pallas as pl
from jax.experimental.pallas import tpu as pltpu

ASPP_OUT = 256
BN_EPS = 1e-5
VMEM_LIMIT = 48 * 1024 * 1024      # explicit scoped-VMEM budget (< v7x 64 MiB)


def _tap_range(k, d, size):
    """Static output-index range [lo, hi) covered by tap k (0,1,2) of a 3-tap
    conv axis with dilation d and padding d (output size == input size).
    Returns (lo, hi, off) where the input index is out_index + off."""
    off = (k - 1) * d
    lo = max(0, -off)
    hi = min(size, size - off)
    return lo, hi, off


def _const_spec(shape):
    """BlockSpec for an input whose block never changes across the batch grid:
    single-buffered (default double-buffering would double its VMEM)."""
    nz = len(shape)
    if nz == 2:
        imap = lambda n: (0, 0)
    elif nz == 3:
        imap = lambda n: (0, 0, 0)
    else:
        imap = lambda n: (0, 0, 0, 0)
    return pl.BlockSpec(shape, imap, pipeline_mode=pl.Buffered(buffer_count=1))


# ----------------------------------------------------------------------------
# Kernel 1: fused ASPP (5 branches + concat + 1x1 projection + BN + ReLU)
# ----------------------------------------------------------------------------
def _fused_aspp(x, params):
    """x: (N, H, W, Cin) bf16  ->  (N, H, W, 256) bf16."""
    N, H, W, Cin = x.shape
    C = ASPP_OUT
    dils = tuple(int(d) for d in params["aspp_dilate"])
    inv_hw = 1.0 / float(H * W)

    # bf16 weights for the MXU (f32 accumulation inside the kernel).
    w0 = params["aspp0_w"].reshape(Cin, C).astype(jnp.bfloat16)
    w1 = params["aspp1_w"].astype(jnp.bfloat16)
    w2 = params["aspp2_w"].astype(jnp.bfloat16)
    w3 = params["aspp3_w"].astype(jnp.bfloat16)
    wp = params["pool_w"].astype(jnp.bfloat16)                       # (Cin, C)
    wproj = params["proj_w"].reshape(5, C, C).astype(jnp.bfloat16)   # b0..b3, pool

    bscale = jnp.stack([params["aspp0_bn"][0], params["aspp1_bn"][0],
                        params["aspp2_bn"][0], params["aspp3_bn"][0],
                        params["pool_bn"][0]], axis=0)               # (5, C) f32
    bbias = jnp.stack([params["aspp0_bn"][1], params["aspp1_bn"][1],
                       params["aspp2_bn"][1], params["aspp3_bn"][1],
                       params["pool_bn"][1]], axis=0)                # (5, C) f32
    pscale = params["proj_bn"][0].reshape(1, C)
    pbias = params["proj_bn"][1].reshape(1, C)

    def kernel(x_ref, w0_ref, w1_ref, w2_ref, w3_ref, wp_ref, wproj_ref,
               bs_ref, bb_ref, ps_ref, pb_ref, o_ref, bacc_ref, acc_ref):
        # x block stays bf16 in VMEM and feeds the MXU directly (no f32 halo
        # scratch, no upcast, no per-tap window copies).
        x2d = x_ref[0].reshape(H * W, Cin)

        # ---- Branch 0: 1x1 conv + BN + ReLU; its projection slice initializes
        # the fused-projection accumulator (no zero / broadcast fill).
        y0 = jnp.dot(x2d, w0_ref[...], preferred_element_type=jnp.float32)
        y0 = jnp.maximum(y0 * bs_ref[0:1, :] + bb_ref[0:1, :], 0.0)
        acc_ref[...] = jnp.dot(y0.astype(jnp.bfloat16), wproj_ref[0],
                               preferred_element_type=jnp.float32)

        # ---- Branches 1..3: 3x3 dilated conv + BN + ReLU -> projection slices.
        # Shift-after-matmul: each tap is a contiguous-row matmul; boundary taps
        # accumulate into a static sub-rectangle of the branch accumulator.
        branch_w = (w1_ref, w2_ref, w3_ref)
        for bi in range(3):
            d = dils[bi]
            w_ref = branch_w[bi]
            # Center tap covers the whole image -> writes bacc directly.
            zc = jnp.dot(x2d, w_ref[1, 1], preferred_element_type=jnp.float32)
            bacc_ref[...] = zc.reshape(H, W, C)
            for kh in range(3):
                for kw in range(3):
                    if kh == 1 and kw == 1:
                        continue
                    oh_lo, oh_hi, roff = _tap_range(kh, d, H)
                    ow_lo, ow_hi, coff = _tap_range(kw, d, W)
                    if oh_hi <= oh_lo or ow_hi <= ow_lo:
                        continue          # tap only sees zero padding (d >= H)
                    nr = oh_hi - oh_lo
                    rows = x_ref[0, oh_lo + roff:oh_hi + roff, :, :]   # (nr,W,Cin) bf16
                    z = jnp.dot(rows.reshape(nr * W, Cin), w_ref[kh, kw],
                                preferred_element_type=jnp.float32)
                    z = z.reshape(nr, W, C)[:, ow_lo + coff:ow_hi + coff, :]
                    bacc_ref[oh_lo:oh_hi, ow_lo:ow_hi, :] += z
            yb = jnp.maximum(
                bacc_ref[...].reshape(H * W, C) * bs_ref[bi + 1:bi + 2, :]
                + bb_ref[bi + 1:bi + 2, :], 0.0)
            acc_ref[...] += jnp.dot(yb.astype(jnp.bfloat16), wproj_ref[bi + 1],
                                    preferred_element_type=jnp.float32)

        # ---- Pooling branch, folded into the projection epilogue as a (1, C)
        # bias: GAP -> 1x1 conv -> BN -> ReLU -> @ W_proj[4]. Spatially
        # constant, never broadcast / materialized to (H, W, C).
        pooled = jnp.sum(x2d.astype(jnp.float32), axis=0, keepdims=True) * inv_hw
        yp = jnp.dot(pooled.astype(jnp.bfloat16), wp_ref[...],
                     preferred_element_type=jnp.float32)
        yp = jnp.maximum(yp * bs_ref[4:5, :] + bb_ref[4:5, :], 0.0)     # (1, C)
        pool_proj = jnp.dot(yp.astype(jnp.bfloat16), wproj_ref[4],
                            preferred_element_type=jnp.float32)          # (1, C)

        # ---- Projection BN + ReLU (Dropout(0.1) is identity in eval).
        bias_tot = pool_proj * ps_ref[...] + pb_ref[...]                 # (1, C)
        out = jnp.maximum(acc_ref[...] * ps_ref[...] + bias_tot, 0.0)
        o_ref[...] = out.reshape(1, H, W, C).astype(o_ref.dtype)

    return pl.pallas_call(
        kernel,
        out_shape=jax.ShapeDtypeStruct((N, H, W, C), jnp.bfloat16),
        grid=(N,),
        in_specs=[
            pl.BlockSpec((1, H, W, Cin), lambda n: (n, 0, 0, 0)),   # per-batch x
            _const_spec((Cin, C)),            # w0
            _const_spec((3, 3, Cin, C)),      # w1
            _const_spec((3, 3, Cin, C)),      # w2
            _const_spec((3, 3, Cin, C)),      # w3
            _const_spec((Cin, C)),            # wp
            _const_spec((5, C, C)),           # wproj
            _const_spec((5, C)),              # bn scale
            _const_spec((5, C)),              # bn bias
            _const_spec((1, C)),              # proj bn scale
            _const_spec((1, C)),              # proj bn bias
        ],
        out_specs=pl.BlockSpec((1, H, W, C), lambda n: (n, 0, 0, 0)),
        scratch_shapes=[
            pltpu.VMEM((H, W, C), jnp.float32),      # per-branch conv accumulator
            pltpu.VMEM((H * W, C), jnp.float32),     # fused projection accumulator
        ],
        compiler_params=pltpu.CompilerParams(
            dimension_semantics=("parallel",),
            vmem_limit_bytes=VMEM_LIMIT),
    )(x, w0, w1, w2, w3, wp, wproj, bscale, bbias, pscale, pbias)


# ----------------------------------------------------------------------------
# Kernel 2: fused head (3x3 conv + BN + ReLU + 1x1 classifier with bias)
# ----------------------------------------------------------------------------
def _fused_head(x, params):
    """x: (N, H, W, 256) bf16  ->  lane-dense padded logits (N, H, W, CPAD) f32."""
    N, H, W, C = x.shape
    nc = params["num_classes"]
    CPAD = 128 * pl.cdiv(nc, 128)          # lane-dense classifier output

    w = params["cls_w"].astype(jnp.bfloat16)                          # (3, 3, C, C)
    s = params["cls_bn"][0].reshape(1, C)
    b = params["cls_bn"][1].reshape(1, C)
    wf = jnp.pad(params["final_w"].reshape(C, nc),
                 ((0, 0), (0, CPAD - nc))).astype(jnp.bfloat16)       # (C, CPAD)
    bf = jnp.pad(params["final_b"], (0, CPAD - nc)).reshape(1, CPAD)  # f32

    def kernel(x_ref, w_ref, s_ref, b_ref, wf_ref, bf_ref, o_ref, hacc_ref):
        x2d = x_ref[0].reshape(H * W, C)
        # 3x3 conv (pad=1) via shift-after-matmul; center tap initializes.
        zc = jnp.dot(x2d, w_ref[1, 1], preferred_element_type=jnp.float32)
        hacc_ref[...] = zc.reshape(H, W, C)
        for kh in range(3):
            for kw in range(3):
                if kh == 1 and kw == 1:
                    continue
                oh_lo, oh_hi, roff = _tap_range(kh, 1, H)
                ow_lo, ow_hi, coff = _tap_range(kw, 1, W)
                if oh_hi <= oh_lo or ow_hi <= ow_lo:
                    continue
                nr = oh_hi - oh_lo
                rows = x_ref[0, oh_lo + roff:oh_hi + roff, :, :]       # (nr, W, C) bf16
                z = jnp.dot(rows.reshape(nr * W, C), w_ref[kh, kw],
                            preferred_element_type=jnp.float32)
                z = z.reshape(nr, W, C)[:, ow_lo + coff:ow_hi + coff, :]
                hacc_ref[oh_lo:oh_hi, ow_lo:ow_hi, :] += z
        h = jnp.maximum(hacc_ref[...].reshape(H * W, C) * s_ref[...] + b_ref[...],
                        0.0)                                           # (H*W, C) f32
        logits = jnp.dot(h.astype(jnp.bfloat16), wf_ref[...],
                         preferred_element_type=jnp.float32) + bf_ref[...]
        o_ref[...] = logits.reshape(1, H, W, CPAD).astype(o_ref.dtype)

    return pl.pallas_call(
        kernel,
        out_shape=jax.ShapeDtypeStruct((N, H, W, CPAD), jnp.float32),
        grid=(N,),
        in_specs=[
            pl.BlockSpec((1, H, W, C), lambda n: (n, 0, 0, 0)),
            _const_spec((3, 3, C, C)),
            _const_spec((1, C)),
            _const_spec((1, C)),
            _const_spec((C, CPAD)),
            _const_spec((1, CPAD)),
        ],
        out_specs=pl.BlockSpec((1, H, W, CPAD), lambda n: (n, 0, 0, 0)),
        scratch_shapes=[
            pltpu.VMEM((H, W, C), jnp.float32),      # 3x3 conv accumulator
        ],
        compiler_params=pltpu.CompilerParams(
            dimension_semantics=("parallel",),
            vmem_limit_bytes=VMEM_LIMIT),
    )(x, w, s, b, wf, bf)


# ----------------------------------------------------------------------------
# Deterministic parameter construction (mirrors DeepLabHead._init_weight)
# ----------------------------------------------------------------------------
def _kaiming(key, kh, kw, cin, cout):
    fan_in = kh * kw * cin
    std = math.sqrt(2.0 / fan_in)          # kaiming_normal_, fan_in, gain sqrt(2)
    return std * jax.random.normal(key, (kh, kw, cin, cout), jnp.float32)


def _bn_fold(cout):
    gamma = jnp.ones((cout,), jnp.float32)
    beta = jnp.zeros((cout,), jnp.float32)
    mean = jnp.zeros((cout,), jnp.float32)
    var = jnp.ones((cout,), jnp.float32)
    scale = gamma / jnp.sqrt(var + BN_EPS)
    bias = beta - mean * scale
    return scale, bias


def init_deeplab_head(key, in_channels, num_classes, aspp_dilate=(12, 24, 36)):
    keys = jax.random.split(key, 10)
    p = {"aspp_dilate": tuple(aspp_dilate), "num_classes": int(num_classes)}
    # ASPP branch 0: 1x1 conv + BN
    p["aspp0_w"] = _kaiming(keys[0], 1, 1, in_channels, ASPP_OUT)
    p["aspp0_bn"] = _bn_fold(ASPP_OUT)
    # ASPP branches 1..3: 3x3 dilated conv + BN
    for i in range(3):
        p[f"aspp{i + 1}_w"] = _kaiming(keys[1 + i], 3, 3, in_channels, ASPP_OUT)
        p[f"aspp{i + 1}_bn"] = _bn_fold(ASPP_OUT)
    # ASPP pooling branch: 1x1 conv + BN
    p["pool_w"] = _kaiming(keys[4], 1, 1, in_channels, ASPP_OUT)[0, 0]   # (Cin, 256)
    p["pool_bn"] = _bn_fold(ASPP_OUT)
    # ASPP projection: 1x1 conv (5*256 -> 256) + BN (+ Dropout(0.1), identity in eval)
    p["proj_w"] = _kaiming(keys[5], 1, 1, 5 * ASPP_OUT, ASPP_OUT)
    p["proj_bn"] = _bn_fold(ASPP_OUT)
    # Head: 3x3 conv (256->256, no bias) + BN
    p["cls_w"] = _kaiming(keys[6], 3, 3, ASPP_OUT, ASPP_OUT)
    p["cls_bn"] = _bn_fold(ASPP_OUT)
    # Final 1x1 conv (256 -> num_classes) with bias (default PyTorch bias init)
    p["final_w"] = _kaiming(keys[7], 1, 1, ASPP_OUT, num_classes)
    bound = 1.0 / math.sqrt(ASPP_OUT)
    p["final_b"] = jax.random.uniform(keys[8], (num_classes,), jnp.float32,
                                      -bound, bound)
    return p


# ----------------------------------------------------------------------------
# Forward pass (feature is a dict with key 'out', NCHW like the PyTorch module)
# ----------------------------------------------------------------------------
def deeplab_head_forward(params, feature):
    x_nchw = feature["out"]
    # NCHW -> NHWC and cast to bf16 for the MXU (one fused XLA pass over x).
    x = jnp.transpose(x_nchw, (0, 2, 3, 1)).astype(jnp.bfloat16)

    proj = _fused_aspp(x, params)           # ASPP + concat + projection, one kernel
    logits_pad = _fused_head(proj, params)  # 3x3 conv+BN+ReLU + classifier, one kernel

    nc = params["num_classes"]
    logits = logits_pad[..., :nc]           # drop lane padding
    return jnp.transpose(logits, (0, 3, 1, 2))   # back to NCHW, f32


# ----------------------------------------------------------------------------
if __name__ == "__main__":
    key = jax.random.PRNGKey(0)
    k_param, k_data = jax.random.split(key)

    N, in_channels, H, W = 2, 8, 16, 16
    num_classes = 5

    params = init_deeplab_head(k_param, in_channels, num_classes, (12, 24, 36))
    x = jax.random.normal(k_data, (N, in_channels, H, W), jnp.float32)
    feature = {"out": x}

    out = jax.block_until_ready(deeplab_head_forward(params, feature))

    assert out.shape == (N, num_classes, H, W), out.shape
    assert bool(jnp.all(jnp.isfinite(out)))
    print("KERNEL_OK")
</pallas_src>

<mosaic_0001>
module attributes {stable_mosaic.version = 11 : i64} {
  func.func @kernel(%arg0: i32, %arg1: memref<1x16x16x8xbf16, #tpu.memory_space<vmem>>, %arg2: memref<8x256xbf16, #tpu.memory_space<vmem>>, %arg3: memref<3x3x8x256xbf16, #tpu.memory_space<vmem>>, %arg4: memref<3x3x8x256xbf16, #tpu.memory_space<vmem>>, %arg5: memref<3x3x8x256xbf16, #tpu.memory_space<vmem>>, %arg6: memref<8x256xbf16, #tpu.memory_space<vmem>>, %arg7: memref<5x256x256xbf16, #tpu.memory_space<vmem>>, %arg8: memref<5x256xf32, #tpu.memory_space<vmem>>, %arg9: memref<5x256xf32, #tpu.memory_space<vmem>>, %arg10: memref<1x256xf32, #tpu.memory_space<vmem>>, %arg11: memref<1x256xf32, #tpu.memory_space<vmem>>, %arg12: memref<1x16x16x256xbf16, #tpu.memory_space<vmem>>, %arg13: memref<16x16x256xf32, #tpu.memory_space<vmem>>, %arg14: memref<256x256xf32, #tpu.memory_space<vmem>>) attributes {dimension_semantics = [#tpu.dimension_semantics<parallel>], iteration_bounds = array<i64: 2>, scalar_prefetch = 0 : i64, scratch_operands = 2 : i64, tpu.core_type = #tpu.core_type<tc>, window_params = [{transform_indices = @transform_0, window_bounds = array<i64: 1, 16, 16, 8>}, {pipeline_mode = #tpu.pipeline_mode<synchronous>, transform_indices = @transform_1, window_bounds = array<i64: 8, 256>}, {pipeline_mode = #tpu.pipeline_mode<synchronous>, transform_indices = @transform_2, window_bounds = array<i64: 3, 3, 8, 256>}, {pipeline_mode = #tpu.pipeline_mode<synchronous>, transform_indices = @transform_3, window_bounds = array<i64: 3, 3, 8, 256>}, {pipeline_mode = #tpu.pipeline_mode<synchronous>, transform_indices = @transform_4, window_bounds = array<i64: 3, 3, 8, 256>}, {pipeline_mode = #tpu.pipeline_mode<synchronous>, transform_indices = @transform_5, window_bounds = array<i64: 8, 256>}, {pipeline_mode = #tpu.pipeline_mode<synchronous>, transform_indices = @transform_6, window_bounds = array<i64: 5, 256, 256>}, {pipeline_mode = #tpu.pipeline_mode<synchronous>, transform_indices = @transform_7, window_bounds = array<i64: 5, 256>}, {pipeline_mode = #tpu.pipeline_mode<synchronous>, transform_indices = @transform_8, window_bounds = array<i64: 5, 256>}, {pipeline_mode = #tpu.pipeline_mode<synchronous>, transform_indices = @transform_9, window_bounds = array<i64: 1, 256>}, {pipeline_mode = #tpu.pipeline_mode<synchronous>, transform_indices = @transform_10, window_bounds = array<i64: 1, 256>}, {transform_indices = @transform_11, window_bounds = array<i64: 1, 16, 16, 256>}]} {
    %c0 = arith.constant 0 : index
    %c0_0 = arith.constant 0 : index
    %c0_1 = arith.constant 0 : index
    %c0_2 = arith.constant 0 : index
    %0 = vector.load %arg1[%c0, %c0_0, %c0_1, %c0_2] : memref<1x16x16x8xbf16, #tpu.memory_space<vmem>>, vector<1x16x16x8xbf16>
    %1 = vector.shape_cast %0 : vector<1x16x16x8xbf16> to vector<16x16x8xbf16>
    %2 = vector.shape_cast %1 : vector<16x16x8xbf16> to vector<256x8xbf16>
    %c0_3 = arith.constant 0 : index
    %c0_4 = arith.constant 0 : index
    %3 = vector.load %arg2[%c0_3, %c0_4] : memref<8x256xbf16, #tpu.memory_space<vmem>>, vector<8x256xbf16>
    %cst = arith.constant dense<0.000000e+00> : vector<256x256xf32>
    %4 = tpu.matmul %2, %3, %cst {dimension_numbers = #tpu.dot_dimension_numbers<[1], [0], [0], [1], [0, 0, 1, 1], [], []>} : vector<256x8xbf16>, vector<8x256xbf16>, vector<256x256xf32> -> vector<256x256xf32>
    %c0_5 = arith.constant 0 : index
    %c0_6 = arith.constant 0 : index
    %5 = vector.load %arg8[%c0_5, %c0_6] : memref<5x256xf32, #tpu.memory_space<vmem>>, vector<1x256xf32>
    %6 = vector.broadcast %5 : vector<1x256xf32> to vector<256x256xf32>
    %7 = arith.mulf %4, %6 : vector<256x256xf32>
    %c0_7 = arith.constant 0 : index
    %c0_8 = arith.constant 0 : index
    %8 = vector.load %arg9[%c0_7, %c0_8] : memref<5x256xf32, #tpu.memory_space<vmem>>, vector<1x256xf32>
    %9 = vector.broadcast %8 : vector<1x256xf32> to vector<256x256xf32>
    %10 = arith.addf %7, %9 : vector<256x256xf32>
    %cst_9 = arith.constant 0.000000e+00 : f32
    %11 = vector.broadcast %cst_9 : f32 to vector<256x256xf32>
    %12 = arith.maximumf %10, %11 : vector<256x256xf32>
    %13 = arith.truncf %12 : vector<256x256xf32> to vector<256x256xbf16>
    %c0_10 = arith.constant 0 : index
    %c0_11 = arith.constant 0 : index
    %c0_12 = arith.constant 0 : index
    %14 = vector.load %arg7[%c0_10, %c0_11, %c0_12] : memref<5x256x256xbf16, #tpu.memory_space<vmem>>, vector<1x256x256xbf16>
    %15 = vector.shape_cast %14 : vector<1x256x256xbf16> to vector<256x256xbf16>
    %cst_13 = arith.constant dense<0.000000e+00> : vector<256x256xf32>
    %16 = tpu.matmul %13, %15, %cst_13 {dimension_numbers = #tpu.dot_dimension_numbers<[1], [0], [0], [1], [0, 0, 1, 1], [], []>} : vector<256x256xbf16>, vector<256x256xbf16>, vector<256x256xf32> -> vector<256x256xf32>
    %c0_14 = arith.constant 0 : index
    %c0_15 = arith.constant 0 : index
    %17 = vector.load %arg14[%c0_14, %c0_15] : memref<256x256xf32, #tpu.memory_space<vmem>>, vector<256x256xf32>
    tpu.vector_store %arg14[%c0_14, %c0_15], %16 {strides = array<i32>} : memref<256x256xf32, #tpu.memory_space<vmem>>, vector<256x256xf32>,
    %c1 = arith.constant 1 : index
    %c1_16 = arith.constant 1 : index
    %c0_17 = arith.constant 0 : index
    %c0_18 = arith.constant 0 : index
    %18 = vector.load %arg3[%c1, %c1_16, %c0_17, %c0_18] : memref<3x3x8x256xbf16, #tpu.memory_space<vmem>>, vector<1x1x8x256xbf16>
    %19 = vector.shape_cast %18 : vector<1x1x8x256xbf16> to vector<8x256xbf16>
    %cst_19 = arith.constant dense<0.000000e+00> : vector<256x256xf32>
    %20 = tpu.matmul %2, %19, %cst_19 {dimension_numbers = #tpu.dot_dimension_numbers<[1], [0], [0], [1], [0, 0, 1, 1], [], []>} : vector<256x8xbf16>, vector<8x256xbf16>, vector<256x256xf32> -> vector<256x256xf32>
    %21 = vector.shape_cast %20 : vector<256x256xf32> to vector<16x16x256xf32>
    %c0_20 = arith.constant 0 : index
    %c0_21 = arith.constant 0 : index
    %c0_22 = arith.constant 0 : index
    %22 = vector.load %arg13[%c0_20, %c0_21, %c0_22] : memref<16x16x256xf32, #tpu.memory_space<vmem>>, vector<16x16x256xf32>
    tpu.vector_store %arg13[%c0_20, %c0_21, %c0_22], %21 {strides = array<i32>} : memref<16x16x256xf32, #tpu.memory_space<vmem>>, vector<16x16x256xf32>,
    %c0_23 = arith.constant 0 : index
    %c0_24 = arith.constant 0 : index
    %c0_25 = arith.constant 0 : index
    %c0_26 = arith.constant 0 : index
    %23 = vector.load %arg1[%c0_23, %c0_24, %c0_25, %c0_26] : memref<1x16x16x8xbf16, #tpu.memory_space<vmem>>, vector<1x4x16x8xbf16>
    %24 = vector.shape_cast %23 : vector<1x4x16x8xbf16> to vector<4x16x8xbf16>
    %25 = vector.shape_cast %24 : vector<4x16x8xbf16> to vector<64x8xbf16>
    %c0_27 = arith.constant 0 : index
    %c0_28 = arith.constant 0 : index
    %c0_29 = arith.constant 0 : index
    %c0_30 = arith.constant 0 : index
    %26 = vector.load %arg3[%c0_27, %c0_28, %c0_29, %c0_30] : memref<3x3x8x256xbf16, #tpu.memory_space<vmem>>, vector<1x1x8x256xbf16>
    %27 = vector.shape_cast %26 : vector<1x1x8x256xbf16> to vector<8x256xbf16>
    %cst_31 = arith.constant dense<0.000000e+00> : vector<64x256xf32>
    %28 = tpu.matmul %25, %27, %cst_31 {dimension_numbers = #tpu.dot_dimension_numbers<[1], [0], [0], [1], [0, 0, 1, 1], [], []>} : vector<64x8xbf16>, vector<8x256xbf16>, vector<64x256xf32> -> vector<64x256xf32>
    %29 = vector.shape_cast %28 : vector<64x256xf32> to vector<4x16x256xf32>
    %30 = vector.extract_strided_slice %29 {offsets = [0, 0, 0], sizes = [4, 4, 256], strides = [1, 1, 1]} : vector<4x16x256xf32> to vector<4x4x256xf32>
    %c12 = arith.constant 12 : index
    %c12_32 = arith.constant 12 : index
    %c0_33 = arith.constant 0 : index
    %31 = vector.load %arg13[%c12, %c12_32, %c0_33] : memref<16x16x256xf32, #tpu.memory_space<vmem>>, vector<4x4x256xf32>
    %32 = arith.addf %31, %30 : vector<4x4x256xf32>
    %c12_34 = arith.constant 12 : index
    %c12_35 = arith.constant 12 : index
    %c0_36 = arith.constant 0 : index
    %33 = vector.load %arg13[%c12_34, %c12_35, %c0_36] : memref<16x16x256xf32, #tpu.memory_space<vmem>>, vector<4x4x256xf32>
    tpu.vector_store %arg13[%c12_34, %c12_35, %c0_36], %32 {strides = array<i32>} : memref<16x16x256xf32, #tpu.memory_space<vmem>>, vector<4x4x256xf32>,
    %c0_37 = arith.constant 0 : index
    %c0_38 = arith.constant 0 : index
    %c0_39 = arith.constant 0 : index
    %c0_40 = arith.constant 0 : index
    %34 = vector.load %arg1[%c0_37, %c0_38, %c0_39, %c0_40] : memref<1x16x16x8xbf16, #tpu.memory_space<vmem>>, vector<1x4x16x8xbf16>
    %35 = vector.shape_cast %34 : vector<1x4x16x8xbf16> to vector<4x16x8xbf16>
    %36 = vector.shape_cast %35 : vector<4x16x8xbf16> to vector<64x8xbf16>
    %c0_41 = arith.constant 0 : index
    %c1_42 = arith.constant 1 : index
    %c0_43 = arith.constant 0 : index
    %c0_44 = arith.constant 0 : index
    %37 = vector.load %arg3[%c0_41, %c1_42, %c0_43, %c0_44] : memref<3x3x8x256xbf16, #tpu.memory_space<vmem>>, vector<1x1x8x256xbf16>
    %38 = vector.shape_cast %37 : vector<1x1x8x256xbf16> to vector<8x256xbf16>
    %cst_45 = arith.constant dense<0.000000e+00> : vector<64x256xf32>
    %39 = tpu.matmul %36, %38, %cst_45 {dimension_numbers = #tpu.dot_dimension_numbers<[1], [0], [0], [1], [0, 0, 1, 1], [], []>} : vector<64x8xbf16>, vector<8x256xbf16>, vector<64x256xf32> -> vector<64x256xf32>
    %40 = vector.shape_cast %39 : vector<64x256xf32> to vector<4x16x256xf32>
    %c12_46 = arith.constant 12 : index
    %c0_47 = arith.constant 0 : index
    %c0_48 = arith.constant 0 : index
    %41 = vector.load %arg13[%c12_46, %c0_47, %c0_48] : memref<16x16x256xf32, #tpu.memory_space<vmem>>, vector<4x16x256xf32>
    %42 = arith.addf %41, %40 : vector<4x16x256xf32>
    %c12_49 = arith.constant 12 : index
    %c0_50 = arith.constant 0 : index
    %c0_51 = arith.constant 0 : index
    %43 = vector.load %arg13[%c12_49, %c0_50, %c0_51] : memref<16x16x256xf32, #tpu.memory_space<vmem>>, vector<4x16x256xf32>
    tpu.vector_store %arg13[%c12_49, %c0_50, %c0_51], %42 {strides = array<i32>} : memref<16x16x256xf32, #tpu.memory_space<vmem>>, vector<4x16x256xf32>,
    %c0_52 = arith.constant 0 : index
    %c0_53 = arith.constant 0 : index
    %c0_54 = arith.constant 0 : index
    %c0_55 = arith.constant 0 : index
    %44 = vector.load %arg1[%c0_52, %c0_53, %c0_54, %c0_55] : memref<1x16x16x8xbf16, #tpu.memory_space<vmem>>, vector<1x4x16x8xbf16>
    %45 = vector.shape_cast %44 : vector<1x4x16x8xbf16> to vector<4x16x8xbf16>
    %46 = vector.shape_cast %45 : vector<4x16x8xbf16> to vector<64x8xbf16>
    %c0_56 = arith.constant 0 : index
    %c2 = arith.constant 2 : index
    %c0_57 = arith.constant 0 : index
    %c0_58 = arith.constant 0 : index
    %47 = vector.load %arg3[%c0_56, %c2, %c0_57, %c0_58] : memref<3x3x8x256xbf16, #tpu.memory_space<vmem>>, vector<1x1x8x256xbf16>
    %48 = vector.shape_cast %47 : vector<1x1x8x256xbf16> to vector<8x256xbf16>
    %cst_59 = arith.constant dense<0.000000e+00> : vector<64x256xf32>
    %49 = tpu.matmul %46, %48, %cst_59 {dimension_numbers = #tpu.dot_dimension_numbers<[1], [0], [0], [1], [0, 0, 1, 1], [], []>} : vector<64x8xbf16>, vector<8x256xbf16>, vector<64x256xf32> -> vector<64x256xf32>
    %50 = vector.shape_cast %49 : vector<64x256xf32> to vector<4x16x256xf32>
    %51 = vector.extract_strided_slice %50 {offsets = [0, 12, 0], sizes = [4, 4, 256], strides = [1, 1, 1]} : vector<4x16x256xf32> to vector<4x4x256xf32>
    %c12_60 = arith.constant 12 : index
    %c0_61 = arith.constant 0 : index
    %c0_62 = arith.constant 0 : index
    %52 = vector.load %arg13[%c12_60, %c0_61, %c0_62] : memref<16x16x256xf32, #tpu.memory_space<vmem>>, vector<4x4x256xf32>
    %53 = arith.addf %52, %51 : vector<4x4x256xf32>
    %c12_63 = arith.constant 12 : index
    %c0_64 = arith.constant 0 : index
    %c0_65 = arith.constant 0 : index
    %54 = vector.load %arg13[%c12_63, %c0_64, %c0_65] : memref<16x16x256xf32, #tpu.memory_space<vmem>>, vector<4x4x256xf32>
    tpu.vector_store %arg13[%c12_63, %c0_64, %c0_65], %53 {strides = array<i32>} : memref<16x16x256xf32, #tpu.memory_space<vmem>>, vector<4x4x256xf32>,
    %c0_66 = arith.constant 0 : index
    %c0_67 = arith.constant 0 : index
    %c0_68 = arith.constant 0 : index
    %c0_69 = arith.constant 0 : index
    %55 = vector.load %arg1[%c0_66, %c0_67, %c0_68, %c0_69] : memref<1x16x16x8xbf16, #tpu.memory_space<vmem>>, vector<1x16x16x8xbf16>
    %56 = vector.shape_cast %55 : vector<1x16x16x8xbf16> to vector<16x16x8xbf16>
    %57 = vector.shape_cast %56 : vector<16x16x8xbf16> to vector<256x8xbf16>
    %c1_70 = arith.constant 1 : index
    %c0_71 = arith.constant 0 : index
    %c0_72 = arith.constant 0 : index
    %c0_73 = arith.constant 0 : index
    %58 = vector.load %arg3[%c1_70, %c0_71, %c0_72, %c0_73] : memref<3x3x8x256xbf16, #tpu.memory_space<vmem>>, vector<1x1x8x256xbf16>
    %59 = vector.shape_cast %58 : vector<1x1x8x256xbf16> to vector<8x256xbf16>
    %cst_74 = arith.constant dense<0.000000e+00> : vector<256x256xf32>
    %60 = tpu.matmul %57, %59, %cst_74 {dimension_numbers = #tpu.dot_dimension_numbers<[1], [0], [0], [1], [0, 0, 1, 1], [], []>} : vector<256x8xbf16>, vector<8x256xbf16>, vector<256x256xf32> -> vector<256x256xf32>
    %61 = vector.shape_cast %60 : vector<256x256xf32> to vector<16x16x256xf32>
    %62 = vector.extract_strided_slice %61 {offsets = [0, 0, 0], sizes = [16, 4, 256], strides = [1, 1, 1]} : vector<16x16x256xf32> to vector<16x4x256xf32>
    %c0_75 = arith.constant 0 : index
    %c12_76 = arith.constant 12 : index
    %c0_77 = arith.constant 0 : index
    %63 = vector.load %arg13[%c0_75, %c12_76, %c0_77] : memref<16x16x256xf32, #tpu.memory_space<vmem>>, vector<16x4x256xf32>
    %64 = arith.addf %63, %62 : vector<16x4x256xf32>
    %c0_78 = arith.constant 0 : index
    %c12_79 = arith.constant 12 : index
    %c0_80 = arith.constant 0 : index
    %65 = vector.load %arg13[%c0_78, %c12_79, %c0_80] : memref<16x16x256xf32, #tpu.memory_space<vmem>>, vector<16x4x256xf32>
    tpu.vector_store %arg13[%c0_78, %c12_79, %c0_80], %64 {strides = array<i32>} : memref<16x16x256xf32, #tpu.memory_space<vmem>>, vector<16x4x256xf32>,
    %c0_81 = arith.constant 0 : index
    %c0_82 = arith.constant 0 : index
    %c0_83 = arith.constant 0 : index
    %c0_84 = arith.constant 0 : index
    %66 = vector.load %arg1[%c0_81, %c0_82, %c0_83, %c0_84] : memref<1x16x16x8xbf16, #tpu.memory_space<vmem>>, vector<1x16x16x8xbf16>
    %67 = vector.shape_cast %66 : vector<1x16x16x8xbf16> to vector<16x16x8xbf16>
    %68 = vector.shape_cast %67 : vector<16x16x8xbf16> to vector<256x8xbf16>
    %c1_85 = arith.constant 1 : index
    %c2_86 = arith.constant 2 : index
    %c0_87 = arith.constant 0 : index
    %c0_88 = arith.constant 0 : index
    %69 = vector.load %arg3[%c1_85, %c2_86, %c0_87, %c0_88] : memref<3x3x8x256xbf16, #tpu.memory_space<vmem>>, vector<1x1x8x256xbf16>
    %70 = vector.shape_cast %69 : vector<1x1x8x256xbf16> to vector<8x256xbf16>
    %cst_89 = arith.constant dense<0.000000e+00> : vector<256x256xf32>
    %71 = tpu.matmul %68, %70, %cst_89 {dimension_numbers = #tpu.dot_dimension_numbers<[1], [0], [0], [1], [0, 0, 1, 1], [], []>} : vector<256x8xbf16>, vector<8x256xbf16>, vector<256x256xf32> -> vector<256x256xf32>
    %72 = vector.shape_cast %71 : vector<256x256xf32> to vector<16x16x256xf32>
    %73 = vector.extract_strided_slice %72 {offsets = [0, 12, 0], sizes = [16, 4, 256], strides = [1, 1, 1]} : vector<16x16x256xf32> to vector<16x4x256xf32>
    %c0_90 = arith.constant 0 : index
    %c0_91 = arith.constant 0 : index
    %c0_92 = arith.constant 0 : index
    %74 = vector.load %arg13[%c0_90, %c0_91, %c0_92] : memref<16x16x256xf32, #tpu.memory_space<vmem>>, vector<16x4x256xf32>
    %75 = arith.addf %74, %73 : vector<16x4x256xf32>
    %c0_93 = arith.constant 0 : index
    %c0_94 = arith.constant 0 : index
    %c0_95 = arith.constant 0 : index
    %76 = vector.load %arg13[%c0_93, %c0_94, %c0_95] : memref<16x16x256xf32, #tpu.memory_space<vmem>>, vector<16x4x256xf32>
    tpu.vector_store %arg13[%c0_93, %c0_94, %c0_95], %75 {strides = array<i32>} : memref<16x16x256xf32, #tpu.memory_space<vmem>>, vector<16x4x256xf32>,
    %c0_96 = arith.constant 0 : index
    %c12_97 = arith.constant 12 : index
    %c0_98 = arith.constant 0 : index
    %c0_99 = arith.constant 0 : index
    %77 = vector.load %arg1[%c0_96, %c12_97, %c0_98, %c0_99] : memref<1x16x16x8xbf16, #tpu.memory_space<vmem>>, vector<1x4x16x8xbf16>
    %78 = vector.shape_cast %77 : vector<1x4x16x8xbf16> to vector<4x16x8xbf16>
    %79 = vector.shape_cast %78 : vector<4x16x8xbf16> to vector<64x8xbf16>
    %c2_100 = arith.constant 2 : index
    %c0_101 = arith.constant 0 : index
    %c0_102 = arith.constant 0 : index
    %c0_103 = arith.constant 0 : index
    %80 = vector.load %arg3[%c2_100, %c0_101, %c0_102, %c0_103] : memref<3x3x8x256xbf16, #tpu.memory_space<vmem>>, vector<1x1x8x256xbf16>
    %81 = vector.shape_cast %80 : vector<1x1x8x256xbf16> to vector<8x256xbf16>
    %cst_104 = arith.constant dense<0.000000e+00> : vector<64x256xf32>
    %82 = tpu.matmul %79, %81, %cst_104 {dimension_numbers = #tpu.dot_dimension_numbers<[1], [0], [0], [1], [0, 0, 1, 1], [], []>} : vector<64x8xbf16>, vector<8x256xbf16>, vector<64x256xf32> -> vector<64x256xf32>
    %83 = vector.shape_cast %82 : vector<64x256xf32> to vector<4x16x256xf32>
    %84 = vector.extract_strided_slice %83 {offsets = [0, 0, 0], sizes = [4, 4, 256], strides = [1, 1, 1]} : vector<4x16x256xf32> to vector<4x4x256xf32>
    %c0_105 = arith.constant 0 : index
    %c12_106 = arith.constant 12 : index
    %c0_107 = arith.constant 0 : index
    %85 = vector.load %arg13[%c0_105, %c12_106, %c0_107] : memref<16x16x256xf32, #tpu.memory_space<vmem>>, vector<4x4x256xf32>
    %86 = arith.addf %85, %84 : vector<4x4x256xf32>
    %c0_108 = arith.constant 0 : index
    %c12_109 = arith.constant 12 : index
    %c0_110 = arith.constant 0 : index
    %87 = vector.load %arg13[%c0_108, %c12_109, %c0_110] : memref<16x16x256xf32, #tpu.memory_space<vmem>>, vector<4x4x256xf32>
    tpu.vector_store %arg13[%c0_108, %c12_109, %c0_110], %86 {strides = array<i32>} : memref<16x16x256xf32, #tpu.memory_space<vmem>>, vector<4x4x256xf32>,
    %c0_111 = arith.constant 0 : index
    %c12_112 = arith.constant 12 : index
    %c0_113 = arith.constant 0 : index
    %c0_114 = arith.constant 0 : index
    %88 = vector.load %arg1[%c0_111, %c12_112, %c0_113, %c0_114] : memref<1x16x16x8xbf16, #tpu.memory_space<vmem>>, vector<1x4x16x8xbf16>
    %89 = vector.shape_cast %88 : vector<1x4x16x8xbf16> to vector<4x16x8xbf16>
    %90 = vector.shape_cast %89 : vector<4x16x8xbf16> to vector<64x8xbf16>
    %c2_115 = arith.constant 2 : index
    %c1_116 = arith.constant 1 : index
    %c0_117 = arith.constant 0 : index
    %c0_118 = arith.constant 0 : index
    %91 = vector.load %arg3[%c2_115, %c1_116, %c0_117, %c0_118] : memref<3x3x8x256xbf16, #tpu.memory_space<vmem>>, vector<1x1x8x256xbf16>
    %92 = vector.shape_cast %91 : vector<1x1x8x256xbf16> to vector<8x256xbf16>
    %cst_119 = arith.constant dense<0.000000e+00> : vector<64x256xf32>
    %93 = tpu.matmul %90, %92, %cst_119 {dimension_numbers = #tpu.dot_dimension_numbers<[1], [0], [0], [1], [0, 0, 1, 1], [], []>} : vector<64x8xbf16>, vector<8x256xbf16>, vector<64x256xf32> -> vector<64x256xf32>
    %94 = vector.shape_cast %93 : vector<64x256xf32> to vector<4x16x256xf32>
    %c0_120 = arith.constant 0 : index
    %c0_121 = arith.constant 0 : index
    %c0_122 = arith.constant 0 : index
    %95 = vector.load %arg13[%c0_120, %c0_121, %c0_122] : memref<16x16x256xf32, #tpu.memory_space<vmem>>, vector<4x16x256xf32>
    %96 = arith.addf %95, %94 : vector<4x16x256xf32>
    %c0_123 = arith.constant 0 : index
    %c0_124 = arith.constant 0 : index
    %c0_125 = arith.constant 0 : index
    %97 = vector.load %arg13[%c0_123, %c0_124, %c0_125] : memref<16x16x256xf32, #tpu.memory_space<vmem>>, vector<4x16x256xf32>
    tpu.vector_store %arg13[%c0_123, %c0_124, %c0_125], %96 {strides = array<i32>} : memref<16x16x256xf32, #tpu.memory_space<vmem>>, vector<4x16x256xf32>,
    %c0_126 = arith.constant 0 : index
    %c12_127 = arith.constant 12 : index
    %c0_128 = arith.constant 0 : index
    %c0_129 = arith.constant 0 : index
    %98 = vector.load %arg1[%c0_126, %c12_127, %c0_128, %c0_129] : memref<1x16x16x8xbf16, #tpu.memory_space<vmem>>, vector<1x4x16x8xbf16>
    %99 = vector.shape_cast %98 : vector<1x4x16x8xbf16> to vector<4x16x8xbf16>
    %100 = vector.shape_cast %99 : vector<4x16x8xbf16> to vector<64x8xbf16>
    %c2_130 = arith.constant 2 : index
    %c2_131 = arith.constant 2 : index
    %c0_132 = arith.constant 0 : index
    %c0_133 = arith.constant 0 : index
    %101 = vector.load %arg3[%c2_130, %c2_131, %c0_132, %c0_133] : memref<3x3x8x256xbf16, #tpu.memory_space<vmem>>, vector<1x1x8x256xbf16>
    %102 = vector.shape_cast %101 : vector<1x1x8x256xbf16> to vector<8x256xbf16>
    %cst_134 = arith.constant dense<0.000000e+00> : vector<64x256xf32>
    %103 = tpu.matmul %100, %102, %cst_134 {dimension_numbers = #tpu.dot_dimension_numbers<[1], [0], [0], [1], [0, 0, 1, 1], [], []>} : vector<64x8xbf16>, vector<8x256xbf16>, vector<64x256xf32> -> vector<64x256xf32>
    %104 = vector.shape_cast %103 : vector<64x256xf32> to vector<4x16x256xf32>
    %105 = vector.extract_strided_slice %104 {offsets = [0, 12, 0], sizes = [4, 4, 256], strides = [1, 1, 1]} : vector<4x16x256xf32> to vector<4x4x256xf32>
    %c0_135 = arith.constant 0 : index
    %c0_136 = arith.constant 0 : index
    %c0_137 = arith.constant 0 : index
    %106 = vector.load %arg13[%c0_135, %c0_136, %c0_137] : memref<16x16x256xf32, #tpu.memory_space<vmem>>, vector<4x4x256xf32>
    %107 = arith.addf %106, %105 : vector<4x4x256xf32>
    %c0_138 = arith.constant 0 : index
    %c0_139 = arith.constant 0 : index
    %c0_140 = arith.constant 0 : index
    %108 = vector.load %arg13[%c0_138, %c0_139, %c0_140] : memref<16x16x256xf32, #tpu.memory_space<vmem>>, vector<4x4x256xf32>
    tpu.vector_store %arg13[%c0_138, %c0_139, %c0_140], %107 {strides = array<i32>} : memref<16x16x256xf32, #tpu.memory_space<vmem>>, vector<4x4x256xf32>,
    %c0_141 = arith.constant 0 : index
    %c0_142 = arith.constant 0 : index
    %c0_143 = arith.constant 0 : index
    %109 = vector.load %arg13[%c0_141, %c0_142, %c0_143] : memref<16x16x256xf32, #tpu.memory_space<vmem>>, vector<16x16x256xf32>
    %110 = vector.shape_cast %109 : vector<16x16x256xf32> to vector<256x256xf32>
    %c1_144 = arith.constant 1 : index
    %c0_145 = arith.constant 0 : index
    %111 = vector.load %arg8[%c1_144, %c0_145] : memref<5x256xf32, #tpu.memory_space<vmem>>, vector<1x256xf32>
    %112 = vector.broadcast %111 : vector<1x256xf32> to vector<256x256xf32>
    %113 = arith.mulf %110, %112 : vector<256x256xf32>
    %c1_146 = arith.constant 1 : index
    %c0_147 = arith.constant 0 : index
    %114 = vector.load %arg9[%c1_146, %c0_147] : memref<5x256xf32, #tpu.memory_space<vmem>>, vector<1x256xf32>
    %115 = vector.broadcast %114 : vector<1x256xf32> to vector<256x256xf32>
    %116 = arith.addf %113, %115 : vector<256x256xf32>
    %cst_148 = arith.constant 0.000000e+00 : f32
    %117 = vector.broadcast %cst_148 : f32 to vector<256x256xf32>
    %118 = arith.maximumf %116, %117 : vector<256x256xf32>
    %c0_149 = arith.constant 0 : index
    %c0_150 = arith.constant 0 : index
    %119 = vector.load %arg14[%c0_149, %c0_150] : memref<256x256xf32, #tpu.memory_space<vmem>>, vector<256x256xf32>
    %120 = arith.truncf %118 : vector<256x256xf32> to vector<256x256xbf16>
    %c1_151 = arith.constant 1 : index
    %c0_152 = arith.constant 0 : index
    %c0_153 = arith.constant 0 : index
    %121 = vector.load %arg7[%c1_151, %c0_152, %c0_153] : memref<5x256x256xbf16, #tpu.memory_space<vmem>>, vector<1x256x256xbf16>
    %122 = vector.shape_cast %121 : vector<1x256x256xbf16> to vector<256x256xbf16>
    %cst_154 = arith.constant dense<0.000000e+00> : vector<256x256xf32>
    %123 = tpu.matmul %120, %122, %cst_154 {dimension_numbers = #tpu.dot_dimension_numbers<[1], [0], [0], [1], [0, 0, 1, 1], [], []>} : vector<256x256xbf16>, vector<256x256xbf16>, vector<256x256xf32> -> vector<256x256xf32>
    %124 = arith.addf %119, %123 : vector<256x256xf32>
    %c0_155 = arith.constant 0 : index
    %c0_156 = arith.constant 0 : index
    %125 = vector.load %arg14[%c0_155, %c0_156] : memref<256x256xf32, #tpu.memory_space<vmem>>, vector<256x256xf32>
    tpu.vector_store %arg14[%c0_155, %c0_156], %124 {strides = array<i32>} : memref<256x256xf32, #tpu.memory_space<vmem>>, vector<256x256xf32>,
    %c1_157 = arith.constant 1 : index
    %c1_158 = arith.constant 1 : index
    %c0_159 = arith.constant 0 : index
    %c0_160 = arith.constant 0 : index
    %126 = vector.load %arg4[%c1_157, %c1_158, %c0_159, %c0_160] : memref<3x3x8x256xbf16, #tpu.memory_space<vmem>>, vector<1x1x8x256xbf16>
    %127 = vector.shape_cast %126 : vector<1x1x8x256xbf16> to vector<8x256xbf16>
    %cst_161 = arith.constant dense<0.000000e+00> : vector<256x256xf32>
    %128 = tpu.matmul %2, %127, %cst_161 {dimension_numbers = #tpu.dot_dimension_numbers<[1], [0], [0], [1], [0, 0, 1, 1], [], []>} : vector<256x8xbf16>, vector<8x256xbf16>, vector<256x256xf32> -> vector<256x256xf32>
    %129 = vector.shape_cast %128 : vector<256x256xf32> to vector<16x16x256xf32>
    %c0_162 = arith.constant 0 : index
    %c0_163 = arith.constant 0 : index
    %c0_164 = arith.constant 0 : index
    %130 = vector.load %arg13[%c0_162, %c0_163, %c0_164] : memref<16x16x256xf32, #tpu.memory_space<vmem>>, vector<16x16x256xf32>
    tpu.vector_store %arg13[%c0_162, %c0_163, %c0_164], %129 {strides = array<i32>} : memref<16x16x256xf32, #tpu.memory_space<vmem>>, vector<16x16x256xf32>,
    %c0_165 = arith.constant 0 : index
    %c0_166 = arith.constant 0 : index
    %c0_167 = arith.constant 0 : index
    %131 = vector.load %arg13[%c0_165, %c0_166, %c0_167] : memref<16x16x256xf32, #tpu.memory_space<vmem>>, vector<16x16x256xf32>
    %132 = vector.shape_cast %131 : vector<16x16x256xf32> to vector<256x256xf32>
    %c2_168 = arith.constant 2 : index
    %c0_169 = arith.constant 0 : index
    %133 = vector.load %arg8[%c2_168, %c0_169] : memref<5x256xf32, #tpu.memory_space<vmem>>, vector<1x256xf32>
    %134 = vector.broadcast %133 : vector<1x256xf32> to vector<256x256xf32>
    %135 = arith.mulf %132, %134 : vector<256x256xf32>
    %c2_170 = arith.constant 2 : index
    %c0_171 = arith.constant 0 : index
    %136 = vector.load %arg9[%c2_170, %c0_171] : memref<5x256xf32, #tpu.memory_space<vmem>>, vector<1x256xf32>
    %137 = vector.broadcast %136 : vector<1x256xf32> to vector<256x256xf32>
    %138 = arith.addf %135, %137 : vector<256x256xf32>
    %cst_172 = arith.constant 0.000000e+00 : f32
    %139 = vector.broadcast %cst_172 : f32 to vector<256x256xf32>
    %140 = arith.maximumf %138, %139 : vector<256x256xf32>
    %c0_173 = arith.constant 0 : index
    %c0_174 = arith.constant 0 : index
    %141 = vector.load %arg14[%c0_173, %c0_174] : memref<256x256xf32, #tpu.memory_space<vmem>>, vector<256x256xf32>
    %142 = arith.truncf %140 : vector<256x256xf32> to vector<256x256xbf16>
    %c2_175 = arith.constant 2 : index
    %c0_176 = arith.constant 0 : index
    %c0_177 = arith.constant 0 : index
    %143 = vector.load %arg7[%c2_175, %c0_176, %c0_177] : memref<5x256x256xbf16, #tpu.memory_space<vmem>>, vector<1x256x256xbf16>
    %144 = vector.shape_cast %143 : vector<1x256x256xbf16> to vector<256x256xbf16>
    %cst_178 = arith.constant dense<0.000000e+00> : vector<256x256xf32>
    %145 = tpu.matmul %142, %144, %cst_178 {dimension_numbers = #tpu.dot_dimension_numbers<[1], [0], [0], [1], [0, 0, 1, 1], [], []>} : vector<256x256xbf16>, vector<256x256xbf16>, vector<256x256xf32> -> vector<256x256xf32>
    %146 = arith.addf %141, %145 : vector<256x256xf32>
    %c0_179 = arith.constant 0 : index
    %c0_180 = arith.constant 0 : index
    %147 = vector.load %arg14[%c0_179, %c0_180] : memref<256x256xf32, #tpu.memory_space<vmem>>, vector<256x256xf32>
    tpu.vector_store %arg14[%c0_179, %c0_180], %146 {strides = array<i32>} : memref<256x256xf32, #tpu.memory_space<vmem>>, vector<256x256xf32>,
    %c1_181 = arith.constant 1 : index
    %c1_182 = arith.constant 1 : index
    %c0_183 = arith.constant 0 : index
    %c0_184 = arith.constant 0 : index
    %148 = vector.load %arg5[%c1_181, %c1_182, %c0_183, %c0_184] : memref<3x3x8x256xbf16, #tpu.memory_space<vmem>>, vector<1x1x8x256xbf16>
    %149 = vector.shape_cast %148 : vector<1x1x8x256xbf16> to vector<8x256xbf16>
    %cst_185 = arith.constant dense<0.000000e+00> : vector<256x256xf32>
    %150 = tpu.matmul %2, %149, %cst_185 {dimension_numbers = #tpu.dot_dimension_numbers<[1], [0], [0], [1], [0, 0, 1, 1], [], []>} : vector<256x8xbf16>, vector<8x256xbf16>, vector<256x256xf32> -> vector<256x256xf32>
    %151 = vector.shape_cast %150 : vector<256x256xf32> to vector<16x16x256xf32>
    %c0_186 = arith.constant 0 : index
    %c0_187 = arith.constant 0 : index
    %c0_188 = arith.constant 0 : index
    %152 = vector.load %arg13[%c0_186, %c0_187, %c0_188] : memref<16x16x256xf32, #tpu.memory_space<vmem>>, vector<16x16x256xf32>
    tpu.vector_store %arg13[%c0_186, %c0_187, %c0_188], %151 {strides = array<i32>} : memref<16x16x256xf32, #tpu.memory_space<vmem>>, vector<16x16x256xf32>,
    %c0_189 = arith.constant 0 : index
    %c0_190 = arith.constant 0 : index
    %c0_191 = arith.constant 0 : index
    %153 = vector.load %arg13[%c0_189, %c0_190, %c0_191] : memref<16x16x256xf32, #tpu.memory_space<vmem>>, vector<16x16x256xf32>
    %154 = vector.shape_cast %153 : vector<16x16x256xf32> to vector<256x256xf32>
    %c3 = arith.constant 3 : index
    %c0_192 = arith.constant 0 : index
    %155 = vector.load %arg8[%c3, %c0_192] : memref<5x256xf32, #tpu.memory_space<vmem>>, vector<1x256xf32>
    %156 = vector.broadcast %155 : vector<1x256xf32> to vector<256x256xf32>
    %157 = arith.mulf %154, %156 : vector<256x256xf32>
    %c3_193 = arith.constant 3 : index
    %c0_194 = arith.constant 0 : index
    %158 = vector.load %arg9[%c3_193, %c0_194] : memref<5x256xf32, #tpu.memory_space<vmem>>, vector<1x256xf32>
    %159 = vector.broadcast %158 : vector<1x256xf32> to vector<256x256xf32>
    %160 = arith.addf %157, %159 : vector<256x256xf32>
    %cst_195 = arith.constant 0.000000e+00 : f32
    %161 = vector.broadcast %cst_195 : f32 to vector<256x256xf32>
    %162 = arith.maximumf %160, %161 : vector<256x256xf32>
    %c0_196 = arith.constant 0 : index
    %c0_197 = arith.constant 0 : index
    %163 = vector.load %arg14[%c0_196, %c0_197] : memref<256x256xf32, #tpu.memory_space<vmem>>, vector<256x256xf32>
    %164 = arith.truncf %162 : vector<256x256xf32> to vector<256x256xbf16>
    %c3_198 = arith.constant 3 : index
    %c0_199 = arith.constant 0 : index
    %c0_200 = arith.constant 0 : index
    %165 = vector.load %arg7[%c3_198, %c0_199, %c0_200] : memref<5x256x256xbf16, #tpu.memory_space<vmem>>, vector<1x256x256xbf16>
    %166 = vector.shape_cast %165 : vector<1x256x256xbf16> to vector<256x256xbf16>
    %cst_201 = arith.constant dense<0.000000e+00> : vector<256x256xf32>
    %167 = tpu.matmul %164, %166, %cst_201 {dimension_numbers = #tpu.dot_dimension_numbers<[1], [0], [0], [1], [0, 0, 1, 1], [], []>} : vector<256x256xbf16>, vector<256x256xbf16>, vector<256x256xf32> -> vector<256x256xf32>
    %168 = arith.addf %163, %167 : vector<256x256xf32>
    %c0_202 = arith.constant 0 : index
    %c0_203 = arith.constant 0 : index
    %169 = vector.load %arg14[%c0_202, %c0_203] : memref<256x256xf32, #tpu.memory_space<vmem>>, vector<256x256xf32>
    tpu.vector_store %arg14[%c0_202, %c0_203], %168 {strides = array<i32>} : memref<256x256xf32, #tpu.memory_space<vmem>>, vector<256x256xf32>,
    %170 = arith.extf %2 : vector<256x8xbf16> to vector<256x8xf32>
    %cst_204 = arith.constant dense<0.000000e+00> : vector<8xf32>
    %171 = vector.multi_reduction <add>, %170, %cst_204 [0] : vector<256x8xf32> to vector<8xf32>
    %172 = vector.shape_cast %171 : vector<8xf32> to vector<1x8xf32>
    %cst_205 = arith.constant 3.906250e-03 : f32
    %173 = vector.broadcast %cst_205 : f32 to vector<1x8xf32>
    %174 = arith.mulf %172, %173 : vector<1x8xf32>
    %175 = arith.truncf %174 : vector<1x8xf32> to vector<1x8xbf16>
    %c0_206 = arith.constant 0 : index
    %c0_207 = arith.constant 0 : index
    %176 = vector.load %arg6[%c0_206, %c0_207] : memref<8x256xbf16, #tpu.memory_space<vmem>>, vector<8x256xbf16>
    %cst_208 = arith.constant dense<0.000000e+00> : vector<1x256xf32>
    %177 = tpu.matmul %175, %176, %cst_208 {dimension_numbers = #tpu.dot_dimension_numbers<[1], [0], [0], [1], [0, 0, 1, 1], [], []>} : vector<1x8xbf16>, vector<8x256xbf16>, vector<1x256xf32> -> vector<1x256xf32>
    %c4 = arith.constant 4 : index
    %c0_209 = arith.constant 0 : index
    %178 = vector.load %arg8[%c4, %c0_209] : memref<5x256xf32, #tpu.memory_space<vmem>>, vector<1x256xf32>
    %179 = arith.mulf %177, %178 : vector<1x256xf32>
    %c4_210 = arith.constant 4 : index
    %c0_211 = arith.constant 0 : index
    %180 = vector.load %arg9[%c4_210, %c0_211] : memref<5x256xf32, #tpu.memory_space<vmem>>, vector<1x256xf32>
    %181 = arith.addf %179, %180 : vector<1x256xf32>
    %cst_212 = arith.constant 0.000000e+00 : f32
    %182 = vector.broadcast %cst_212 : f32 to vector<1x256xf32>
    %183 = arith.maximumf %181, %182 : vector<1x256xf32>
    %184 = arith.truncf %183 : vector<1x256xf32> to vector<1x256xbf16>
    %c4_213 = arith.constant 4 : index
    %c0_214 = arith.constant 0 : index
    %c0_215 = arith.constant 0 : index
    %185 = vector.load %arg7[%c4_213, %c0_214, %c0_215] : memref<5x256x256xbf16, #tpu.memory_space<vmem>>, vector<1x256x256xbf16>
    %186 = vector.shape_cast %185 : vector<1x256x256xbf16> to vector<256x256xbf16>
    %cst_216 = arith.constant dense<0.000000e+00> : vector<1x256xf32>
    %187 = tpu.matmul %184, %186, %cst_216 {dimension_numbers = #tpu.dot_dimension_numbers<[1], [0], [0], [1], [0, 0, 1, 1], [], []>} : vector<1x256xbf16>, vector<256x256xbf16>, vector<1x256xf32> -> vector<1x256xf32>
    %c0_217 = arith.constant 0 : index
    %c0_218 = arith.constant 0 : index
    %188 = vector.load %arg10[%c0_217, %c0_218] : memref<1x256xf32, #tpu.memory_space<vmem>>, vector<1x256xf32>
    %189 = arith.mulf %187, %188 : vector<1x256xf32>
    %c0_219 = arith.constant 0 : index
    %c0_220 = arith.constant 0 : index
    %190 = vector.load %arg11[%c0_219, %c0_220] : memref<1x256xf32, #tpu.memory_space<vmem>>, vector<1x256xf32>
    %191 = arith.addf %189, %190 : vector<1x256xf32>
    %c0_221 = arith.constant 0 : index
    %c0_222 = arith.constant 0 : index
    %192 = vector.load %arg14[%c0_221, %c0_222] : memref<256x256xf32, #tpu.memory_space<vmem>>, vector<256x256xf32>
    %c0_223 = arith.constant 0 : index
    %c0_224 = arith.constant 0 : index
    %193 = vector.load %arg10[%c0_223, %c0_224] : memref<1x256xf32, #tpu.memory_space<vmem>>, vector<1x256xf32>
    %194 = vector.broadcast %193 : vector<1x256xf32> to vector<256x256xf32>
    %195 = arith.mulf %192, %194 : vector<256x256xf32>
    %196 = vector.broadcast %191 : vector<1x256xf32> to vector<256x256xf32>
    %197 = arith.addf %195, %196 : vector<256x256xf32>
    %cst_225 = arith.constant 0.000000e+00 : f32
    %198 = vector.broadcast %cst_225 : f32 to vector<256x256xf32>
    %199 = arith.maximumf %197, %198 : vector<256x256xf32>
    %200 = vector.shape_cast %199 : vector<256x256xf32> to vector<1x16x16x256xf32>
    %201 = arith.truncf %200 : vector<1x16x16x256xf32> to vector<1x16x16x256xbf16>
    %c0_226 = arith.constant 0 : index
    %c0_227 = arith.constant 0 : index
    %c0_228 = arith.constant 0 : index
    %c0_229 = arith.constant 0 : index
    %202 = vector.load %arg12[%c0_226, %c0_227, %c0_228, %c0_229] : memref<1x16x16x256xbf16, #tpu.memory_space<vmem>>, vector<1x16x16x256xbf16>
    tpu.vector_store %arg12[%c0_226, %c0_227, %c0_228, %c0_229], %201 {strides = array<i32>} : memref<1x16x16x256xbf16, #tpu.memory_space<vmem>>, vector<1x16x16x256xbf16>,
    return
  }
  func.func @transform_0(%arg0: i32) -> (i32, i32, i32, i32) {
    %c0_i32 = arith.constant 0 : i32
    %c0_i32_0 = arith.constant 0 : i32
    %c0_i32_1 = arith.constant 0 : i32
    %c0_i32_2 = arith.constant 0 : i32
    return %arg0, %c0_i32, %c0_i32_0, %c0_i32_1 : i32, i32, i32, i32
  }
  func.func @transform_1(%arg0: i32) -> (i32, i32) {
    %c0_i32 = arith.constant 0 : i32
    %c0_i32_0 = arith.constant 0 : i32
    %c0_i32_1 = arith.constant 0 : i32
    return %c0_i32, %c0_i32_0 : i32, i32
  }
  func.func @transform_2(%arg0: i32) -> (i32, i32, i32, i32) {
    %c0_i32 = arith.constant 0 : i32
    %c0_i32_0 = arith.constant 0 : i32
    %c0_i32_1 = arith.constant 0 : i32
    %c0_i32_2 = arith.constant 0 : i32
    %c0_i32_3 = arith.constant 0 : i32
    return %c0_i32, %c0_i32_0, %c0_i32_1, %c0_i32_2 : i32, i32, i32, i32
  }
  func.func @transform_3(%arg0: i32) -> (i32, i32, i32, i32) {
    %c0_i32 = arith.constant 0 : i32
    %c0_i32_0 = arith.constant 0 : i32
    %c0_i32_1 = arith.constant 0 : i32
    %c0_i32_2 = arith.constant 0 : i32
    %c0_i32_3 = arith.constant 0 : i32
    return %c0_i32, %c0_i32_0, %c0_i32_1, %c0_i32_2 : i32, i32, i32, i32
  }
  func.func @transform_4(%arg0: i32) -> (i32, i32, i32, i32) {
    %c0_i32 = arith.constant 0 : i32
    %c0_i32_0 = arith.constant 0 : i32
    %c0_i32_1 = arith.constant 0 : i32
    %c0_i32_2 = arith.constant 0 : i32
    %c0_i32_3 = arith.constant 0 : i32
    return %c0_i32, %c0_i32_0, %c0_i32_1, %c0_i32_2 : i32, i32, i32, i32
  }
  func.func @transform_5(%arg0: i32) -> (i32, i32) {
    %c0_i32 = arith.constant 0 : i32
    %c0_i32_0 = arith.constant 0 : i32
    %c0_i32_1 = arith.constant 0 : i32
    return %c0_i32, %c0_i32_0 : i32, i32
  }
  func.func @transform_6(%arg0: i32) -> (i32, i32, i32) {
    %c0_i32 = arith.constant 0 : i32
    %c0_i32_0 = arith.constant 0 : i32
    %c0_i32_1 = arith.constant 0 : i32
    %c0_i32_2 = arith.constant 0 : i32
    return %c0_i32, %c0_i32_0, %c0_i32_1 : i32, i32, i32
  }
  func.func @transform_7(%arg0: i32) -> (i32, i32) {
    %c0_i32 = arith.constant 0 : i32
    %c0_i32_0 = arith.constant 0 : i32
    %c0_i32_1 = arith.constant 0 : i32
    return %c0_i32, %c0_i32_0 : i32, i32
  }
  func.func @transform_8(%arg0: i32) -> (i32, i32) {
    %c0_i32 = arith.constant 0 : i32
    %c0_i32_0 = arith.constant 0 : i32
    %c0_i32_1 = arith.constant 0 : i32
    return %c0_i32, %c0_i32_0 : i32, i32
  }
  func.func @transform_9(%arg0: i32) -> (i32, i32) {
    %c0_i32 = arith.constant 0 : i32
    %c0_i32_0 = arith.constant 0 : i32
    %c0_i32_1 = arith.constant 0 : i32
    return %c0_i32, %c0_i32_0 : i32, i32
  }
  func.func @transform_10(%arg0: i32) -> (i32, i32) {
    %c0_i32 = arith.constant 0 : i32
    %c0_i32_0 = arith.constant 0 : i32
    %c0_i32_1 = arith.constant 0 : i32
    return %c0_i32, %c0_i32_0 : i32, i32
  }
  func.func @transform_11(%arg0: i32) -> (i32, i32, i32, i32) {
    %c0_i32 = arith.constant 0 : i32
    %c0_i32_0 = arith.constant 0 : i32
    %c0_i32_1 = arith.constant 0 : i32
    %c0_i32_2 = arith.constant 0 : i32
    return %arg0, %c0_i32, %c0_i32_0, %c0_i32_1 : i32, i32, i32, i32
  }
}

</mosaic_0001>

<llo_original>
// kernel: tpu_custom_call.1
$region0: #{tpu_custom_call.1}
  #allocation0 [shape = 'u32[]', space=smem, size = 0x4, offset = 0x4, fixed_abs, tag = 'smem constant byte address 0x4 - core index']
  #allocation1 [shape = 'u32[72,128]{1,0:T(1,128)}', space=vmem, size = 0x9000, scoped, tag = 'internal scratch']
  #allocation2 [shape = 'f32[16,16,256]{2,1,0:T(8,128)}', space=vmem, size = 0x40000, scoped, tag = 'scratch operand']
  #allocation3 [shape = 'f32[256,256]{1,0:T(8,128)}', space=vmem, size = 0x40000, scoped, tag = 'scratch operand']
  %s0 = inlined_call_operand.vmem [shape: bf16[2,16,16,8], index: 0, kind: input, shape index: {}]
  %s1 = inlined_call_operand.vmem [shape: bf16[8,256], index: 1, kind: input, shape index: {}]
  %s2 = inlined_call_operand.vmem [shape: bf16[3,3,8,256], index: 2, kind: input, shape index: {}]
  %s3 = inlined_call_operand.vmem [shape: bf16[3,3,8,256], index: 3, kind: input, shape index: {}]
  %s4 = inlined_call_operand.vmem [shape: bf16[3,3,8,256], index: 4, kind: input, shape index: {}]
  %s5 = inlined_call_operand.vmem [shape: bf16[8,256], index: 5, kind: input, shape index: {}]
  %s6 = inlined_call_operand.hbm [shape: bf16[5,256,256], index: 6, kind: input, shape index: {}]
  %s7 = inlined_call_operand.vmem [shape: f32[5,256], index: 7, kind: input, shape index: {}]
  %s8 = inlined_call_operand.vmem [shape: f32[5,256], index: 8, kind: input, shape index: {}]
  %s9 = inlined_call_operand.vmem [shape: f32[1,256], index: 9, kind: input, shape index: {}]
  %s10 = inlined_call_operand.vmem [shape: f32[1,256], index: 10, kind: input, shape index: {}]
  %s11 = inlined_call_operand.hbm [shape: bf16[2,16,16,256], index: 11, kind: output, shape index: {}]
  %s12 = sld [smem:[#allocation0]]
  $region81: #{tpu_custom_call.1} parent=0
    _
  %s14 = ssub.s32 1, %s12
  %s15 = scalar_select 0, %s14, %s12
  $region1: #{tpu_custom_call.1} parent=0
    #allocation4 [shape = 'u8[655360]{0}', space=vmem, size = 0xa0000, scoped, tag = 'input window, operand 6, single buffered']
    #allocation5 [shape = 's32[2]{0}', space=sflag, size = 0x8, scoped, tag = 'scoped memory for tpu_custom_call.1']
    #allocation6 [shape = 's32[2]{0}', space=sflag, size = 0x8, scoped, tag = 'scoped memory for tpu_custom_call.1']
    #allocation7 [shape = 'u8[262144]{0}', space=vmem, size = 0x40000, scoped, tag = 'output window, operand 0']
    %16 = vsyncpa [#allocation5], 0
    %17 = vsyncpa [#allocation6], 0
    %s18 = scalar_lea.sflag [#allocation6], 1
    %19 = vsyncpa %s18, 0
    loop: start=0, step=1, limit=4
    $region2: #{tpu_custom_call.1} parent=1 // loop_pre_header
      _
    $region3: #{tpu_custom_call.1} parent=1 // loop_header
      %s21 = sphi 0, %s25
      %p22 = scmp.ge.s32.totalorder %s21, 4
      %s31 = sphi 0, %s33
      %s34 = sphi 0, %s31
      %s35 = sphi 0, %s34
      %s51 = sphi 0, %s35
      %s55 = sphi 0, %s55
      %s57 = sphi 0, %s55
      %s58 = sphi 0, %s57
      %s72 = sphi 0, %s58
      %s76 = sphi 0, %s76
      %s78 = sphi 0, %s76
      %s79 = sphi 0, %s78
      %s93 = sphi 0, %s79
      %s97 = sphi 0, %s97
      %s99 = sphi 0, %s97
      %s100 = sphi 0, %s99
      %s114 = sphi 0, %s100
      %s118 = sphi 0, %s118
      %s120 = sphi 0, %s118
      %s121 = sphi 0, %s120
      %s135 = sphi 0, %s121
      %s139 = sphi 0, %s139
      %s141 = sphi 0, %s139
      %s142 = sphi 0, %s141
      %s156 = sphi 0, %s142
      %s160 = sphi 0, %s160
      %s162 = sphi 0, %s160
      %s163 = sphi 0, %s162
      %s177 = sphi 0, %s163
      %s181 = sphi 0, %s181
      %s183 = sphi 0, %s181
      %s184 = sphi 0, %s183
      %s198 = sphi 0, %s184
      %s202 = sphi 0, %s202
      %s204 = sphi 0, %s202
      %s205 = sphi 0, %s204
      %s219 = sphi 0, %s205
      %s223 = sphi 0, %s223
      %s225 = sphi 0, %s223
      %s226 = sphi 0, %s225
      %s240 = sphi 0, %s226
      %s244 = sphi 0, %s244
      %s246 = sphi 0, %s244
      %s247 = sphi 0, %s246
      %s261 = sphi 0, %s247
      %s267 = sphi 0, %s269
      %s270 = sphi 0, %s267
      %s271 = sphi 0, %s270
      %s287 = sphi 0, %s271
    $region4: #{tpu_custom_call.1} parent=1 // loop_header_branch
      %24 = sbr.rel (%p22) target = $region8
    $region5: #{tpu_custom_call.1} parent=1 // loop_body
      %s26 = ssub.s32 %s21, 1
      %s27 = ssub.s32 %s21, 2
      %s28 = sadd.s32 %s21, 1
      %s29 = ssub.s32 %s21, %s28
      %p30 = scmp.eq.s32.totalorder %s29, 0
      %s32 = sadd.s32 %s31, 1
      %s33 = scalar_select %p30, %s31, %s32
      %p36 = pneg %p30
      %p37 = scmp.eq.s32.totalorder %s21, 1
      %p38 = por %p36, %p37
      %p39 = scmp.ne.s32.totalorder %s31, %s34
      %p40 = scmp.eq.s32.totalorder %s21, 0
      %p41 = por %p39, %p40
      %p42 = scmp.ne.s32.totalorder %s31, %s34
      %p43 = scmp.eq.s32.totalorder %s26, 1
      %p44 = por %p42, %p43
      %p45 = scmp.ne.s32.totalorder %s34, %s35
      %p46 = scmp.eq.s32.totalorder %s26, 0
      %p47 = por %p45, %p46
      %p48 = scmp.ne.s32.totalorder %s34, %s35
      %p49 = scmp.eq.s32.totalorder %s27, 1
      %p50 = por %p48, %p49
      %p52 = scmp.ne.s32.totalorder %s35, %s51
      %p53 = scmp.eq.s32.totalorder %s27, 0
      %p54 = por %p52, %p53
      %s56 = sadd.s32 %s55, 1
      %p59 = scmp.eq.s32.totalorder %s21, 1
      %p60 = scmp.ne.s32.totalorder %s55, %s57
      %p61 = scmp.eq.s32.totalorder %s21, 0
      %p62 = por %p60, %p61
      %p63 = scmp.ne.s32.totalorder %s55, %s57
      %p64 = scmp.eq.s32.totalorder %s26, 1
      %p65 = por %p63, %p64
      %p66 = scmp.ne.s32.totalorder %s57, %s58
      %p67 = scmp.eq.s32.totalorder %s26, 0
      %p68 = por %p66, %p67
      %p69 = scmp.ne.s32.totalorder %s57, %s58
      %p70 = scmp.eq.s32.totalorder %s27, 1
      %p71 = por %p69, %p70
      %p73 = scmp.ne.s32.totalorder %s58, %s72
      %p74 = scmp.eq.s32.totalorder %s27, 0
      %p75 = por %p73, %p74
      %s77 = sadd.s32 %s76, 1
      %p80 = scmp.eq.s32.totalorder %s21, 1
      %p81 = scmp.ne.s32.totalorder %s76, %s78
      %p82 = scmp.eq.s32.totalorder %s21, 0
      %p83 = por %p81, %p82
      %p84 = scmp.ne.s32.totalorder %s76, %s78
      %p85 = scmp.eq.s32.totalorder %s26, 1
      %p86 = por %p84, %p85
      %p87 = scmp.ne.s32.totalorder %s78, %s79
      %p88 = scmp.eq.s32.totalorder %s26, 0
      %p89 = por %p87, %p88
      %p90 = scmp.ne.s32.totalorder %s78, %s79
      %p91 = scmp.eq.s32.totalorder %s27, 1
      %p92 = por %p90, %p91
      %p94 = scmp.ne.s32.totalorder %s79, %s93
      %p95 = scmp.eq.s32.totalorder %s27, 0
      %p96 = por %p94, %p95
      %s98 = sadd.s32 %s97, 1
      %p101 = scmp.eq.s32.totalorder %s21, 1
      %p102 = scmp.ne.s32.totalorder %s97, %s99
      %p103 = scmp.eq.s32.totalorder %s21, 0
      %p104 = por %p102, %p103
      %p105 = scmp.ne.s32.totalorder %s97, %s99
      %p106 = scmp.eq.s32.totalorder %s26, 1
      %p107 = por %p105, %p106
      %p108 = scmp.ne.s32.totalorder %s99, %s100
      %p109 = scmp.eq.s32.totalorder %s26, 0
      %p110 = por %p108, %p109
      %p111 = scmp.ne.s32.totalorder %s99, %s100
      %p112 = scmp.eq.s32.totalorder %s27, 1
      %p113 = por %p111, %p112
      %p115 = scmp.ne.s32.totalorder %s100, %s114
      %p116 = scmp.eq.s32.totalorder %s27, 0
      %p117 = por %p115, %p116
      %s119 = sadd.s32 %s118, 1
      %p122 = scmp.eq.s32.totalorder %s21, 1
      %p123 = scmp.ne.s32.totalorder %s118, %s120
      %p124 = scmp.eq.s32.totalorder %s21, 0
      %p125 = por %p123, %p124
      %p126 = scmp.ne.s32.totalorder %s118, %s120
      %p127 = scmp.eq.s32.totalorder %s26, 1
      %p128 = por %p126, %p127
      %p129 = scmp.ne.s32.totalorder %s120, %s121
      %p130 = scmp.eq.s32.totalorder %s26, 0
      %p131 = por %p129, %p130
      %p132 = scmp.ne.s32.totalorder %s120, %s121
      %p133 = scmp.eq.s32.totalorder %s27, 1
      %p134 = por %p132, %p133
      %p136 = scmp.ne.s32.totalorder %s121, %s135
      %p137 = scmp.eq.s32.totalorder %s27, 0
      %p138 = por %p136, %p137
      %s140 = sadd.s32 %s139, 1
      %p143 = scmp.eq.s32.totalorder %s21, 1
      %p144 = scmp.ne.s32.totalorder %s139, %s141
      %p145 = scmp.eq.s32.totalorder %s21, 0
      %p146 = por %p144, %p145
      %p147 = scmp.ne.s32.totalorder %s139, %s141
      %p148 = scmp.eq.s32.totalorder %s26, 1
      %p149 = por %p147, %p148
      %p150 = scmp.ne.s32.totalorder %s141, %s142
      %p151 = scmp.eq.s32.totalorder %s26, 0
      %p152 = por %p150, %p151
      %p153 = scmp.ne.s32.totalorder %s141, %s142
      %p154 = scmp.eq.s32.totalorder %s27, 1
      %p155 = por %p153, %p154
      %p157 = scmp.ne.s32.totalorder %s142, %s156
      %p158 = scmp.eq.s32.totalorder %s27, 0
      %p159 = por %p157, %p158
      %s161 = sadd.s32 %s160, 1
      %p164 = scmp.eq.s32.totalorder %s21, 1
      %p165 = scmp.ne.s32.totalorder %s160, %s162
      %p166 = scmp.eq.s32.totalorder %s21, 0
      %p167 = por %p165, %p166
      %p168 = scmp.ne.s32.totalorder %s160, %s162
      %p169 = scmp.eq.s32.totalorder %s26, 1
      %p170 = por %p168, %p169
      %p171 = scmp.ne.s32.totalorder %s162, %s163
      %p172 = scmp.eq.s32.totalorder %s26, 0
      %p173 = por %p171, %p172
      %p174 = scmp.ne.s32.totalorder %s162, %s163
      %p175 = scmp.eq.s32.totalorder %s27, 1
      %p176 = por %p174, %p175
      %p178 = scmp.ne.s32.totalorder %s163, %s177
      %p179 = scmp.eq.s32.totalorder %s27, 0
      %p180 = por %p178, %p179
      %s182 = sadd.s32 %s181, 1
      %p185 = scmp.eq.s32.totalorder %s21, 1
      %p186 = scmp.ne.s32.totalorder %s181, %s183
      %p187 = scmp.eq.s32.totalorder %s21, 0
      %p188 = por %p186, %p187
      %p189 = scmp.ne.s32.totalorder %s181, %s183
      %p190 = scmp.eq.s32.totalorder %s26, 1
      %p191 = por %p189, %p190
      %p192 = scmp.ne.s32.totalorder %s183, %s184
      %p193 = scmp.eq.s32.totalorder %s26, 0
      %p194 = por %p192, %p193
      %p195 = scmp.ne.s32.totalorder %s183, %s184
      %p196 = scmp.eq.s32.totalorder %s27, 1
      %p197 = por %p195, %p196
      %p199 = scmp.ne.s32.totalorder %s184, %s198
      %p200 = scmp.eq.s32.totalorder %s27, 0
      %p201 = por %p199, %p200
      %s203 = sadd.s32 %s202, 1
      %p206 = scmp.eq.s32.totalorder %s21, 1
      %p207 = scmp.ne.s32.totalorder %s202, %s204
      %p208 = scmp.eq.s32.totalorder %s21, 0
      %p209 = por %p207, %p208
      %p210 = scmp.ne.s32.totalorder %s202, %s204
      %p211 = scmp.eq.s32.totalorder %s26, 1
      %p212 = por %p210, %p211
      %p213 = scmp.ne.s32.totalorder %s204, %s205
      %p214 = scmp.eq.s32.totalorder %s26, 0
      %p215 = por %p213, %p214
      %p216 = scmp.ne.s32.totalorder %s204, %s205
      %p217 = scmp.eq.s32.totalorder %s27, 1
      %p218 = por %p216, %p217
      %p220 = scmp.ne.s32.totalorder %s205, %s219
      %p221 = scmp.eq.s32.totalorder %s27, 0
      %p222 = por %p220, %p221
      %s224 = sadd.s32 %s223, 1
      %p227 = scmp.eq.s32.totalorder %s21, 1
      %p228 = scmp.ne.s32.totalorder %s223, %s225
      %p229 = scmp.eq.s32.totalorder %s21, 0
      %p230 = por %p228, %p229
      %p231 = scmp.ne.s32.totalorder %s223, %s225
      %p232 = scmp.eq.s32.totalorder %s26, 1
      %p233 = por %p231, %p232
      %p234 = scmp.ne.s32.totalorder %s225, %s226
      %p235 = scmp.eq.s32.totalorder %s26, 0
      %p236 = por %p234, %p235
      %p237 = scmp.ne.s32.totalorder %s225, %s226
      %p238 = scmp.eq.s32.totalorder %s27, 1
      %p239 = por %p237, %p238
      %p241 = scmp.ne.s32.totalorder %s226, %s240
      %p242 = scmp.eq.s32.totalorder %s27, 0
      %p243 = por %p241, %p242
      %s245 = sadd.s32 %s244, 1
      %p248 = scmp.eq.s32.totalorder %s21, 1
      %p249 = scmp.ne.s32.totalorder %s244, %s246
      %p250 = scmp.eq.s32.totalorder %s21, 0
      %p251 = por %p249, %p250
      %p252 = scmp.ne.s32.totalorder %s244, %s246
      %p253 = scmp.eq.s32.totalorder %s26, 1
      %p254 = por %p252, %p253
      %p255 = scmp.ne.s32.totalorder %s246, %s247
      %p256 = scmp.eq.s32.totalorder %s26, 0
      %p257 = por %p255, %p256
      %p258 = scmp.ne.s32.totalorder %s246, %s247
      %p259 = scmp.eq.s32.totalorder %s27, 1
      %p260 = por %p258, %p259
      %p262 = scmp.ne.s32.totalorder %s247, %s261
      %p263 = scmp.eq.s32.totalorder %s27, 0
      %p264 = por %p262, %p263
      %s265 = ssub.s32 %s21, %s28
      %p266 = scmp.eq.s32.totalorder %s265, 0
      %s268 = sadd.s32 %s267, 1
      %s269 = scalar_select %p266, %s267, %s268
      %p272 = pneg %p266
      %p273 = scmp.eq.s32.totalorder %s21, 1
      %p274 = por %p272, %p273
      %p275 = scmp.ne.s32.totalorder %s267, %s270
      %p276 = scmp.eq.s32.totalorder %s21, 0
      %p277 = por %p275, %p276
      %p278 = scmp.ne.s32.totalorder %s267, %s270
      %p279 = scmp.eq.s32.totalorder %s26, 1
      %p280 = por %p278, %p279
      %p281 = scmp.ne.s32.totalorder %s270, %s271
      %p282 = scmp.eq.s32.totalorder %s26, 0
      %p283 = por %p281, %p282
      %p284 = scmp.ne.s32.totalorder %s270, %s271
      %p285 = scmp.eq.s32.totalorder %s27, 1
      %p286 = por %p284, %p285
      %p288 = scmp.ne.s32.totalorder %s271, %s287
      %p289 = scmp.eq.s32.totalorder %s27, 0
      %p290 = por %p288, %p289
      %p291 = scmp.le.s32.totalorder 1, %s21
      %p292 = scmp.lt.s32.totalorder %s21, 3
      %p293 = pnand %p291, %p292
      %p294 = pneg %p293
      // Predicated region
      $region9: #{tpu_custom_call.1} parent=5 // pred_check
        _
      $region10: #{tpu_custom_call.1} parent=5 // pred_check_branch
        %296 = sbr.rel (%p293) target = $region12
      $region11: #{tpu_custom_call.1} parent=5 // pred_region
        %s297 = ssub.s32 %s21, 1
        // Predicated region
        $region13: #{tpu_custom_call.1} parent=11 // pred_check
          %p298 = pneg %p68
        $region14: #{tpu_custom_call.1} parent=11 // pred_check_branch
          %300 = sbr.rel (%p298) target = $region16
        $region15: #{tpu_custom_call.1} parent=11 // pred_region
          _
        $region16: #{tpu_custom_call.1} parent=11 // pred_fallthru
          _
        // Predicated region
        $region17: #{tpu_custom_call.1} parent=11 // pred_check
          %p301 = pneg %p89
        $region18: #{tpu_custom_call.1} parent=11 // pred_check_branch
          %303 = sbr.rel (%p301) target = $region20
        $region19: #{tpu_custom_call.1} parent=11 // pred_region
          _
        $region20: #{tpu_custom_call.1} parent=11 // pred_fallthru
          _
        // Predicated region
        $region21: #{tpu_custom_call.1} parent=11 // pred_check
          %p304 = pneg %p110
        $region22: #{tpu_custom_call.1} parent=11 // pred_check_branch
          %306 = sbr.rel (%p304) target = $region24
        $region23: #{tpu_custom_call.1} parent=11 // pred_region
          _
        $region24: #{tpu_custom_call.1} parent=11 // pred_fallthru
          _
        // Predicated region
        $region25: #{tpu_custom_call.1} parent=11 // pred_check
          %p307 = pneg %p131
        $region26: #{tpu_custom_call.1} parent=11 // pred_check_branch
          %309 = sbr.rel (%p307) target = $region28
        $region27: #{tpu_custom_call.1} parent=11 // pred_region
          _
        $region28: #{tpu_custom_call.1} parent=11 // pred_fallthru
          _
        // Predicated region
        $region29: #{tpu_custom_call.1} parent=11 // pred_check
          %p310 = pneg %p152
        $region30: #{tpu_custom_call.1} parent=11 // pred_check_branch
          %312 = sbr.rel (%p310) target = $region32
        $region31: #{tpu_custom_call.1} parent=11 // pred_region
          _
        $region32: #{tpu_custom_call.1} parent=11 // pred_fallthru
          _
        // Predicated region
        $region33: #{tpu_custom_call.1} parent=11 // pred_check
          %p313 = pneg %p173
        $region34: #{tpu_custom_call.1} parent=11 // pred_check_branch
          %315 = sbr.rel (%p313) target = $region36
        $region35: #{tpu_custom_call.1} parent=11 // pred_region
          %317 = vsyncadd [#allocation5], 0
          %s318 = sshll.u32 %s6, 4
          %s319 = int_to_ptr.hbm [resolvable:$true] %s318
          %s320 = sshll.u32 [#allocation4], 4
          %s321 = int_to_ptr.vmem [resolvable:$true] %s320
          %326 = dma.hbm_to_vmem [thread:$0]  %s319, 20480, %s321, [#allocation5], 128, 128, 8
        $region36: #{tpu_custom_call.1} parent=11 // pred_fallthru
          _
        // Predicated region
        $region37: #{tpu_custom_call.1} parent=11 // pred_check
          %p327 = pneg %p194
        $region38: #{tpu_custom_call.1} parent=11 // pred_check_branch
          %329 = sbr.rel (%p327) target = $region40
        $region39: #{tpu_custom_call.1} parent=11 // pred_region
          _
        $region40: #{tpu_custom_call.1} parent=11 // pred_fallthru
          _
        // Predicated region
        $region41: #{tpu_custom_call.1} parent=11 // pred_check
          %p330 = pneg %p215
        $region42: #{tpu_custom_call.1} parent=11 // pred_check_branch
          %332 = sbr.rel (%p330) target = $region44
        $region43: #{tpu_custom_call.1} parent=11 // pred_region
          _
        $region44: #{tpu_custom_call.1} parent=11 // pred_fallthru
          _
        // Predicated region
        $region45: #{tpu_custom_call.1} parent=11 // pred_check
          %p333 = pneg %p236
        $region46: #{tpu_custom_call.1} parent=11 // pred_check_branch
          %335 = sbr.rel (%p333) target = $region48
        $region47: #{tpu_custom_call.1} parent=11 // pred_region
          _
        $region48: #{tpu_custom_call.1} parent=11 // pred_fallthru
          _
        // Predicated region
        $region49: #{tpu_custom_call.1} parent=11 // pred_check
          %p336 = pneg %p257
        $region50: #{tpu_custom_call.1} parent=11 // pred_check_branch
          %338 = sbr.rel (%p336) target = $region52
        $region51: #{tpu_custom_call.1} parent=11 // pred_region
          _
        $region52: #{tpu_custom_call.1} parent=11 // pred_fallthru
          _
      $region12: #{tpu_custom_call.1} parent=5 // pred_fallthru
        _
      %p339 = scmp.lt.s32.totalorder %s21, 2
      // Predicated region
      $region53: #{tpu_custom_call.1} parent=5 // pred_check
        %p340 = pneg %p339
      $region54: #{tpu_custom_call.1} parent=5 // pred_check_branch
        %342 = sbr.rel (%p340) target = $region56
      $region55: #{tpu_custom_call.1} parent=5 // pred_region
        // Predicated region
        $region57: #{tpu_custom_call.1} parent=55 // pred_check
          %p343 = pneg %p41
        $region58: #{tpu_custom_call.1} parent=55 // pred_check_branch
          %345 = sbr.rel (%p343) target = $region60
        $region59: #{tpu_custom_call.1} parent=55 // pred_region
          %p346 = scmp.lt.s32.totalorder %s21, 1
          %s347 = scalar_select %p346, %s21, 1
          %s348 = smul.addr %s347, 32
          %s349 = smul.addr %s348, 4
          %s350 = scalar_lea.vmem %s0, %s349
        $region60: #{tpu_custom_call.1} parent=55 // pred_fallthru
          _
      $region56: #{tpu_custom_call.1} parent=5 // pred_fallthru
        _
      %p351 = scmp.le.s32.totalorder 1, %s21
      %p352 = scmp.lt.s32.totalorder %s21, 3
      %p353 = pnand %p351, %p352
      %p354 = pneg %p353
      // Predicated region
      $region61: #{tpu_custom_call.1} parent=5 // pred_check
        _
      $region62: #{tpu_custom_call.1} parent=5 // pred_check_branch
        %356 = sbr.rel (%p353) target = $region64
      $region63: #{tpu_custom_call.1} parent=5 // pred_region
        %s357 = ssub.s32 %s21, 1
        // Predicated region
        $region65: #{tpu_custom_call.1} parent=63 // pred_check
          %p358 = pneg %p173
        $region66: #{tpu_custom_call.1} parent=63 // pred_check_branch
          %360 = sbr.rel (%p358) target = $region68
        $region67: #{tpu_custom_call.1} parent=63 // pred_region
          %362 = dma.done [#allocation5], 20480
        $region68: #{tpu_custom_call.1} parent=63 // pred_fallthru
          _
        %p363 = scmp.lt.s32.totalorder %s26, 1
        %s364 = scalar_select %p363, %s26, 1
        %s365 = smul.addr %s364, 32
        %s366 = smul.addr %s365, 4
        %s367 = scalar_lea.vmem %s0, %s366
        %p368 = pneg %p47
        %p369 = pneg %p44
        %p370 = pneg %p68
        %p371 = pneg %p65
        %p372 = pneg %p89
        %p373 = pneg %p86
        %p374 = pneg %p110
        %p375 = pneg %p107
        %p376 = pneg %p131
        %p377 = pneg %p128
        %p378 = pneg %p152
        %p379 = pneg %p149
        %p380 = pneg %p173
        %p381 = pneg %p170
        %p382 = pneg %p194
        %p383 = pneg %p191
        %p384 = pneg %p215
        %p385 = pneg %p212
        %p386 = pneg %p236
        %p387 = pneg %p233
        %p388 = pneg %p257
        %p389 = pneg %p254
        %p390 = pneg %p283
        %p391 = pneg %p280
        %s392 = sand.u32 %s270, 1
        %s393 = scalar_lea.sflag [#allocation6], %s392
        %s394 = sand.u32 %s270, 1
        %s395 = smul.addr %s394, 256
        %s396 = scalar_lea.vmem [#allocation7], %s395
        %p397 = scmp.lt.s32.totalorder %s26, 1
        %s398 = scalar_select %p397, %s26, 1
        %s399 = smul.addr %s398, 32
        %s400 = smul.addr %s399, 4
        %s401 = scalar_lea.vmem %s0, %s400
        %v403 = vld [vmem:[%s401] sm:$0xf]
        %v404 = vld [vmem:[%s401 + $0x4] sm:$0xf]
        %v405 = vld [vmem:[%s401 + $0x8] sm:$0xf]
        %v406 = vld [vmem:[%s401 + $0xc] sm:$0xf]
        %v407 = vld [vmem:[%s401 + $0x10] sm:$0xf]
        %v408 = vld [vmem:[%s401 + $0x14] sm:$0xf]
        %v409 = vld [vmem:[%s401 + $0x18] sm:$0xf]
        %v410 = vld [vmem:[%s401 + $0x1c] sm:$0xf]
        %v411 = vld [vmem:[%s401 + $0x20] sm:$0xf]
        %v412 = vld [vmem:[%s401 + $0x24] sm:$0xf]
        %v413 = vld [vmem:[%s401 + $0x28] sm:$0xf]
        %v414 = vld [vmem:[%s401 + $0x2c] sm:$0xf]
        %v415 = vld [vmem:[%s401 + $0x30] sm:$0xf]
        %v416 = vld [vmem:[%s401 + $0x34] sm:$0xf]
        %v417 = vld [vmem:[%s401 + $0x38] sm:$0xf]
        %v418 = vld [vmem:[%s401 + $0x3c] sm:$0xf]
        %v419 = vld [vmem:[%s401 + $0x40] sm:$0xf]
        %v420 = vld [vmem:[%s401 + $0x44] sm:$0xf]
        %v421 = vld [vmem:[%s401 + $0x48] sm:$0xf]
        %v422 = vld [vmem:[%s401 + $0x4c] sm:$0xf]
        %v423 = vld [vmem:[%s401 + $0x50] sm:$0xf]
        %v424 = vld [vmem:[%s401 + $0x54] sm:$0xf]
        %v425 = vld [vmem:[%s401 + $0x58] sm:$0xf]
        %v426 = vld [vmem:[%s401 + $0x5c] sm:$0xf]
        %v427 = vld [vmem:[%s401 + $0x60] sm:$0xf]
        %v428 = vld [vmem:[%s401 + $0x64] sm:$0xf]
        %v429 = vld [vmem:[%s401 + $0x68] sm:$0xf]
        %v430 = vld [vmem:[%s401 + $0x6c] sm:$0xf]
        %v431 = vld [vmem:[%s401 + $0x70] sm:$0xf]
        %v432 = vld [vmem:[%s401 + $0x74] sm:$0xf]
        %v433 = vld [vmem:[%s401 + $0x78] sm:$0xf]
        %v434 = vld [vmem:[%s401 + $0x7c] sm:$0xf]
        %v435 = vld [vmem:[%s1] sm:$0xff]
        %v468 = vunpack.c.l.b16 %v403
        %v469 = vunpack.c.l.b16 %v404
        %v470 = vunpack.c.l.b16 %v405
        %v471 = vunpack.c.l.b16 %v406
        %v472 = vunpack.c.l.b16 %v407
        %v473 = vunpack.c.l.b16 %v408
        %v474 = vunpack.c.l.b16 %v409
        %v475 = vunpack.c.l.b16 %v410
        %v476 = vunpack.c.l.b16 %v411
        %v477 = vunpack.c.l.b16 %v412
        %v478 = vunpack.c.l.b16 %v413
        %v479 = vunpack.c.l.b16 %v414
        %v480 = vunpack.c.l.b16 %v415
        %v481 = vunpack.c.l.b16 %v416
        %v482 = vunpack.c.l.b16 %v417
        %v483 = vunpack.c.l.b16 %v418
        %v484 = vunpack.c.l.b16 %v419
        %v485 = vunpack.c.l.b16 %v420
        %v486 = vunpack.c.l.b16 %v421
        %v487 = vunpack.c.l.b16 %v422
        %v488 = vunpack.c.l.b16 %v423
        %v489 = vunpack.c.l.b16 %v424
        %v490 = vunpack.c.l.b16 %v425
        %v491 = vunpack.c.l.b16 %v426
        %v492 = vunpack.c.l.b16 %v427
        %v493 = vunpack.c.l.b16 %v428
        %v494 = vunpack.c.l.b16 %v429
        %v495 = vunpack.c.l.b16 %v430
        %v496 = vunpack.c.l.b16 %v431
        %v497 = vunpack.c.l.b16 %v432
        %v498 = vunpack.c.l.b16 %v433
        %v499 = vunpack.c.l.b16 %v434
        %v500 = vpack.c.b16 %v469, %v468
        %v501 = vpack.c.b16 %v471, %v470
        %v502 = vpack.c.b16 %v473, %v472
        %v503 = vpack.c.b16 %v475, %v474
        %v504 = vpack.c.b16 %v477, %v476
        %v505 = vpack.c.b16 %v479, %v478
        %v506 = vpack.c.b16 %v481, %v480
        %v507 = vpack.c.b16 %v483, %v482
        %v508 = vpack.c.b16 %v485, %v484
        %v509 = vpack.c.b16 %v487, %v486
        %v510 = vpack.c.b16 %v489, %v488
        %v511 = vpack.c.b16 %v491, %v490
        %v512 = vpack.c.b16 %v493, %v492
        %v513 = vpack.c.b16 %v495, %v494
        %v514 = vpack.c.b16 %v497, %v496
        %v515 = vpack.c.b16 %v499, %v498
        %v517 = vunpack.c.l.b16 %v435
        %v518 = vunpack.c.h.b16 %v435
        %v519 = vpack.c.b16 %v517, %v517
        %v520 = vpack.c.b16 %v518, %v518
        %vm521 = vcmask 64512
        %v523 = vsel %vm521, %v500, 0
        %v526 = vsel %vm521, %v501, 0
        %v529 = vsel %vm521, %v502, 0
        %v532 = vsel %vm521, %v503, 0
        %v535 = vsel %vm521, %v504, 0
        %v538 = vsel %vm521, %v505, 0
        %v541 = vsel %vm521, %v506, 0
        %v544 = vsel %vm521, %v507, 0
        %v547 = vsel %vm521, %v508, 0
        %v550 = vsel %vm521, %v509, 0
        %v553 = vsel %vm521, %v510, 0
        %v556 = vsel %vm521, %v511, 0
        %v559 = vsel %vm521, %v512, 0
        %v562 = vsel %vm521, %v513, 0
        %v565 = vsel %vm521, %v514, 0
        %v568 = vsel %vm521, %v515, 0
        %vm570 = vcmask 1043456
        %v572 = vsel %vm570, %v519, 0
        %v575 = vsel %vm570, %v520, 0
        %577 = vmatpush.bf16.msra.mxu0 0
        %578 = vmatpush.bf16.msra.mxu0 0
        %579 = vmatpush.bf16.msra.mxu0 0
        %580 = vmatpush.bf16.msra.mxu0 0
        %581 = vmatpush.bf16.msra.mxu0 0
        %582 = vmatpush.bf16.msra.mxu0 0
        %583 = vmatpush.bf16.msra.mxu0 0
        %584 = vmatpush.bf16.msra.mxu0 %v572
        %585 = vmatmul.bf16.gmra.mxu0 %v523
        %v586 = vpop.f32.mrf.mxu0
        %v587 = vadd.f32 0.0, %v586
        %v588 = vpop.f32.mrf.mxu0
        %v589 = vadd.f32 0.0, %v588
        %590 = vmatmul.bf16.gmra.mxu0 %v526
        %v591 = vpop.f32.mrf.mxu0
        %v592 = vadd.f32 0.0, %v591
        %v593 = vpop.f32.mrf.mxu0
        %v594 = vadd.f32 0.0, %v593
        %595 = vmatmul.bf16.gmra.mxu0 %v529
        %v596 = vpop.f32.mrf.mxu0
        %v597 = vadd.f32 0.0, %v596
        %v598 = vpop.f32.mrf.mxu0
        %v599 = vadd.f32 0.0, %v598
        %600 = vmatmul.bf16.gmra.mxu0 %v532
        %v601 = vpop.f32.mrf.mxu0
        %v602 = vadd.f32 0.0, %v601
        %v603 = vpop.f32.mrf.mxu0
        %v604 = vadd.f32 0.0, %v603
        %605 = vmatmul.bf16.gmra.mxu0 %v535
        %v606 = vpop.f32.mrf.mxu0
        %v607 = vadd.f32 0.0, %v606
        %v608 = vpop.f32.mrf.mxu0
        %v609 = vadd.f32 0.0, %v608
        %610 = vmatmul.bf16.gmra.mxu0 %v538
        %v611 = vpop.f32.mrf.mxu0
        %v612 = vadd.f32 0.0, %v611
        %v613 = vpop.f32.mrf.mxu0
        %v614 = vadd.f32 0.0, %v613
        %615 = vmatmul.bf16.gmra.mxu0 %v541
        %v616 = vpop.f32.mrf.mxu0
        %v617 = vadd.f32 0.0, %v616
        %v618 = vpop.f32.mrf.mxu0
        %v619 = vadd.f32 0.0, %v618
        %620 = vmatmul.bf16.gmra.mxu0 %v544
        %v621 = vpop.f32.mrf.mxu0
        %v622 = vadd.f32 0.0, %v621
        %v623 = vpop.f32.mrf.mxu0
        %v624 = vadd.f32 0.0, %v623
        %625 = vmatmul.bf16.gmra.mxu0 %v547
        %v626 = vpop.f32.mrf.mxu0
        %v627 = vadd.f32 0.0, %v626
        %v628 = vpop.f32.mrf.mxu0
        %v629 = vadd.f32 0.0, %v628
        %630 = vmatmul.bf16.gmra.mxu0 %v550
        %v631 = vpop.f32.mrf.mxu0
        %v632 = vadd.f32 0.0, %v631
        %v633 = vpop.f32.mrf.mxu0
        %v634 = vadd.f32 0.0, %v633
        %635 = vmatmul.bf16.gmra.mxu0 %v553
        %v636 = vpop.f32.mrf.mxu0
        %v637 = vadd.f32 0.0, %v636
        %v638 = vpop.f32.mrf.mxu0
        %v639 = vadd.f32 0.0, %v638
        %640 = vmatmul.bf16.gmra.mxu0 %v556
        %v641 = vpop.f32.mrf.mxu0
        %v642 = vadd.f32 0.0, %v641
        %v643 = vpop.f32.mrf.mxu0
        %v644 = vadd.f32 0.0, %v643
        %645 = vmatmul.bf16.gmra.mxu0 %v559
        %v646 = vpop.f32.mrf.mxu0
        %v647 = vadd.f32 0.0, %v646
        %v648 = vpop.f32.mrf.mxu0
        %v649 = vadd.f32 0.0, %v648
        %650 = vmatmul.bf16.gmra.mxu0 %v562
        %v651 = vpop.f32.mrf.mxu0
        %v652 = vadd.f32 0.0, %v651
        %v653 = vpop.f32.mrf.mxu0
        %v654 = vadd.f32 0.0, %v653
        %655 = vmatmul.bf16.gmra.mxu0 %v565
        %v656 = vpop.f32.mrf.mxu0
        %v657 = vadd.f32 0.0, %v656
        %v658 = vpop.f32.mrf.mxu0
        %v659 = vadd.f32 0.0, %v658
        %660 = vmatmul.bf16.gmra.mxu0 %v568
        %v661 = vpop.f32.mrf.mxu0
        %v662 = vadd.f32 0.0, %v661
        %v663 = vpop.f32.mrf.mxu0
        %v664 = vadd.f32 0.0, %v663
        %665 = vdwg.mxu0
        %666 = vmatpush.bf16.msra.mxu0 0
        %667 = vmatpush.bf16.msra.mxu0 0
        %668 = vmatpush.bf16.msra.mxu0 0
        %669 = vmatpush.bf16.msra.mxu0 0
        %670 = vmatpush.bf16.msra.mxu0 0
        %671 = vmatpush.bf16.msra.mxu0 0
        %672 = vmatpush.bf16.msra.mxu0 0
        %673 = vmatpush.bf16.msra.mxu0 %v575
        %674 = vmatmul.bf16.gmra.mxu0 %v523
        %v675 = vpop.f32.mrf.mxu0
        %v676 = vadd.f32 0.0, %v675
        %v677 = vpop.f32.mrf.mxu0
        %v678 = vadd.f32 0.0, %v677
        %679 = vmatmul.bf16.gmra.mxu0 %v526
        %v680 = vpop.f32.mrf.mxu0
        %v681 = vadd.f32 0.0, %v680
        %v682 = vpop.f32.mrf.mxu0
        %v683 = vadd.f32 0.0, %v682
        %684 = vmatmul.bf16.gmra.mxu0 %v529
        %v685 = vpop.f32.mrf.mxu0
        %v686 = vadd.f32 0.0, %v685
        %v687 = vpop.f32.mrf.mxu0
        %v688 = vadd.f32 0.0, %v687
        %689 = vmatmul.bf16.gmra.mxu0 %v532
        %v690 = vpop.f32.mrf.mxu0
        %v691 = vadd.f32 0.0, %v690
        %v692 = vpop.f32.mrf.mxu0
        %v693 = vadd.f32 0.0, %v692
        %694 = vmatmul.bf16.gmra.mxu0 %v535
        %v695 = vpop.f32.mrf.mxu0
        %v696 = vadd.f32 0.0, %v695
        %v697 = vpop.f32.mrf.mxu0
        %v698 = vadd.f32 0.0, %v697
        %699 = vmatmul.bf16.gmra.mxu0 %v538
        %v700 = vpop.f32.mrf.mxu0
        %v701 = vadd.f32 0.0, %v700
        %v702 = vpop.f32.mrf.mxu0
        %v703 = vadd.f32 0.0, %v702
        %704 = vmatmul.bf16.gmra.mxu0 %v541
        %v705 = vpop.f32.mrf.mxu0
        %v706 = vadd.f32 0.0, %v705
        %v707 = vpop.f32.mrf.mxu0
        %v708 = vadd.f32 0.0, %v707
        %709 = vmatmul.bf16.gmra.mxu0 %v544
        %v710 = vpop.f32.mrf.mxu0
        %v711 = vadd.f32 0.0, %v710
        %v712 = vpop.f32.mrf.mxu0
        %v713 = vadd.f32 0.0, %v712
        %714 = vmatmul.bf16.gmra.mxu0 %v547
        %v715 = vpop.f32.mrf.mxu0
        %v716 = vadd.f32 0.0, %v715
        %v717 = vpop.f32.mrf.mxu0
        %v718 = vadd.f32 0.0, %v717
        %719 = vmatmul.bf16.gmra.mxu0 %v550
        %v720 = vpop.f32.mrf.mxu0
        %v721 = vadd.f32 0.0, %v720
        %v722 = vpop.f32.mrf.mxu0
        %v723 = vadd.f32 0.0, %v722
        %724 = vmatmul.bf16.gmra.mxu0 %v553
        %v725 = vpop.f32.mrf.mxu0
        %v726 = vadd.f32 0.0, %v725
        %v727 = vpop.f32.mrf.mxu0
        %v728 = vadd.f32 0.0, %v727
        %729 = vmatmul.bf16.gmra.mxu0 %v556
        %v730 = vpop.f32.mrf.mxu0
        %v731 = vadd.f32 0.0, %v730
        %v732 = vpop.f32.mrf.mxu0
        %v733 = vadd.f32 0.0, %v732
        %734 = vmatmul.bf16.gmra.mxu0 %v559
        %v735 = vpop.f32.mrf.mxu0
        %v736 = vadd.f32 0.0, %v735
        %v737 = vpop.f32.mrf.mxu0
        %v738 = vadd.f32 0.0, %v737
        %739 = vmatmul.bf16.gmra.mxu0 %v562
        %v740 = vpop.f32.mrf.mxu0
        %v741 = vadd.f32 0.0, %v740
        %v742 = vpop.f32.mrf.mxu0
        %v743 = vadd.f32 0.0, %v742
        %744 = vmatmul.bf16.gmra.mxu0 %v565
        %v745 = vpop.f32.mrf.mxu0
        %v746 = vadd.f32 0.0, %v745
        %v747 = vpop.f32.mrf.mxu0
        %v748 = vadd.f32 0.0, %v747
        %749 = vmatmul.bf16.gmra.mxu0 %v568
        %v750 = vpop.f32.mrf.mxu0
        %v751 = vadd.f32 0.0, %v750
        %v752 = vpop.f32.mrf.mxu0
        %v753 = vadd.f32 0.0, %v752
        %754 = vdwg.mxu0
        %v755 = vld [vmem:[%s7] ss:$8 sm:$0x3]
        %v757 = vperm.slane %v755, 0
        %v758 = vperm.slane %v755, 1
        %v761 = vmul.f32 %v587, %v757
        %v762 = vmul.f32 %v676, %v758
        %v763 = vmul.f32 %v589, %v757
        %v764 = vmul.f32 %v678, %v758
        %v765 = vmul.f32 %v592, %v757
        %v766 = vmul.f32 %v681, %v758
        %v767 = vmul.f32 %v594, %v757
        %v768 = vmul.f32 %v683, %v758
        %v769 = vmul.f32 %v597, %v757
        %v770 = vmul.f32 %v686, %v758
        %v771 = vmul.f32 %v599, %v757
        %v772 = vmul.f32 %v688, %v758
        %v773 = vmul.f32 %v602, %v757
        %v774 = vmul.f32 %v691, %v758
        %v775 = vmul.f32 %v604, %v757
        %v776 = vmul.f32 %v693, %v758
        %v777 = vmul.f32 %v607, %v757
        %v778 = vmul.f32 %v696, %v758
        %v779 = vmul.f32 %v609, %v757
        %v780 = vmul.f32 %v698, %v758
        %v781 = vmul.f32 %v612, %v757
        %v782 = vmul.f32 %v701, %v758
        %v783 = vmul.f32 %v614, %v757
        %v784 = vmul.f32 %v703, %v758
        %v785 = vmul.f32 %v617, %v757
        %v786 = vmul.f32 %v706, %v758
        %v787 = vmul.f32 %v619, %v757
        %v788 = vmul.f32 %v708, %v758
        %v789 = vmul.f32 %v622, %v757
        %v790 = vmul.f32 %v711, %v758
        %v791 = vmul.f32 %v624, %v757
        %v792 = vmul.f32 %v713, %v758
        %v793 = vmul.f32 %v627, %v757
        %v794 = vmul.f32 %v716, %v758
        %v795 = vmul.f32 %v629, %v757
        %v796 = vmul.f32 %v718, %v758
        %v797 = vmul.f32 %v632, %v757
        %v798 = vmul.f32 %v721, %v758
        %v799 = vmul.f32 %v634, %v757
        %v800 = vmul.f32 %v723, %v758
        %v801 = vmul.f32 %v637, %v757
        %v802 = vmul.f32 %v726, %v758
        %v803 = vmul.f32 %v639, %v757
        %v804 = vmul.f32 %v728, %v758
        %v805 = vmul.f32 %v642, %v757
        %v806 = vmul.f32 %v731, %v758
        %v807 = vmul.f32 %v644, %v757
        %v808 = vmul.f32 %v733, %v758
        %v809 = vmul.f32 %v647, %v757
        %v810 = vmul.f32 %v736, %v758
        %v811 = vmul.f32 %v649, %v757
        %v812 = vmul.f32 %v738, %v758
        %v813 = vmul.f32 %v652, %v757
        %v814 = vmul.f32 %v741, %v758
        %v815 = vmul.f32 %v654, %v757
        %v816 = vmul.f32 %v743, %v758
        %v817 = vmul.f32 %v657, %v757
        %v818 = vmul.f32 %v746, %v758
        %v819 = vmul.f32 %v659, %v757
        %v820 = vmul.f32 %v748, %v758
        %v821 = vmul.f32 %v662, %v757
        %v822 = vmul.f32 %v751, %v758
        %v823 = vmul.f32 %v664, %v757
        %v824 = vmul.f32 %v753, %v758
        %v825 = vld [vmem:[%s8] ss:$8 sm:$0x3]
        %v827 = vperm.slane %v825, 0
        %v828 = vperm.slane %v825, 1
        %v831 = vadd.f32 %v761, %v827
        %v832 = vadd.f32 %v762, %v828
        %v833 = vadd.f32 %v763, %v827
        %v834 = vadd.f32 %v764, %v828
        %v835 = vadd.f32 %v765, %v827
        %v836 = vadd.f32 %v766, %v828
        %v837 = vadd.f32 %v767, %v827
        %v838 = vadd.f32 %v768, %v828
        %v839 = vadd.f32 %v769, %v827
        %v840 = vadd.f32 %v770, %v828
        %v841 = vadd.f32 %v771, %v827
        %v842 = vadd.f32 %v772, %v828
        %v843 = vadd.f32 %v773, %v827
        %v844 = vadd.f32 %v774, %v828
        %v845 = vadd.f32 %v775, %v827
        %v846 = vadd.f32 %v776, %v828
        %v847 = vadd.f32 %v777, %v827
        %v848 = vadd.f32 %v778, %v828
        %v849 = vadd.f32 %v779, %v827
        %v850 = vadd.f32 %v780, %v828
        %v851 = vadd.f32 %v781, %v827
        %v852 = vadd.f32 %v782, %v828
        %v853 = vadd.f32 %v783, %v827
        %v854 = vadd.f32 %v784, %v828
        %v855 = vadd.f32 %v785, %v827
        %v856 = vadd.f32 %v786, %v828
        %v857 = vadd.f32 %v787, %v827
        %v858 = vadd.f32 %v788, %v828
        %v859 = vadd.f32 %v789, %v827
        %v860 = vadd.f32 %v790, %v828
        %v861 = vadd.f32 %v791, %v827
        %v862 = vadd.f32 %v792, %v828
        %v863 = vadd.f32 %v793, %v827
        %v864 = vadd.f32 %v794, %v828
        %v865 = vadd.f32 %v795, %v827
        %v866 = vadd.f32 %v796, %v828
        %v867 = vadd.f32 %v797, %v827
        %v868 = vadd.f32 %v798, %v828
        %v869 = vadd.f32 %v799, %v827
        %v870 = vadd.f32 %v800, %v828
        %v871 = vadd.f32 %v801, %v827
        %v872 = vadd.f32 %v802, %v828
        %v873 = vadd.f32 %v803, %v827
        %v874 = vadd.f32 %v804, %v828
        %v875 = vadd.f32 %v805, %v827
        %v876 = vadd.f32 %v806, %v828
        %v877 = vadd.f32 %v807, %v827
        %v878 = vadd.f32 %v808, %v828
        %v879 = vadd.f32 %v809, %v827
        %v880 = vadd.f32 %v810, %v828
        %v881 = vadd.f32 %v811, %v827
        %v882 = vadd.f32 %v812, %v828
        %v883 = vadd.f32 %v813, %v827
        %v884 = vadd.f32 %v814, %v828
        %v885 = vadd.f32 %v815, %v827
        %v886 = vadd.f32 %v816, %v828
        %v887 = vadd.f32 %v817, %v827
        %v888 = vadd.f32 %v818, %v828
        %v889 = vadd.f32 %v819, %v827
        %v890 = vadd.f32 %v820, %v828
        %v891 = vadd.f32 %v821, %v827
        %v892 = vadd.f32 %v822, %v828
        %v893 = vadd.f32 %v823, %v827
        %v894 = vadd.f32 %v824, %v828
        %v895 = vmax.f32 %v831, 0.0
        %v896 = vmax.f32 %v832, 0.0
        %v897 = vmax.f32 %v833, 0.0
        %v898 = vmax.f32 %v834, 0.0
        %v899 = vmax.f32 %v835, 0.0
        %v900 = vmax.f32 %v836, 0.0
        %v901 = vmax.f32 %v837, 0.0
        %v902 = vmax.f32 %v838, 0.0
        %v903 = vmax.f32 %v839, 0.0
        %v904 = vmax.f32 %v840, 0.0
        %v905 = vmax.f32 %v841, 0.0
        %v906 = vmax.f32 %v842, 0.0
        %v907 = vmax.f32 %v843, 0.0
        %v908 = vmax.f32 %v844, 0.0
        %v909 = vmax.f32 %v845, 0.0
        %v910 = vmax.f32 %v846, 0.0
        %v911 = vmax.f32 %v847, 0.0
        %v912 = vmax.f32 %v848, 0.0
        %v913 = vmax.f32 %v849, 0.0
        %v914 = vmax.f32 %v850, 0.0
        %v915 = vmax.f32 %v851, 0.0
        %v916 = vmax.f32 %v852, 0.0
        %v917 = vmax.f32 %v853, 0.0
        %v918 = vmax.f32 %v854, 0.0
        %v919 = vmax.f32 %v855, 0.0
        %v920 = vmax.f32 %v856, 0.0
        %v921 = vmax.f32 %v857, 0.0
        %v922 = vmax.f32 %v858, 0.0
        %v923 = vmax.f32 %v859, 0.0
        %v924 = vmax.f32 %v860, 0.0
        %v925 = vmax.f32 %v861, 0.0
        %v926 = vmax.f32 %v862, 0.0
        %v927 = vmax.f32 %v863, 0.0
        %v928 = vmax.f32 %v864, 0.0
        %v929 = vmax.f32 %v865, 0.0
        %v930 = vmax.f32 %v866, 0.0
        %v931 = vmax.f32 %v867, 0.0
        %v932 = vmax.f32 %v868, 0.0
        %v933 = vmax.f32 %v869, 0.0
        %v934 = vmax.f32 %v870, 0.0
        %v935 = vmax.f32 %v871, 0.0
        %v936 = vmax.f32 %v872, 0.0
        %v937 = vmax.f32 %v873, 0.0
        %v938 = vmax.f32 %v874, 0.0
        %v939 = vmax.f32 %v875, 0.0
        %v940 = vmax.f32 %v876, 0.0
        %v941 = vmax.f32 %v877, 0.0
        %v942 = vmax.f32 %v878, 0.0
        %v943 = vmax.f32 %v879, 0.0
        %v944 = vmax.f32 %v880, 0.0
        %v945 = vmax.f32 %v881, 0.0
        %v946 = vmax.f32 %v882, 0.0
        %v947 = vmax.f32 %v883, 0.0
        %v948 = vmax.f32 %v884, 0.0
        %v949 = vmax.f32 %v885, 0.0
        %v950 = vmax.f32 %v886, 0.0
        %v951 = vmax.f32 %v887, 0.0
        %v952 = vmax.f32 %v888, 0.0
        %v953 = vmax.f32 %v889, 0.0
        %v954 = vmax.f32 %v890, 0.0
        %v955 = vmax.f32 %v891, 0.0
        %v956 = vmax.f32 %v892, 0.0
        %v957 = vmax.f32 %v893, 0.0
        %v958 = vmax.f32 %v894, 0.0
        %v959 = vpack.c.bf16 %v897, %v895
        %v960 = vpack.c.bf16 %v898, %v896
        %v961 = vpack.c.bf16 %v901, %v899
        %v962 = vpack.c.bf16 %v902, %v900
        %v963 = vpack.c.bf16 %v905, %v903
        %v964 = vpack.c.bf16 %v906, %v904
        %v965 = vpack.c.bf16 %v909, %v907
        %v966 = vpack.c.bf16 %v910, %v908
        %v967 = vpack.c.bf16 %v913, %v911
        %v968 = vpack.c.bf16 %v914, %v912
        %v969 = vpack.c.bf16 %v917, %v915
        %v970 = vpack.c.bf16 %v918, %v916
        %v971 = vpack.c.bf16 %v921, %v919
        %v972 = vpack.c.bf16 %v922, %v920
        %v973 = vpack.c.bf16 %v925, %v923
        %v974 = vpack.c.bf16 %v926, %v924
        %v975 = vpack.c.bf16 %v929, %v927
        %v976 = vpack.c.bf16 %v930, %v928
        %v977 = vpack.c.bf16 %v933, %v931
        %v978 = vpack.c.bf16 %v934, %v932
        %v979 = vpack.c.bf16 %v937, %v935
        %v980 = vpack.c.bf16 %v938, %v936
        %v981 = vpack.c.bf16 %v941, %v939
        %v982 = vpack.c.bf16 %v942, %v940
        %v983 = vpack.c.bf16 %v945, %v943
        %v984 = vpack.c.bf16 %v946, %v944
        %v985 = vpack.c.bf16 %v949, %v947
        %v986 = vpack.c.bf16 %v950, %v948
        %v987 = vpack.c.bf16 %v953, %v951
        %v988 = vpack.c.bf16 %v954, %v952
        %v989 = vpack.c.bf16 %v957, %v955
        %v990 = vpack.c.bf16 %v958, %v956
        %v991 = vld [vmem:[#allocation4] sm:$0xff]
        %v992 = vld [vmem:[#allocation4 + $0x8] sm:$0xff]
        %v993 = vld [vmem:[#allocation4 + $0x10] sm:$0xff]
        %v994 = vld [vmem:[#allocation4 + $0x18] sm:$0xff]
        %v995 = vld [vmem:[#allocation4 + $0x20] sm:$0xff]
        %v996 = vld [vmem:[#allocation4 + $0x28] sm:$0xff]
        %v997 = vld [vmem:[#allocation4 + $0x30] sm:$0xff]
        %v998 = vld [vmem:[#allocation4 + $0x38] sm:$0xff]
        %v999 = vld [vmem:[#allocation4 + $0x40] sm:$0xff]
        %v1000 = vld [vmem:[#allocation4 + $0x48] sm:$0xff]
        %v1001 = vld [vmem:[#allocation4 + $0x50] sm:$0xff]
        %v1002 = vld [vmem:[#allocation4 + $0x58] sm:$0xff]
        %v1003 = vld [vmem:[#allocation4 + $0x60] sm:$0xff]
        %v1004 = vld [vmem:[#allocation4 + $0x68] sm:$0xff]
        %v1005 = vld [vmem:[#allocation4 + $0x70] sm:$0xff]
        %v1006 = vld [vmem:[#allocation4 + $0x78] sm:$0xff]
        %v1007 = vld [vmem:[#allocation4 + $0x80] sm:$0xff]
        %v1008 = vld [vmem:[#allocation4 + $0x88] sm:$0xff]
        %v1009 = vld [vmem:[#allocation4 + $0x90] sm:$0xff]
        %v1010 = vld [vmem:[#allocation4 + $0x98] sm:$0xff]
        %v1011 = vld [vmem:[#allocation4 + $0xa0] sm:$0xff]
        %v1012 = vld [vmem:[#allocation4 + $0xa8] sm:$0xff]
        %v1013 = vld [vmem:[#allocation4 + $0xb0] sm:$0xff]
        %v1014 = vld [vmem:[#allocation4 + $0xb8] sm:$0xff]
        %v1015 = vld [vmem:[#allocation4 + $0xc0] sm:$0xff]
        %v1016 = vld [vmem:[#allocation4 + $0xc8] sm:$0xff]
        %v1017 = vld [vmem:[#allocation4 + $0xd0] sm:$0xff]
        %v1018 = vld [vmem:[#allocation4 + $0xd8] sm:$0xff]
        %v1019 = vld [vmem:[#allocation4 + $0xe0] sm:$0xff]
        %v1020 = vld [vmem:[#allocation4 + $0xe8] sm:$0xff]
        %v1021 = vld [vmem:[#allocation4 + $0xf0] sm:$0xff]
        %v1022 = vld [vmem:[#allocation4 + $0xf8] sm:$0xff]
        %v1055 = vunpack.c.l.b16 %v991
        %v1056 = vunpack.c.h.b16 %v991
        %v1057 = vunpack.c.l.b16 %v992
        %v1058 = vunpack.c.h.b16 %v992
        %v1059 = vunpack.c.l.b16 %v993
        %v1060 = vunpack.c.h.b16 %v993
        %v1061 = vunpack.c.l.b16 %v994
        %v1062 = vunpack.c.h.b16 %v994
        %v1063 = vunpack.c.l.b16 %v995
        %v1064 = vunpack.c.h.b16 %v995
        %v1065 = vunpack.c.l.b16 %v996
        %v1066 = vunpack.c.h.b16 %v996
        %v1067 = vunpack.c.l.b16 %v997
        %v1068 = vunpack.c.h.b16 %v997
        %v1069 = vunpack.c.l.b16 %v998
        %v1070 = vunpack.c.h.b16 %v998
        %v1071 = vunpack.c.l.b16 %v999
        %v1072 = vunpack.c.h.b16 %v999
        %v1073 = vunpack.c.l.b16 %v1000
        %v1074 = vunpack.c.h.b16 %v1000
        %v1075 = vunpack.c.l.b16 %v1001
        %v1076 = vunpack.c.h.b16 %v1001
        %v1077 = vunpack.c.l.b16 %v1002
        %v1078 = vunpack.c.h.b16 %v1002
        %v1079 = vunpack.c.l.b16 %v1003
        %v1080 = vunpack.c.h.b16 %v1003
        %v1081 = vunpack.c.l.b16 %v1004
        %v1082 = vunpack.c.h.b16 %v1004
        %v1083 = vunpack.c.l.b16 %v1005
        %v1084 = vunpack.c.h.b16 %v1005
        %v1085 = vunpack.c.l.b16 %v1006
        %v1086 = vunpack.c.h.b16 %v1006
        %v1087 = vunpack.c.l.b16 %v1007
        %v1088 = vunpack.c.h.b16 %v1007
        %v1089 = vunpack.c.l.b16 %v1008
        %v1090 = vunpack.c.h.b16 %v1008
        %v1091 = vunpack.c.l.b16 %v1009
        %v1092 = vunpack.c.h.b16 %v1009
        %v1093 = vunpack.c.l.b16 %v1010
        %v1094 = vunpack.c.h.b16 %v1010
        %v1095 = vunpack.c.l.b16 %v1011
        %v1096 = vunpack.c.h.b16 %v1011
        %v1097 = vunpack.c.l.b16 %v1012
        %v1098 = vunpack.c.h.b16 %v1012
        %v1099 = vunpack.c.l.b16 %v1013
        %v1100 = vunpack.c.h.b16 %v1013
        %v1101 = vunpack.c.l.b16 %v1014
        %v1102 = vunpack.c.h.b16 %v1014
        %v1103 = vunpack.c.l.b16 %v1015
        %v1104 = vunpack.c.h.b16 %v1015
        %v1105 = vunpack.c.l.b16 %v1016
        %v1106 = vunpack.c.h.b16 %v1016
        %v1107 = vunpack.c.l.b16 %v1017
        %v1108 = vunpack.c.h.b16 %v1017
        %v1109 = vunpack.c.l.b16 %v1018
        %v1110 = vunpack.c.h.b16 %v1018
        %v1111 = vunpack.c.l.b16 %v1019
        %v1112 = vunpack.c.h.b16 %v1019
        %v1113 = vunpack.c.l.b16 %v1020
        %v1114 = vunpack.c.h.b16 %v1020
        %v1115 = vunpack.c.l.b16 %v1021
        %v1116 = vunpack.c.h.b16 %v1021
        %v1117 = vunpack.c.l.b16 %v1022
        %v1118 = vunpack.c.h.b16 %v1022
        %v1119 = vpack.c.b16 %v1057, %v1055
        %v1120 = vpack.c.b16 %v1058, %v1056
        %v1121 = vpack.c.b16 %v1061, %v1059
        %v1122 = vpack.c.b16 %v1062, %v1060
        %v1123 = vpack.c.b16 %v1065, %v1063
        %v1124 = vpack.c.b16 %v1066, %v1064
        %v1125 = vpack.c.b16 %v1069, %v1067
        %v1126 = vpack.c.b16 %v1070, %v1068
        %v1127 = vpack.c.b16 %v1073, %v1071
        %v1128 = vpack.c.b16 %v1074, %v1072
        %v1129 = vpack.c.b16 %v1077, %v1075
        %v1130 = vpack.c.b16 %v1078, %v1076
        %v1131 = vpack.c.b16 %v1081, %v1079
        %v1132 = vpack.c.b16 %v1082, %v1080
        %v1133 = vpack.c.b16 %v1085, %v1083
        %v1134 = vpack.c.b16 %v1086, %v1084
        %v1135 = vpack.c.b16 %v1089, %v1087
        %v1136 = vpack.c.b16 %v1090, %v1088
        %v1137 = vpack.c.b16 %v1093, %v1091
        %v1138 = vpack.c.b16 %v1094, %v1092
        %v1139 = vpack.c.b16 %v1097, %v1095
        %v1140 = vpack.c.b16 %v1098, %v1096
        %v1141 = vpack.c.b16 %v1101, %v1099
        %v1142 = vpack.c.b16 %v1102, %v1100
        %v1143 = vpack.c.b16 %v1105, %v1103
        %v1144 = vpack.c.b16 %v1106, %v1104
        %v1145 = vpack.c.b16 %v1109, %v1107
        %v1146 = vpack.c.b16 %v1110, %v1108
        %v1147 = vpack.c.b16 %v1113, %v1111
        %v1148 = vpack.c.b16 %v1114, %v1112
        %v1149 = vpack.c.b16 %v1117, %v1115
        %v1150 = vpack.c.b16 %v1118, %v1116
        %1183 = vmatpush.bf16.msra.mxu0 %v1133
        %1184 = vmatpush.bf16.msra.mxu0 %v1131
        %1185 = vmatpush.bf16.msra.mxu0 %v1129
        %1186 = vmatpush.bf16.msra.mxu0 %v1127
        %1187 = vmatpush.bf16.msra.mxu0 %v1125
        %1188 = vmatpush.bf16.msra.mxu0 %v1123
        %1189 = vmatpush.bf16.msra.mxu0 %v1121
        %1190 = vmatpush.bf16.msra.mxu0 %v1119
        %1191 = vmatmul.bf16.gmra.mxu0 %v959
        %v1192 = vpop.f32.mrf.mxu0
        %v1193 = vadd.f32 0.0, %v1192
        %v1194 = vpop.f32.mrf.mxu0
        %v1195 = vadd.f32 0.0, %v1194
        %1196 = vmatmul.bf16.gmra.mxu0 %v961
        %v1197 = vpop.f32.mrf.mxu0
        %v1198 = vadd.f32 0.0, %v1197
        %v1199 = vpop.f32.mrf.mxu0
        %v1200 = vadd.f32 0.0, %v1199
        %1201 = vmatmul.bf16.gmra.mxu0 %v963
        %v1202 = vpop.f32.mrf.mxu0
        %v1203 = vadd.f32 0.0, %v1202
        %v1204 = vpop.f32.mrf.mxu0
        %v1205 = vadd.f32 0.0, %v1204
        %1206 = vmatmul.bf16.gmra.mxu0 %v965
        %v1207 = vpop.f32.mrf.mxu0
        %v1208 = vadd.f32 0.0, %v1207
        %v1209 = vpop.f32.mrf.mxu0
        %v1210 = vadd.f32 0.0, %v1209
        %1211 = vmatmul.bf16.gmra.mxu0 %v967
        %v1212 = vpop.f32.mrf.mxu0
        %v1213 = vadd.f32 0.0, %v1212
        %v1214 = vpop.f32.mrf.mxu0
        %v1215 = vadd.f32 0.0, %v1214
        %1216 = vmatmul.bf16.gmra.mxu0 %v969
        %v1217 = vpop.f32.mrf.mxu0
        %v1218 = vadd.f32 0.0, %v1217
        %v1219 = vpop.f32.mrf.mxu0
        %v1220 = vadd.f32 0.0, %v1219
        %1221 = vmatmul.bf16.gmra.mxu0 %v971
        %v1222 = vpop.f32.mrf.mxu0
        %v1223 = vadd.f32 0.0, %v1222
        %v1224 = vpop.f32.mrf.mxu0
        %v1225 = vadd.f32 0.0, %v1224
        %1226 = vmatmul.bf16.gmra.mxu0 %v973
        %v1227 = vpop.f32.mrf.mxu0
        %v1228 = vadd.f32 0.0, %v1227
        %v1229 = vpop.f32.mrf.mxu0
        %v1230 = vadd.f32 0.0, %v1229
        %1231 = vmatmul.bf16.gmra.mxu0 %v975
        %v1232 = vpop.f32.mrf.mxu0
        %v1233 = vadd.f32 0.0, %v1232
        %v1234 = vpop.f32.mrf.mxu0
        %v1235 = vadd.f32 0.0, %v1234
        %1236 = vmatmul.bf16.gmra.mxu0 %v977
        %v1237 = vpop.f32.mrf.mxu0
        %v1238 = vadd.f32 0.0, %v1237
        %v1239 = vpop.f32.mrf.mxu0
        %v1240 = vadd.f32 0.0, %v1239
        %1241 = vmatmul.bf16.gmra.mxu0 %v979
        %v1242 = vpop.f32.mrf.mxu0
        %v1243 = vadd.f32 0.0, %v1242
        %v1244 = vpop.f32.mrf.mxu0
        %v1245 = vadd.f32 0.0, %v1244
        %1246 = vmatmul.bf16.gmra.mxu0 %v981
        %v1247 = vpop.f32.mrf.mxu0
        %v1248 = vadd.f32 0.0, %v1247
        %v1249 = vpop.f32.mrf.mxu0
        %v1250 = vadd.f32 0.0, %v1249
        %1251 = vmatmul.bf16.gmra.mxu0 %v983
        %v1252 = vpop.f32.mrf.mxu0
        %v1253 = vadd.f32 0.0, %v1252
        %v1254 = vpop.f32.mrf.mxu0
        %v1255 = vadd.f32 0.0, %v1254
        %1256 = vmatmul.bf16.gmra.mxu0 %v985
        %v1257 = vpop.f32.mrf.mxu0
        %v1258 = vadd.f32 0.0, %v1257
        %v1259 = vpop.f32.mrf.mxu0
        %v1260 = vadd.f32 0.0, %v1259
        %1261 = vmatmul.bf16.gmra.mxu0 %v987
        %v1262 = vpop.f32.mrf.mxu0
        %v1263 = vadd.f32 0.0, %v1262
        %v1264 = vpop.f32.mrf.mxu0
        %v1265 = vadd.f32 0.0, %v1264
        %1266 = vmatmul.bf16.gmra.mxu0 %v989
        %v1267 = vpop.f32.mrf.mxu0
        %v1268 = vadd.f32 0.0, %v1267
        %v1269 = vpop.f32.mrf.mxu0
        %v1270 = vadd.f32 0.0, %v1269
        %1271 = vdwg.mxu0
        %1272 = vmatpush.bf16.msra.mxu0 %v1149
        %1273 = vmatpush.bf16.msra.mxu0 %v1147
        %1274 = vmatpush.bf16.msra.mxu0 %v1145
        %1275 = vmatpush.bf16.msra.mxu0 %v1143
        %1276 = vmatpush.bf16.msra.mxu0 %v1141
        %1277 = vmatpush.bf16.msra.mxu0 %v1139
        %1278 = vmatpush.bf16.msra.mxu0 %v1137
        %1279 = vmatpush.bf16.msra.mxu0 %v1135
        %1280 = vmatmul.bf16.gmra.mxu0 %v960
        %v1281 = vpop.f32.mrf.mxu0
        %v1282 = vadd.f32 %v1193, %v1281
        %v1283 = vpop.f32.mrf.mxu0
        %v1284 = vadd.f32 %v1195, %v1283
        %1285 = vmatmul.bf16.gmra.mxu0 %v962
        %v1286 = vpop.f32.mrf.mxu0
        %v1287 = vadd.f32 %v1198, %v1286
        %v1288 = vpop.f32.mrf.mxu0
        %v1289 = vadd.f32 %v1200, %v1288
        %1290 = vmatmul.bf16.gmra.mxu0 %v964
        %v1291 = vpop.f32.mrf.mxu0
        %v1292 = vadd.f32 %v1203, %v1291
        %v1293 = vpop.f32.mrf.mxu0
        %v1294 = vadd.f32 %v1205, %v1293
        %1295 = vmatmul.bf16.gmra.mxu0 %v966
        %v1296 = vpop.f32.mrf.mxu0
        %v1297 = vadd.f32 %v1208, %v1296
        %v1298 = vpop.f32.mrf.mxu0
        %v1299 = vadd.f32 %v1210, %v1298
        %1300 = vmatmul.bf16.gmra.mxu0 %v968
        %v1301 = vpop.f32.mrf.mxu0
        %v1302 = vadd.f32 %v1213, %v1301
        %v1303 = vpop.f32.mrf.mxu0
        %v1304 = vadd.f32 %v1215, %v1303
        %1305 = vmatmul.bf16.gmra.mxu0 %v970
        %v1306 = vpop.f32.mrf.mxu0
        %v1307 = vadd.f32 %v1218, %v1306
        %v1308 = vpop.f32.mrf.mxu0
        %v1309 = vadd.f32 %v1220, %v1308
        %1310 = vmatmul.bf16.gmra.mxu0 %v972
        %v1311 = vpop.f32.mrf.mxu0
        %v1312 = vadd.f32 %v1223, %v1311
        %v1313 = vpop.f32.mrf.mxu0
        %v1314 = vadd.f32 %v1225, %v1313
        %1315 = vmatmul.bf16.gmra.mxu0 %v974
        %v1316 = vpop.f32.mrf.mxu0
        %v1317 = vadd.f32 %v1228, %v1316
        %v1318 = vpop.f32.mrf.mxu0
        %v1319 = vadd.f32 %v1230, %v1318
        %1320 = vmatmul.bf16.gmra.mxu0 %v976
        %v1321 = vpop.f32.mrf.mxu0
        %v1322 = vadd.f32 %v1233, %v1321
        %v1323 = vpop.f32.mrf.mxu0
        %v1324 = vadd.f32 %v1235, %v1323
        %1325 = vmatmul.bf16.gmra.mxu0 %v978
        %v1326 = vpop.f32.mrf.mxu0
        %v1327 = vadd.f32 %v1238, %v1326
        %v1328 = vpop.f32.mrf.mxu0
        %v1329 = vadd.f32 %v1240, %v1328
        %1330 = vmatmul.bf16.gmra.mxu0 %v980
        %v1331 = vpop.f32.mrf.mxu0
        %v1332 = vadd.f32 %v1243, %v1331
        %v1333 = vpop.f32.mrf.mxu0
        %v1334 = vadd.f32 %v1245, %v1333
        %1335 = vmatmul.bf16.gmra.mxu0 %v982
        %v1336 = vpop.f32.mrf.mxu0
        %v1337 = vadd.f32 %v1248, %v1336
        %v1338 = vpop.f32.mrf.mxu0
        %v1339 = vadd.f32 %v1250, %v1338
        %1340 = vmatmul.bf16.gmra.mxu0 %v984
        %v1341 = vpop.f32.mrf.mxu0
        %v1342 = vadd.f32 %v1253, %v1341
        %v1343 = vpop.f32.mrf.mxu0
        %v1344 = vadd.f32 %v1255, %v1343
        %1345 = vmatmul.bf16.gmra.mxu0 %v986
        %v1346 = vpop.f32.mrf.mxu0
        %v1347 = vadd.f32 %v1258, %v1346
        %v1348 = vpop.f32.mrf.mxu0
        %v1349 = vadd.f32 %v1260, %v1348
        %1350 = vmatmul.bf16.gmra.mxu0 %v988
        %v1351 = vpop.f32.mrf.mxu0
        %v1352 = vadd.f32 %v1263, %v1351
        %v1353 = vpop.f32.mrf.mxu0
        %v1354 = vadd.f32 %v1265, %v1353
        %1355 = vmatmul.bf16.gmra.mxu0 %v990
        %v1356 = vpop.f32.mrf.mxu0
        %v1357 = vadd.f32 %v1268, %v1356
        %v1358 = vpop.f32.mrf.mxu0
        %v1359 = vadd.f32 %v1270, %v1358
        %1360 = vdwg.mxu0
        %1361 = vmatpush.bf16.msra.mxu0 %v1134
        %1362 = vmatpush.bf16.msra.mxu0 %v1132
        %1363 = vmatpush.bf16.msra.mxu0 %v1130
        %1364 = vmatpush.bf16.msra.mxu0 %v1128
        %1365 = vmatpush.bf16.msra.mxu0 %v1126
        %1366 = vmatpush.bf16.msra.mxu0 %v1124
        %1367 = vmatpush.bf16.msra.mxu0 %v1122
        %1368 = vmatpush.bf16.msra.mxu0 %v1120
        %1369 = vmatmul.bf16.gmra.mxu0 %v959
        %v1370 = vpop.f32.mrf.mxu0
        %v1371 = vadd.f32 0.0, %v1370
        %v1372 = vpop.f32.mrf.mxu0
        %v1373 = vadd.f32 0.0, %v1372
        %1374 = vmatmul.bf16.gmra.mxu0 %v961
        %v1375 = vpop.f32.mrf.mxu0
        %v1376 = vadd.f32 0.0, %v1375
        %v1377 = vpop.f32.mrf.mxu0
        %v1378 = vadd.f32 0.0, %v1377
        %1379 = vmatmul.bf16.gmra.mxu0 %v963
        %v1380 = vpop.f32.mrf.mxu0
        %v1381 = vadd.f32 0.0, %v1380
        %v1382 = vpop.f32.mrf.mxu0
        %v1383 = vadd.f32 0.0, %v1382
        %1384 = vmatmul.bf16.gmra.mxu0 %v965
        %v1385 = vpop.f32.mrf.mxu0
        %v1386 = vadd.f32 0.0, %v1385
        %v1387 = vpop.f32.mrf.mxu0
        %v1388 = vadd.f32 0.0, %v1387
        %1389 = vmatmul.bf16.gmra.mxu0 %v967
        %v1390 = vpop.f32.mrf.mxu0
        %v1391 = vadd.f32 0.0, %v1390
        %v1392 = vpop.f32.mrf.mxu0
        %v1393 = vadd.f32 0.0, %v1392
        %1394 = vmatmul.bf16.gmra.mxu0 %v969
        %v1395 = vpop.f32.mrf.mxu0
        %v1396 = vadd.f32 0.0, %v1395
        %v1397 = vpop.f32.mrf.mxu0
        %v1398 = vadd.f32 0.0, %v1397
        %1399 = vmatmul.bf16.gmra.mxu0 %v971
        %v1400 = vpop.f32.mrf.mxu0
        %v1401 = vadd.f32 0.0, %v1400
        %v1402 = vpop.f32.mrf.mxu0
        %v1403 = vadd.f32 0.0, %v1402
        %1404 = vmatmul.bf16.gmra.mxu0 %v973
        %v1405 = vpop.f32.mrf.mxu0
        %v1406 = vadd.f32 0.0, %v1405
        %v1407 = vpop.f32.mrf.mxu0
        %v1408 = vadd.f32 0.0, %v1407
        %1409 = vmatmul.bf16.gmra.mxu0 %v975
        %v1410 = vpop.f32.mrf.mxu0
        %v1411 = vadd.f32 0.0, %v1410
        %v1412 = vpop.f32.mrf.mxu0
        %v1413 = vadd.f32 0.0, %v1412
        %1414 = vmatmul.bf16.gmra.mxu0 %v977
        %v1415 = vpop.f32.mrf.mxu0
        %v1416 = vadd.f32 0.0, %v1415
        %v1417 = vpop.f32.mrf.mxu0
        %v1418 = vadd.f32 0.0, %v1417
        %1419 = vmatmul.bf16.gmra.mxu0 %v979
        %v1420 = vpop.f32.mrf.mxu0
        %v1421 = vadd.f32 0.0, %v1420
        %v1422 = vpop.f32.mrf.mxu0
        %v1423 = vadd.f32 0.0, %v1422
        %1424 = vmatmul.bf16.gmra.mxu0 %v981
        %v1425 = vpop.f32.mrf.mxu0
        %v1426 = vadd.f32 0.0, %v1425
        %v1427 = vpop.f32.mrf.mxu0
        %v1428 = vadd.f32 0.0, %v1427
        %1429 = vmatmul.bf16.gmra.mxu0 %v983
        %v1430 = vpop.f32.mrf.mxu0
        %v1431 = vadd.f32 0.0, %v1430
        %v1432 = vpop.f32.mrf.mxu0
        %v1433 = vadd.f32 0.0, %v1432
        %1434 = vmatmul.bf16.gmra.mxu0 %v985
        %v1435 = vpop.f32.mrf.mxu0
        %v1436 = vadd.f32 0.0, %v1435
        %v1437 = vpop.f32.mrf.mxu0
        %v1438 = vadd.f32 0.0, %v1437
        %1439 = vmatmul.bf16.gmra.mxu0 %v987
        %v1440 = vpop.f32.mrf.mxu0
        %v1441 = vadd.f32 0.0, %v1440
        %v1442 = vpop.f32.mrf.mxu0
        %v1443 = vadd.f32 0.0, %v1442
        %1444 = vmatmul.bf16.gmra.mxu0 %v989
        %v1445 = vpop.f32.mrf.mxu0
        %v1446 = vadd.f32 0.0, %v1445
        %v1447 = vpop.f32.mrf.mxu0
        %v1448 = vadd.f32 0.0, %v1447
        %1449 = vdwg.mxu0
        %1450 = vmatpush.bf16.msra.mxu0 %v1150
        %1451 = vmatpush.bf16.msra.mxu0 %v1148
        %1452 = vmatpush.bf16.msra.mxu0 %v1146
        %1453 = vmatpush.bf16.msra.mxu0 %v1144
        %1454 = vmatpush.bf16.msra.mxu0 %v1142
        %1455 = vmatpush.bf16.msra.mxu0 %v1140
        %1456 = vmatpush.bf16.msra.mxu0 %v1138
        %1457 = vmatpush.bf16.msra.mxu0 %v1136
        %1458 = vmatmul.bf16.gmra.mxu0 %v960
        %v1459 = vpop.f32.mrf.mxu0
        %v1460 = vadd.f32 %v1371, %v1459
        %v1461 = vpop.f32.mrf.mxu0
        %v1462 = vadd.f32 %v1373, %v1461
        %1463 = vmatmul.bf16.gmra.mxu0 %v962
        %v1464 = vpop.f32.mrf.mxu0
        %v1465 = vadd.f32 %v1376, %v1464
        %v1466 = vpop.f32.mrf.mxu0
        %v1467 = vadd.f32 %v1378, %v1466
        %1468 = vmatmul.bf16.gmra.mxu0 %v964
        %v1469 = vpop.f32.mrf.mxu0
        %v1470 = vadd.f32 %v1381, %v1469
        %v1471 = vpop.f32.mrf.mxu0
        %v1472 = vadd.f32 %v1383, %v1471
        %1473 = vmatmul.bf16.gmra.mxu0 %v966
        %v1474 = vpop.f32.mrf.mxu0
        %v1475 = vadd.f32 %v1386, %v1474
        %v1476 = vpop.f32.mrf.mxu0
        %v1477 = vadd.f32 %v1388, %v1476
        %1478 = vmatmul.bf16.gmra.mxu0 %v968
        %v1479 = vpop.f32.mrf.mxu0
        %v1480 = vadd.f32 %v1391, %v1479
        %v1481 = vpop.f32.mrf.mxu0
        %v1482 = vadd.f32 %v1393, %v1481
        %1483 = vmatmul.bf16.gmra.mxu0 %v970
        %v1484 = vpop.f32.mrf.mxu0
        %v1485 = vadd.f32 %v1396, %v1484
        %v1486 = vpop.f32.mrf.mxu0
        %v1487 = vadd.f32 %v1398, %v1486
        %1488 = vmatmul.bf16.gmra.mxu0 %v972
        %v1489 = vpop.f32.mrf.mxu0
        %v1490 = vadd.f32 %v1401, %v1489
        %v1491 = vpop.f32.mrf.mxu0
        %v1492 = vadd.f32 %v1403, %v1491
        %1493 = vmatmul.bf16.gmra.mxu0 %v974
        %v1494 = vpop.f32.mrf.mxu0
        %v1495 = vadd.f32 %v1406, %v1494
        %v1496 = vpop.f32.mrf.mxu0
        %v1497 = vadd.f32 %v1408, %v1496
        %1498 = vmatmul.bf16.gmra.mxu0 %v976
        %v1499 = vpop.f32.mrf.mxu0
        %v1500 = vadd.f32 %v1411, %v1499
        %v1501 = vpop.f32.mrf.mxu0
        %v1502 = vadd.f32 %v1413, %v1501
        %1503 = vmatmul.bf16.gmra.mxu0 %v978
        %v1504 = vpop.f32.mrf.mxu0
        %v1505 = vadd.f32 %v1416, %v1504
        %v1506 = vpop.f32.mrf.mxu0
        %v1507 = vadd.f32 %v1418, %v1506
        %1508 = vmatmul.bf16.gmra.mxu0 %v980
        %v1509 = vpop.f32.mrf.mxu0
        %v1510 = vadd.f32 %v1421, %v1509
        %v1511 = vpop.f32.mrf.mxu0
        %v1512 = vadd.f32 %v1423, %v1511
        %1513 = vmatmul.bf16.gmra.mxu0 %v982
        %v1514 = vpop.f32.mrf.mxu0
        %v1515 = vadd.f32 %v1426, %v1514
        %v1516 = vpop.f32.mrf.mxu0
        %v1517 = vadd.f32 %v1428, %v1516
        %1518 = vmatmul.bf16.gmra.mxu0 %v984
        %v1519 = vpop.f32.mrf.mxu0
        %v1520 = vadd.f32 %v1431, %v1519
        %v1521 = vpop.f32.mrf.mxu0
        %v1522 = vadd.f32 %v1433, %v1521
        %1523 = vmatmul.bf16.gmra.mxu0 %v986
        %v1524 = vpop.f32.mrf.mxu0
        %v1525 = vadd.f32 %v1436, %v1524
        %v1526 = vpop.f32.mrf.mxu0
        %v1527 = vadd.f32 %v1438, %v1526
        %1528 = vmatmul.bf16.gmra.mxu0 %v988
        %v1529 = vpop.f32.mrf.mxu0
        %v1530 = vadd.f32 %v1441, %v1529
        %v1531 = vpop.f32.mrf.mxu0
        %v1532 = vadd.f32 %v1443, %v1531
        %1533 = vmatmul.bf16.gmra.mxu0 %v990
        %v1534 = vpop.f32.mrf.mxu0
        %v1535 = vadd.f32 %v1446, %v1534
        %v1536 = vpop.f32.mrf.mxu0
        %v1537 = vadd.f32 %v1448, %v1536
        %1538 = vdwg.mxu0
        %1539 = vst [vmem:[#allocation3] sm:$0xff] %v1282
        %1540 = vst [vmem:[#allocation3 + $0x8] sm:$0xff] %v1460
        %1541 = vst [vmem:[#allocation3 + $0x10] sm:$0xff] %v1284
        %1542 = vst [vmem:[#allocation3 + $0x18] sm:$0xff] %v1462
        %1543 = vst [vmem:[#allocation3 + $0x20] sm:$0xff] %v1287
        %1544 = vst [vmem:[#allocation3 + $0x28] sm:$0xff] %v1465
        %1545 = vst [vmem:[#allocation3 + $0x30] sm:$0xff] %v1289
        %1546 = vst [vmem:[#allocation3 + $0x38] sm:$0xff] %v1467
        %1547 = vst [vmem:[#allocation3 + $0x40] sm:$0xff] %v1292
        %1548 = vst [vmem:[#allocation3 + $0x48] sm:$0xff] %v1470
        %1549 = vst [vmem:[#allocation3 + $0x50] sm:$0xff] %v1294
        %1550 = vst [vmem:[#allocation3 + $0x58] sm:$0xff] %v1472
        %1551 = vst [vmem:[#allocation3 + $0x60] sm:$0xff] %v1297
        %1552 = vst [vmem:[#allocation3 + $0x68] sm:$0xff] %v1475
        %1553 = vst [vmem:[#allocation3 + $0x70] sm:$0xff] %v1299
        %1554 = vst [vmem:[#allocation3 + $0x78] sm:$0xff] %v1477
        %1555 = vst [vmem:[#allocation3 + $0x80] sm:$0xff] %v1302
        %1556 = vst [vmem:[#allocation3 + $0x88] sm:$0xff] %v1480
        %1557 = vst [vmem:[#allocation3 + $0x90] sm:$0xff] %v1304
        %1558 = vst [vmem:[#allocation3 + $0x98] sm:$0xff] %v1482
        %1559 = vst [vmem:[#allocation3 + $0xa0] sm:$0xff] %v1307
        %1560 = vst [vmem:[#allocation3 + $0xa8] sm:$0xff] %v1485
        %1561 = vst [vmem:[#allocation3 + $0xb0] sm:$0xff] %v1309
        %1562 = vst [vmem:[#allocation3 + $0xb8] sm:$0xff] %v1487
        %1563 = vst [vmem:[#allocation3 + $0xc0] sm:$0xff] %v1312
        %1564 = vst [vmem:[#allocation3 + $0xc8] sm:$0xff] %v1490
        %1565 = vst [vmem:[#allocation3 + $0xd0] sm:$0xff] %v1314
        %1566 = vst [vmem:[#allocation3 + $0xd8] sm:$0xff] %v1492
        %1567 = vst [vmem:[#allocation3 + $0xe0] sm:$0xff] %v1317
        %1568 = vst [vmem:[#allocation3 + $0xe8] sm:$0xff] %v1495
        %1569 = vst [vmem:[#allocation3 + $0xf0] sm:$0xff] %v1319
        %1570 = vst [vmem:[#allocation3 + $0xf8] sm:$0xff] %v1497
        %1571 = vst [vmem:[#allocation3 + $0x100] sm:$0xff] %v1322
        %1572 = vst [vmem:[#allocation3 + $0x108] sm:$0xff] %v1500
        %1573 = vst [vmem:[#allocation3 + $0x110] sm:$0xff] %v1324
        %1574 = vst [vmem:[#allocation3 + $0x118] sm:$0xff] %v1502
        %1575 = vst [vmem:[#allocation3 + $0x120] sm:$0xff] %v1327
        %1576 = vst [vmem:[#allocation3 + $0x128] sm:$0xff] %v1505
        %1577 = vst [vmem:[#allocation3 + $0x130] sm:$0xff] %v1329
        %1578 = vst [vmem:[#allocation3 + $0x138] sm:$0xff] %v1507
        %1579 = vst [vmem:[#allocation3 + $0x140] sm:$0xff] %v1332
        %1580 = vst [vmem:[#allocation3 + $0x148] sm:$0xff] %v1510
        %1581 = vst [vmem:[#allocation3 + $0x150] sm:$0xff] %v1334
        %1582 = vst [vmem:[#allocation3 + $0x158] sm:$0xff] %v1512
        %1583 = vst [vmem:[#allocation3 + $0x160] sm:$0xff] %v1337
        %1584 = vst [vmem:[#allocation3 + $0x168] sm:$0xff] %v1515
        %1585 = vst [vmem:[#allocation3 + $0x170] sm:$0xff] %v1339
        %1586 = vst [vmem:[#allocation3 + $0x178] sm:$0xff] %v1517
        %1587 = vst [vmem:[#allocation3 + $0x180] sm:$0xff] %v1342
        %1588 = vst [vmem:[#allocation3 + $0x188] sm:$0xff] %v1520
        %1589 = vst [vmem:[#allocation3 + $0x190] sm:$0xff] %v1344
        %1590 = vst [vmem:[#allocation3 + $0x198] sm:$0xff] %v1522
        %1591 = vst [vmem:[#allocation3 + $0x1a0] sm:$0xff] %v1347
        %1592 = vst [vmem:[#allocation3 + $0x1a8] sm:$0xff] %v1525
        %1593 = vst [vmem:[#allocation3 + $0x1b0] sm:$0xff] %v1349
        %1594 = vst [vmem:[#allocation3 + $0x1b8] sm:$0xff] %v1527
        %1595 = vst [vmem:[#allocation3 + $0x1c0] sm:$0xff] %v1352
        %1596 = vst [vmem:[#allocation3 + $0x1c8] sm:$0xff] %v1530
        %1597 = vst [vmem:[#allocation3 + $0x1d0] sm:$0xff] %v1354
        %1598 = vst [vmem:[#allocation3 + $0x1d8] sm:$0xff] %v1532
        %1599 = vst [vmem:[#allocation3 + $0x1e0] sm:$0xff] %v1357
        %1600 = vst [vmem:[#allocation3 + $0x1e8] sm:$0xff] %v1535
        %1601 = vst [vmem:[#allocation3 + $0x1f0] sm:$0xff] %v1359
        %1602 = vst [vmem:[#allocation3 + $0x1f8] sm:$0xff] %v1537
        %s1603 = scalar_lea.vmem %s2, 32
        %v1604 = vld [vmem:[%s1603] sm:$0xff]
        %v1606 = vunpack.c.l.b16 %v1604
        %v1607 = vunpack.c.h.b16 %v1604
        %v1608 = vpack.c.b16 %v1606, %v1606
        %v1609 = vpack.c.b16 %v1607, %v1607
        %v1611 = vsel %vm570, %v1608, 0
        %v1614 = vsel %vm570, %v1609, 0
        %1616 = vmatpush.bf16.msra.mxu0 0
        %1617 = vmatpush.bf16.msra.mxu0 0
        %1618 = vmatpush.bf16.msra.mxu0 0
        %1619 = vmatpush.bf16.msra.mxu0 0
        %1620 = vmatpush.bf16.msra.mxu0 0
        %1621 = vmatpush.bf16.msra.mxu0 0
        %1622 = vmatpush.bf16.msra.mxu0 0
        %1623 = vmatpush.bf16.msra.mxu0 %v1611
        %1624 = vmatmul.bf16.gmra.mxu0 %v523
        %v1625 = vpop.f32.mrf.mxu0
        %v1626 = vadd.f32 0.0, %v1625
        %v1627 = vpop.f32.mrf.mxu0
        %v1628 = vadd.f32 0.0, %v1627
        %1629 = vmatmul.bf16.gmra.mxu0 %v526
        %v1630 = vpop.f32.mrf.mxu0
        %v1631 = vadd.f32 0.0, %v1630
        %v1632 = vpop.f32.mrf.mxu0
        %v1633 = vadd.f32 0.0, %v1632
        %1634 = vmatmul.bf16.gmra.mxu0 %v529
        %v1635 = vpop.f32.mrf.mxu0
        %v1636 = vadd.f32 0.0, %v1635
        %v1637 = vpop.f32.mrf.mxu0
        %v1638 = vadd.f32 0.0, %v1637
        %1639 = vmatmul.bf16.gmra.mxu0 %v532
        %v1640 = vpop.f32.mrf.mxu0
        %v1641 = vadd.f32 0.0, %v1640
        %v1642 = vpop.f32.mrf.mxu0
        %v1643 = vadd.f32 0.0, %v1642
        %1644 = vmatmul.bf16.gmra.mxu0 %v535
        %v1645 = vpop.f32.mrf.mxu0
        %v1646 = vadd.f32 0.0, %v1645
        %v1647 = vpop.f32.mrf.mxu0
        %v1648 = vadd.f32 0.0, %v1647
        %1649 = vmatmul.bf16.gmra.mxu0 %v538
        %v1650 = vpop.f32.mrf.mxu0
        %v1651 = vadd.f32 0.0, %v1650
        %v1652 = vpop.f32.mrf.mxu0
        %v1653 = vadd.f32 0.0, %v1652
        %1654 = vmatmul.bf16.gmra.mxu0 %v541
        %v1655 = vpop.f32.mrf.mxu0
        %v1656 = vadd.f32 0.0, %v1655
        %v1657 = vpop.f32.mrf.mxu0
        %v1658 = vadd.f32 0.0, %v1657
        %1659 = vmatmul.bf16.gmra.mxu0 %v544
        %v1660 = vpop.f32.mrf.mxu0
        %v1661 = vadd.f32 0.0, %v1660
        %v1662 = vpop.f32.mrf.mxu0
        %v1663 = vadd.f32 0.0, %v1662
        %1664 = vmatmul.bf16.gmra.mxu0 %v547
        %v1665 = vpop.f32.mrf.mxu0
        %v1666 = vadd.f32 0.0, %v1665
        %v1667 = vpop.f32.mrf.mxu0
        %v1668 = vadd.f32 0.0, %v1667
        %1669 = vmatmul.bf16.gmra.mxu0 %v550
        %v1670 = vpop.f32.mrf.mxu0
        %v1671 = vadd.f32 0.0, %v1670
        %v1672 = vpop.f32.mrf.mxu0
        %v1673 = vadd.f32 0.0, %v1672
        %1674 = vmatmul.bf16.gmra.mxu0 %v553
        %v1675 = vpop.f32.mrf.mxu0
        %v1676 = vadd.f32 0.0, %v1675
        %v1677 = vpop.f32.mrf.mxu0
        %v1678 = vadd.f32 0.0, %v1677
        %1679 = vmatmul.bf16.gmra.mxu0 %v556
        %v1680 = vpop.f32.mrf.mxu0
        %v1681 = vadd.f32 0.0, %v1680
        %v1682 = vpop.f32.mrf.mxu0
        %v1683 = vadd.f32 0.0, %v1682
        %1684 = vmatmul.bf16.gmra.mxu0 %v559
        %v1685 = vpop.f32.mrf.mxu0
        %v1686 = vadd.f32 0.0, %v1685
        %v1687 = vpop.f32.mrf.mxu0
        %v1688 = vadd.f32 0.0, %v1687
        %1689 = vmatmul.bf16.gmra.mxu0 %v562
        %v1690 = vpop.f32.mrf.mxu0
        %v1691 = vadd.f32 0.0, %v1690
        %v1692 = vpop.f32.mrf.mxu0
        %v1693 = vadd.f32 0.0, %v1692
        %1694 = vmatmul.bf16.gmra.mxu0 %v565
        %v1695 = vpop.f32.mrf.mxu0
        %v1696 = vadd.f32 0.0, %v1695
        %v1697 = vpop.f32.mrf.mxu0
        %v1698 = vadd.f32 0.0, %v1697
        %1699 = vmatmul.bf16.gmra.mxu0 %v568
        %v1700 = vpop.f32.mrf.mxu0
        %v1701 = vadd.f32 0.0, %v1700
        %v1702 = vpop.f32.mrf.mxu0
        %v1703 = vadd.f32 0.0, %v1702
        %1704 = vdwg.mxu0
        %1705 = vmatpush.bf16.msra.mxu0 0
        %1706 = vmatpush.bf16.msra.mxu0 0
        %1707 = vmatpush.bf16.msra.mxu0 0
        %1708 = vmatpush.bf16.msra.mxu0 0
        %1709 = vmatpush.bf16.msra.mxu0 0
        %1710 = vmatpush.bf16.msra.mxu0 0
        %1711 = vmatpush.bf16.msra.mxu0 0
        %1712 = vmatpush.bf16.msra.mxu0 %v1614
        %1713 = vmatmul.bf16.gmra.mxu0 %v523
        %v1714 = vpop.f32.mrf.mxu0
        %v1715 = vadd.f32 0.0, %v1714
        %v1716 = vpop.f32.mrf.mxu0
        %v1717 = vadd.f32 0.0, %v1716
        %1718 = vmatmul.bf16.gmra.mxu0 %v526
        %v1719 = vpop.f32.mrf.mxu0
        %v1720 = vadd.f32 0.0, %v1719
        %v1721 = vpop.f32.mrf.mxu0
        %v1722 = vadd.f32 0.0, %v1721
        %1723 = vmatmul.bf16.gmra.mxu0 %v529
        %v1724 = vpop.f32.mrf.mxu0
        %v1725 = vadd.f32 0.0, %v1724
        %v1726 = vpop.f32.mrf.mxu0
        %v1727 = vadd.f32 0.0, %v1726
        %1728 = vmatmul.bf16.gmra.mxu0 %v532
        %v1729 = vpop.f32.mrf.mxu0
        %v1730 = vadd.f32 0.0, %v1729
        %v1731 = vpop.f32.mrf.mxu0
        %v1732 = vadd.f32 0.0, %v1731
        %1733 = vmatmul.bf16.gmra.mxu0 %v535
        %v1734 = vpop.f32.mrf.mxu0
        %v1735 = vadd.f32 0.0, %v1734
        %v1736 = vpop.f32.mrf.mxu0
        %v1737 = vadd.f32 0.0, %v1736
        %1738 = vmatmul.bf16.gmra.mxu0 %v538
        %v1739 = vpop.f32.mrf.mxu0
        %v1740 = vadd.f32 0.0, %v1739
        %v1741 = vpop.f32.mrf.mxu0
        %v1742 = vadd.f32 0.0, %v1741
        %1743 = vmatmul.bf16.gmra.mxu0 %v541
        %v1744 = vpop.f32.mrf.mxu0
        %v1745 = vadd.f32 0.0, %v1744
        %v1746 = vpop.f32.mrf.mxu0
        %v1747 = vadd.f32 0.0, %v1746
        %1748 = vmatmul.bf16.gmra.mxu0 %v544
        %v1749 = vpop.f32.mrf.mxu0
        %v1750 = vadd.f32 0.0, %v1749
        %v1751 = vpop.f32.mrf.mxu0
        %v1752 = vadd.f32 0.0, %v1751
        %1753 = vmatmul.bf16.gmra.mxu0 %v547
        %v1754 = vpop.f32.mrf.mxu0
        %v1755 = vadd.f32 0.0, %v1754
        %v1756 = vpop.f32.mrf.mxu0
        %v1757 = vadd.f32 0.0, %v1756
        %1758 = vmatmul.bf16.gmra.mxu0 %v550
        %v1759 = vpop.f32.mrf.mxu0
        %v1760 = vadd.f32 0.0, %v1759
        %v1761 = vpop.f32.mrf.mxu0
        %v1762 = vadd.f32 0.0, %v1761
        %1763 = vmatmul.bf16.gmra.mxu0 %v553
        %v1764 = vpop.f32.mrf.mxu0
        %v1765 = vadd.f32 0.0, %v1764
        %v1766 = vpop.f32.mrf.mxu0
        %v1767 = vadd.f32 0.0, %v1766
        %1768 = vmatmul.bf16.gmra.mxu0 %v556
        %v1769 = vpop.f32.mrf.mxu0
        %v1770 = vadd.f32 0.0, %v1769
        %v1771 = vpop.f32.mrf.mxu0
        %v1772 = vadd.f32 0.0, %v1771
        %1773 = vmatmul.bf16.gmra.mxu0 %v559
        %v1774 = vpop.f32.mrf.mxu0
        %v1775 = vadd.f32 0.0, %v1774
        %v1776 = vpop.f32.mrf.mxu0
        %v1777 = vadd.f32 0.0, %v1776
        %1778 = vmatmul.bf16.gmra.mxu0 %v562
        %v1779 = vpop.f32.mrf.mxu0
        %v1780 = vadd.f32 0.0, %v1779
        %v1781 = vpop.f32.mrf.mxu0
        %v1782 = vadd.f32 0.0, %v1781
        %1783 = vmatmul.bf16.gmra.mxu0 %v565
        %v1784 = vpop.f32.mrf.mxu0
        %v1785 = vadd.f32 0.0, %v1784
        %v1786 = vpop.f32.mrf.mxu0
        %v1787 = vadd.f32 0.0, %v1786
        %1788 = vmatmul.bf16.gmra.mxu0 %v568
        %v1789 = vpop.f32.mrf.mxu0
        %v1790 = vadd.f32 0.0, %v1789
        %v1791 = vpop.f32.mrf.mxu0
        %v1792 = vadd.f32 0.0, %v1791
        %1793 = vdwg.mxu0
        %1794 = vst [vmem:[#allocation2] sm:$0xff] %v1626
        %1795 = vst [vmem:[#allocation2 + $0x8] sm:$0xff] %v1715
        %1796 = vst [vmem:[#allocation2 + $0x10] sm:$0xff] %v1628
        %1797 = vst [vmem:[#allocation2 + $0x18] sm:$0xff] %v1717
        %1798 = vst [vmem:[#allocation2 + $0x20] sm:$0xff] %v1631
        %1799 = vst [vmem:[#allocation2 + $0x28] sm:$0xff] %v1720
        %1800 = vst [vmem:[#allocation2 + $0x30] sm:$0xff] %v1633
        %1801 = vst [vmem:[#allocation2 + $0x38] sm:$0xff] %v1722
        %1802 = vst [vmem:[#allocation2 + $0x40] sm:$0xff] %v1636
        %1803 = vst [vmem:[#allocation2 + $0x48] sm:$0xff] %v1725
        %1804 = vst [vmem:[#allocation2 + $0x50] sm:$0xff] %v1638
        %1805 = vst [vmem:[#allocation2 + $0x58] sm:$0xff] %v1727
        %1806 = vst [vmem:[#allocation2 + $0x60] sm:$0xff] %v1641
        %1807 = vst [vmem:[#allocation2 + $0x68] sm:$0xff] %v1730
        %1808 = vst [vmem:[#allocation2 + $0x70] sm:$0xff] %v1643
        %1809 = vst [vmem:[#allocation2 + $0x78] sm:$0xff] %v1732
        %1810 = vst [vmem:[#allocation2 + $0x80] sm:$0xff] %v1646
        %1811 = vst [vmem:[#allocation2 + $0x88] sm:$0xff] %v1735
        %1812 = vst [vmem:[#allocation2 + $0x90] sm:$0xff] %v1648
        %1813 = vst [vmem:[#allocation2 + $0x98] sm:$0xff] %v1737
        %1814 = vst [vmem:[#allocation2 + $0xa0] sm:$0xff] %v1651
        %1815 = vst [vmem:[#allocation2 + $0xa8] sm:$0xff] %v1740
        %1816 = vst [vmem:[#allocation2 + $0xb0] sm:$0xff] %v1653
        %1817 = vst [vmem:[#allocation2 + $0xb8] sm:$0xff] %v1742
        %1818 = vst [vmem:[#allocation2 + $0xc0] sm:$0xff] %v1656
        %1819 = vst [vmem:[#allocation2 + $0xc8] sm:$0xff] %v1745
        %1820 = vst [vmem:[#allocation2 + $0xd0] sm:$0xff] %v1658
        %1821 = vst [vmem:[#allocation2 + $0xd8] sm:$0xff] %v1747
        %1822 = vst [vmem:[#allocation2 + $0xe0] sm:$0xff] %v1661
        %1823 = vst [vmem:[#allocation2 + $0xe8] sm:$0xff] %v1750
        %1824 = vst [vmem:[#allocation2 + $0xf0] sm:$0xff] %v1663
        %1825 = vst [vmem:[#allocation2 + $0xf8] sm:$0xff] %v1752
        %1826 = vst [vmem:[#allocation2 + $0x100] sm:$0xff] %v1666
        %1827 = vst [vmem:[#allocation2 + $0x108] sm:$0xff] %v1755
        %1828 = vst [vmem:[#allocation2 + $0x110] sm:$0xff] %v1668
        %1829 = vst [vmem:[#allocation2 + $0x118] sm:$0xff] %v1757
        %1830 = vst [vmem:[#allocation2 + $0x120] sm:$0xff] %v1671
        %1831 = vst [vmem:[#allocation2 + $0x128] sm:$0xff] %v1760
        %1832 = vst [vmem:[#allocation2 + $0x130] sm:$0xff] %v1673
        %1833 = vst [vmem:[#allocation2 + $0x138] sm:$0xff] %v1762
        %1834 = vst [vmem:[#allocation2 + $0x140] sm:$0xff] %v1676
        %1835 = vst [vmem:[#allocation2 + $0x148] sm:$0xff] %v1765
        %1836 = vst [vmem:[#allocation2 + $0x150] sm:$0xff] %v1678
        %1837 = vst [vmem:[#allocation2 + $0x158] sm:$0xff] %v1767
        %1838 = vst [vmem:[#allocation2 + $0x160] sm:$0xff] %v1681
        %1839 = vst [vmem:[#allocation2 + $0x168] sm:$0xff] %v1770
        %1840 = vst [vmem:[#allocation2 + $0x170] sm:$0xff] %v1683
        %1841 = vst [vmem:[#allocation2 + $0x178] sm:$0xff] %v1772
        %1842 = vst [vmem:[#allocation2 + $0x180] sm:$0xff] %v1686
        %1843 = vst [vmem:[#allocation2 + $0x188] sm:$0xff] %v1775
        %1844 = vst [vmem:[#allocation2 + $0x190] sm:$0xff] %v1688
        %1845 = vst [vmem:[#allocation2 + $0x198] sm:$0xff] %v1777
        %1846 = vst [vmem:[#allocation2 + $0x1a0] sm:$0xff] %v1691
        %1847 = vst [vmem:[#allocation2 + $0x1a8] sm:$0xff] %v1780
        %1848 = vst [vmem:[#allocation2 + $0x1b0] sm:$0xff] %v1693
        %1849 = vst [vmem:[#allocation2 + $0x1b8] sm:$0xff] %v1782
        %1850 = vst [vmem:[#allocation2 + $0x1c0] sm:$0xff] %v1696
        %1851 = vst [vmem:[#allocation2 + $0x1c8] sm:$0xff] %v1785
        %1852 = vst [vmem:[#allocation2 + $0x1d0] sm:$0xff] %v1698
        %1853 = vst [vmem:[#allocation2 + $0x1d8] sm:$0xff] %v1787
        %1854 = vst [vmem:[#allocation2 + $0x1e0] sm:$0xff] %v1701
        %1855 = vst [vmem:[#allocation2 + $0x1e8] sm:$0xff] %v1790
        %1856 = vst [vmem:[#allocation2 + $0x1f0] sm:$0xff] %v1703
        %1857 = vst [vmem:[#allocation2 + $0x1f8] sm:$0xff] %v1792
        %v1858 = vld [vmem:[%s401] sm:$0xf]
        %v1859 = vld [vmem:[%s401 + $0x4] sm:$0xf]
        %v1860 = vld [vmem:[%s401 + $0x8] sm:$0xf]
        %v1861 = vld [vmem:[%s401 + $0xc] sm:$0xf]
        %v1862 = vld [vmem:[%s401 + $0x10] sm:$0xf]
        %v1863 = vld [vmem:[%s401 + $0x14] sm:$0xf]
        %v1864 = vld [vmem:[%s401 + $0x18] sm:$0xf]
        %v1865 = vld [vmem:[%s401 + $0x1c] sm:$0xf]
        %v1866 = vld [vmem:[%s2] sm:$0xff]
        %v1875 = vunpack.c.l.b16 %v1858
        %v1876 = vunpack.c.l.b16 %v1859
        %v1877 = vunpack.c.l.b16 %v1860
        %v1878 = vunpack.c.l.b16 %v1861
        %v1879 = vunpack.c.l.b16 %v1862
        %v1880 = vunpack.c.l.b16 %v1863
        %v1881 = vunpack.c.l.b16 %v1864
        %v1882 = vunpack.c.l.b16 %v1865
        %v1883 = vpack.c.b16 %v1876, %v1875
        %v1884 = vpack.c.b16 %v1878, %v1877
        %v1885 = vpack.c.b16 %v1880, %v1879
        %v1886 = vpack.c.b16 %v1882, %v1881
        %v1888 = vunpack.c.l.b16 %v1866
        %v1889 = vunpack.c.h.b16 %v1866
        %v1890 = vpack.c.b16 %v1888, %v1888
        %v1891 = vpack.c.b16 %v1889, %v1889
        %v1893 = vsel %vm521, %v1883, 0
        %v1896 = vsel %vm521, %v1884, 0
        %v1899 = vsel %vm521, %v1885, 0
        %v1902 = vsel %vm521, %v1886, 0
        %v1905 = vsel %vm570, %v1890, 0
        %v1908 = vsel %vm570, %v1891, 0
        %1910 = vmatpush.bf16.msra.mxu0 0
        %1911 = vmatpush.bf16.msra.mxu0 0
        %1912 = vmatpush.bf16.msra.mxu0 0
        %1913 = vmatpush.bf16.msra.mxu0 0
        %1914 = vmatpush.bf16.msra.mxu0 0
        %1915 = vmatpush.bf16.msra.mxu0 0
        %1916 = vmatpush.bf16.msra.mxu0 0
        %1917 = vmatpush.bf16.msra.mxu0 %v1905
        %1918 = vmatmul.bf16.gmra.mxu0 %v1893
        %v1919 = vpop.f32.mrf.mxu0
        %v1920 = vadd.f32 0.0, %v1919
        %v1921 = vpop.f32.mrf.mxu0
        %1922 = vmatmul.bf16.gmra.mxu0 %v1896
        %v1923 = vpop.f32.mrf.mxu0
        %v1924 = vadd.f32 0.0, %v1923
        %v1925 = vpop.f32.mrf.mxu0
        %1926 = vmatmul.bf16.gmra.mxu0 %v1899
        %v1927 = vpop.f32.mrf.mxu0
        %v1928 = vadd.f32 0.0, %v1927
        %v1929 = vpop.f32.mrf.mxu0
        %1930 = vmatmul.bf16.gmra.mxu0 %v1902
        %v1931 = vpop.f32.mrf.mxu0
        %v1932 = vadd.f32 0.0, %v1931
        %v1933 = vpop.f32.mrf.mxu0
        %1934 = vdwg.mxu0
        %1935 = vmatpush.bf16.msra.mxu0 0
        %1936 = vmatpush.bf16.msra.mxu0 0
        %1937 = vmatpush.bf16.msra.mxu0 0
        %1938 = vmatpush.bf16.msra.mxu0 0
        %1939 = vmatpush.bf16.msra.mxu0 0
        %1940 = vmatpush.bf16.msra.mxu0 0
        %1941 = vmatpush.bf16.msra.mxu0 0
        %1942 = vmatpush.bf16.msra.mxu0 %v1908
        %1943 = vmatmul.bf16.gmra.mxu0 %v1893
        %v1944 = vpop.f32.mrf.mxu0
        %v1945 = vadd.f32 0.0, %v1944
        %v1946 = vpop.f32.mrf.mxu0
        %1947 = vmatmul.bf16.gmra.mxu0 %v1896
        %v1948 = vpop.f32.mrf.mxu0
        %v1949 = vadd.f32 0.0, %v1948
        %v1950 = vpop.f32.mrf.mxu0
        %1951 = vmatmul.bf16.gmra.mxu0 %v1899
        %v1952 = vpop.f32.mrf.mxu0
        %v1953 = vadd.f32 0.0, %v1952
        %v1954 = vpop.f32.mrf.mxu0
        %1955 = vmatmul.bf16.gmra.mxu0 %v1902
        %v1956 = vpop.f32.mrf.mxu0
        %v1957 = vadd.f32 0.0, %v1956
        %v1958 = vpop.f32.mrf.mxu0
        %1959 = vdwg.mxu0
        %s1960 = scalar_lea.vmem [#allocation2], 384
        %v1961 = vld [vmem:[%s1960 + $0x10] sm:$0xf0]
        %v1962 = vld [vmem:[%s1960 + $0x18] sm:$0xf0]
        %v1963 = vld [vmem:[%s1960 + $0x30] sm:$0xf0]
        %v1964 = vld [vmem:[%s1960 + $0x38] sm:$0xf0]
        %v1965 = vld [vmem:[%s1960 + $0x50] sm:$0xf0]
        %v1966 = vld [vmem:[%s1960 + $0x58] sm:$0xf0]
        %v1967 = vld [vmem:[%s1960 + $0x70] sm:$0xf0]
        %v1968 = vld [vmem:[%s1960 + $0x78] sm:$0xf0]
        %v1977 = vrot.slane %v1920, 4
        %v1978 = vrot.slane %v1945, 4
        %v1979 = vrot.slane %v1924, 4
        %v1980 = vrot.slane %v1949, 4
        %v1981 = vrot.slane %v1928, 4
        %v1982 = vrot.slane %v1953, 4
        %v1983 = vrot.slane %v1932, 4
        %v1984 = vrot.slane %v1957, 4
        %v1993 = vadd.f32 %v1961, %v1977
        %v1994 = vadd.f32 %v1962, %v1978
        %v1995 = vadd.f32 %v1963, %v1979
        %v1996 = vadd.f32 %v1964, %v1980
        %v1997 = vadd.f32 %v1965, %v1981
        %v1998 = vadd.f32 %v1966, %v1982
        %v1999 = vadd.f32 %v1967, %v1983
        %v2000 = vadd.f32 %v1968, %v1984
        %2001 = vst [vmem:[%s1960 + $0x10] sm:$0xf0] %v1993
        %2002 = vst [vmem:[%s1960 + $0x18] sm:$0xf0] %v1994
        %2003 = vst [vmem:[%s1960 + $0x30] sm:$0xf0] %v1995
        %2004 = vst [vmem:[%s1960 + $0x38] sm:$0xf0] %v1996
        %2005 = vst [vmem:[%s1960 + $0x50] sm:$0xf0] %v1997
        %2006 = vst [vmem:[%s1960 + $0x58] sm:$0xf0] %v1998
        %2007 = vst [vmem:[%s1960 + $0x70] sm:$0xf0] %v1999
        %2008 = vst [vmem:[%s1960 + $0x78] sm:$0xf0] %v2000
        %v2009 = vld [vmem:[%s401] sm:$0xf]
        %v2010 = vld [vmem:[%s401 + $0x4] sm:$0xf]
        %v2011 = vld [vmem:[%s401 + $0x8] sm:$0xf]
        %v2012 = vld [vmem:[%s401 + $0xc] sm:$0xf]
        %v2013 = vld [vmem:[%s401 + $0x10] sm:$0xf]
        %v2014 = vld [vmem:[%s401 + $0x14] sm:$0xf]
        %v2015 = vld [vmem:[%s401 + $0x18] sm:$0xf]
        %v2016 = vld [vmem:[%s401 + $0x1c] sm:$0xf]
        %s2017 = scalar_lea.vmem %s2, 8
        %v2018 = vld [vmem:[%s2017] sm:$0xff]
        %v2027 = vunpack.c.l.b16 %v2009
        %v2028 = vunpack.c.l.b16 %v2010
        %v2029 = vunpack.c.l.b16 %v2011
        %v2030 = vunpack.c.l.b16 %v2012
        %v2031 = vunpack.c.l.b16 %v2013
        %v2032 = vunpack.c.l.b16 %v2014
        %v2033 = vunpack.c.l.b16 %v2015
        %v2034 = vunpack.c.l.b16 %v2016
        %v2035 = vpack.c.b16 %v2028, %v2027
        %v2036 = vpack.c.b16 %v2030, %v2029
        %v2037 = vpack.c.b16 %v2032, %v2031
        %v2038 = vpack.c.b16 %v2034, %v2033
        %v2040 = vunpack.c.l.b16 %v2018
        %v2041 = vunpack.c.h.b16 %v2018
        %v2042 = vpack.c.b16 %v2040, %v2040
        %v2043 = vpack.c.b16 %v2041, %v2041
        %v2045 = vsel %vm521, %v2035, 0
        %v2048 = vsel %vm521, %v2036, 0
        %v2051 = vsel %vm521, %v2037, 0
        %v2054 = vsel %vm521, %v2038, 0
        %v2057 = vsel %vm570, %v2042, 0
        %v2060 = vsel %vm570, %v2043, 0
        %2062 = vmatpush.bf16.msra.mxu0 0
        %2063 = vmatpush.bf16.msra.mxu0 0
        %2064 = vmatpush.bf16.msra.mxu0 0
        %2065 = vmatpush.bf16.msra.mxu0 0
        %2066 = vmatpush.bf16.msra.mxu0 0
        %2067 = vmatpush.bf16.msra.mxu0 0
        %2068 = vmatpush.bf16.msra.mxu0 0
        %2069 = vmatpush.bf16.msra.mxu0 %v2057
        %2070 = vmatmul.bf16.gmra.mxu0 %v2045
        %v2071 = vpop.f32.mrf.mxu0
        %v2072 = vadd.f32 0.0, %v2071
        %v2073 = vpop.f32.mrf.mxu0
        %v2074 = vadd.f32 0.0, %v2073
        %2075 = vmatmul.bf16.gmra.mxu0 %v2048
        %v2076 = vpop.f32.mrf.mxu0
        %v2077 = vadd.f32 0.0, %v2076
        %v2078 = vpop.f32.mrf.mxu0
        %v2079 = vadd.f32 0.0, %v2078
        %2080 = vmatmul.bf16.gmra.mxu0 %v2051
        %v2081 = vpop.f32.mrf.mxu0
        %v2082 = vadd.f32 0.0, %v2081
        %v2083 = vpop.f32.mrf.mxu0
        %v2084 = vadd.f32 0.0, %v2083
        %2085 = vmatmul.bf16.gmra.mxu0 %v2054
        %v2086 = vpop.f32.mrf.mxu0
        %v2087 = vadd.f32 0.0, %v2086
        %v2088 = vpop.f32.mrf.mxu0
        %v2089 = vadd.f32 0.0, %v2088
        %2090 = vdwg.mxu0
        %2091 = vmatpush.bf16.msra.mxu0 0
        %2092 = vmatpush.bf16.msra.mxu0 0
        %2093 = vmatpush.bf16.msra.mxu0 0
        %2094 = vmatpush.bf16.msra.mxu0 0
        %2095 = vmatpush.bf16.msra.mxu0 0
        %2096 = vmatpush.bf16.msra.mxu0 0
        %2097 = vmatpush.bf16.msra.mxu0 0
        %2098 = vmatpush.bf16.msra.mxu0 %v2060
        %2099 = vmatmul.bf16.gmra.mxu0 %v2045
        %v2100 = vpop.f32.mrf.mxu0
        %v2101 = vadd.f32 0.0, %v2100
        %v2102 = vpop.f32.mrf.mxu0
        %v2103 = vadd.f32 0.0, %v2102
        %2104 = vmatmul.bf16.gmra.mxu0 %v2048
        %v2105 = vpop.f32.mrf.mxu0
        %v2106 = vadd.f32 0.0, %v2105
        %v2107 = vpop.f32.mrf.mxu0
        %v2108 = vadd.f32 0.0, %v2107
        %2109 = vmatmul.bf16.gmra.mxu0 %v2051
        %v2110 = vpop.f32.mrf.mxu0
        %v2111 = vadd.f32 0.0, %v2110
        %v2112 = vpop.f32.mrf.mxu0
        %v2113 = vadd.f32 0.0, %v2112
        %2114 = vmatmul.bf16.gmra.mxu0 %v2054
        %v2115 = vpop.f32.mrf.mxu0
        %v2116 = vadd.f32 0.0, %v2115
        %v2117 = vpop.f32.mrf.mxu0
        %v2118 = vadd.f32 0.0, %v2117
        %2119 = vdwg.mxu0
        %v2120 = vld [vmem:[%s1960] sm:$0xff]
        %v2121 = vld [vmem:[%s1960 + $0x8] sm:$0xff]
        %v2122 = vld [vmem:[%s1960 + $0x10] sm:$0xff]
        %v2123 = vld [vmem:[%s1960 + $0x18] sm:$0xff]
        %v2124 = vld [vmem:[%s1960 + $0x20] sm:$0xff]
        %v2125 = vld [vmem:[%s1960 + $0x28] sm:$0xff]
        %v2126 = vld [vmem:[%s1960 + $0x30] sm:$0xff]
        %v2127 = vld [vmem:[%s1960 + $0x38] sm:$0xff]
        %v2128 = vld [vmem:[%s1960 + $0x40] sm:$0xff]
        %v2129 = vld [vmem:[%s1960 + $0x48] sm:$0xff]
        %v2130 = vld [vmem:[%s1960 + $0x50] sm:$0xff]
        %v2131 = vld [vmem:[%s1960 + $0x58] sm:$0xff]
        %v2132 = vld [vmem:[%s1960 + $0x60] sm:$0xff]
        %v2133 = vld [vmem:[%s1960 + $0x68] sm:$0xff]
        %v2134 = vld [vmem:[%s1960 + $0x70] sm:$0xff]
        %v2135 = vld [vmem:[%s1960 + $0x78] sm:$0xff]
        %v2136 = vadd.f32 %v2120, %v2072
        %v2137 = vadd.f32 %v2121, %v2101
        %v2138 = vadd.f32 %v2122, %v2074
        %v2139 = vadd.f32 %v2123, %v2103
        %v2140 = vadd.f32 %v2124, %v2077
        %v2141 = vadd.f32 %v2125, %v2106
        %v2142 = vadd.f32 %v2126, %v2079
        %v2143 = vadd.f32 %v2127, %v2108
        %v2144 = vadd.f32 %v2128, %v2082
        %v2145 = vadd.f32 %v2129, %v2111
        %v2146 = vadd.f32 %v2130, %v2084
        %v2147 = vadd.f32 %v2131, %v2113
        %v2148 = vadd.f32 %v2132, %v2087
        %v2149 = vadd.f32 %v2133, %v2116
        %v2150 = vadd.f32 %v2134, %v2089
        %v2151 = vadd.f32 %v2135, %v2118
        %2152 = vst [vmem:[%s1960] sm:$0xff] %v2136
        %2153 = vst [vmem:[%s1960 + $0x8] sm:$0xff] %v2137
        %2154 = vst [vmem:[%s1960 + $0x10] sm:$0xff] %v2138
        %2155 = vst [vmem:[%s1960 + $0x18] sm:$0xff] %v2139
        %2156 = vst [vmem:[%s1960 + $0x20] sm:$0xff] %v2140
        %2157 = vst [vmem:[%s1960 + $0x28] sm:$0xff] %v2141
        %2158 = vst [vmem:[%s1960 + $0x30] sm:$0xff] %v2142
        %2159 = vst [vmem:[%s1960 + $0x38] sm:$0xff] %v2143
        %2160 = vst [vmem:[%s1960 + $0x40] sm:$0xff] %v2144
        %2161 = vst [vmem:[%s1960 + $0x48] sm:$0xff] %v2145
        %2162 = vst [vmem:[%s1960 + $0x50] sm:$0xff] %v2146
        %2163 = vst [vmem:[%s1960 + $0x58] sm:$0xff] %v2147
        %2164 = vst [vmem:[%s1960 + $0x60] sm:$0xff] %v2148
        %2165 = vst [vmem:[%s1960 + $0x68] sm:$0xff] %v2149
        %2166 = vst [vmem:[%s1960 + $0x70] sm:$0xff] %v2150
        %2167 = vst [vmem:[%s1960 + $0x78] sm:$0xff] %v2151
        %v2168 = vld [vmem:[%s401] sm:$0xf]
        %v2169 = vld [vmem:[%s401 + $0x4] sm:$0xf]
        %v2170 = vld [vmem:[%s401 + $0x8] sm:$0xf]
        %v2171 = vld [vmem:[%s401 + $0xc] sm:$0xf]
        %v2172 = vld [vmem:[%s401 + $0x10] sm:$0xf]
        %v2173 = vld [vmem:[%s401 + $0x14] sm:$0xf]
        %v2174 = vld [vmem:[%s401 + $0x18] sm:$0xf]
        %v2175 = vld [vmem:[%s401 + $0x1c] sm:$0xf]
        %s2176 = scalar_lea.vmem %s2, 16
        %v2177 = vld [vmem:[%s2176] sm:$0xff]
        %v2186 = vunpack.c.l.b16 %v2168
        %v2187 = vunpack.c.l.b16 %v2169
        %v2188 = vunpack.c.l.b16 %v2170
        %v2189 = vunpack.c.l.b16 %v2171
        %v2190 = vunpack.c.l.b16 %v2172
        %v2191 = vunpack.c.l.b16 %v2173
        %v2192 = vunpack.c.l.b16 %v2174
        %v2193 = vunpack.c.l.b16 %v2175
        %v2194 = vpack.c.b16 %v2187, %v2186
        %v2195 = vpack.c.b16 %v2189, %v2188
        %v2196 = vpack.c.b16 %v2191, %v2190
        %v2197 = vpack.c.b16 %v2193, %v2192
        %v2199 = vunpack.c.l.b16 %v2177
        %v2200 = vunpack.c.h.b16 %v2177
        %v2201 = vpack.c.b16 %v2199, %v2199
        %v2202 = vpack.c.b16 %v2200, %v2200
        %v2204 = vsel %vm521, %v2194, 0
        %v2207 = vsel %vm521, %v2195, 0
        %v2210 = vsel %vm521, %v2196, 0
        %v2213 = vsel %vm521, %v2197, 0
        %v2216 = vsel %vm570, %v2201, 0
        %v2219 = vsel %vm570, %v2202, 0
        %2221 = vmatpush.bf16.msra.mxu0 0
        %2222 = vmatpush.bf16.msra.mxu0 0
        %2223 = vmatpush.bf16.msra.mxu0 0
        %2224 = vmatpush.bf16.msra.mxu0 0
        %2225 = vmatpush.bf16.msra.mxu0 0
        %2226 = vmatpush.bf16.msra.mxu0 0
        %2227 = vmatpush.bf16.msra.mxu0 0
        %2228 = vmatpush.bf16.msra.mxu0 %v2216
        %2229 = vmatmul.bf16.gmra.mxu0 %v2204
        %v2230 = vpop.f32.mrf.mxu0
        %v2231 = vpop.f32.mrf.mxu0
        %v2232 = vadd.f32 0.0, %v2231
        %2233 = vmatmul.bf16.gmra.mxu0 %v2207
        %v2234 = vpop.f32.mrf.mxu0
        %v2235 = vpop.f32.mrf.mxu0
        %v2236 = vadd.f32 0.0, %v2235
        %2237 = vmatmul.bf16.gmra.mxu0 %v2210
        %v2238 = vpop.f32.mrf.mxu0
        %v2239 = vpop.f32.mrf.mxu0
        %v2240 = vadd.f32 0.0, %v2239
        %2241 = vmatmul.bf16.gmra.mxu0 %v2213
        %v2242 = vpop.f32.mrf.mxu0
        %v2243 = vpop.f32.mrf.mxu0
        %v2244 = vadd.f32 0.0, %v2243
        %2245 = vdwg.mxu0
        %2246 = vmatpush.bf16.msra.mxu0 0
        %2247 = vmatpush.bf16.msra.mxu0 0
        %2248 = vmatpush.bf16.msra.mxu0 0
        %2249 = vmatpush.bf16.msra.mxu0 0
        %2250 = vmatpush.bf16.msra.mxu0 0
        %2251 = vmatpush.bf16.msra.mxu0 0
        %2252 = vmatpush.bf16.msra.mxu0 0
        %2253 = vmatpush.bf16.msra.mxu0 %v2219
        %2254 = vmatmul.bf16.gmra.mxu0 %v2204
        %v2255 = vpop.f32.mrf.mxu0
        %v2256 = vpop.f32.mrf.mxu0
        %v2257 = vadd.f32 0.0, %v2256
        %2258 = vmatmul.bf16.gmra.mxu0 %v2207
        %v2259 = vpop.f32.mrf.mxu0
        %v2260 = vpop.f32.mrf.mxu0
        %v2261 = vadd.f32 0.0, %v2260
        %2262 = vmatmul.bf16.gmra.mxu0 %v2210
        %v2263 = vpop.f32.mrf.mxu0
        %v2264 = vpop.f32.mrf.mxu0
        %v2265 = vadd.f32 0.0, %v2264
        %2266 = vmatmul.bf16.gmra.mxu0 %v2213
        %v2267 = vpop.f32.mrf.mxu0
        %v2268 = vpop.f32.mrf.mxu0
        %v2269 = vadd.f32 0.0, %v2268
        %2270 = vdwg.mxu0
        %v2271 = vld [vmem:[%s1960] sm:$0xf]
        %v2272 = vld [vmem:[%s1960 + $0x8] sm:$0xf]
        %v2273 = vld [vmem:[%s1960 + $0x20] sm:$0xf]
        %v2274 = vld [vmem:[%s1960 + $0x28] sm:$0xf]
        %v2275 = vld [vmem:[%s1960 + $0x40] sm:$0xf]
        %v2276 = vld [vmem:[%s1960 + $0x48] sm:$0xf]
        %v2277 = vld [vmem:[%s1960 + $0x60] sm:$0xf]
        %v2278 = vld [vmem:[%s1960 + $0x68] sm:$0xf]
        %v2287 = vrot.slane %v2232, 4
        %v2288 = vrot.slane %v2257, 4
        %v2289 = vrot.slane %v2236, 4
        %v2290 = vrot.slane %v2261, 4
        %v2291 = vrot.slane %v2240, 4
        %v2292 = vrot.slane %v2265, 4
        %v2293 = vrot.slane %v2244, 4
        %v2294 = vrot.slane %v2269, 4
        %v2303 = vadd.f32 %v2271, %v2287
        %v2304 = vadd.f32 %v2272, %v2288
        %v2305 = vadd.f32 %v2273, %v2289
        %v2306 = vadd.f32 %v2274, %v2290
        %v2307 = vadd.f32 %v2275, %v2291
        %v2308 = vadd.f32 %v2276, %v2292
        %v2309 = vadd.f32 %v2277, %v2293
        %v2310 = vadd.f32 %v2278, %v2294
        %2311 = vst [vmem:[%s1960] sm:$0xf] %v2303
        %2312 = vst [vmem:[%s1960 + $0x8] sm:$0xf] %v2304
        %2313 = vst [vmem:[%s1960 + $0x20] sm:$0xf] %v2305
        %2314 = vst [vmem:[%s1960 + $0x28] sm:$0xf] %v2306
        %2315 = vst [vmem:[%s1960 + $0x40] sm:$0xf] %v2307
        %2316 = vst [vmem:[%s1960 + $0x48] sm:$0xf] %v2308
        %2317 = vst [vmem:[%s1960 + $0x60] sm:$0xf] %v2309
        %2318 = vst [vmem:[%s1960 + $0x68] sm:$0xf] %v2310
        %v2319 = vld [vmem:[%s401] sm:$0xf]
        %v2320 = vld [vmem:[%s401 + $0x4] sm:$0xf]
        %v2321 = vld [vmem:[%s401 + $0x8] sm:$0xf]
        %v2322 = vld [vmem:[%s401 + $0xc] sm:$0xf]
        %v2323 = vld [vmem:[%s401 + $0x10] sm:$0xf]
        %v2324 = vld [vmem:[%s401 + $0x14] sm:$0xf]
        %v2325 = vld [vmem:[%s401 + $0x18] sm:$0xf]
        %v2326 = vld [vmem:[%s401 + $0x1c] sm:$0xf]
        %v2327 = vld [vmem:[%s401 + $0x20] sm:$0xf]
        %v2328 = vld [vmem:[%s401 + $0x24] sm:$0xf]
        %v2329 = vld [vmem:[%s401 + $0x28] sm:$0xf]
        %v2330 = vld [vmem:[%s401 + $0x2c] sm:$0xf]
        %v2331 = vld [vmem:[%s401 + $0x30] sm:$0xf]
        %v2332 = vld [vmem:[%s401 + $0x34] sm:$0xf]
        %v2333 = vld [vmem:[%s401 + $0x38] sm:$0xf]
        %v2334 = vld [vmem:[%s401 + $0x3c] sm:$0xf]
        %v2335 = vld [vmem:[%s401 + $0x40] sm:$0xf]
        %v2336 = vld [vmem:[%s401 + $0x44] sm:$0xf]
        %v2337 = vld [vmem:[%s401 + $0x48] sm:$0xf]
        %v2338 = vld [vmem:[%s401 + $0x4c] sm:$0xf]
        %v2339 = vld [vmem:[%s401 + $0x50] sm:$0xf]
        %v2340 = vld [vmem:[%s401 + $0x54] sm:$0xf]
        %v2341 = vld [vmem:[%s401 + $0x58] sm:$0xf]
        %v2342 = vld [vmem:[%s401 + $0x5c] sm:$0xf]
        %v2343 = vld [vmem:[%s401 + $0x60] sm:$0xf]
        %v2344 = vld [vmem:[%s401 + $0x64] sm:$0xf]
        %v2345 = vld [vmem:[%s401 + $0x68] sm:$0xf]
        %v2346 = vld [vmem:[%s401 + $0x6c] sm:$0xf]
        %v2347 = vld [vmem:[%s401 + $0x70] sm:$0xf]
        %v2348 = vld [vmem:[%s401 + $0x74] sm:$0xf]
        %v2349 = vld [vmem:[%s401 + $0x78] sm:$0xf]
        %v2350 = vld [vmem:[%s401 + $0x7c] sm:$0xf]
        %s2351 = scalar_lea.vmem %s2, 24
        %v2352 = vld [vmem:[%s2351] sm:$0xff]
        %v2385 = vunpack.c.l.b16 %v2319
        %v2386 = vunpack.c.l.b16 %v2320
        %v2387 = vunpack.c.l.b16 %v2321
        %v2388 = vunpack.c.l.b16 %v2322
        %v2389 = vunpack.c.l.b16 %v2323
        %v2390 = vunpack.c.l.b16 %v2324
        %v2391 = vunpack.c.l.b16 %v2325
        %v2392 = vunpack.c.l.b16 %v2326
        %v2393 = vunpack.c.l.b16 %v2327
        %v2394 = vunpack.c.l.b16 %v2328
        %v2395 = vunpack.c.l.b16 %v2329
        %v2396 = vunpack.c.l.b16 %v2330
        %v2397 = vunpack.c.l.b16 %v2331
        %v2398 = vunpack.c.l.b16 %v2332
        %v2399 = vunpack.c.l.b16 %v2333
        %v2400 = vunpack.c.l.b16 %v2334
        %v2401 = vunpack.c.l.b16 %v2335
        %v2402 = vunpack.c.l.b16 %v2336
        %v2403 = vunpack.c.l.b16 %v2337
        %v2404 = vunpack.c.l.b16 %v2338
        %v2405 = vunpack.c.l.b16 %v2339
        %v2406 = vunpack.c.l.b16 %v2340
        %v2407 = vunpack.c.l.b16 %v2341
        %v2408 = vunpack.c.l.b16 %v2342
        %v2409 = vunpack.c.l.b16 %v2343
        %v2410 = vunpack.c.l.b16 %v2344
        %v2411 = vunpack.c.l.b16 %v2345
        %v2412 = vunpack.c.l.b16 %v2346
        %v2413 = vunpack.c.l.b16 %v2347
        %v2414 = vunpack.c.l.b16 %v2348
        %v2415 = vunpack.c.l.b16 %v2349
        %v2416 = vunpack.c.l.b16 %v2350
        %v2417 = vpack.c.b16 %v2386, %v2385
        %v2418 = vpack.c.b16 %v2388, %v2387
        %v2419 = vpack.c.b16 %v2390, %v2389
        %v2420 = vpack.c.b16 %v2392, %v2391
        %v2421 = vpack.c.b16 %v2394, %v2393
        %v2422 = vpack.c.b16 %v2396, %v2395
        %v2423 = vpack.c.b16 %v2398, %v2397
        %v2424 = vpack.c.b16 %v2400, %v2399
        %v2425 = vpack.c.b16 %v2402, %v2401
        %v2426 = vpack.c.b16 %v2404, %v2403
        %v2427 = vpack.c.b16 %v2406, %v2405
        %v2428 = vpack.c.b16 %v2408, %v2407
        %v2429 = vpack.c.b16 %v2410, %v2409
        %v2430 = vpack.c.b16 %v2412, %v2411
        %v2431 = vpack.c.b16 %v2414, %v2413
        %v2432 = vpack.c.b16 %v2416, %v2415
        %v2434 = vunpack.c.l.b16 %v2352
        %v2435 = vunpack.c.h.b16 %v2352
        %v2436 = vpack.c.b16 %v2434, %v2434
        %v2437 = vpack.c.b16 %v2435, %v2435
        %v2439 = vsel %vm521, %v2417, 0
        %v2442 = vsel %vm521, %v2418, 0
        %v2445 = vsel %vm521, %v2419, 0
        %v2448 = vsel %vm521, %v2420, 0
        %v2451 = vsel %vm521, %v2421, 0
        %v2454 = vsel %vm521, %v2422, 0
        %v2457 = vsel %vm521, %v2423, 0
        %v2460 = vsel %vm521, %v2424, 0
        %v2463 = vsel %vm521, %v2425, 0
        %v2466 = vsel %vm521, %v2426, 0
        %v2469 = vsel %vm521, %v2427, 0
        %v2472 = vsel %vm521, %v2428, 0
        %v2475 = vsel %vm521, %v2429, 0
        %v2478 = vsel %vm521, %v2430, 0
        %v2481 = vsel %vm521, %v2431, 0
        %v2484 = vsel %vm521, %v2432, 0
        %v2487 = vsel %vm570, %v2436, 0
        %v2490 = vsel %vm570, %v2437, 0
        %2492 = vmatpush.bf16.msra.mxu0 0
        %2493 = vmatpush.bf16.msra.mxu0 0
        %2494 = vmatpush.bf16.msra.mxu0 0
        %2495 = vmatpush.bf16.msra.mxu0 0
        %2496 = vmatpush.bf16.msra.mxu0 0
        %2497 = vmatpush.bf16.msra.mxu0 0
        %2498 = vmatpush.bf16.msra.mxu0 0
        %2499 = vmatpush.bf16.msra.mxu0 %v2487
        %2500 = vmatmul.bf16.gmra.mxu0 %v2439
        %v2501 = vpop.f32.mrf.mxu0
        %v2502 = vadd.f32 0.0, %v2501
        %v2503 = vpop.f32.mrf.mxu0
        %2504 = vmatmul.bf16.gmra.mxu0 %v2442
        %v2505 = vpop.f32.mrf.mxu0
        %v2506 = vadd.f32 0.0, %v2505
        %v2507 = vpop.f32.mrf.mxu0
        %2508 = vmatmul.bf16.gmra.mxu0 %v2445
        %v2509 = vpop.f32.mrf.mxu0
        %v2510 = vadd.f32 0.0, %v2509
        %v2511 = vpop.f32.mrf.mxu0
        %2512 = vmatmul.bf16.gmra.mxu0 %v2448
        %v2513 = vpop.f32.mrf.mxu0
        %v2514 = vadd.f32 0.0, %v2513
        %v2515 = vpop.f32.mrf.mxu0
        %2516 = vmatmul.bf16.gmra.mxu0 %v2451
        %v2517 = vpop.f32.mrf.mxu0
        %v2518 = vadd.f32 0.0, %v2517
        %v2519 = vpop.f32.mrf.mxu0
        %2520 = vmatmul.bf16.gmra.mxu0 %v2454
        %v2521 = vpop.f32.mrf.mxu0
        %v2522 = vadd.f32 0.0, %v2521
        %v2523 = vpop.f32.mrf.mxu0
        %2524 = vmatmul.bf16.gmra.mxu0 %v2457
        %v2525 = vpop.f32.mrf.mxu0
        %v2526 = vadd.f32 0.0, %v2525
        %v2527 = vpop.f32.mrf.mxu0
        %2528 = vmatmul.bf16.gmra.mxu0 %v2460
        %v2529 = vpop.f32.mrf.mxu0
        %v2530 = vadd.f32 0.0, %v2529
        %v2531 = vpop.f32.mrf.mxu0
        %2532 = vmatmul.bf16.gmra.mxu0 %v2463
        %v2533 = vpop.f32.mrf.mxu0
        %v2534 = vadd.f32 0.0, %v2533
        %v2535 = vpop.f32.mrf.mxu0
        %2536 = vmatmul.bf16.gmra.mxu0 %v2466
        %v2537 = vpop.f32.mrf.mxu0
        %v2538 = vadd.f32 0.0, %v2537
        %v2539 = vpop.f32.mrf.mxu0
        %2540 = vmatmul.bf16.gmra.mxu0 %v2469
        %v2541 = vpop.f32.mrf.mxu0
        %v2542 = vadd.f32 0.0, %v2541
        %v2543 = vpop.f32.mrf.mxu0
        %2544 = vmatmul.bf16.gmra.mxu0 %v2472
        %v2545 = vpop.f32.mrf.mxu0
        %v2546 = vadd.f32 0.0, %v2545
        %v2547 = vpop.f32.mrf.mxu0
        %2548 = vmatmul.bf16.gmra.mxu0 %v2475
        %v2549 = vpop.f32.mrf.mxu0
        %v2550 = vadd.f32 0.0, %v2549
        %v2551 = vpop.f32.mrf.mxu0
        %2552 = vmatmul.bf16.gmra.mxu0 %v2478
        %v2553 = vpop.f32.mrf.mxu0
        %v2554 = vadd.f32 0.0, %v2553
        %v2555 = vpop.f32.mrf.mxu0
        %2556 = vmatmul.bf16.gmra.mxu0 %v2481
        %v2557 = vpop.f32.mrf.mxu0
        %v2558 = vadd.f32 0.0, %v2557
        %v2559 = vpop.f32.mrf.mxu0
        %2560 = vmatmul.bf16.gmra.mxu0 %v2484
        %v2561 = vpop.f32.mrf.mxu0
        %v2562 = vadd.f32 0.0, %v2561
        %v2563 = vpop.f32.mrf.mxu0
        %2564 = vdwg.mxu0
        %2565 = vmatpush.bf16.msra.mxu0 0
        %2566 = vmatpush.bf16.msra.mxu0 0
        %2567 = vmatpush.bf16.msra.mxu0 0
        %2568 = vmatpush.bf16.msra.mxu0 0
        %2569 = vmatpush.bf16.msra.mxu0 0
        %2570 = vmatpush.bf16.msra.mxu0 0
        %2571 = vmatpush.bf16.msra.mxu0 0
        %2572 = vmatpush.bf16.msra.mxu0 %v2490
        %2573 = vmatmul.bf16.gmra.mxu0 %v2439
        %v2574 = vpop.f32.mrf.mxu0
        %v2575 = vadd.f32 0.0, %v2574
        %v2576 = vpop.f32.mrf.mxu0
        %2577 = vmatmul.bf16.gmra.mxu0 %v2442
        %v2578 = vpop.f32.mrf.mxu0
        %v2579 = vadd.f32 0.0, %v2578
        %v2580 = vpop.f32.mrf.mxu0
        %2581 = vmatmul.bf16.gmra.mxu0 %v2445
        %v2582 = vpop.f32.mrf.mxu0
        %v2583 = vadd.f32 0.0, %v2582
        %v2584 = vpop.f32.mrf.mxu0
        %2585 = vmatmul.bf16.gmra.mxu0 %v2448
        %v2586 = vpop.f32.mrf.mxu0
        %v2587 = vadd.f32 0.0, %v2586
        %v2588 = vpop.f32.mrf.mxu0
        %2589 = vmatmul.bf16.gmra.mxu0 %v2451
        %v2590 = vpop.f32.mrf.mxu0
        %v2591 = vadd.f32 0.0, %v2590
        %v2592 = vpop.f32.mrf.mxu0
        %2593 = vmatmul.bf16.gmra.mxu0 %v2454
        %v2594 = vpop.f32.mrf.mxu0
        %v2595 = vadd.f32 0.0, %v2594
        %v2596 = vpop.f32.mrf.mxu0
        %2597 = vmatmul.bf16.gmra.mxu0 %v2457
        %v2598 = vpop.f32.mrf.mxu0
        %v2599 = vadd.f32 0.0, %v2598
        %v2600 = vpop.f32.mrf.mxu0
        %2601 = vmatmul.bf16.gmra.mxu0 %v2460
        %v2602 = vpop.f32.mrf.mxu0
        %v2603 = vadd.f32 0.0, %v2602
        %v2604 = vpop.f32.mrf.mxu0
        %2605 = vmatmul.bf16.gmra.mxu0 %v2463
        %v2606 = vpop.f32.mrf.mxu0
        %v2607 = vadd.f32 0.0, %v2606
        %v2608 = vpop.f32.mrf.mxu0
        %2609 = vmatmul.bf16.gmra.mxu0 %v2466
        %v2610 = vpop.f32.mrf.mxu0
        %v2611 = vadd.f32 0.0, %v2610
        %v2612 = vpop.f32.mrf.mxu0
        %2613 = vmatmul.bf16.gmra.mxu0 %v2469
        %v2614 = vpop.f32.mrf.mxu0
        %v2615 = vadd.f32 0.0, %v2614
        %v2616 = vpop.f32.mrf.mxu0
        %2617 = vmatmul.bf16.gmra.mxu0 %v2472
        %v2618 = vpop.f32.mrf.mxu0
        %v2619 = vadd.f32 0.0, %v2618
        %v2620 = vpop.f32.mrf.mxu0
        %2621 = vmatmul.bf16.gmra.mxu0 %v2475
        %v2622 = vpop.f32.mrf.mxu0
        %v2623 = vadd.f32 0.0, %v2622
        %v2624 = vpop.f32.mrf.mxu0
        %2625 = vmatmul.bf16.gmra.mxu0 %v2478
        %v2626 = vpop.f32.mrf.mxu0
        %v2627 = vadd.f32 0.0, %v2626
        %v2628 = vpop.f32.mrf.mxu0
        %2629 = vmatmul.bf16.gmra.mxu0 %v2481
        %v2630 = vpop.f32.mrf.mxu0
        %v2631 = vadd.f32 0.0, %v2630
        %v2632 = vpop.f32.mrf.mxu0
        %2633 = vmatmul.bf16.gmra.mxu0 %v2484
        %v2634 = vpop.f32.mrf.mxu0
        %v2635 = vadd.f32 0.0, %v2634
        %v2636 = vpop.f32.mrf.mxu0
        %2637 = vdwg.mxu0
        %v2638 = vld [vmem:[#allocation2 + $0x10] sm:$0xf0]
        %v2639 = vld [vmem:[#allocation2 + $0x18] sm:$0xf0]
        %v2640 = vld [vmem:[#allocation2 + $0x30] sm:$0xf0]
        %v2641 = vld [vmem:[#allocation2 + $0x38] sm:$0xf0]
        %v2642 = vld [vmem:[#allocation2 + $0x50] sm:$0xf0]
        %v2643 = vld [vmem:[#allocation2 + $0x58] sm:$0xf0]
        %v2644 = vld [vmem:[#allocation2 + $0x70] sm:$0xf0]
        %v2645 = vld [vmem:[#allocation2 + $0x78] sm:$0xf0]
        %v2646 = vld [vmem:[#allocation2 + $0x90] sm:$0xf0]
        %v2647 = vld [vmem:[#allocation2 + $0x98] sm:$0xf0]
        %v2648 = vld [vmem:[#allocation2 + $0xb0] sm:$0xf0]
        %v2649 = vld [vmem:[#allocation2 + $0xb8] sm:$0xf0]
        %v2650 = vld [vmem:[#allocation2 + $0xd0] sm:$0xf0]
        %v2651 = vld [vmem:[#allocation2 + $0xd8] sm:$0xf0]
        %v2652 = vld [vmem:[#allocation2 + $0xf0] sm:$0xf0]
        %v2653 = vld [vmem:[#allocation2 + $0xf8] sm:$0xf0]
        %v2654 = vld [vmem:[#allocation2 + $0x110] sm:$0xf0]
        %v2655 = vld [vmem:[#allocation2 + $0x118] sm:$0xf0]
        %v2656 = vld [vmem:[#allocation2 + $0x130] sm:$0xf0]
        %v2657 = vld [vmem:[#allocation2 + $0x138] sm:$0xf0]
        %v2658 = vld [vmem:[#allocation2 + $0x150] sm:$0xf0]
        %v2659 = vld [vmem:[#allocation2 + $0x158] sm:$0xf0]
        %v2660 = vld [vmem:[#allocation2 + $0x170] sm:$0xf0]
        %v2661 = vld [vmem:[#allocation2 + $0x178] sm:$0xf0]
        %v2662 = vld [vmem:[#allocation2 + $0x190] sm:$0xf0]
        %v2663 = vld [vmem:[#allocation2 + $0x198] sm:$0xf0]
        %v2664 = vld [vmem:[#allocation2 + $0x1b0] sm:$0xf0]
        %v2665 = vld [vmem:[#allocation2 + $0x1b8] sm:$0xf0]
        %v2666 = vld [vmem:[#allocation2 + $0x1d0] sm:$0xf0]
        %v2667 = vld [vmem:[#allocation2 + $0x1d8] sm:$0xf0]
        %v2668 = vld [vmem:[#allocation2 + $0x1f0] sm:$0xf0]
        %v2669 = vld [vmem:[#allocation2 + $0x1f8] sm:$0xf0]
        %v2702 = vrot.slane %v2502, 4
        %v2703 = vrot.slane %v2575, 4
        %v2704 = vrot.slane %v2506, 4
        %v2705 = vrot.slane %v2579, 4
        %v2706 = vrot.slane %v2510, 4
        %v2707 = vrot.slane %v2583, 4
        %v2708 = vrot.slane %v2514, 4
        %v2709 = vrot.slane %v2587, 4
        %v2710 = vrot.slane %v2518, 4
        %v2711 = vrot.slane %v2591, 4
        %v2712 = vrot.slane %v2522, 4
        %v2713 = vrot.slane %v2595, 4
        %v2714 = vrot.slane %v2526, 4
        %v2715 = vrot.slane %v2599, 4
        %v2716 = vrot.slane %v2530, 4
        %v2717 = vrot.slane %v2603, 4
        %v2718 = vrot.slane %v2534, 4
        %v2719 = vrot.slane %v2607, 4
        %v2720 = vrot.slane %v2538, 4
        %v2721 = vrot.slane %v2611, 4
        %v2722 = vrot.slane %v2542, 4
        %v2723 = vrot.slane %v2615, 4
        %v2724 = vrot.slane %v2546, 4
        %v2725 = vrot.slane %v2619, 4
        %v2726 = vrot.slane %v2550, 4
        %v2727 = vrot.slane %v2623, 4
        %v2728 = vrot.slane %v2554, 4
        %v2729 = vrot.slane %v2627, 4
        %v2730 = vrot.slane %v2558, 4
        %v2731 = vrot.slane %v2631, 4
        %v2732 = vrot.slane %v2562, 4
        %v2733 = vrot.slane %v2635, 4
        %v2766 = vadd.f32 %v2638, %v2702
        %v2767 = vadd.f32 %v2639, %v2703
        %v2768 = vadd.f32 %v2640, %v2704
        %v2769 = vadd.f32 %v2641, %v2705
        %v2770 = vadd.f32 %v2642, %v2706
        %v2771 = vadd.f32 %v2643, %v2707
        %v2772 = vadd.f32 %v2644, %v2708
        %v2773 = vadd.f32 %v2645, %v2709
        %v2774 = vadd.f32 %v2646, %v2710
        %v2775 = vadd.f32 %v2647, %v2711
        %v2776 = vadd.f32 %v2648, %v2712
        %v2777 = vadd.f32 %v2649, %v2713
        %v2778 = vadd.f32 %v2650, %v2714
        %v2779 = vadd.f32 %v2651, %v2715
        %v2780 = vadd.f32 %v2652, %v2716
        %v2781 = vadd.f32 %v2653, %v2717
        %v2782 = vadd.f32 %v2654, %v2718
        %v2783 = vadd.f32 %v2655, %v2719
        %v2784 = vadd.f32 %v2656, %v2720
        %v2785 = vadd.f32 %v2657, %v2721
        %v2786 = vadd.f32 %v2658, %v2722
        %v2787 = vadd.f32 %v2659, %v2723
        %v2788 = vadd.f32 %v2660, %v2724
        %v2789 = vadd.f32 %v2661, %v2725
        %v2790 = vadd.f32 %v2662, %v2726
        %v2791 = vadd.f32 %v2663, %v2727
        %v2792 = vadd.f32 %v2664, %v2728
        %v2793 = vadd.f32 %v2665, %v2729
        %v2794 = vadd.f32 %v2666, %v2730
        %v2795 = vadd.f32 %v2667, %v2731
        %v2796 = vadd.f32 %v2668, %v2732
        %v2797 = vadd.f32 %v2669, %v2733
        %2798 = vst [vmem:[#allocation2 + $0x10] sm:$0xf0] %v2766
        %2799 = vst [vmem:[#allocation2 + $0x18] sm:$0xf0] %v2767
        %2800 = vst [vmem:[#allocation2 + $0x30] sm:$0xf0] %v2768
        %2801 = vst [vmem:[#allocation2 + $0x38] sm:$0xf0] %v2769
        %2802 = vst [vmem:[#allocation2 + $0x50] sm:$0xf0] %v2770
        %2803 = vst [vmem:[#allocation2 + $0x58] sm:$0xf0] %v2771
        %2804 = vst [vmem:[#allocation2 + $0x70] sm:$0xf0] %v2772
        %2805 = vst [vmem:[#allocation2 + $0x78] sm:$0xf0] %v2773
        %2806 = vst [vmem:[#allocation2 + $0x90] sm:$0xf0] %v2774
        %2807 = vst [vmem:[#allocation2 + $0x98] sm:$0xf0] %v2775
        %2808 = vst [vmem:[#allocation2 + $0xb0] sm:$0xf0] %v2776
        %2809 = vst [vmem:[#allocation2 + $0xb8] sm:$0xf0] %v2777
        %2810 = vst [vmem:[#allocation2 + $0xd0] sm:$0xf0] %v2778
        %2811 = vst [vmem:[#allocation2 + $0xd8] sm:$0xf0] %v2779
        %2812 = vst [vmem:[#allocation2 + $0xf0] sm:$0xf0] %v2780
        %2813 = vst [vmem:[#allocation2 + $0xf8] sm:$0xf0] %v2781
        %2814 = vst [vmem:[#allocation2 + $0x110] sm:$0xf0] %v2782
        %2815 = vst [vmem:[#allocation2 + $0x118] sm:$0xf0] %v2783
        %2816 = vst [vmem:[#allocation2 + $0x130] sm:$0xf0] %v2784
        %2817 = vst [vmem:[#allocation2 + $0x138] sm:$0xf0] %v2785
        %2818 = vst [vmem:[#allocation2 + $0x150] sm:$0xf0] %v2786
        %2819 = vst [vmem:[#allocation2 + $0x158] sm:$0xf0] %v2787
        %2820 = vst [vmem:[#allocation2 + $0x170] sm:$0xf0] %v2788
        %2821 = vst [vmem:[#allocation2 + $0x178] sm:$0xf0] %v2789
        %2822 = vst [vmem:[#allocation2 + $0x190] sm:$0xf0] %v2790
        %2823 = vst [vmem:[#allocation2 + $0x198] sm:$0xf0] %v2791
        %2824 = vst [vmem:[#allocation2 + $0x1b0] sm:$0xf0] %v2792
        %2825 = vst [vmem:[#allocation2 + $0x1b8] sm:$0xf0] %v2793
        %2826 = vst [vmem:[#allocation2 + $0x1d0] sm:$0xf0] %v2794
        %2827 = vst [vmem:[#allocation2 + $0x1d8] sm:$0xf0] %v2795
        %2828 = vst [vmem:[#allocation2 + $0x1f0] sm:$0xf0] %v2796
        %2829 = vst [vmem:[#allocation2 + $0x1f8] sm:$0xf0] %v2797
        %v2830 = vld [vmem:[%s401] sm:$0xf]
        %v2831 = vld [vmem:[%s401 + $0x4] sm:$0xf]
        %v2832 = vld [vmem:[%s401 + $0x8] sm:$0xf]
        %v2833 = vld [vmem:[%s401 + $0xc] sm:$0xf]
        %v2834 = vld [vmem:[%s401 + $0x10] sm:$0xf]
        %v2835 = vld [vmem:[%s401 + $0x14] sm:$0xf]
        %v2836 = vld [vmem:[%s401 + $0x18] sm:$0xf]
        %v2837 = vld [vmem:[%s401 + $0x1c] sm:$0xf]
        %v2838 = vld [vmem:[%s401 + $0x20] sm:$0xf]
        %v2839 = vld [vmem:[%s401 + $0x24] sm:$0xf]
        %v2840 = vld [vmem:[%s401 + $0x28] sm:$0xf]
        %v2841 = vld [vmem:[%s401 + $0x2c] sm:$0xf]
        %v2842 = vld [vmem:[%s401 + $0x30] sm:$0xf]
        %v2843 = vld [vmem:[%s401 + $0x34] sm:$0xf]
        %v2844 = vld [vmem:[%s401 + $0x38] sm:$0xf]
        %v2845 = vld [vmem:[%s401 + $0x3c] sm:$0xf]
        %v2846 = vld [vmem:[%s401 + $0x40] sm:$0xf]
        %v2847 = vld [vmem:[%s401 + $0x44] sm:$0xf]
        %v2848 = vld [vmem:[%s401 + $0x48] sm:$0xf]
        %v2849 = vld [vmem:[%s401 + $0x4c] sm:$0xf]
        %v2850 = vld [vmem:[%s401 + $0x50] sm:$0xf]
        %v2851 = vld [vmem:[%s401 + $0x54] sm:$0xf]
        %v2852 = vld [vmem:[%s401 + $0x58] sm:$0xf]
        %v2853 = vld [vmem:[%s401 + $0x5c] sm:$0xf]
        %v2854 = vld [vmem:[%s401 + $0x60] sm:$0xf]
        %v2855 = vld [vmem:[%s401 + $0x64] sm:$0xf]
        %v2856 = vld [vmem:[%s401 + $0x68] sm:$0xf]
        %v2857 = vld [vmem:[%s401 + $0x6c] sm:$0xf]
        %v2858 = vld [vmem:[%s401 + $0x70] sm:$0xf]
        %v2859 = vld [vmem:[%s401 + $0x74] sm:$0xf]
        %v2860 = vld [vmem:[%s401 + $0x78] sm:$0xf]
        %v2861 = vld [vmem:[%s401 + $0x7c] sm:$0xf]
        %s2862 = scalar_lea.vmem %s2, 40
        %v2863 = vld [vmem:[%s2862] sm:$0xff]
        %v2896 = vunpack.c.l.b16 %v2830
        %v2897 = vunpack.c.l.b16 %v2831
        %v2898 = vunpack.c.l.b16 %v2832
        %v2899 = vunpack.c.l.b16 %v2833
        %v2900 = vunpack.c.l.b16 %v2834
        %v2901 = vunpack.c.l.b16 %v2835
        %v2902 = vunpack.c.l.b16 %v2836
        %v2903 = vunpack.c.l.b16 %v2837
        %v2904 = vunpack.c.l.b16 %v2838
        %v2905 = vunpack.c.l.b16 %v2839
        %v2906 = vunpack.c.l.b16 %v2840
        %v2907 = vunpack.c.l.b16 %v2841
        %v2908 = vunpack.c.l.b16 %v2842
        %v2909 = vunpack.c.l.b16 %v2843
        %v2910 = vunpack.c.l.b16 %v2844
        %v2911 = vunpack.c.l.b16 %v2845
        %v2912 = vunpack.c.l.b16 %v2846
        %v2913 = vunpack.c.l.b16 %v2847
        %v2914 = vunpack.c.l.b16 %v2848
        %v2915 = vunpack.c.l.b16 %v2849
        %v2916 = vunpack.c.l.b16 %v2850
        %v2917 = vunpack.c.l.b16 %v2851
        %v2918 = vunpack.c.l.b16 %v2852
        %v2919 = vunpack.c.l.b16 %v2853
        %v2920 = vunpack.c.l.b16 %v2854
        %v2921 = vunpack.c.l.b16 %v2855
        %v2922 = vunpack.c.l.b16 %v2856
        %v2923 = vunpack.c.l.b16 %v2857
        %v2924 = vunpack.c.l.b16 %v2858
        %v2925 = vunpack.c.l.b16 %v2859
        %v2926 = vunpack.c.l.b16 %v2860
        %v2927 = vunpack.c.l.b16 %v2861
        %v2928 = vpack.c.b16 %v2897, %v2896
        %v2929 = vpack.c.b16 %v2899, %v2898
        %v2930 = vpack.c.b16 %v2901, %v2900
        %v2931 = vpack.c.b16 %v2903, %v2902
        %v2932 = vpack.c.b16 %v2905, %v2904
        %v2933 = vpack.c.b16 %v2907, %v2906
        %v2934 = vpack.c.b16 %v2909, %v2908
        %v2935 = vpack.c.b16 %v2911, %v2910
        %v2936 = vpack.c.b16 %v2913, %v2912
        %v2937 = vpack.c.b16 %v2915, %v2914
        %v2938 = vpack.c.b16 %v2917, %v2916
        %v2939 = vpack.c.b16 %v2919, %v2918
        %v2940 = vpack.c.b16 %v2921, %v2920
        %v2941 = vpack.c.b16 %v2923, %v2922
        %v2942 = vpack.c.b16 %v2925, %v2924
        %v2943 = vpack.c.b16 %v2927, %v2926
        %v2945 = vunpack.c.l.b16 %v2863
        %v2946 = vunpack.c.h.b16 %v2863
        %v2947 = vpack.c.b16 %v2945, %v2945
        %v2948 = vpack.c.b16 %v2946, %v2946
        %v2950 = vsel %vm521, %v2928, 0
        %v2953 = vsel %vm521, %v2929, 0
        %v2956 = vsel %vm521, %v2930, 0
        %v2959 = vsel %vm521, %v2931, 0
        %v2962 = vsel %vm521, %v2932, 0
        %v2965 = vsel %vm521, %v2933, 0
        %v2968 = vsel %vm521, %v2934, 0
        %v2971 = vsel %vm521, %v2935, 0
        %v2974 = vsel %vm521, %v2936, 0
        %v2977 = vsel %vm521, %v2937, 0
        %v2980 = vsel %vm521, %v2938, 0
        %v2983 = vsel %vm521, %v2939, 0
        %v2986 = vsel %vm521, %v2940, 0
        %v2989 = vsel %vm521, %v2941, 0
        %v2992 = vsel %vm521, %v2942, 0
        %v2995 = vsel %vm521, %v2943, 0
        %v2998 = vsel %vm570, %v2947, 0
        %v3001 = vsel %vm570, %v2948, 0
        %3003 = vmatpush.bf16.msra.mxu0 0
        %3004 = vmatpush.bf16.msra.mxu0 0
        %3005 = vmatpush.bf16.msra.mxu0 0
        %3006 = vmatpush.bf16.msra.mxu0 0
        %3007 = vmatpush.bf16.msra.mxu0 0
        %3008 = vmatpush.bf16.msra.mxu0 0
        %3009 = vmatpush.bf16.msra.mxu0 0
        %3010 = vmatpush.bf16.msra.mxu0 %v2998
        %3011 = vmatmul.bf16.gmra.mxu0 %v2950
        %v3012 = vpop.f32.mrf.mxu0
        %v3013 = vpop.f32.mrf.mxu0
        %v3014 = vadd.f32 0.0, %v3013
        %3015 = vmatmul.bf16.gmra.mxu0 %v2953
        %v3016 = vpop.f32.mrf.mxu0
        %v3017 = vpop.f32.mrf.mxu0
        %v3018 = vadd.f32 0.0, %v3017
        %3019 = vmatmul.bf16.gmra.mxu0 %v2956
        %v3020 = vpop.f32.mrf.mxu0
        %v3021 = vpop.f32.mrf.mxu0
        %v3022 = vadd.f32 0.0, %v3021
        %3023 = vmatmul.bf16.gmra.mxu0 %v2959
        %v3024 = vpop.f32.mrf.mxu0
        %v3025 = vpop.f32.mrf.mxu0
        %v3026 = vadd.f32 0.0, %v3025
        %3027 = vmatmul.bf16.gmra.mxu0 %v2962
        %v3028 = vpop.f32.mrf.mxu0
        %v3029 = vpop.f32.mrf.mxu0
        %v3030 = vadd.f32 0.0, %v3029
        %3031 = vmatmul.bf16.gmra.mxu0 %v2965
        %v3032 = vpop.f32.mrf.mxu0
        %v3033 = vpop.f32.mrf.mxu0
        %v3034 = vadd.f32 0.0, %v3033
        %3035 = vmatmul.bf16.gmra.mxu0 %v2968
        %v3036 = vpop.f32.mrf.mxu0
        %v3037 = vpop.f32.mrf.mxu0
        %v3038 = vadd.f32 0.0, %v3037
        %3039 = vmatmul.bf16.gmra.mxu0 %v2971
        %v3040 = vpop.f32.mrf.mxu0
        %v3041 = vpop.f32.mrf.mxu0
        %v3042 = vadd.f32 0.0, %v3041
        %3043 = vmatmul.bf16.gmra.mxu0 %v2974
        %v3044 = vpop.f32.mrf.mxu0
        %v3045 = vpop.f32.mrf.mxu0
        %v3046 = vadd.f32 0.0, %v3045
        %3047 = vmatmul.bf16.gmra.mxu0 %v2977
        %v3048 = vpop.f32.mrf.mxu0
        %v3049 = vpop.f32.mrf.mxu0
        %v3050 = vadd.f32 0.0, %v3049
        %3051 = vmatmul.bf16.gmra.mxu0 %v2980
        %v3052 = vpop.f32.mrf.mxu0
        %v3053 = vpop.f32.mrf.mxu0
        %v3054 = vadd.f32 0.0, %v3053
        %3055 = vmatmul.bf16.gmra.mxu0 %v2983
        %v3056 = vpop.f32.mrf.mxu0
        %v3057 = vpop.f32.mrf.mxu0
        %v3058 = vadd.f32 0.0, %v3057
        %3059 = vmatmul.bf16.gmra.mxu0 %v2986
        %v3060 = vpop.f32.mrf.mxu0
        %v3061 = vpop.f32.mrf.mxu0
        %v3062 = vadd.f32 0.0, %v3061
        %3063 = vmatmul.bf16.gmra.mxu0 %v2989
        %v3064 = vpop.f32.mrf.mxu0
        %v3065 = vpop.f32.mrf.mxu0
        %v3066 = vadd.f32 0.0, %v3065
        %3067 = vmatmul.bf16.gmra.mxu0 %v2992
        %v3068 = vpop.f32.mrf.mxu0
        %v3069 = vpop.f32.mrf.mxu0
        %v3070 = vadd.f32 0.0, %v3069
        %3071 = vmatmul.bf16.gmra.mxu0 %v2995
        %v3072 = vpop.f32.mrf.mxu0
        %v3073 = vpop.f32.mrf.mxu0
        %v3074 = vadd.f32 0.0, %v3073
        %3075 = vdwg.mxu0
        %3076 = vmatpush.bf16.msra.mxu0 0
        %3077 = vmatpush.bf16.msra.mxu0 0
        %3078 = vmatpush.bf16.msra.mxu0 0
        %3079 = vmatpush.bf16.msra.mxu0 0
        %3080 = vmatpush.bf16.msra.mxu0 0
        %3081 = vmatpush.bf16.msra.mxu0 0
        %3082 = vmatpush.bf16.msra.mxu0 0
        %3083 = vmatpush.bf16.msra.mxu0 %v3001
        %3084 = vmatmul.bf16.gmra.mxu0 %v2950
        %v3085 = vpop.f32.mrf.mxu0
        %v3086 = vpop.f32.mrf.mxu0
        %v3087 = vadd.f32 0.0, %v3086
        %3088 = vmatmul.bf16.gmra.mxu0 %v2953
        %v3089 = vpop.f32.mrf.mxu0
        %v3090 = vpop.f32.mrf.mxu0
        %v3091 = vadd.f32 0.0, %v3090
        %3092 = vmatmul.bf16.gmra.mxu0 %v2956
        %v3093 = vpop.f32.mrf.mxu0
        %v3094 = vpop.f32.mrf.mxu0
        %v3095 = vadd.f32 0.0, %v3094
        %3096 = vmatmul.bf16.gmra.mxu0 %v2959
        %v3097 = vpop.f32.mrf.mxu0
        %v3098 = vpop.f32.mrf.mxu0
        %v3099 = vadd.f32 0.0, %v3098
        %3100 = vmatmul.bf16.gmra.mxu0 %v2962
        %v3101 = vpop.f32.mrf.mxu0
        %v3102 = vpop.f32.mrf.mxu0
        %v3103 = vadd.f32 0.0, %v3102
        %3104 = vmatmul.bf16.gmra.mxu0 %v2965
        %v3105 = vpop.f32.mrf.mxu0
        %v3106 = vpop.f32.mrf.mxu0
        %v3107 = vadd.f32 0.0, %v3106
        %3108 = vmatmul.bf16.gmra.mxu0 %v2968
        %v3109 = vpop.f32.mrf.mxu0
        %v3110 = vpop.f32.mrf.mxu0
        %v3111 = vadd.f32 0.0, %v3110
        %3112 = vmatmul.bf16.gmra.mxu0 %v2971
        %v3113 = vpop.f32.mrf.mxu0
        %v3114 = vpop.f32.mrf.mxu0
        %v3115 = vadd.f32 0.0, %v3114
        %3116 = vmatmul.bf16.gmra.mxu0 %v2974
        %v3117 = vpop.f32.mrf.mxu0
        %v3118 = vpop.f32.mrf.mxu0
        %v3119 = vadd.f32 0.0, %v3118
        %3120 = vmatmul.bf16.gmra.mxu0 %v2977
        %v3121 = vpop.f32.mrf.mxu0
        %v3122 = vpop.f32.mrf.mxu0
        %v3123 = vadd.f32 0.0, %v3122
        %3124 = vmatmul.bf16.gmra.mxu0 %v2980
        %v3125 = vpop.f32.mrf.mxu0
        %v3126 = vpop.f32.mrf.mxu0
        %v3127 = vadd.f32 0.0, %v3126
        %3128 = vmatmul.bf16.gmra.mxu0 %v2983
        %v3129 = vpop.f32.mrf.mxu0
        %v3130 = vpop.f32.mrf.mxu0
        %v3131 = vadd.f32 0.0, %v3130
        %3132 = vmatmul.bf16.gmra.mxu0 %v2986
        %v3133 = vpop.f32.mrf.mxu0
        %v3134 = vpop.f32.mrf.mxu0
        %v3135 = vadd.f32 0.0, %v3134
        %3136 = vmatmul.bf16.gmra.mxu0 %v2989
        %v3137 = vpop.f32.mrf.mxu0
        %v3138 = vpop.f32.mrf.mxu0
        %v3139 = vadd.f32 0.0, %v3138
        %3140 = vmatmul.bf16.gmra.mxu0 %v2992
        %v3141 = vpop.f32.mrf.mxu0
        %v3142 = vpop.f32.mrf.mxu0
        %v3143 = vadd.f32 0.0, %v3142
        %3144 = vmatmul.bf16.gmra.mxu0 %v2995
        %v3145 = vpop.f32.mrf.mxu0
        %v3146 = vpop.f32.mrf.mxu0
        %v3147 = vadd.f32 0.0, %v3146
        %3148 = vdwg.mxu0
        %v3149 = vld [vmem:[#allocation2] sm:$0xf]
        %v3150 = vld [vmem:[#allocation2 + $0x8] sm:$0xf]
        %v3151 = vld [vmem:[#allocation2 + $0x20] sm:$0xf]
        %v3152 = vld [vmem:[#allocation2 + $0x28] sm:$0xf]
        %v3153 = vld [vmem:[#allocation2 + $0x40] sm:$0xf]
        %v3154 = vld [vmem:[#allocation2 + $0x48] sm:$0xf]
        %v3155 = vld [vmem:[#allocation2 + $0x60] sm:$0xf]
        %v3156 = vld [vmem:[#allocation2 + $0x68] sm:$0xf]
        %v3157 = vld [vmem:[#allocation2 + $0x80] sm:$0xf]
        %v3158 = vld [vmem:[#allocation2 + $0x88] sm:$0xf]
        %v3159 = vld [vmem:[#allocation2 + $0xa0] sm:$0xf]
        %v3160 = vld [vmem:[#allocation2 + $0xa8] sm:$0xf]
        %v3161 = vld [vmem:[#allocation2 + $0xc0] sm:$0xf]
        %v3162 = vld [vmem:[#allocation2 + $0xc8] sm:$0xf]
        %v3163 = vld [vmem:[#allocation2 + $0xe0] sm:$0xf]
        %v3164 = vld [vmem:[#allocation2 + $0xe8] sm:$0xf]
        %v3165 = vld [vmem:[#allocation2 + $0x100] sm:$0xf]
        %v3166 = vld [vmem:[#allocation2 + $0x108] sm:$0xf]
        %v3167 = vld [vmem:[#allocation2 + $0x120] sm:$0xf]
        %v3168 = vld [vmem:[#allocation2 + $0x128] sm:$0xf]
        %v3169 = vld [vmem:[#allocation2 + $0x140] sm:$0xf]
        %v3170 = vld [vmem:[#allocation2 + $0x148] sm:$0xf]
        %v3171 = vld [vmem:[#allocation2 + $0x160] sm:$0xf]
        %v3172 = vld [vmem:[#allocation2 + $0x168] sm:$0xf]
        %v3173 = vld [vmem:[#allocation2 + $0x180] sm:$0xf]
        %v3174 = vld [vmem:[#allocation2 + $0x188] sm:$0xf]
        %v3175 = vld [vmem:[#allocation2 + $0x1a0] sm:$0xf]
        %v3176 = vld [vmem:[#allocation2 + $0x1a8] sm:$0xf]
        %v3177 = vld [vmem:[#allocation2 + $0x1c0] sm:$0xf]
        %v3178 = vld [vmem:[#allocation2 + $0x1c8] sm:$0xf]
        %v3179 = vld [vmem:[#allocation2 + $0x1e0] sm:$0xf]
        %v3180 = vld [vmem:[#allocation2 + $0x1e8] sm:$0xf]
        %v3213 = vrot.slane %v3014, 4
        %v3214 = vrot.slane %v3087, 4
        %v3215 = vrot.slane %v3018, 4
        %v3216 = vrot.slane %v3091, 4
        %v3217 = vrot.slane %v3022, 4
        %v3218 = vrot.slane %v3095, 4
        %v3219 = vrot.slane %v3026, 4
        %v3220 = vrot.slane %v3099, 4
        %v3221 = vrot.slane %v3030, 4
        %v3222 = vrot.slane %v3103, 4
        %v3223 = vrot.slane %v3034, 4
        %v3224 = vrot.slane %v3107, 4
        %v3225 = vrot.slane %v3038, 4
        %v3226 = vrot.slane %v3111, 4
        %v3227 = vrot.slane %v3042, 4
        %v3228 = vrot.slane %v3115, 4
        %v3229 = vrot.slane %v3046, 4
        %v3230 = vrot.slane %v3119, 4
        %v3231 = vrot.slane %v3050, 4
        %v3232 = vrot.slane %v3123, 4
        %v3233 = vrot.slane %v3054, 4
        %v3234 = vrot.slane %v3127, 4
        %v3235 = vrot.slane %v3058, 4
        %v3236 = vrot.slane %v3131, 4
        %v3237 = vrot.slane %v3062, 4
        %v3238 = vrot.slane %v3135, 4
        %v3239 = vrot.slane %v3066, 4
        %v3240 = vrot.slane %v3139, 4
        %v3241 = vrot.slane %v3070, 4
        %v3242 = vrot.slane %v3143, 4
        %v3243 = vrot.slane %v3074, 4
        %v3244 = vrot.slane %v3147, 4
        %v3277 = vadd.f32 %v3149, %v3213
        %v3278 = vadd.f32 %v3150, %v3214
        %v3279 = vadd.f32 %v3151, %v3215
        %v3280 = vadd.f32 %v3152, %v3216
        %v3281 = vadd.f32 %v3153, %v3217
        %v3282 = vadd.f32 %v3154, %v3218
        %v3283 = vadd.f32 %v3155, %v3219
        %v3284 = vadd.f32 %v3156, %v3220
        %v3285 = vadd.f32 %v3157, %v3221
        %v3286 = vadd.f32 %v3158, %v3222
        %v3287 = vadd.f32 %v3159, %v3223
        %v3288 = vadd.f32 %v3160, %v3224
        %v3289 = vadd.f32 %v3161, %v3225
        %v3290 = vadd.f32 %v3162, %v3226
        %v3291 = vadd.f32 %v3163, %v3227
        %v3292 = vadd.f32 %v3164, %v3228
        %v3293 = vadd.f32 %v3165, %v3229
        %v3294 = vadd.f32 %v3166, %v3230
        %v3295 = vadd.f32 %v3167, %v3231
        %v3296 = vadd.f32 %v3168, %v3232
        %v3297 = vadd.f32 %v3169, %v3233
        %v3298 = vadd.f32 %v3170, %v3234
        %v3299 = vadd.f32 %v3171, %v3235
        %v3300 = vadd.f32 %v3172, %v3236
        %v3301 = vadd.f32 %v3173, %v3237
        %v3302 = vadd.f32 %v3174, %v3238
        %v3303 = vadd.f32 %v3175, %v3239
        %v3304 = vadd.f32 %v3176, %v3240
        %v3305 = vadd.f32 %v3177, %v3241
        %v3306 = vadd.f32 %v3178, %v3242
        %v3307 = vadd.f32 %v3179, %v3243
        %v3308 = vadd.f32 %v3180, %v3244
        %3309 = vst [vmem:[#allocation2] sm:$0xf] %v3277
        %3310 = vst [vmem:[#allocation2 + $0x8] sm:$0xf] %v3278
        %3311 = vst [vmem:[#allocation2 + $0x20] sm:$0xf] %v3279
        %3312 = vst [vmem:[#allocation2 + $0x28] sm:$0xf] %v3280
        %3313 = vst [vmem:[#allocation2 + $0x40] sm:$0xf] %v3281
        %3314 = vst [vmem:[#allocation2 + $0x48] sm:$0xf] %v3282
        %3315 = vst [vmem:[#allocation2 + $0x60] sm:$0xf] %v3283
        %3316 = vst [vmem:[#allocation2 + $0x68] sm:$0xf] %v3284
        %3317 = vst [vmem:[#allocation2 + $0x80] sm:$0xf] %v3285
        %3318 = vst [vmem:[#allocation2 + $0x88] sm:$0xf] %v3286
        %3319 = vst [vmem:[#allocation2 + $0xa0] sm:$0xf] %v3287
        %3320 = vst [vmem:[#allocation2 + $0xa8] sm:$0xf] %v3288
        %3321 = vst [vmem:[#allocation2 + $0xc0] sm:$0xf] %v3289
        %3322 = vst [vmem:[#allocation2 + $0xc8] sm:$0xf] %v3290
        %3323 = vst [vmem:[#allocation2 + $0xe0] sm:$0xf] %v3291
        %3324 = vst [vmem:[#allocation2 + $0xe8] sm:$0xf] %v3292
        %3325 = vst [vmem:[#allocation2 + $0x100] sm:$0xf] %v3293
        %3326 = vst [vmem:[#allocation2 + $0x108] sm:$0xf] %v3294
        %3327 = vst [vmem:[#allocation2 + $0x120] sm:$0xf] %v3295
        %3328 = vst [vmem:[#allocation2 + $0x128] sm:$0xf] %v3296
        %3329 = vst [vmem:[#allocation2 + $0x140] sm:$0xf] %v3297
        %3330 = vst [vmem:[#allocation2 + $0x148] sm:$0xf] %v3298
        %3331 = vst [vmem:[#allocation2 + $0x160] sm:$0xf] %v3299
        %3332 = vst [vmem:[#allocation2 + $0x168] sm:$0xf] %v3300
        %3333 = vst [vmem:[#allocation2 + $0x180] sm:$0xf] %v3301
        %3334 = vst [vmem:[#allocation2 + $0x188] sm:$0xf] %v3302
        %3335 = vst [vmem:[#allocation2 + $0x1a0] sm:$0xf] %v3303
        %3336 = vst [vmem:[#allocation2 + $0x1a8] sm:$0xf] %v3304
        %3337 = vst [vmem:[#allocation2 + $0x1c0] sm:$0xf] %v3305
        %3338 = vst [vmem:[#allocation2 + $0x1c8] sm:$0xf] %v3306
        %3339 = vst [vmem:[#allocation2 + $0x1e0] sm:$0xf] %v3307
        %3340 = vst [vmem:[#allocation2 + $0x1e8] sm:$0xf] %v3308
        %s3341 = scalar_lea.vmem %s401, 96
        %v3342 = vld [vmem:[%s3341] sm:$0xf]
        %v3343 = vld [vmem:[%s3341 + $0x4] sm:$0xf]
        %v3344 = vld [vmem:[%s3341 + $0x8] sm:$0xf]
        %v3345 = vld [vmem:[%s3341 + $0xc] sm:$0xf]
        %v3346 = vld [vmem:[%s3341 + $0x10] sm:$0xf]
        %v3347 = vld [vmem:[%s3341 + $0x14] sm:$0xf]
        %v3348 = vld [vmem:[%s3341 + $0x18] sm:$0xf]
        %v3349 = vld [vmem:[%s3341 + $0x1c] sm:$0xf]
        %s3350 = scalar_lea.vmem %s2, 48
        %v3351 = vld [vmem:[%s3350] sm:$0xff]
        %v3360 = vunpack.c.l.b16 %v3342
        %v3361 = vunpack.c.l.b16 %v3343
        %v3362 = vunpack.c.l.b16 %v3344
        %v3363 = vunpack.c.l.b16 %v3345
        %v3364 = vunpack.c.l.b16 %v3346
        %v3365 = vunpack.c.l.b16 %v3347
        %v3366 = vunpack.c.l.b16 %v3348
        %v3367 = vunpack.c.l.b16 %v3349
        %v3368 = vpack.c.b16 %v3361, %v3360
        %v3369 = vpack.c.b16 %v3363, %v3362
        %v3370 = vpack.c.b16 %v3365, %v3364
        %v3371 = vpack.c.b16 %v3367, %v3366
        %v3373 = vunpack.c.l.b16 %v3351
        %v3374 = vunpack.c.h.b16 %v3351
        %v3375 = vpack.c.b16 %v3373, %v3373
        %v3376 = vpack.c.b16 %v3374, %v3374
        %v3378 = vsel %vm521, %v3368, 0
        %v3381 = vsel %vm521, %v3369, 0
        %v3384 = vsel %vm521, %v3370, 0
        %v3387 = vsel %vm521, %v3371, 0
        %v3390 = vsel %vm570, %v3375, 0
        %v3393 = vsel %vm570, %v3376, 0
        %3395 = vmatpush.bf16.msra.mxu0 0
        %3396 = vmatpush.bf16.msra.mxu0 0
        %3397 = vmatpush.bf16.msra.mxu0 0
        %3398 = vmatpush.bf16.msra.mxu0 0
        %3399 = vmatpush.bf16.msra.mxu0 0
        %3400 = vmatpush.bf16.msra.mxu0 0
        %3401 = vmatpush.bf16.msra.mxu0 0
        %3402 = vmatpush.bf16.msra.mxu0 %v3390
        %3403 = vmatmul.bf16.gmra.mxu0 %v3378
        %v3404 = vpop.f32.mrf.mxu0
        %v3405 = vadd.f32 0.0, %v3404
        %v3406 = vpop.f32.mrf.mxu0
        %3407 = vmatmul.bf16.gmra.mxu0 %v3381
        %v3408 = vpop.f32.mrf.mxu0
        %v3409 = vadd.f32 0.0, %v3408
        %v3410 = vpop.f32.mrf.mxu0
        %3411 = vmatmul.bf16.gmra.mxu0 %v3384
        %v3412 = vpop.f32.mrf.mxu0
        %v3413 = vadd.f32 0.0, %v3412
        %v3414 = vpop.f32.mrf.mxu0
        %3415 = vmatmul.bf16.gmra.mxu0 %v3387
        %v3416 = vpop.f32.mrf.mxu0
        %v3417 = vadd.f32 0.0, %v3416
        %v3418 = vpop.f32.mrf.mxu0
        %3419 = vdwg.mxu0
        %3420 = vmatpush.bf16.msra.mxu0 0
        %3421 = vmatpush.bf16.msra.mxu0 0
        %3422 = vmatpush.bf16.msra.mxu0 0
        %3423 = vmatpush.bf16.msra.mxu0 0
        %3424 = vmatpush.bf16.msra.mxu0 0
        %3425 = vmatpush.bf16.msra.mxu0 0
        %3426 = vmatpush.bf16.msra.mxu0 0
        %3427 = vmatpush.bf16.msra.mxu0 %v3393
        %3428 = vmatmul.bf16.gmra.mxu0 %v3378
        %v3429 = vpop.f32.mrf.mxu0
        %v3430 = vadd.f32 0.0, %v3429
        %v3431 = vpop.f32.mrf.mxu0
        %3432 = vmatmul.bf16.gmra.mxu0 %v3381
        %v3433 = vpop.f32.mrf.mxu0
        %v3434 = vadd.f32 0.0, %v3433
        %v3435 = vpop.f32.mrf.mxu0
        %3436 = vmatmul.bf16.gmra.mxu0 %v3384
        %v3437 = vpop.f32.mrf.mxu0
        %v3438 = vadd.f32 0.0, %v3437
        %v3439 = vpop.f32.mrf.mxu0
        %3440 = vmatmul.bf16.gmra.mxu0 %v3387
        %v3441 = vpop.f32.mrf.mxu0
        %v3442 = vadd.f32 0.0, %v3441
        %v3443 = vpop.f32.mrf.mxu0
        %3444 = vdwg.mxu0
        %v3445 = vld [vmem:[#allocation2 + $0x10] sm:$0xf0]
        %v3446 = vld [vmem:[#allocation2 + $0x18] sm:$0xf0]
        %v3447 = vld [vmem:[#allocation2 + $0x30] sm:$0xf0]
        %v3448 = vld [vmem:[#allocation2 + $0x38] sm:$0xf0]
        %v3449 = vld [vmem:[#allocation2 + $0x50] sm:$0xf0]
        %v3450 = vld [vmem:[#allocation2 + $0x58] sm:$0xf0]
        %v3451 = vld [vmem:[#allocation2 + $0x70] sm:$0xf0]
        %v3452 = vld [vmem:[#allocation2 + $0x78] sm:$0xf0]
        %v3461 = vrot.slane %v3405, 4
        %v3462 = vrot.slane %v3430, 4
        %v3463 = vrot.slane %v3409, 4
        %v3464 = vrot.slane %v3434, 4
        %v3465 = vrot.slane %v3413, 4
        %v3466 = vrot.slane %v3438, 4
        %v3467 = vrot.slane %v3417, 4
        %v3468 = vrot.slane %v3442, 4
        %v3477 = vadd.f32 %v3445, %v3461
        %v3478 = vadd.f32 %v3446, %v3462
        %v3479 = vadd.f32 %v3447, %v3463
        %v3480 = vadd.f32 %v3448, %v3464
        %v3481 = vadd.f32 %v3449, %v3465
        %v3482 = vadd.f32 %v3450, %v3466
        %v3483 = vadd.f32 %v3451, %v3467
        %v3484 = vadd.f32 %v3452, %v3468
        %3485 = vst [vmem:[#allocation2 + $0x10] sm:$0xf0] %v3477
        %3486 = vst [vmem:[#allocation2 + $0x18] sm:$0xf0] %v3478
        %3487 = vst [vmem:[#allocation2 + $0x30] sm:$0xf0] %v3479
        %3488 = vst [vmem:[#allocation2 + $0x38] sm:$0xf0] %v3480
        %3489 = vst [vmem:[#allocation2 + $0x50] sm:$0xf0] %v3481
        %3490 = vst [vmem:[#allocation2 + $0x58] sm:$0xf0] %v3482
        %3491 = vst [vmem:[#allocation2 + $0x70] sm:$0xf0] %v3483
        %3492 = vst [vmem:[#allocation2 + $0x78] sm:$0xf0] %v3484
        %v3493 = vld [vmem:[%s3341] sm:$0xf]
        %v3494 = vld [vmem:[%s3341 + $0x4] sm:$0xf]
        %v3495 = vld [vmem:[%s3341 + $0x8] sm:$0xf]
        %v3496 = vld [vmem:[%s3341 + $0xc] sm:$0xf]
        %v3497 = vld [vmem:[%s3341 + $0x10] sm:$0xf]
        %v3498 = vld [vmem:[%s3341 + $0x14] sm:$0xf]
        %v3499 = vld [vmem:[%s3341 + $0x18] sm:$0xf]
        %v3500 = vld [vmem:[%s3341 + $0x1c] sm:$0xf]
        %s3501 = scalar_lea.vmem %s2, 56
        %v3502 = vld [vmem:[%s3501] sm:$0xff]
        %v3511 = vunpack.c.l.b16 %v3493
        %v3512 = vunpack.c.l.b16 %v3494
        %v3513 = vunpack.c.l.b16 %v3495
        %v3514 = vunpack.c.l.b16 %v3496
        %v3515 = vunpack.c.l.b16 %v3497
        %v3516 = vunpack.c.l.b16 %v3498
        %v3517 = vunpack.c.l.b16 %v3499
        %v3518 = vunpack.c.l.b16 %v3500
        %v3519 = vpack.c.b16 %v3512, %v3511
        %v3520 = vpack.c.b16 %v3514, %v3513
        %v3521 = vpack.c.b16 %v3516, %v3515
        %v3522 = vpack.c.b16 %v3518, %v3517
        %v3524 = vunpack.c.l.b16 %v3502
        %v3525 = vunpack.c.h.b16 %v3502
        %v3526 = vpack.c.b16 %v3524, %v3524
        %v3527 = vpack.c.b16 %v3525, %v3525
        %v3529 = vsel %vm521, %v3519, 0
        %v3532 = vsel %vm521, %v3520, 0
        %v3535 = vsel %vm521, %v3521, 0
        %v3538 = vsel %vm521, %v3522, 0
        %v3541 = vsel %vm570, %v3526, 0
        %v3544 = vsel %vm570, %v3527, 0
        %3546 = vmatpush.bf16.msra.mxu0 0
        %3547 = vmatpush.bf16.msra.mxu0 0
        %3548 = vmatpush.bf16.msra.mxu0 0
        %3549 = vmatpush.bf16.msra.mxu0 0
        %3550 = vmatpush.bf16.msra.mxu0 0
        %3551 = vmatpush.bf16.msra.mxu0 0
        %3552 = vmatpush.bf16.msra.mxu0 0
        %3553 = vmatpush.bf16.msra.mxu0 %v3541
        %3554 = vmatmul.bf16.gmra.mxu0 %v3529
        %v3555 = vpop.f32.mrf.mxu0
        %v3556 = vadd.f32 0.0, %v3555
        %v3557 = vpop.f32.mrf.mxu0
        %v3558 = vadd.f32 0.0, %v3557
        %3559 = vmatmul.bf16.gmra.mxu0 %v3532
        %v3560 = vpop.f32.mrf.mxu0
        %v3561 = vadd.f32 0.0, %v3560
        %v3562 = vpop.f32.mrf.mxu0
        %v3563 = vadd.f32 0.0, %v3562
        %3564 = vmatmul.bf16.gmra.mxu0 %v3535
        %v3565 = vpop.f32.mrf.mxu0
        %v3566 = vadd.f32 0.0, %v3565
        %v3567 = vpop.f32.mrf.mxu0
        %v3568 = vadd.f32 0.0, %v3567
        %3569 = vmatmul.bf16.gmra.mxu0 %v3538
        %v3570 = vpop.f32.mrf.mxu0
        %v3571 = vadd.f32 0.0, %v3570
        %v3572 = vpop.f32.mrf.mxu0
        %v3573 = vadd.f32 0.0, %v3572
        %3574 = vdwg.mxu0
        %3575 = vmatpush.bf16.msra.mxu0 0
        %3576 = vmatpush.bf16.msra.mxu0 0
        %3577 = vmatpush.bf16.msra.mxu0 0
        %3578 = vmatpush.bf16.msra.mxu0 0
        %3579 = vmatpush.bf16.msra.mxu0 0
        %3580 = vmatpush.bf16.msra.mxu0 0
        %3581 = vmatpush.bf16.msra.mxu0 0
        %3582 = vmatpush.bf16.msra.mxu0 %v3544
        %3583 = vmatmul.bf16.gmra.mxu0 %v3529
        %v3584 = vpop.f32.mrf.mxu0
        %v3585 = vadd.f32 0.0, %v3584
        %v3586 = vpop.f32.mrf.mxu0
        %v3587 = vadd.f32 0.0, %v3586
        %3588 = vmatmul.bf16.gmra.mxu0 %v3532
        %v3589 = vpop.f32.mrf.mxu0
        %v3590 = vadd.f32 0.0, %v3589
        %v3591 = vpop.f32.mrf.mxu0
        %v3592 = vadd.f32 0.0, %v3591
        %3593 = vmatmul.bf16.gmra.mxu0 %v3535
        %v3594 = vpop.f32.mrf.mxu0
        %v3595 = vadd.f32 0.0, %v3594
        %v3596 = vpop.f32.mrf.mxu0
        %v3597 = vadd.f32 0.0, %v3596
        %3598 = vmatmul.bf16.gmra.mxu0 %v3538
        %v3599 = vpop.f32.mrf.mxu0
        %v3600 = vadd.f32 0.0, %v3599
        %v3601 = vpop.f32.mrf.mxu0
        %v3602 = vadd.f32 0.0, %v3601
        %3603 = vdwg.mxu0
        %v3604 = vld [vmem:[#allocation2] sm:$0xff]
        %v3605 = vld [vmem:[#allocation2 + $0x8] sm:$0xff]
        %v3606 = vld [vmem:[#allocation2 + $0x10] sm:$0xff]
        %v3607 = vld [vmem:[#allocation2 + $0x18] sm:$0xff]
        %v3608 = vld [vmem:[#allocation2 + $0x20] sm:$0xff]
        %v3609 = vld [vmem:[#allocation2 + $0x28] sm:$0xff]
        %v3610 = vld [vmem:[#allocation2 + $0x30] sm:$0xff]
        %v3611 = vld [vmem:[#allocation2 + $0x38] sm:$0xff]
        %v3612 = vld [vmem:[#allocation2 + $0x40] sm:$0xff]
        %v3613 = vld [vmem:[#allocation2 + $0x48] sm:$0xff]
        %v3614 = vld [vmem:[#allocation2 + $0x50] sm:$0xff]
        %v3615 = vld [vmem:[#allocation2 + $0x58] sm:$0xff]
        %v3616 = vld [vmem:[#allocation2 + $0x60] sm:$0xff]
        %v3617 = vld [vmem:[#allocation2 + $0x68] sm:$0xff]
        %v3618 = vld [vmem:[#allocation2 + $0x70] sm:$0xff]
        %v3619 = vld [vmem:[#allocation2 + $0x78] sm:$0xff]
        %v3620 = vadd.f32 %v3604, %v3556
        %v3621 = vadd.f32 %v3605, %v3585
        %v3622 = vadd.f32 %v3606, %v3558
        %v3623 = vadd.f32 %v3607, %v3587
        %v3624 = vadd.f32 %v3608, %v3561
        %v3625 = vadd.f32 %v3609, %v3590
        %v3626 = vadd.f32 %v3610, %v3563
        %v3627 = vadd.f32 %v3611, %v3592
        %v3628 = vadd.f32 %v3612, %v3566
        %v3629 = vadd.f32 %v3613, %v3595
        %v3630 = vadd.f32 %v3614, %v3568
        %v3631 = vadd.f32 %v3615, %v3597
        %v3632 = vadd.f32 %v3616, %v3571
        %v3633 = vadd.f32 %v3617, %v3600
        %v3634 = vadd.f32 %v3618, %v3573
        %v3635 = vadd.f32 %v3619, %v3602
        %3636 = vst [vmem:[#allocation2] sm:$0xff] %v3620
        %3637 = vst [vmem:[#allocation2 + $0x8] sm:$0xff] %v3621
        %3638 = vst [vmem:[#allocation2 + $0x10] sm:$0xff] %v3622
        %3639 = vst [vmem:[#allocation2 + $0x18] sm:$0xff] %v3623
        %3640 = vst [vmem:[#allocation2 + $0x20] sm:$0xff] %v3624
        %3641 = vst [vmem:[#allocation2 + $0x28] sm:$0xff] %v3625
        %3642 = vst [vmem:[#allocation2 + $0x30] sm:$0xff] %v3626
        %3643 = vst [vmem:[#allocation2 + $0x38] sm:$0xff] %v3627
        %3644 = vst [vmem:[#allocation2 + $0x40] sm:$0xff] %v3628
        %3645 = vst [vmem:[#allocation2 + $0x48] sm:$0xff] %v3629
        %3646 = vst [vmem:[#allocation2 + $0x50] sm:$0xff] %v3630
        %3647 = vst [vmem:[#allocation2 + $0x58] sm:$0xff] %v3631
        %3648 = vst [vmem:[#allocation2 + $0x60] sm:$0xff] %v3632
        %3649 = vst [vmem:[#allocation2 + $0x68] sm:$0xff] %v3633
        %3650 = vst [vmem:[#allocation2 + $0x70] sm:$0xff] %v3634
        %3651 = vst [vmem:[#allocation2 + $0x78] sm:$0xff] %v3635
        %v3652 = vld [vmem:[%s3341] sm:$0xf]
        %v3653 = vld [vmem:[%s3341 + $0x4] sm:$0xf]
        %v3654 = vld [vmem:[%s3341 + $0x8] sm:$0xf]
        %v3655 = vld [vmem:[%s3341 + $0xc] sm:$0xf]
        %v3656 = vld [vmem:[%s3341 + $0x10] sm:$0xf]
        %v3657 = vld [vmem:[%s3341 + $0x14] sm:$0xf]
        %v3658 = vld [vmem:[%s3341 + $0x18] sm:$0xf]
        %v3659 = vld [vmem:[%s3341 + $0x1c] sm:$0xf]
        %s3660 = scalar_lea.vmem %s2, 64
        %v3661 = vld [vmem:[%s3660] sm:$0xff]
        %v3670 = vunpack.c.l.b16 %v3652
        %v3671 = vunpack.c.l.b16 %v3653
        %v3672 = vunpack.c.l.b16 %v3654
        %v3673 = vunpack.c.l.b16 %v3655
        %v3674 = vunpack.c.l.b16 %v3656
        %v3675 = vunpack.c.l.b16 %v3657
        %v3676 = vunpack.c.l.b16 %v3658
        %v3677 = vunpack.c.l.b16 %v3659
        %v3678 = vpack.c.b16 %v3671, %v3670
        %v3679 = vpack.c.b16 %v3673, %v3672
        %v3680 = vpack.c.b16 %v3675, %v3674
        %v3681 = vpack.c.b16 %v3677, %v3676
        %v3683 = vunpack.c.l.b16 %v3661
        %v3684 = vunpack.c.h.b16 %v3661
        %v3685 = vpack.c.b16 %v3683, %v3683
        %v3686 = vpack.c.b16 %v3684, %v3684
        %v3688 = vsel %vm521, %v3678, 0
        %v3691 = vsel %vm521, %v3679, 0
        %v3694 = vsel %vm521, %v3680, 0
        %v3697 = vsel %vm521, %v3681, 0
        %v3700 = vsel %vm570, %v3685, 0
        %v3703 = vsel %vm570, %v3686, 0
        %3705 = vmatpush.bf16.msra.mxu0 0
        %3706 = vmatpush.bf16.msra.mxu0 0
        %3707 = vmatpush.bf16.msra.mxu0 0
        %3708 = vmatpush.bf16.msra.mxu0 0
        %3709 = vmatpush.bf16.msra.mxu0 0
        %3710 = vmatpush.bf16.msra.mxu0 0
        %3711 = vmatpush.bf16.msra.mxu0 0
        %3712 = vmatpush.bf16.msra.mxu0 %v3700
        %3713 = vmatmul.bf16.gmra.mxu0 %v3688
        %v3714 = vpop.f32.mrf.mxu0
        %v3715 = vpop.f32.mrf.mxu0
        %v3716 = vadd.f32 0.0, %v3715
        %3717 = vmatmul.bf16.gmra.mxu0 %v3691
        %v3718 = vpop.f32.mrf.mxu0
        %v3719 = vpop.f32.mrf.mxu0
        %v3720 = vadd.f32 0.0, %v3719
        %3721 = vmatmul.bf16.gmra.mxu0 %v3694
        %v3722 = vpop.f32.mrf.mxu0
        %v3723 = vpop.f32.mrf.mxu0
        %v3724 = vadd.f32 0.0, %v3723
        %3725 = vmatmul.bf16.gmra.mxu0 %v3697
        %v3726 = vpop.f32.mrf.mxu0
        %v3727 = vpop.f32.mrf.mxu0
        %v3728 = vadd.f32 0.0, %v3727
        %3729 = vdwg.mxu0
        %3730 = vmatpush.bf16.msra.mxu0 0
        %3731 = vmatpush.bf16.msra.mxu0 0
        %3732 = vmatpush.bf16.msra.mxu0 0
        %3733 = vmatpush.bf16.msra.mxu0 0
        %3734 = vmatpush.bf16.msra.mxu0 0
        %3735 = vmatpush.bf16.msra.mxu0 0
        %3736 = vmatpush.bf16.msra.mxu0 0
        %3737 = vmatpush.bf16.msra.mxu0 %v3703
        %3738 = vmatmul.bf16.gmra.mxu0 %v3688
        %v3739 = vpop.f32.mrf.mxu0
        %v3740 = vpop.f32.mrf.mxu0
        %v3741 = vadd.f32 0.0, %v3740
        %3742 = vmatmul.bf16.gmra.mxu0 %v3691
        %v3743 = vpop.f32.mrf.mxu0
        %v3744 = vpop.f32.mrf.mxu0
        %v3745 = vadd.f32 0.0, %v3744
        %3746 = vmatmul.bf16.gmra.mxu0 %v3694
        %v3747 = vpop.f32.mrf.mxu0
        %v3748 = vpop.f32.mrf.mxu0
        %v3749 = vadd.f32 0.0, %v3748
        %3750 = vmatmul.bf16.gmra.mxu0 %v3697
        %v3751 = vpop.f32.mrf.mxu0
        %v3752 = vpop.f32.mrf.mxu0
        %v3753 = vadd.f32 0.0, %v3752
        %3754 = vdwg.mxu0
        %v3755 = vld [vmem:[#allocation2] sm:$0xf]
        %v3756 = vld [vmem:[#allocation2 + $0x8] sm:$0xf]
        %v3757 = vld [vmem:[#allocation2 + $0x20] sm:$0xf]
        %v3758 = vld [vmem:[#allocation2 + $0x28] sm:$0xf]
        %v3759 = vld [vmem:[#allocation2 + $0x40] sm:$0xf]
        %v3760 = vld [vmem:[#allocation2 + $0x48] sm:$0xf]
        %v3761 = vld [vmem:[#allocation2 + $0x60] sm:$0xf]
        %v3762 = vld [vmem:[#allocation2 + $0x68] sm:$0xf]
        %v3771 = vrot.slane %v3716, 4
        %v3772 = vrot.slane %v3741, 4
        %v3773 = vrot.slane %v3720, 4
        %v3774 = vrot.slane %v3745, 4
        %v3775 = vrot.slane %v3724, 4
        %v3776 = vrot.slane %v3749, 4
        %v3777 = vrot.slane %v3728, 4
        %v3778 = vrot.slane %v3753, 4
        %v3787 = vadd.f32 %v3755, %v3771
        %v3788 = vadd.f32 %v3756, %v3772
        %v3789 = vadd.f32 %v3757, %v3773
        %v3790 = vadd.f32 %v3758, %v3774
        %v3791 = vadd.f32 %v3759, %v3775
        %v3792 = vadd.f32 %v3760, %v3776
        %v3793 = vadd.f32 %v3761, %v3777
        %v3794 = vadd.f32 %v3762, %v3778
        %3795 = vst [vmem:[#allocation2] sm:$0xf] %v3787
        %3796 = vst [vmem:[#allocation2 + $0x8] sm:$0xf] %v3788
        %3797 = vst [vmem:[#allocation2 + $0x20] sm:$0xf] %v3789
        %3798 = vst [vmem:[#allocation2 + $0x28] sm:$0xf] %v3790
        %3799 = vst [vmem:[#allocation2 + $0x40] sm:$0xf] %v3791
        %3800 = vst [vmem:[#allocation2 + $0x48] sm:$0xf] %v3792
        %3801 = vst [vmem:[#allocation2 + $0x60] sm:$0xf] %v3793
        %3802 = vst [vmem:[#allocation2 + $0x68] sm:$0xf] %v3794
        %v3803 = vld [vmem:[#allocation2] sm:$0xff]
        %v3804 = vld [vmem:[#allocation2 + $0x8] sm:$0xff]
        %v3805 = vld [vmem:[#allocation2 + $0x10] sm:$0xff]
        %v3806 = vld [vmem:[#allocation2 + $0x18] sm:$0xff]
        %v3807 = vld [vmem:[#allocation2 + $0x20] sm:$0xff]
        %v3808 = vld [vmem:[#allocation2 + $0x28] sm:$0xff]
        %v3809 = vld [vmem:[#allocation2 + $0x30] sm:$0xff]
        %v3810 = vld [vmem:[#allocation2 + $0x38] sm:$0xff]
        %v3811 = vld [vmem:[#allocation2 + $0x40] sm:$0xff]
        %v3812 = vld [vmem:[#allocation2 + $0x48] sm:$0xff]
        %v3813 = vld [vmem:[#allocation2 + $0x50] sm:$0xff]
        %v3814 = vld [vmem:[#allocation2 + $0x58] sm:$0xff]
        %v3815 = vld [vmem:[#allocation2 + $0x60] sm:$0xff]
        %v3816 = vld [vmem:[#allocation2 + $0x68] sm:$0xff]
        %v3817 = vld [vmem:[#allocation2 + $0x70] sm:$0xff]
        %v3818 = vld [vmem:[#allocation2 + $0x78] sm:$0xff]
        %v3819 = vld [vmem:[#allocation2 + $0x80] sm:$0xff]
        %v3820 = vld [vmem:[#allocation2 + $0x88] sm:$0xff]
        %v3821 = vld [vmem:[#allocation2 + $0x90] sm:$0xff]
        %v3822 = vld [vmem:[#allocation2 + $0x98] sm:$0xff]
        %v3823 = vld [vmem:[#allocation2 + $0xa0] sm:$0xff]
        %v3824 = vld [vmem:[#allocation2 + $0xa8] sm:$0xff]
        %v3825 = vld [vmem:[#allocation2 + $0xb0] sm:$0xff]
        %v3826 = vld [vmem:[#allocation2 + $0xb8] sm:$0xff]
        %v3827 = vld [vmem:[#allocation2 + $0xc0] sm:$0xff]
        %v3828 = vld [vmem:[#allocation2 + $0xc8] sm:$0xff]
        %v3829 = vld [vmem:[#allocation2 + $0xd0] sm:$0xff]
        %v3830 = vld [vmem:[#allocation2 + $0xd8] sm:$0xff]
        %v3831 = vld [vmem:[#allocation2 + $0xe0] sm:$0xff]
        %v3832 = vld [vmem:[#allocation2 + $0xe8] sm:$0xff]
        %v3833 = vld [vmem:[#allocation2 + $0xf0] sm:$0xff]
        %v3834 = vld [vmem:[#allocation2 + $0xf8] sm:$0xff]
        %v3835 = vld [vmem:[#allocation2 + $0x100] sm:$0xff]
        %v3836 = vld [vmem:[#allocation2 + $0x108] sm:$0xff]
        %v3837 = vld [vmem:[#allocation2 + $0x110] sm:$0xff]
        %v3838 = vld [vmem:[#allocation2 + $0x118] sm:$0xff]
        %v3839 = vld [vmem:[#allocation2 + $0x120] sm:$0xff]
        %v3840 = vld [vmem:[#allocation2 + $0x128] sm:$0xff]
        %v3841 = vld [vmem:[#allocation2 + $0x130] sm:$0xff]
        %v3842 = vld [vmem:[#allocation2 + $0x138] sm:$0xff]
        %v3843 = vld [vmem:[#allocation2 + $0x140] sm:$0xff]
        %v3844 = vld [vmem:[#allocation2 + $0x148] sm:$0xff]
        %v3845 = vld [vmem:[#allocation2 + $0x150] sm:$0xff]
        %v3846 = vld [vmem:[#allocation2 + $0x158] sm:$0xff]
        %v3847 = vld [vmem:[#allocation2 + $0x160] sm:$0xff]
        %v3848 = vld [vmem:[#allocation2 + $0x168] sm:$0xff]
        %v3849 = vld [vmem:[#allocation2 + $0x170] sm:$0xff]
        %v3850 = vld [vmem:[#allocation2 + $0x178] sm:$0xff]
        %v3851 = vld [vmem:[#allocation2 + $0x180] sm:$0xff]
        %v3852 = vld [vmem:[#allocation2 + $0x188] sm:$0xff]
        %v3853 = vld [vmem:[#allocation2 + $0x190] sm:$0xff]
        %v3854 = vld [vmem:[#allocation2 + $0x198] sm:$0xff]
        %v3855 = vld [vmem:[#allocation2 + $0x1a0] sm:$0xff]
        %v3856 = vld [vmem:[#allocation2 + $0x1a8] sm:$0xff]
        %v3857 = vld [vmem:[#allocation2 + $0x1b0] sm:$0xff]
        %v3858 = vld [vmem:[#allocation2 + $0x1b8] sm:$0xff]
        %v3859 = vld [vmem:[#allocation2 + $0x1c0] sm:$0xff]
        %v3860 = vld [vmem:[#allocation2 + $0x1c8] sm:$0xff]
        %v3861 = vld [vmem:[#allocation2 + $0x1d0] sm:$0xff]
        %v3862 = vld [vmem:[#allocation2 + $0x1d8] sm:$0xff]
        %v3863 = vld [vmem:[#allocation2 + $0x1e0] sm:$0xff]
        %v3864 = vld [vmem:[#allocation2 + $0x1e8] sm:$0xff]
        %v3865 = vld [vmem:[#allocation2 + $0x1f0] sm:$0xff]
        %v3866 = vld [vmem:[#allocation2 + $0x1f8] sm:$0xff]
        %s3867 = scalar_lea.vmem %s7, 1
        %v3868 = vld [vmem:[%s3867] ss:$8 sm:$0x3]
        %v3870 = vperm.slane %v3868, 0
        %v3871 = vperm.slane %v3868, 1
        %v3874 = vmul.f32 %v3803, %v3870
        %v3875 = vmul.f32 %v3804, %v3871
        %v3876 = vmul.f32 %v3805, %v3870
        %v3877 = vmul.f32 %v3806, %v3871
        %v3878 = vmul.f32 %v3807, %v3870
        %v3879 = vmul.f32 %v3808, %v3871
        %v3880 = vmul.f32 %v3809, %v3870
        %v3881 = vmul.f32 %v3810, %v3871
        %v3882 = vmul.f32 %v3811, %v3870
        %v3883 = vmul.f32 %v3812, %v3871
        %v3884 = vmul.f32 %v3813, %v3870
        %v3885 = vmul.f32 %v3814, %v3871
        %v3886 = vmul.f32 %v3815, %v3870
        %v3887 = vmul.f32 %v3816, %v3871
        %v3888 = vmul.f32 %v3817, %v3870
        %v3889 = vmul.f32 %v3818, %v3871
        %v3890 = vmul.f32 %v3819, %v3870
        %v3891 = vmul.f32 %v3820, %v3871
        %v3892 = vmul.f32 %v3821, %v3870
        %v3893 = vmul.f32 %v3822, %v3871
        %v3894 = vmul.f32 %v3823, %v3870
        %v3895 = vmul.f32 %v3824, %v3871
        %v3896 = vmul.f32 %v3825, %v3870
        %v3897 = vmul.f32 %v3826, %v3871
        %v3898 = vmul.f32 %v3827, %v3870
        %v3899 = vmul.f32 %v3828, %v3871
        %v3900 = vmul.f32 %v3829, %v3870
        %v3901 = vmul.f32 %v3830, %v3871
        %v3902 = vmul.f32 %v3831, %v3870
        %v3903 = vmul.f32 %v3832, %v3871
        %v3904 = vmul.f32 %v3833, %v3870
        %v3905 = vmul.f32 %v3834, %v3871
        %v3906 = vmul.f32 %v3835, %v3870
        %v3907 = vmul.f32 %v3836, %v3871
        %v3908 = vmul.f32 %v3837, %v3870
        %v3909 = vmul.f32 %v3838, %v3871
        %v3910 = vmul.f32 %v3839, %v3870
        %v3911 = vmul.f32 %v3840, %v3871
        %v3912 = vmul.f32 %v3841, %v3870
        %v3913 = vmul.f32 %v3842, %v3871
        %v3914 = vmul.f32 %v3843, %v3870
        %v3915 = vmul.f32 %v3844, %v3871
        %v3916 = vmul.f32 %v3845, %v3870
        %v3917 = vmul.f32 %v3846, %v3871
        %v3918 = vmul.f32 %v3847, %v3870
        %v3919 = vmul.f32 %v3848, %v3871
        %v3920 = vmul.f32 %v3849, %v3870
        %v3921 = vmul.f32 %v3850, %v3871
        %v3922 = vmul.f32 %v3851, %v3870
        %v3923 = vmul.f32 %v3852, %v3871
        %v3924 = vmul.f32 %v3853, %v3870
        %v3925 = vmul.f32 %v3854, %v3871
        %v3926 = vmul.f32 %v3855, %v3870
        %v3927 = vmul.f32 %v3856, %v3871
        %v3928 = vmul.f32 %v3857, %v3870
        %v3929 = vmul.f32 %v3858, %v3871
        %v3930 = vmul.f32 %v3859, %v3870
        %v3931 = vmul.f32 %v3860, %v3871
        %v3932 = vmul.f32 %v3861, %v3870
        %v3933 = vmul.f32 %v3862, %v3871
        %v3934 = vmul.f32 %v3863, %v3870
        %v3935 = vmul.f32 %v3864, %v3871
        %v3936 = vmul.f32 %v3865, %v3870
        %v3937 = vmul.f32 %v3866, %v3871
        %s3938 = scalar_lea.vmem %s8, 1
        %v3939 = vld [vmem:[%s3938] ss:$8 sm:$0x3]
        %v3941 = vperm.slane %v3939, 0
        %v3942 = vperm.slane %v3939, 1
        %v3945 = vadd.f32 %v3874, %v3941
        %v3946 = vadd.f32 %v3875, %v3942
        %v3947 = vadd.f32 %v3876, %v3941
        %v3948 = vadd.f32 %v3877, %v3942
        %v3949 = vadd.f32 %v3878, %v3941
        %v3950 = vadd.f32 %v3879, %v3942
        %v3951 = vadd.f32 %v3880, %v3941
        %v3952 = vadd.f32 %v3881, %v3942
        %v3953 = vadd.f32 %v3882, %v3941
        %v3954 = vadd.f32 %v3883, %v3942
        %v3955 = vadd.f32 %v3884, %v3941
        %v3956 = vadd.f32 %v3885, %v3942
        %v3957 = vadd.f32 %v3886, %v3941
        %v3958 = vadd.f32 %v3887, %v3942
        %v3959 = vadd.f32 %v3888, %v3941
        %v3960 = vadd.f32 %v3889, %v3942
        %v3961 = vadd.f32 %v3890, %v3941
        %v3962 = vadd.f32 %v3891, %v3942
        %v3963 = vadd.f32 %v3892, %v3941
        %v3964 = vadd.f32 %v3893, %v3942
        %v3965 = vadd.f32 %v3894, %v3941
        %v3966 = vadd.f32 %v3895, %v3942
        %v3967 = vadd.f32 %v3896, %v3941
        %v3968 = vadd.f32 %v3897, %v3942
        %v3969 = vadd.f32 %v3898, %v3941
        %v3970 = vadd.f32 %v3899, %v3942
        %v3971 = vadd.f32 %v3900, %v3941
        %v3972 = vadd.f32 %v3901, %v3942
        %v3973 = vadd.f32 %v3902, %v3941
        %v3974 = vadd.f32 %v3903, %v3942
        %v3975 = vadd.f32 %v3904, %v3941
        %v3976 = vadd.f32 %v3905, %v3942
        %v3977 = vadd.f32 %v3906, %v3941
        %v3978 = vadd.f32 %v3907, %v3942
        %v3979 = vadd.f32 %v3908, %v3941
        %v3980 = vadd.f32 %v3909, %v3942
        %v3981 = vadd.f32 %v3910, %v3941
        %v3982 = vadd.f32 %v3911, %v3942
        %v3983 = vadd.f32 %v3912, %v3941
        %v3984 = vadd.f32 %v3913, %v3942
        %v3985 = vadd.f32 %v3914, %v3941
        %v3986 = vadd.f32 %v3915, %v3942
        %v3987 = vadd.f32 %v3916, %v3941
        %v3988 = vadd.f32 %v3917, %v3942
        %v3989 = vadd.f32 %v3918, %v3941
        %v3990 = vadd.f32 %v3919, %v3942
        %v3991 = vadd.f32 %v3920, %v3941
        %v3992 = vadd.f32 %v3921, %v3942
        %v3993 = vadd.f32 %v3922, %v3941
        %v3994 = vadd.f32 %v3923, %v3942
        %v3995 = vadd.f32 %v3924, %v3941
        %v3996 = vadd.f32 %v3925, %v3942
        %v3997 = vadd.f32 %v3926, %v3941
        %v3998 = vadd.f32 %v3927, %v3942
        %v3999 = vadd.f32 %v3928, %v3941
        %v4000 = vadd.f32 %v3929, %v3942
        %v4001 = vadd.f32 %v3930, %v3941
        %v4002 = vadd.f32 %v3931, %v3942
        %v4003 = vadd.f32 %v3932, %v3941
        %v4004 = vadd.f32 %v3933, %v3942
        %v4005 = vadd.f32 %v3934, %v3941
        %v4006 = vadd.f32 %v3935, %v3942
        %v4007 = vadd.f32 %v3936, %v3941
        %v4008 = vadd.f32 %v3937, %v3942
        %v4009 = vmax.f32 %v3945, 0.0
        %v4010 = vmax.f32 %v3946, 0.0
        %v4011 = vmax.f32 %v3947, 0.0
        %v4012 = vmax.f32 %v3948, 0.0
        %v4013 = vmax.f32 %v3949, 0.0
        %v4014 = vmax.f32 %v3950, 0.0
        %v4015 = vmax.f32 %v3951, 0.0
        %v4016 = vmax.f32 %v3952, 0.0
        %v4017 = vmax.f32 %v3953, 0.0
        %v4018 = vmax.f32 %v3954, 0.0
        %v4019 = vmax.f32 %v3955, 0.0
        %v4020 = vmax.f32 %v3956, 0.0
        %v4021 = vmax.f32 %v3957, 0.0
        %v4022 = vmax.f32 %v3958, 0.0
        %v4023 = vmax.f32 %v3959, 0.0
        %v4024 = vmax.f32 %v3960, 0.0
        %v4025 = vmax.f32 %v3961, 0.0
        %v4026 = vmax.f32 %v3962, 0.0
        %v4027 = vmax.f32 %v3963, 0.0
        %v4028 = vmax.f32 %v3964, 0.0
        %v4029 = vmax.f32 %v3965, 0.0
        %v4030 = vmax.f32 %v3966, 0.0
        %v4031 = vmax.f32 %v3967, 0.0
        %v4032 = vmax.f32 %v3968, 0.0
        %v4033 = vmax.f32 %v3969, 0.0
        %v4034 = vmax.f32 %v3970, 0.0
        %v4035 = vmax.f32 %v3971, 0.0
        %v4036 = vmax.f32 %v3972, 0.0
        %v4037 = vmax.f32 %v3973, 0.0
        %v4038 = vmax.f32 %v3974, 0.0
        %v4039 = vmax.f32 %v3975, 0.0
        %v4040 = vmax.f32 %v3976, 0.0
        %v4041 = vmax.f32 %v3977, 0.0
        %v4042 = vmax.f32 %v3978, 0.0
        %v4043 = vmax.f32 %v3979, 0.0
        %v4044 = vmax.f32 %v3980, 0.0
        %v4045 = vmax.f32 %v3981, 0.0
        %v4046 = vmax.f32 %v3982, 0.0
        %v4047 = vmax.f32 %v3983, 0.0
        %v4048 = vmax.f32 %v3984, 0.0
        %v4049 = vmax.f32 %v3985, 0.0
        %v4050 = vmax.f32 %v3986, 0.0
        %v4051 = vmax.f32 %v3987, 0.0
        %v4052 = vmax.f32 %v3988, 0.0
        %v4053 = vmax.f32 %v3989, 0.0
        %v4054 = vmax.f32 %v3990, 0.0
        %v4055 = vmax.f32 %v3991, 0.0
        %v4056 = vmax.f32 %v3992, 0.0
        %v4057 = vmax.f32 %v3993, 0.0
        %v4058 = vmax.f32 %v3994, 0.0
        %v4059 = vmax.f32 %v3995, 0.0
        %v4060 = vmax.f32 %v3996, 0.0
        %v4061 = vmax.f32 %v3997, 0.0
        %v4062 = vmax.f32 %v3998, 0.0
        %v4063 = vmax.f32 %v3999, 0.0
        %v4064 = vmax.f32 %v4000, 0.0
        %v4065 = vmax.f32 %v4001, 0.0
        %v4066 = vmax.f32 %v4002, 0.0
        %v4067 = vmax.f32 %v4003, 0.0
        %v4068 = vmax.f32 %v4004, 0.0
        %v4069 = vmax.f32 %v4005, 0.0
        %v4070 = vmax.f32 %v4006, 0.0
        %v4071 = vmax.f32 %v4007, 0.0
        %v4072 = vmax.f32 %v4008, 0.0
        %v4073 = vld [vmem:[#allocation3] sm:$0xff]
        %v4074 = vld [vmem:[#allocation3 + $0x8] sm:$0xff]
        %v4075 = vld [vmem:[#allocation3 + $0x10] sm:$0xff]
        %v4076 = vld [vmem:[#allocation3 + $0x18] sm:$0xff]
        %v4077 = vld [vmem:[#allocation3 + $0x20] sm:$0xff]
        %v4078 = vld [vmem:[#allocation3 + $0x28] sm:$0xff]
        %v4079 = vld [vmem:[#allocation3 + $0x30] sm:$0xff]
        %v4080 = vld [vmem:[#allocation3 + $0x38] sm:$0xff]
        %v4081 = vld [vmem:[#allocation3 + $0x40] sm:$0xff]
        %v4082 = vld [vmem:[#allocation3 + $0x48] sm:$0xff]
        %v4083 = vld [vmem:[#allocation3 + $0x50] sm:$0xff]
        %v4084 = vld [vmem:[#allocation3 + $0x58] sm:$0xff]
        %v4085 = vld [vmem:[#allocation3 + $0x60] sm:$0xff]
        %v4086 = vld [vmem:[#allocation3 + $0x68] sm:$0xff]
        %v4087 = vld [vmem:[#allocation3 + $0x70] sm:$0xff]
        %v4088 = vld [vmem:[#allocation3 + $0x78] sm:$0xff]
        %v4089 = vld [vmem:[#allocation3 + $0x80] sm:$0xff]
        %v4090 = vld [vmem:[#allocation3 + $0x88] sm:$0xff]
        %v4091 = vld [vmem:[#allocation3 + $0x90] sm:$0xff]
        %v4092 = vld [vmem:[#allocation3 + $0x98] sm:$0xff]
        %v4093 = vld [vmem:[#allocation3 + $0xa0] sm:$0xff]
        %v4094 = vld [vmem:[#allocation3 + $0xa8] sm:$0xff]
        %v4095 = vld [vmem:[#allocation3 + $0xb0] sm:$0xff]
        %v4096 = vld [vmem:[#allocation3 + $0xb8] sm:$0xff]
        %v4097 = vld [vmem:[#allocation3 + $0xc0] sm:$0xff]
        %v4098 = vld [vmem:[#allocation3 + $0xc8] sm:$0xff]
        %v4099 = vld [vmem:[#allocation3 + $0xd0] sm:$0xff]
        %v4100 = vld [vmem:[#allocation3 + $0xd8] sm:$0xff]
        %v4101 = vld [vmem:[#allocation3 + $0xe0] sm:$0xff]
        %v4102 = vld [vmem:[#allocation3 + $0xe8] sm:$0xff]
        %v4103 = vld [vmem:[#allocation3 + $0xf0] sm:$0xff]
        %v4104 = vld [vmem:[#allocation3 + $0xf8] sm:$0xff]
        %v4105 = vld [vmem:[#allocation3 + $0x100] sm:$0xff]
        %v4106 = vld [vmem:[#allocation3 + $0x108] sm:$0xff]
        %v4107 = vld [vmem:[#allocation3 + $0x110] sm:$0xff]
        %v4108 = vld [vmem:[#allocation3 + $0x118] sm:$0xff]
        %v4109 = vld [vmem:[#allocation3 + $0x120] sm:$0xff]
        %v4110 = vld [vmem:[#allocation3 + $0x128] sm:$0xff]
        %v4111 = vld [vmem:[#allocation3 + $0x130] sm:$0xff]
        %v4112 = vld [vmem:[#allocation3 + $0x138] sm:$0xff]
        %v4113 = vld [vmem:[#allocation3 + $0x140] sm:$0xff]
        %v4114 = vld [vmem:[#allocation3 + $0x148] sm:$0xff]
        %v4115 = vld [vmem:[#allocation3 + $0x150] sm:$0xff]
        %v4116 = vld [vmem:[#allocation3 + $0x158] sm:$0xff]
        %v4117 = vld [vmem:[#allocation3 + $0x160] sm:$0xff]
        %v4118 = vld [vmem:[#allocation3 + $0x168] sm:$0xff]
        %v4119 = vld [vmem:[#allocation3 + $0x170] sm:$0xff]
        %v4120 = vld [vmem:[#allocation3 + $0x178] sm:$0xff]
        %v4121 = vld [vmem:[#allocation3 + $0x180] sm:$0xff]
        %v4122 = vld [vmem:[#allocation3 + $0x188] sm:$0xff]
        %v4123 = vld [vmem:[#allocation3 + $0x190] sm:$0xff]
        %v4124 = vld [vmem:[#allocation3 + $0x198] sm:$0xff]
        %v4125 = vld [vmem:[#allocation3 + $0x1a0] sm:$0xff]
        %v4126 = vld [vmem:[#allocation3 + $0x1a8] sm:$0xff]
        %v4127 = vld [vmem:[#allocation3 + $0x1b0] sm:$0xff]
        %v4128 = vld [vmem:[#allocation3 + $0x1b8] sm:$0xff]
        %v4129 = vld [vmem:[#allocation3 + $0x1c0] sm:$0xff]
        %v4130 = vld [vmem:[#allocation3 + $0x1c8] sm:$0xff]
        %v4131 = vld [vmem:[#allocation3 + $0x1d0] sm:$0xff]
        %v4132 = vld [vmem:[#allocation3 + $0x1d8] sm:$0xff]
        %v4133 = vld [vmem:[#allocation3 + $0x1e0] sm:$0xff]
        %v4134 = vld [vmem:[#allocation3 + $0x1e8] sm:$0xff]
        %v4135 = vld [vmem:[#allocation3 + $0x1f0] sm:$0xff]
        %v4136 = vld [vmem:[#allocation3 + $0x1f8] sm:$0xff]
        %v4137 = vpack.c.bf16 %v4011, %v4009
        %v4138 = vpack.c.bf16 %v4012, %v4010
        %v4139 = vpack.c.bf16 %v4015, %v4013
        %v4140 = vpack.c.bf16 %v4016, %v4014
        %v4141 = vpack.c.bf16 %v4019, %v4017
        %v4142 = vpack.c.bf16 %v4020, %v4018
        %v4143 = vpack.c.bf16 %v4023, %v4021
        %v4144 = vpack.c.bf16 %v4024, %v4022
        %v4145 = vpack.c.bf16 %v4027, %v4025
        %v4146 = vpack.c.bf16 %v4028, %v4026
        %v4147 = vpack.c.bf16 %v4031, %v4029
        %v4148 = vpack.c.bf16 %v4032, %v4030
        %v4149 = vpack.c.bf16 %v4035, %v4033
        %v4150 = vpack.c.bf16 %v4036, %v4034
        %v4151 = vpack.c.bf16 %v4039, %v4037
        %v4152 = vpack.c.bf16 %v4040, %v4038
        %v4153 = vpack.c.bf16 %v4043, %v4041
        %v4154 = vpack.c.bf16 %v4044, %v4042
        %v4155 = vpack.c.bf16 %v4047, %v4045
        %v4156 = vpack.c.bf16 %v4048, %v4046
        %v4157 = vpack.c.bf16 %v4051, %v4049
        %v4158 = vpack.c.bf16 %v4052, %v4050
        %v4159 = vpack.c.bf16 %v4055, %v4053
        %v4160 = vpack.c.bf16 %v4056, %v4054
        %v4161 = vpack.c.bf16 %v4059, %v4057
        %v4162 = vpack.c.bf16 %v4060, %v4058
        %v4163 = vpack.c.bf16 %v4063, %v4061
        %v4164 = vpack.c.bf16 %v4064, %v4062
        %v4165 = vpack.c.bf16 %v4067, %v4065
        %v4166 = vpack.c.bf16 %v4068, %v4066
        %v4167 = vpack.c.bf16 %v4071, %v4069
        %v4168 = vpack.c.bf16 %v4072, %v4070
        %s4169 = scalar_lea.vmem [#allocation4], 256
        %v4170 = vld [vmem:[%s4169] sm:$0xff]
        %v4171 = vld [vmem:[%s4169 + $0x8] sm:$0xff]
        %v4172 = vld [vmem:[%s4169 + $0x10] sm:$0xff]
        %v4173 = vld [vmem:[%s4169 + $0x18] sm:$0xff]
        %v4174 = vld [vmem:[%s4169 + $0x20] sm:$0xff]
        %v4175 = vld [vmem:[%s4169 + $0x28] sm:$0xff]
        %v4176 = vld [vmem:[%s4169 + $0x30] sm:$0xff]
        %v4177 = vld [vmem:[%s4169 + $0x38] sm:$0xff]
        %v4178 = vld [vmem:[%s4169 + $0x40] sm:$0xff]
        %v4179 = vld [vmem:[%s4169 + $0x48] sm:$0xff]
        %v4180 = vld [vmem:[%s4169 + $0x50] sm:$0xff]
        %v4181 = vld [vmem:[%s4169 + $0x58] sm:$0xff]
        %v4182 = vld [vmem:[%s4169 + $0x60] sm:$0xff]
        %v4183 = vld [vmem:[%s4169 + $0x68] sm:$0xff]
        %v4184 = vld [vmem:[%s4169 + $0x70] sm:$0xff]
        %v4185 = vld [vmem:[%s4169 + $0x78] sm:$0xff]
        %v4186 = vld [vmem:[%s4169 + $0x80] sm:$0xff]
        %v4187 = vld [vmem:[%s4169 + $0x88] sm:$0xff]
        %v4188 = vld [vmem:[%s4169 + $0x90] sm:$0xff]
        %v4189 = vld [vmem:[%s4169 + $0x98] sm:$0xff]
        %v4190 = vld [vmem:[%s4169 + $0xa0] sm:$0xff]
        %v4191 = vld [vmem:[%s4169 + $0xa8] sm:$0xff]
        %v4192 = vld [vmem:[%s4169 + $0xb0] sm:$0xff]
        %v4193 = vld [vmem:[%s4169 + $0xb8] sm:$0xff]
        %v4194 = vld [vmem:[%s4169 + $0xc0] sm:$0xff]
        %v4195 = vld [vmem:[%s4169 + $0xc8] sm:$0xff]
        %v4196 = vld [vmem:[%s4169 + $0xd0] sm:$0xff]
        %v4197 = vld [vmem:[%s4169 + $0xd8] sm:$0xff]
        %v4198 = vld [vmem:[%s4169 + $0xe0] sm:$0xff]
        %v4199 = vld [vmem:[%s4169 + $0xe8] sm:$0xff]
        %v4200 = vld [vmem:[%s4169 + $0xf0] sm:$0xff]
        %v4201 = vld [vmem:[%s4169 + $0xf8] sm:$0xff]
        %v4234 = vunpack.c.l.b16 %v4170
        %v4235 = vunpack.c.h.b16 %v4170
        %v4236 = vunpack.c.l.b16 %v4171
        %v4237 = vunpack.c.h.b16 %v4171
        %v4238 = vunpack.c.l.b16 %v4172
        %v4239 = vunpack.c.h.b16 %v4172
        %v4240 = vunpack.c.l.b16 %v4173
        %v4241 = vunpack.c.h.b16 %v4173
        %v4242 = vunpack.c.l.b16 %v4174
        %v4243 = vunpack.c.h.b16 %v4174
        %v4244 = vunpack.c.l.b16 %v4175
        %v4245 = vunpack.c.h.b16 %v4175
        %v4246 = vunpack.c.l.b16 %v4176
        %v4247 = vunpack.c.h.b16 %v4176
        %v4248 = vunpack.c.l.b16 %v4177
        %v4249 = vunpack.c.h.b16 %v4177
        %v4250 = vunpack.c.l.b16 %v4178
        %v4251 = vunpack.c.h.b16 %v4178
        %v4252 = vunpack.c.l.b16 %v4179
        %v4253 = vunpack.c.h.b16 %v4179
        %v4254 = vunpack.c.l.b16 %v4180
        %v4255 = vunpack.c.h.b16 %v4180
        %v4256 = vunpack.c.l.b16 %v4181
        %v4257 = vunpack.c.h.b16 %v4181
        %v4258 = vunpack.c.l.b16 %v4182
        %v4259 = vunpack.c.h.b16 %v4182
        %v4260 = vunpack.c.l.b16 %v4183
        %v4261 = vunpack.c.h.b16 %v4183
        %v4262 = vunpack.c.l.b16 %v4184
        %v4263 = vunpack.c.h.b16 %v4184
        %v4264 = vunpack.c.l.b16 %v4185
        %v4265 = vunpack.c.h.b16 %v4185
        %v4266 = vunpack.c.l.b16 %v4186
        %v4267 = vunpack.c.h.b16 %v4186
        %v4268 = vunpack.c.l.b16 %v4187
        %v4269 = vunpack.c.h.b16 %v4187
        %v4270 = vunpack.c.l.b16 %v4188
        %v4271 = vunpack.c.h.b16 %v4188
        %v4272 = vunpack.c.l.b16 %v4189
        %v4273 = vunpack.c.h.b16 %v4189
        %v4274 = vunpack.c.l.b16 %v4190
        %v4275 = vunpack.c.h.b16 %v4190
        %v4276 = vunpack.c.l.b16 %v4191
        %v4277 = vunpack.c.h.b16 %v4191
        %v4278 = vunpack.c.l.b16 %v4192
        %v4279 = vunpack.c.h.b16 %v4192
        %v4280 = vunpack.c.l.b16 %v4193
        %v4281 = vunpack.c.h.b16 %v4193
        %v4282 = vunpack.c.l.b16 %v4194
        %v4283 = vunpack.c.h.b16 %v4194
        %v4284 = vunpack.c.l.b16 %v4195
        %v4285 = vunpack.c.h.b16 %v4195
        %v4286 = vunpack.c.l.b16 %v4196
        %v4287 = vunpack.c.h.b16 %v4196
        %v4288 = vunpack.c.l.b16 %v4197
        %v4289 = vunpack.c.h.b16 %v4197
        %v4290 = vunpack.c.l.b16 %v4198
        %v4291 = vunpack.c.h.b16 %v4198
        %v4292 = vunpack.c.l.b16 %v4199
        %v4293 = vunpack.c.h.b16 %v4199
        %v4294 = vunpack.c.l.b16 %v4200
        %v4295 = vunpack.c.h.b16 %v4200
        %v4296 = vunpack.c.l.b16 %v4201
        %v4297 = vunpack.c.h.b16 %v4201
        %v4298 = vpack.c.b16 %v4236, %v4234
        %v4299 = vpack.c.b16 %v4237, %v4235
        %v4300 = vpack.c.b16 %v4240, %v4238
        %v4301 = vpack.c.b16 %v4241, %v4239
        %v4302 = vpack.c.b16 %v4244, %v4242
        %v4303 = vpack.c.b16 %v4245, %v4243
        %v4304 = vpack.c.b16 %v4248, %v4246
        %v4305 = vpack.c.b16 %v4249, %v4247
        %v4306 = vpack.c.b16 %v4252, %v4250
        %v4307 = vpack.c.b16 %v4253, %v4251
        %v4308 = vpack.c.b16 %v4256, %v4254
        %v4309 = vpack.c.b16 %v4257, %v4255
        %v4310 = vpack.c.b16 %v4260, %v4258
        %v4311 = vpack.c.b16 %v4261, %v4259
        %v4312 = vpack.c.b16 %v4264, %v4262
        %v4313 = vpack.c.b16 %v4265, %v4263
        %v4314 = vpack.c.b16 %v4268, %v4266
        %v4315 = vpack.c.b16 %v4269, %v4267
        %v4316 = vpack.c.b16 %v4272, %v4270
        %v4317 = vpack.c.b16 %v4273, %v4271
        %v4318 = vpack.c.b16 %v4276, %v4274
        %v4319 = vpack.c.b16 %v4277, %v4275
        %v4320 = vpack.c.b16 %v4280, %v4278
        %v4321 = vpack.c.b16 %v4281, %v4279
        %v4322 = vpack.c.b16 %v4284, %v4282
        %v4323 = vpack.c.b16 %v4285, %v4283
        %v4324 = vpack.c.b16 %v4288, %v4286
        %v4325 = vpack.c.b16 %v4289, %v4287
        %v4326 = vpack.c.b16 %v4292, %v4290
        %v4327 = vpack.c.b16 %v4293, %v4291
        %v4328 = vpack.c.b16 %v4296, %v4294
        %v4329 = vpack.c.b16 %v4297, %v4295
        %4362 = vmatpush.bf16.msra.mxu0 %v4312
        %4363 = vmatpush.bf16.msra.mxu0 %v4310
        %4364 = vmatpush.bf16.msra.mxu0 %v4308
        %4365 = vmatpush.bf16.msra.mxu0 %v4306
        %4366 = vmatpush.bf16.msra.mxu0 %v4304
        %4367 = vmatpush.bf16.msra.mxu0 %v4302
        %4368 = vmatpush.bf16.msra.mxu0 %v4300
        %4369 = vmatpush.bf16.msra.mxu0 %v4298
        %4370 = vmatmul.bf16.gmra.mxu0 %v4137
        %v4371 = vpop.f32.mrf.mxu0
        %v4372 = vadd.f32 0.0, %v4371
        %v4373 = vpop.f32.mrf.mxu0
        %v4374 = vadd.f32 0.0, %v4373
        %4375 = vmatmul.bf16.gmra.mxu0 %v4139
        %v4376 = vpop.f32.mrf.mxu0
        %v4377 = vadd.f32 0.0, %v4376
        %v4378 = vpop.f32.mrf.mxu0
        %v4379 = vadd.f32 0.0, %v4378
        %4380 = vmatmul.bf16.gmra.mxu0 %v4141
        %v4381 = vpop.f32.mrf.mxu0
        %v4382 = vadd.f32 0.0, %v4381
        %v4383 = vpop.f32.mrf.mxu0
        %v4384 = vadd.f32 0.0, %v4383
        %4385 = vmatmul.bf16.gmra.mxu0 %v4143
        %v4386 = vpop.f32.mrf.mxu0
        %v4387 = vadd.f32 0.0, %v4386
        %v4388 = vpop.f32.mrf.mxu0
        %v4389 = vadd.f32 0.0, %v4388
        %4390 = vmatmul.bf16.gmra.mxu0 %v4145
        %v4391 = vpop.f32.mrf.mxu0
        %v4392 = vadd.f32 0.0, %v4391
        %v4393 = vpop.f32.mrf.mxu0
        %v4394 = vadd.f32 0.0, %v4393
        %4395 = vmatmul.bf16.gmra.mxu0 %v4147
        %v4396 = vpop.f32.mrf.mxu0
        %v4397 = vadd.f32 0.0, %v4396
        %v4398 = vpop.f32.mrf.mxu0
        %v4399 = vadd.f32 0.0, %v4398
        %4400 = vmatmul.bf16.gmra.mxu0 %v4149
        %v4401 = vpop.f32.mrf.mxu0
        %v4402 = vadd.f32 0.0, %v4401
        %v4403 = vpop.f32.mrf.mxu0
        %v4404 = vadd.f32 0.0, %v4403
        %4405 = vmatmul.bf16.gmra.mxu0 %v4151
        %v4406 = vpop.f32.mrf.mxu0
        %v4407 = vadd.f32 0.0, %v4406
        %v4408 = vpop.f32.mrf.mxu0
        %v4409 = vadd.f32 0.0, %v4408
        %4410 = vmatmul.bf16.gmra.mxu0 %v4153
        %v4411 = vpop.f32.mrf.mxu0
        %v4412 = vadd.f32 0.0, %v4411
        %v4413 = vpop.f32.mrf.mxu0
        %v4414 = vadd.f32 0.0, %v4413
        %4415 = vmatmul.bf16.gmra.mxu0 %v4155
        %v4416 = vpop.f32.mrf.mxu0
        %v4417 = vadd.f32 0.0, %v4416
        %v4418 = vpop.f32.mrf.mxu0
        %v4419 = vadd.f32 0.0, %v4418
        %4420 = vmatmul.bf16.gmra.mxu0 %v4157
        %v4421 = vpop.f32.mrf.mxu0
        %v4422 = vadd.f32 0.0, %v4421
        %v4423 = vpop.f32.mrf.mxu0
        %v4424 = vadd.f32 0.0, %v4423
        %4425 = vmatmul.bf16.gmra.mxu0 %v4159
        %v4426 = vpop.f32.mrf.mxu0
        %v4427 = vadd.f32 0.0, %v4426
        %v4428 = vpop.f32.mrf.mxu0
        %v4429 = vadd.f32 0.0, %v4428
        %4430 = vmatmul.bf16.gmra.mxu0 %v4161
        %v4431 = vpop.f32.mrf.mxu0
        %v4432 = vadd.f32 0.0, %v4431
        %v4433 = vpop.f32.mrf.mxu0
        %v4434 = vadd.f32 0.0, %v4433
        %4435 = vmatmul.bf16.gmra.mxu0 %v4163
        %v4436 = vpop.f32.mrf.mxu0
        %v4437 = vadd.f32 0.0, %v4436
        %v4438 = vpop.f32.mrf.mxu0
        %v4439 = vadd.f32 0.0, %v4438
        %4440 = vmatmul.bf16.gmra.mxu0 %v4165
        %v4441 = vpop.f32.mrf.mxu0
        %v4442 = vadd.f32 0.0, %v4441
        %v4443 = vpop.f32.mrf.mxu0
        %v4444 = vadd.f32 0.0, %v4443
        %4445 = vmatmul.bf16.gmra.mxu0 %v4167
        %v4446 = vpop.f32.mrf.mxu0
        %v4447 = vadd.f32 0.0, %v4446
        %v4448 = vpop.f32.mrf.mxu0
        %v4449 = vadd.f32 0.0, %v4448
        %4450 = vdwg.mxu0
        %4451 = vmatpush.bf16.msra.mxu0 %v4328
        %4452 = vmatpush.bf16.msra.mxu0 %v4326
        %4453 = vmatpush.bf16.msra.mxu0 %v4324
        %4454 = vmatpush.bf16.msra.mxu0 %v4322
        %4455 = vmatpush.bf16.msra.mxu0 %v4320
        %4456 = vmatpush.bf16.msra.mxu0 %v4318
        %4457 = vmatpush.bf16.msra.mxu0 %v4316
        %4458 = vmatpush.bf16.msra.mxu0 %v4314
        %4459 = vmatmul.bf16.gmra.mxu0 %v4138
        %v4460 = vpop.f32.mrf.mxu0
        %v4461 = vadd.f32 %v4372, %v4460
        %v4462 = vpop.f32.mrf.mxu0
        %v4463 = vadd.f32 %v4374, %v4462
        %4464 = vmatmul.bf16.gmra.mxu0 %v4140
        %v4465 = vpop.f32.mrf.mxu0
        %v4466 = vadd.f32 %v4377, %v4465
        %v4467 = vpop.f32.mrf.mxu0
        %v4468 = vadd.f32 %v4379, %v4467
        %4469 = vmatmul.bf16.gmra.mxu0 %v4142
        %v4470 = vpop.f32.mrf.mxu0
        %v4471 = vadd.f32 %v4382, %v4470
        %v4472 = vpop.f32.mrf.mxu0
        %v4473 = vadd.f32 %v4384, %v4472
        %4474 = vmatmul.bf16.gmra.mxu0 %v4144
        %v4475 = vpop.f32.mrf.mxu0
        %v4476 = vadd.f32 %v4387, %v4475
        %v4477 = vpop.f32.mrf.mxu0
        %v4478 = vadd.f32 %v4389, %v4477
        %4479 = vmatmul.bf16.gmra.mxu0 %v4146
        %v4480 = vpop.f32.mrf.mxu0
        %v4481 = vadd.f32 %v4392, %v4480
        %v4482 = vpop.f32.mrf.mxu0
        %v4483 = vadd.f32 %v4394, %v4482
        %4484 = vmatmul.bf16.gmra.mxu0 %v4148
        %v4485 = vpop.f32.mrf.mxu0
        %v4486 = vadd.f32 %v4397, %v4485
        %v4487 = vpop.f32.mrf.mxu0
        %v4488 = vadd.f32 %v4399, %v4487
        %4489 = vmatmul.bf16.gmra.mxu0 %v4150
        %v4490 = vpop.f32.mrf.mxu0
        %v4491 = vadd.f32 %v4402, %v4490
        %v4492 = vpop.f32.mrf.mxu0
        %v4493 = vadd.f32 %v4404, %v4492
        %4494 = vmatmul.bf16.gmra.mxu0 %v4152
        %v4495 = vpop.f32.mrf.mxu0
        %v4496 = vadd.f32 %v4407, %v4495
        %v4497 = vpop.f32.mrf.mxu0
        %v4498 = vadd.f32 %v4409, %v4497
        %4499 = vmatmul.bf16.gmra.mxu0 %v4154
        %v4500 = vpop.f32.mrf.mxu0
        %v4501 = vadd.f32 %v4412, %v4500
        %v4502 = vpop.f32.mrf.mxu0
        %v4503 = vadd.f32 %v4414, %v4502
        %4504 = vmatmul.bf16.gmra.mxu0 %v4156
        %v4505 = vpop.f32.mrf.mxu0
        %v4506 = vadd.f32 %v4417, %v4505
        %v4507 = vpop.f32.mrf.mxu0
        %v4508 = vadd.f32 %v4419, %v4507
        %4509 = vmatmul.bf16.gmra.mxu0 %v4158
        %v4510 = vpop.f32.mrf.mxu0
        %v4511 = vadd.f32 %v4422, %v4510
        %v4512 = vpop.f32.mrf.mxu0
        %v4513 = vadd.f32 %v4424, %v4512
        %4514 = vmatmul.bf16.gmra.mxu0 %v4160
        %v4515 = vpop.f32.mrf.mxu0
        %v4516 = vadd.f32 %v4427, %v4515
        %v4517 = vpop.f32.mrf.mxu0
        %v4518 = vadd.f32 %v4429, %v4517
        %4519 = vmatmul.bf16.gmra.mxu0 %v4162
        %v4520 = vpop.f32.mrf.mxu0
        %v4521 = vadd.f32 %v4432, %v4520
        %v4522 = vpop.f32.mrf.mxu0
        %v4523 = vadd.f32 %v4434, %v4522
        %4524 = vmatmul.bf16.gmra.mxu0 %v4164
        %v4525 = vpop.f32.mrf.mxu0
        %v4526 = vadd.f32 %v4437, %v4525
        %v4527 = vpop.f32.mrf.mxu0
        %v4528 = vadd.f32 %v4439, %v4527
        %4529 = vmatmul.bf16.gmra.mxu0 %v4166
        %v4530 = vpop.f32.mrf.mxu0
        %v4531 = vadd.f32 %v4442, %v4530
        %v4532 = vpop.f32.mrf.mxu0
        %v4533 = vadd.f32 %v4444, %v4532
        %4534 = vmatmul.bf16.gmra.mxu0 %v4168
        %v4535 = vpop.f32.mrf.mxu0
        %v4536 = vadd.f32 %v4447, %v4535
        %v4537 = vpop.f32.mrf.mxu0
        %v4538 = vadd.f32 %v4449, %v4537
        %4539 = vdwg.mxu0
        %4540 = vmatpush.bf16.msra.mxu0 %v4313
        %4541 = vmatpush.bf16.msra.mxu0 %v4311
        %4542 = vmatpush.bf16.msra.mxu0 %v4309
        %4543 = vmatpush.bf16.msra.mxu0 %v4307
        %4544 = vmatpush.bf16.msra.mxu0 %v4305
        %4545 = vmatpush.bf16.msra.mxu0 %v4303
        %4546 = vmatpush.bf16.msra.mxu0 %v4301
        %4547 = vmatpush.bf16.msra.mxu0 %v4299
        %4548 = vmatmul.bf16.gmra.mxu0 %v4137
        %v4549 = vpop.f32.mrf.mxu0
        %v4550 = vadd.f32 0.0, %v4549
        %v4551 = vpop.f32.mrf.mxu0
        %v4552 = vadd.f32 0.0, %v4551
        %4553 = vmatmul.bf16.gmra.mxu0 %v4139
        %v4554 = vpop.f32.mrf.mxu0
        %v4555 = vadd.f32 0.0, %v4554
        %v4556 = vpop.f32.mrf.mxu0
        %v4557 = vadd.f32 0.0, %v4556
        %4558 = vmatmul.bf16.gmra.mxu0 %v4141
        %v4559 = vpop.f32.mrf.mxu0
        %v4560 = vadd.f32 0.0, %v4559
        %v4561 = vpop.f32.mrf.mxu0
        %v4562 = vadd.f32 0.0, %v4561
        %4563 = vmatmul.bf16.gmra.mxu0 %v4143
        %v4564 = vpop.f32.mrf.mxu0
        %v4565 = vadd.f32 0.0, %v4564
        %v4566 = vpop.f32.mrf.mxu0
        %v4567 = vadd.f32 0.0, %v4566
        %4568 = vmatmul.bf16.gmra.mxu0 %v4145
        %v4569 = vpop.f32.mrf.mxu0
        %v4570 = vadd.f32 0.0, %v4569
        %v4571 = vpop.f32.mrf.mxu0
        %v4572 = vadd.f32 0.0, %v4571
        %4573 = vmatmul.bf16.gmra.mxu0 %v4147
        %v4574 = vpop.f32.mrf.mxu0
        %v4575 = vadd.f32 0.0, %v4574
        %v4576 = vpop.f32.mrf.mxu0
        %v4577 = vadd.f32 0.0, %v4576
        %4578 = vmatmul.bf16.gmra.mxu0 %v4149
        %v4579 = vpop.f32.mrf.mxu0
        %v4580 = vadd.f32 0.0, %v4579
        %v4581 = vpop.f32.mrf.mxu0
        %v4582 = vadd.f32 0.0, %v4581
        %4583 = vmatmul.bf16.gmra.mxu0 %v4151
        %v4584 = vpop.f32.mrf.mxu0
        %v4585 = vadd.f32 0.0, %v4584
        %v4586 = vpop.f32.mrf.mxu0
        %v4587 = vadd.f32 0.0, %v4586
        %4588 = vmatmul.bf16.gmra.mxu0 %v4153
        %v4589 = vpop.f32.mrf.mxu0
        %v4590 = vadd.f32 0.0, %v4589
        %v4591 = vpop.f32.mrf.mxu0
        %v4592 = vadd.f32 0.0, %v4591
        %4593 = vmatmul.bf16.gmra.mxu0 %v4155
        %v4594 = vpop.f32.mrf.mxu0
        %v4595 = vadd.f32 0.0, %v4594
        %v4596 = vpop.f32.mrf.mxu0
        %v4597 = vadd.f32 0.0, %v4596
        %4598 = vmatmul.bf16.gmra.mxu0 %v4157
        %v4599 = vpop.f32.mrf.mxu0
        %v4600 = vadd.f32 0.0, %v4599
        %v4601 = vpop.f32.mrf.mxu0
        %v4602 = vadd.f32 0.0, %v4601
        %4603 = vmatmul.bf16.gmra.mxu0 %v4159
        %v4604 = vpop.f32.mrf.mxu0
        %v4605 = vadd.f32 0.0, %v4604
        %v4606 = vpop.f32.mrf.mxu0
        %v4607 = vadd.f32 0.0, %v4606
        %4608 = vmatmul.bf16.gmra.mxu0 %v4161
        %v4609 = vpop.f32.mrf.mxu0
        %v4610 = vadd.f32 0.0, %v4609
        %v4611 = vpop.f32.mrf.mxu0
        %v4612 = vadd.f32 0.0, %v4611
        %4613 = vmatmul.bf16.gmra.mxu0 %v4163
        %v4614 = vpop.f32.mrf.mxu0
        %v4615 = vadd.f32 0.0, %v4614
        %v4616 = vpop.f32.mrf.mxu0
        %v4617 = vadd.f32 0.0, %v4616
        %4618 = vmatmul.bf16.gmra.mxu0 %v4165
        %v4619 = vpop.f32.mrf.mxu0
        %v4620 = vadd.f32 0.0, %v4619
        %v4621 = vpop.f32.mrf.mxu0
        %v4622 = vadd.f32 0.0, %v4621
        %4623 = vmatmul.bf16.gmra.mxu0 %v4167
        %v4624 = vpop.f32.mrf.mxu0
        %v4625 = vadd.f32 0.0, %v4624
        %v4626 = vpop.f32.mrf.mxu0
        %v4627 = vadd.f32 0.0, %v4626
        %4628 = vdwg.mxu0
        %4629 = vmatpush.bf16.msra.mxu0 %v4329
        %4630 = vmatpush.bf16.msra.mxu0 %v4327
        %4631 = vmatpush.bf16.msra.mxu0 %v4325
        %4632 = vmatpush.bf16.msra.mxu0 %v4323
        %4633 = vmatpush.bf16.msra.mxu0 %v4321
        %4634 = vmatpush.bf16.msra.mxu0 %v4319
        %4635 = vmatpush.bf16.msra.mxu0 %v4317
        %4636 = vmatpush.bf16.msra.mxu0 %v4315
        %4637 = vmatmul.bf16.gmra.mxu0 %v4138
        %v4638 = vpop.f32.mrf.mxu0
        %v4639 = vadd.f32 %v4550, %v4638
        %v4640 = vpop.f32.mrf.mxu0
        %v4641 = vadd.f32 %v4552, %v4640
        %4642 = vmatmul.bf16.gmra.mxu0 %v4140
        %v4643 = vpop.f32.mrf.mxu0
        %v4644 = vadd.f32 %v4555, %v4643
        %v4645 = vpop.f32.mrf.mxu0
        %v4646 = vadd.f32 %v4557, %v4645
        %4647 = vmatmul.bf16.gmra.mxu0 %v4142
        %v4648 = vpop.f32.mrf.mxu0
        %v4649 = vadd.f32 %v4560, %v4648
        %v4650 = vpop.f32.mrf.mxu0
        %v4651 = vadd.f32 %v4562, %v4650
        %4652 = vmatmul.bf16.gmra.mxu0 %v4144
        %v4653 = vpop.f32.mrf.mxu0
        %v4654 = vadd.f32 %v4565, %v4653
        %v4655 = vpop.f32.mrf.mxu0
        %v4656 = vadd.f32 %v4567, %v4655
        %4657 = vmatmul.bf16.gmra.mxu0 %v4146
        %v4658 = vpop.f32.mrf.mxu0
        %v4659 = vadd.f32 %v4570, %v4658
        %v4660 = vpop.f32.mrf.mxu0
        %v4661 = vadd.f32 %v4572, %v4660
        %4662 = vmatmul.bf16.gmra.mxu0 %v4148
        %v4663 = vpop.f32.mrf.mxu0
        %v4664 = vadd.f32 %v4575, %v4663
        %v4665 = vpop.f32.mrf.mxu0
        %v4666 = vadd.f32 %v4577, %v4665
        %4667 = vmatmul.bf16.gmra.mxu0 %v4150
        %v4668 = vpop.f32.mrf.mxu0
        %v4669 = vadd.f32 %v4580, %v4668
        %v4670 = vpop.f32.mrf.mxu0
        %v4671 = vadd.f32 %v4582, %v4670
        %4672 = vmatmul.bf16.gmra.mxu0 %v4152
        %v4673 = vpop.f32.mrf.mxu0
        %v4674 = vadd.f32 %v4585, %v4673
        %v4675 = vpop.f32.mrf.mxu0
        %v4676 = vadd.f32 %v4587, %v4675
        %4677 = vmatmul.bf16.gmra.mxu0 %v4154
        %v4678 = vpop.f32.mrf.mxu0
        %v4679 = vadd.f32 %v4590, %v4678
        %v4680 = vpop.f32.mrf.mxu0
        %v4681 = vadd.f32 %v4592, %v4680
        %4682 = vmatmul.bf16.gmra.mxu0 %v4156
        %v4683 = vpop.f32.mrf.mxu0
        %v4684 = vadd.f32 %v4595, %v4683
        %v4685 = vpop.f32.mrf.mxu0
        %v4686 = vadd.f32 %v4597, %v4685
        %4687 = vmatmul.bf16.gmra.mxu0 %v4158
        %v4688 = vpop.f32.mrf.mxu0
        %v4689 = vadd.f32 %v4600, %v4688
        %v4690 = vpop.f32.mrf.mxu0
        %v4691 = vadd.f32 %v4602, %v4690
        %4692 = vmatmul.bf16.gmra.mxu0 %v4160
        %v4693 = vpop.f32.mrf.mxu0
        %v4694 = vadd.f32 %v4605, %v4693
        %v4695 = vpop.f32.mrf.mxu0
        %v4696 = vadd.f32 %v4607, %v4695
        %4697 = vmatmul.bf16.gmra.mxu0 %v4162
        %v4698 = vpop.f32.mrf.mxu0
        %v4699 = vadd.f32 %v4610, %v4698
        %v4700 = vpop.f32.mrf.mxu0
        %v4701 = vadd.f32 %v4612, %v4700
        %4702 = vmatmul.bf16.gmra.mxu0 %v4164
        %v4703 = vpop.f32.mrf.mxu0
        %v4704 = vadd.f32 %v4615, %v4703
        %v4705 = vpop.f32.mrf.mxu0
        %v4706 = vadd.f32 %v4617, %v4705
        %4707 = vmatmul.bf16.gmra.mxu0 %v4166
        %v4708 = vpop.f32.mrf.mxu0
        %v4709 = vadd.f32 %v4620, %v4708
        %v4710 = vpop.f32.mrf.mxu0
        %v4711 = vadd.f32 %v4622, %v4710
        %4712 = vmatmul.bf16.gmra.mxu0 %v4168
        %v4713 = vpop.f32.mrf.mxu0
        %v4714 = vadd.f32 %v4625, %v4713
        %v4715 = vpop.f32.mrf.mxu0
        %v4716 = vadd.f32 %v4627, %v4715
        %4717 = vdwg.mxu0
        %v4718 = vadd.f32 %v4073, %v4461
        %v4719 = vadd.f32 %v4074, %v4639
        %v4720 = vadd.f32 %v4075, %v4463
        %v4721 = vadd.f32 %v4076, %v4641
        %v4722 = vadd.f32 %v4077, %v4466
        %v4723 = vadd.f32 %v4078, %v4644
        %v4724 = vadd.f32 %v4079, %v4468
        %v4725 = vadd.f32 %v4080, %v4646
        %v4726 = vadd.f32 %v4081, %v4471
        %v4727 = vadd.f32 %v4082, %v4649
        %v4728 = vadd.f32 %v4083, %v4473
        %v4729 = vadd.f32 %v4084, %v4651
        %v4730 = vadd.f32 %v4085, %v4476
        %v4731 = vadd.f32 %v4086, %v4654
        %v4732 = vadd.f32 %v4087, %v4478
        %v4733 = vadd.f32 %v4088, %v4656
        %v4734 = vadd.f32 %v4089, %v4481
        %v4735 = vadd.f32 %v4090, %v4659
        %v4736 = vadd.f32 %v4091, %v4483
        %v4737 = vadd.f32 %v4092, %v4661
        %v4738 = vadd.f32 %v4093, %v4486
        %v4739 = vadd.f32 %v4094, %v4664
        %v4740 = vadd.f32 %v4095, %v4488
        %v4741 = vadd.f32 %v4096, %v4666
        %v4742 = vadd.f32 %v4097, %v4491
        %v4743 = vadd.f32 %v4098, %v4669
        %v4744 = vadd.f32 %v4099, %v4493
        %v4745 = vadd.f32 %v4100, %v4671
        %v4746 = vadd.f32 %v4101, %v4496
        %v4747 = vadd.f32 %v4102, %v4674
        %v4748 = vadd.f32 %v4103, %v4498
        %v4749 = vadd.f32 %v4104, %v4676
        %v4750 = vadd.f32 %v4105, %v4501
        %v4751 = vadd.f32 %v4106, %v4679
        %v4752 = vadd.f32 %v4107, %v4503
        %v4753 = vadd.f32 %v4108, %v4681
        %v4754 = vadd.f32 %v4109, %v4506
        %v4755 = vadd.f32 %v4110, %v4684
        %v4756 = vadd.f32 %v4111, %v4508
        %v4757 = vadd.f32 %v4112, %v4686
        %v4758 = vadd.f32 %v4113, %v4511
        %v4759 = vadd.f32 %v4114, %v4689
        %v4760 = vadd.f32 %v4115, %v4513
        %v4761 = vadd.f32 %v4116, %v4691
        %v4762 = vadd.f32 %v4117, %v4516
        %v4763 = vadd.f32 %v4118, %v4694
        %v4764 = vadd.f32 %v4119, %v4518
        %v4765 = vadd.f32 %v4120, %v4696
        %v4766 = vadd.f32 %v4121, %v4521
        %v4767 = vadd.f32 %v4122, %v4699
        %v4768 = vadd.f32 %v4123, %v4523
        %v4769 = vadd.f32 %v4124, %v4701
        %v4770 = vadd.f32 %v4125, %v4526
        %v4771 = vadd.f32 %v4126, %v4704
        %v4772 = vadd.f32 %v4127, %v4528
        %v4773 = vadd.f32 %v4128, %v4706
        %v4774 = vadd.f32 %v4129, %v4531
        %v4775 = vadd.f32 %v4130, %v4709
        %v4776 = vadd.f32 %v4131, %v4533
        %v4777 = vadd.f32 %v4132, %v4711
        %v4778 = vadd.f32 %v4133, %v4536
        %v4779 = vadd.f32 %v4134, %v4714
        %v4780 = vadd.f32 %v4135, %v4538
        %v4781 = vadd.f32 %v4136, %v4716
        %4782 = vst [vmem:[#allocation3] sm:$0xff] %v4718
        %4783 = vst [vmem:[#allocation3 + $0x8] sm:$0xff] %v4719
        %4784 = vst [vmem:[#allocation3 + $0x10] sm:$0xff] %v4720
        %4785 = vst [vmem:[#allocation3 + $0x18] sm:$0xff] %v4721
        %4786 = vst [vmem:[#allocation3 + $0x20] sm:$0xff] %v4722
        %4787 = vst [vmem:[#allocation3 + $0x28] sm:$0xff] %v4723
        %4788 = vst [vmem:[#allocation3 + $0x30] sm:$0xff] %v4724
        %4789 = vst [vmem:[#allocation3 + $0x38] sm:$0xff] %v4725
        %4790 = vst [vmem:[#allocation3 + $0x40] sm:$0xff] %v4726
        %4791 = vst [vmem:[#allocation3 + $0x48] sm:$0xff] %v4727
        %4792 = vst [vmem:[#allocation3 + $0x50] sm:$0xff] %v4728
        %4793 = vst [vmem:[#allocation3 + $0x58] sm:$0xff] %v4729
        %4794 = vst [vmem:[#allocation3 + $0x60] sm:$0xff] %v4730
        %4795 = vst [vmem:[#allocation3 + $0x68] sm:$0xff] %v4731
        %4796 = vst [vmem:[#allocation3 + $0x70] sm:$0xff] %v4732
        %4797 = vst [vmem:[#allocation3 + $0x78] sm:$0xff] %v4733
        %4798 = vst [vmem:[#allocation3 + $0x80] sm:$0xff] %v4734
        %4799 = vst [vmem:[#allocation3 + $0x88] sm:$0xff] %v4735
        %4800 = vst [vmem:[#allocation3 + $0x90] sm:$0xff] %v4736
        %4801 = vst [vmem:[#allocation3 + $0x98] sm:$0xff] %v4737
        %4802 = vst [vmem:[#allocation3 + $0xa0] sm:$0xff] %v4738
        %4803 = vst [vmem:[#allocation3 + $0xa8] sm:$0xff] %v4739
        %4804 = vst [vmem:[#allocation3 + $0xb0] sm:$0xff] %v4740
        %4805 = vst [vmem:[#allocation3 + $0xb8] sm:$0xff] %v4741
        %4806 = vst [vmem:[#allocation3 + $0xc0] sm:$0xff] %v4742
        %4807 = vst [vmem:[#allocation3 + $0xc8] sm:$0xff] %v4743
        %4808 = vst [vmem:[#allocation3 + $0xd0] sm:$0xff] %v4744
        %4809 = vst [vmem:[#allocation3 + $0xd8] sm:$0xff] %v4745
        %4810 = vst [vmem:[#allocation3 + $0xe0] sm:$0xff] %v4746
        %4811 = vst [vmem:[#allocation3 + $0xe8] sm:$0xff] %v4747
        %4812 = vst [vmem:[#allocation3 + $0xf0] sm:$0xff] %v4748
        %4813 = vst [vmem:[#allocation3 + $0xf8] sm:$0xff] %v4749
        %4814 = vst [vmem:[#allocation3 + $0x100] sm:$0xff] %v4750
        %4815 = vst [vmem:[#allocation3 + $0x108] sm:$0xff] %v4751
        %4816 = vst [vmem:[#allocation3 + $0x110] sm:$0xff] %v4752
        %4817 = vst [vmem:[#allocation3 + $0x118] sm:$0xff] %v4753
        %4818 = vst [vmem:[#allocation3 + $0x120] sm:$0xff] %v4754
        %4819 = vst [vmem:[#allocation3 + $0x128] sm:$0xff] %v4755
        %4820 = vst [vmem:[#allocation3 + $0x130] sm:$0xff] %v4756
        %4821 = vst [vmem:[#allocation3 + $0x138] sm:$0xff] %v4757
        %4822 = vst [vmem:[#allocation3 + $0x140] sm:$0xff] %v4758
        %4823 = vst [vmem:[#allocation3 + $0x148] sm:$0xff] %v4759
        %4824 = vst [vmem:[#allocation3 + $0x150] sm:$0xff] %v4760
        %4825 = vst [vmem:[#allocation3 + $0x158] sm:$0xff] %v4761
        %4826 = vst [vmem:[#allocation3 + $0x160] sm:$0xff] %v4762
        %4827 = vst [vmem:[#allocation3 + $0x168] sm:$0xff] %v4763
        %4828 = vst [vmem:[#allocation3 + $0x170] sm:$0xff] %v4764
        %4829 = vst [vmem:[#allocation3 + $0x178] sm:$0xff] %v4765
        %4830 = vst [vmem:[#allocation3 + $0x180] sm:$0xff] %v4766
        %4831 = vst [vmem:[#allocation3 + $0x188] sm:$0xff] %v4767
        %4832 = vst [vmem:[#allocation3 + $0x190] sm:$0xff] %v4768
        %4833 = vst [vmem:[#allocation3 + $0x198] sm:$0xff] %v4769
        %4834 = vst [vmem:[#allocation3 + $0x1a0] sm:$0xff] %v4770
        %4835 = vst [vmem:[#allocation3 + $0x1a8] sm:$0xff] %v4771
        %4836 = vst [vmem:[#allocation3 + $0x1b0] sm:$0xff] %v4772
        %4837 = vst [vmem:[#allocation3 + $0x1b8] sm:$0xff] %v4773
        %4838 = vst [vmem:[#allocation3 + $0x1c0] sm:$0xff] %v4774
        %4839 = vst [vmem:[#allocation3 + $0x1c8] sm:$0xff] %v4775
        %4840 = vst [vmem:[#allocation3 + $0x1d0] sm:$0xff] %v4776
        %4841 = vst [vmem:[#allocation3 + $0x1d8] sm:$0xff] %v4777
        %4842 = vst [vmem:[#allocation3 + $0x1e0] sm:$0xff] %v4778
        %4843 = vst [vmem:[#allocation3 + $0x1e8] sm:$0xff] %v4779
        %4844 = vst [vmem:[#allocation3 + $0x1f0] sm:$0xff] %v4780
        %4845 = vst [vmem:[#allocation3 + $0x1f8] sm:$0xff] %v4781
        %s4846 = scalar_lea.vmem %s3, 32
        %v4847 = vld [vmem:[%s4846] sm:$0xff]
        %v4849 = vunpack.c.l.b16 %v4847
        %v4850 = vunpack.c.h.b16 %v4847
        %v4851 = vpack.c.b16 %v4849, %v4849
        %v4852 = vpack.c.b16 %v4850, %v4850
        %v4854 = vsel %vm570, %v4851, 0
        %v4857 = vsel %vm570, %v4852, 0
        %4859 = vmatpush.bf16.msra.mxu0 0
        %4860 = vmatpush.bf16.msra.mxu0 0
        %4861 = vmatpush.bf16.msra.mxu0 0
        %4862 = vmatpush.bf16.msra.mxu0 0
        %4863 = vmatpush.bf16.msra.mxu0 0
        %4864 = vmatpush.bf16.msra.mxu0 0
        %4865 = vmatpush.bf16.msra.mxu0 0
        %4866 = vmatpush.bf16.msra.mxu0 %v4854
        %4867 = vmatmul.bf16.gmra.mxu0 %v523
        %v4868 = vpop.f32.mrf.mxu0
        %v4869 = vadd.f32 0.0, %v4868
        %v4870 = vpop.f32.mrf.mxu0
        %v4871 = vadd.f32 0.0, %v4870
        %4872 = vmatmul.bf16.gmra.mxu0 %v526
        %v4873 = vpop.f32.mrf.mxu0
        %v4874 = vadd.f32 0.0, %v4873
        %v4875 = vpop.f32.mrf.mxu0
        %v4876 = vadd.f32 0.0, %v4875
        %4877 = vmatmul.bf16.gmra.mxu0 %v529
        %v4878 = vpop.f32.mrf.mxu0
        %v4879 = vadd.f32 0.0, %v4878
        %v4880 = vpop.f32.mrf.mxu0
        %v4881 = vadd.f32 0.0, %v4880
        %4882 = vmatmul.bf16.gmra.mxu0 %v532
        %v4883 = vpop.f32.mrf.mxu0
        %v4884 = vadd.f32 0.0, %v4883
        %v4885 = vpop.f32.mrf.mxu0
        %v4886 = vadd.f32 0.0, %v4885
        %4887 = vmatmul.bf16.gmra.mxu0 %v535
        %v4888 = vpop.f32.mrf.mxu0
        %v4889 = vadd.f32 0.0, %v4888
        %v4890 = vpop.f32.mrf.mxu0
        %v4891 = vadd.f32 0.0, %v4890
        %4892 = vmatmul.bf16.gmra.mxu0 %v538
        %v4893 = vpop.f32.mrf.mxu0
        %v4894 = vadd.f32 0.0, %v4893
        %v4895 = vpop.f32.mrf.mxu0
        %v4896 = vadd.f32 0.0, %v4895
        %4897 = vmatmul.bf16.gmra.mxu0 %v541
        %v4898 = vpop.f32.mrf.mxu0
        %v4899 = vadd.f32 0.0, %v4898
        %v4900 = vpop.f32.mrf.mxu0
        %v4901 = vadd.f32 0.0, %v4900
        %4902 = vmatmul.bf16.gmra.mxu0 %v544
        %v4903 = vpop.f32.mrf.mxu0
        %v4904 = vadd.f32 0.0, %v4903
        %v4905 = vpop.f32.mrf.mxu0
        %v4906 = vadd.f32 0.0, %v4905
        %4907 = vmatmul.bf16.gmra.mxu0 %v547
        %v4908 = vpop.f32.mrf.mxu0
        %v4909 = vadd.f32 0.0, %v4908
        %v4910 = vpop.f32.mrf.mxu0
        %v4911 = vadd.f32 0.0, %v4910
        %4912 = vmatmul.bf16.gmra.mxu0 %v550
        %v4913 = vpop.f32.mrf.mxu0
        %v4914 = vadd.f32 0.0, %v4913
        %v4915 = vpop.f32.mrf.mxu0
        %v4916 = vadd.f32 0.0, %v4915
        %4917 = vmatmul.bf16.gmra.mxu0 %v553
        %v4918 = vpop.f32.mrf.mxu0
        %v4919 = vadd.f32 0.0, %v4918
        %v4920 = vpop.f32.mrf.mxu0
        %v4921 = vadd.f32 0.0, %v4920
        %4922 = vmatmul.bf16.gmra.mxu0 %v556
        %v4923 = vpop.f32.mrf.mxu0
        %v4924 = vadd.f32 0.0, %v4923
        %v4925 = vpop.f32.mrf.mxu0
        %v4926 = vadd.f32 0.0, %v4925
        %4927 = vmatmul.bf16.gmra.mxu0 %v559
        %v4928 = vpop.f32.mrf.mxu0
        %v4929 = vadd.f32 0.0, %v4928
        %v4930 = vpop.f32.mrf.mxu0
        %v4931 = vadd.f32 0.0, %v4930
        %4932 = vmatmul.bf16.gmra.mxu0 %v562
        %v4933 = vpop.f32.mrf.mxu0
        %v4934 = vadd.f32 0.0, %v4933
        %v4935 = vpop.f32.mrf.mxu0
        %v4936 = vadd.f32 0.0, %v4935
        %4937 = vmatmul.bf16.gmra.mxu0 %v565
        %v4938 = vpop.f32.mrf.mxu0
        %v4939 = vadd.f32 0.0, %v4938
        %v4940 = vpop.f32.mrf.mxu0
        %v4941 = vadd.f32 0.0, %v4940
        %4942 = vmatmul.bf16.gmra.mxu0 %v568
        %v4943 = vpop.f32.mrf.mxu0
        %v4944 = vadd.f32 0.0, %v4943
        %v4945 = vpop.f32.mrf.mxu0
        %v4946 = vadd.f32 0.0, %v4945
        %4947 = vdwg.mxu0
        %4948 = vmatpush.bf16.msra.mxu0 0
        %4949 = vmatpush.bf16.msra.mxu0 0
        %4950 = vmatpush.bf16.msra.mxu0 0
        %4951 = vmatpush.bf16.msra.mxu0 0
        %4952 = vmatpush.bf16.msra.mxu0 0
        %4953 = vmatpush.bf16.msra.mxu0 0
        %4954 = vmatpush.bf16.msra.mxu0 0
        %4955 = vmatpush.bf16.msra.mxu0 %v4857
        %4956 = vmatmul.bf16.gmra.mxu0 %v523
        %v4957 = vpop.f32.mrf.mxu0
        %v4958 = vadd.f32 0.0, %v4957
        %v4959 = vpop.f32.mrf.mxu0
        %v4960 = vadd.f32 0.0, %v4959
        %4961 = vmatmul.bf16.gmra.mxu0 %v526
        %v4962 = vpop.f32.mrf.mxu0
        %v4963 = vadd.f32 0.0, %v4962
        %v4964 = vpop.f32.mrf.mxu0
        %v4965 = vadd.f32 0.0, %v4964
        %4966 = vmatmul.bf16.gmra.mxu0 %v529
        %v4967 = vpop.f32.mrf.mxu0
        %v4968 = vadd.f32 0.0, %v4967
        %v4969 = vpop.f32.mrf.mxu0
        %v4970 = vadd.f32 0.0, %v4969
        %4971 = vmatmul.bf16.gmra.mxu0 %v532
        %v4972 = vpop.f32.mrf.mxu0
        %v4973 = vadd.f32 0.0, %v4972
        %v4974 = vpop.f32.mrf.mxu0
        %v4975 = vadd.f32 0.0, %v4974
        %4976 = vmatmul.bf16.gmra.mxu0 %v535
        %v4977 = vpop.f32.mrf.mxu0
        %v4978 = vadd.f32 0.0, %v4977
        %v4979 = vpop.f32.mrf.mxu0
        %v4980 = vadd.f32 0.0, %v4979
        %4981 = vmatmul.bf16.gmra.mxu0 %v538
        %v4982 = vpop.f32.mrf.mxu0
        %v4983 = vadd.f32 0.0, %v4982
        %v4984 = vpop.f32.mrf.mxu0
        %v4985 = vadd.f32 0.0, %v4984
        %4986 = vmatmul.bf16.gmra.mxu0 %v541
        %v4987 = vpop.f32.mrf.mxu0
        %v4988 = vadd.f32 0.0, %v4987
        %v4989 = vpop.f32.mrf.mxu0
        %v4990 = vadd.f32 0.0, %v4989
        %4991 = vmatmul.bf16.gmra.mxu0 %v544
        %v4992 = vpop.f32.mrf.mxu0
        %v4993 = vadd.f32 0.0, %v4992
        %v4994 = vpop.f32.mrf.mxu0
        %v4995 = vadd.f32 0.0, %v4994
        %4996 = vmatmul.bf16.gmra.mxu0 %v547
        %v4997 = vpop.f32.mrf.mxu0
        %v4998 = vadd.f32 0.0, %v4997
        %v4999 = vpop.f32.mrf.mxu0
        %v5000 = vadd.f32 0.0, %v4999
        %5001 = vmatmul.bf16.gmra.mxu0 %v550
        %v5002 = vpop.f32.mrf.mxu0
        %v5003 = vadd.f32 0.0, %v5002
        %v5004 = vpop.f32.mrf.mxu0
        %v5005 = vadd.f32 0.0, %v5004
        %5006 = vmatmul.bf16.gmra.mxu0 %v553
        %v5007 = vpop.f32.mrf.mxu0
        %v5008 = vadd.f32 0.0, %v5007
        %v5009 = vpop.f32.mrf.mxu0
        %v5010 = vadd.f32 0.0, %v5009
        %5011 = vmatmul.bf16.gmra.mxu0 %v556
        %v5012 = vpop.f32.mrf.mxu0
        %v5013 = vadd.f32 0.0, %v5012
        %v5014 = vpop.f32.mrf.mxu0
        %v5015 = vadd.f32 0.0, %v5014
        %5016 = vmatmul.bf16.gmra.mxu0 %v559
        %v5017 = vpop.f32.mrf.mxu0
        %v5018 = vadd.f32 0.0, %v5017
        %v5019 = vpop.f32.mrf.mxu0
        %v5020 = vadd.f32 0.0, %v5019
        %5021 = vmatmul.bf16.gmra.mxu0 %v562
        %v5022 = vpop.f32.mrf.mxu0
        %v5023 = vadd.f32 0.0, %v5022
        %v5024 = vpop.f32.mrf.mxu0
        %v5025 = vadd.f32 0.0, %v5024
        %5026 = vmatmul.bf16.gmra.mxu0 %v565
        %v5027 = vpop.f32.mrf.mxu0
        %v5028 = vadd.f32 0.0, %v5027
        %v5029 = vpop.f32.mrf.mxu0
        %v5030 = vadd.f32 0.0, %v5029
        %5031 = vmatmul.bf16.gmra.mxu0 %v568
        %v5032 = vpop.f32.mrf.mxu0
        %v5033 = vadd.f32 0.0, %v5032
        %v5034 = vpop.f32.mrf.mxu0
        %v5035 = vadd.f32 0.0, %v5034
        %5036 = vdwg.mxu0
        %5037 = vst [vmem:[#allocation2] sm:$0xff] %v4869
        %5038 = vst [vmem:[#allocation2 + $0x8] sm:$0xff] %v4958
        %5039 = vst [vmem:[#allocation2 + $0x10] sm:$0xff] %v4871
        %5040 = vst [vmem:[#allocation2 + $0x18] sm:$0xff] %v4960
        %5041 = vst [vmem:[#allocation2 + $0x20] sm:$0xff] %v4874
        %5042 = vst [vmem:[#allocation2 + $0x28] sm:$0xff] %v4963
        %5043 = vst [vmem:[#allocation2 + $0x30] sm:$0xff] %v4876
        %5044 = vst [vmem:[#allocation2 + $0x38] sm:$0xff] %v4965
        %5045 = vst [vmem:[#allocation2 + $0x40] sm:$0xff] %v4879
        %5046 = vst [vmem:[#allocation2 + $0x48] sm:$0xff] %v4968
        %5047 = vst [vmem:[#allocation2 + $0x50] sm:$0xff] %v4881
        %5048 = vst [vmem:[#allocation2 + $0x58] sm:$0xff] %v4970
        %5049 = vst [vmem:[#allocation2 + $0x60] sm:$0xff] %v4884
        %5050 = vst [vmem:[#allocation2 + $0x68] sm:$0xff] %v4973
        %5051 = vst [vmem:[#allocation2 + $0x70] sm:$0xff] %v4886
        %5052 = vst [vmem:[#allocation2 + $0x78] sm:$0xff] %v4975
        %5053 = vst [vmem:[#allocation2 + $0x80] sm:$0xff] %v4889
        %5054 = vst [vmem:[#allocation2 + $0x88] sm:$0xff] %v4978
        %5055 = vst [vmem:[#allocation2 + $0x90] sm:$0xff] %v4891
        %5056 = vst [vmem:[#allocation2 + $0x98] sm:$0xff] %v4980
        %5057 = vst [vmem:[#allocation2 + $0xa0] sm:$0xff] %v4894
        %5058 = vst [vmem:[#allocation2 + $0xa8] sm:$0xff] %v4983
        %5059 = vst [vmem:[#allocation2 + $0xb0] sm:$0xff] %v4896
        %5060 = vst [vmem:[#allocation2 + $0xb8] sm:$0xff] %v4985
        %5061 = vst [vmem:[#allocation2 + $0xc0] sm:$0xff] %v4899
        %5062 = vst [vmem:[#allocation2 + $0xc8] sm:$0xff] %v4988
        %5063 = vst [vmem:[#allocation2 + $0xd0] sm:$0xff] %v4901
        %5064 = vst [vmem:[#allocation2 + $0xd8] sm:$0xff] %v4990
        %5065 = vst [vmem:[#allocation2 + $0xe0] sm:$0xff] %v4904
        %5066 = vst [vmem:[#allocation2 + $0xe8] sm:$0xff] %v4993
        %5067 = vst [vmem:[#allocation2 + $0xf0] sm:$0xff] %v4906
        %5068 = vst [vmem:[#allocation2 + $0xf8] sm:$0xff] %v4995
        %5069 = vst [vmem:[#allocation2 + $0x100] sm:$0xff] %v4909
        %5070 = vst [vmem:[#allocation2 + $0x108] sm:$0xff] %v4998
        %5071 = vst [vmem:[#allocation2 + $0x110] sm:$0xff] %v4911
        %5072 = vst [vmem:[#allocation2 + $0x118] sm:$0xff] %v5000
        %5073 = vst [vmem:[#allocation2 + $0x120] sm:$0xff] %v4914
        %5074 = vst [vmem:[#allocation2 + $0x128] sm:$0xff] %v5003
        %5075 = vst [vmem:[#allocation2 + $0x130] sm:$0xff] %v4916
        %5076 = vst [vmem:[#allocation2 + $0x138] sm:$0xff] %v5005
        %5077 = vst [vmem:[#allocation2 + $0x140] sm:$0xff] %v4919
        %5078 = vst [vmem:[#allocation2 + $0x148] sm:$0xff] %v5008
        %5079 = vst [vmem:[#allocation2 + $0x150] sm:$0xff] %v4921
        %5080 = vst [vmem:[#allocation2 + $0x158] sm:$0xff] %v5010
        %5081 = vst [vmem:[#allocation2 + $0x160] sm:$0xff] %v4924
        %5082 = vst [vmem:[#allocation2 + $0x168] sm:$0xff] %v5013
        %5083 = vst [vmem:[#allocation2 + $0x170] sm:$0xff] %v4926
        %5084 = vst [vmem:[#allocation2 + $0x178] sm:$0xff] %v5015
        %5085 = vst [vmem:[#allocation2 + $0x180] sm:$0xff] %v4929
        %5086 = vst [vmem:[#allocation2 + $0x188] sm:$0xff] %v5018
        %5087 = vst [vmem:[#allocation2 + $0x190] sm:$0xff] %v4931
        %5088 = vst [vmem:[#allocation2 + $0x198] sm:$0xff] %v5020
        %5089 = vst [vmem:[#allocation2 + $0x1a0] sm:$0xff] %v4934
        %5090 = vst [vmem:[#allocation2 + $0x1a8] sm:$0xff] %v5023
        %5091 = vst [vmem:[#allocation2 + $0x1b0] sm:$0xff] %v4936
        %5092 = vst [vmem:[#allocation2 + $0x1b8] sm:$0xff] %v5025
        %5093 = vst [vmem:[#allocation2 + $0x1c0] sm:$0xff] %v4939
        %5094 = vst [vmem:[#allocation2 + $0x1c8] sm:$0xff] %v5028
        %5095 = vst [vmem:[#allocation2 + $0x1d0] sm:$0xff] %v4941
        %5096 = vst [vmem:[#allocation2 + $0x1d8] sm:$0xff] %v5030
        %5097 = vst [vmem:[#allocation2 + $0x1e0] sm:$0xff] %v4944
        %5098 = vst [vmem:[#allocation2 + $0x1e8] sm:$0xff] %v5033
        %5099 = vst [vmem:[#allocation2 + $0x1f0] sm:$0xff] %v4946
        %5100 = vst [vmem:[#allocation2 + $0x1f8] sm:$0xff] %v5035
        %v5101 = vld [vmem:[#allocation2] sm:$0xff]
        %v5102 = vld [vmem:[#allocation2 + $0x8] sm:$0xff]
        %v5103 = vld [vmem:[#allocation2 + $0x10] sm:$0xff]
        %v5104 = vld [vmem:[#allocation2 + $0x18] sm:$0xff]
        %v5105 = vld [vmem:[#allocation2 + $0x20] sm:$0xff]
        %v5106 = vld [vmem:[#allocation2 + $0x28] sm:$0xff]
        %v5107 = vld [vmem:[#allocation2 + $0x30] sm:$0xff]
        %v5108 = vld [vmem:[#allocation2 + $0x38] sm:$0xff]
        %v5109 = vld [vmem:[#allocation2 + $0x40] sm:$0xff]
        %v5110 = vld [vmem:[#allocation2 + $0x48] sm:$0xff]
        %v5111 = vld [vmem:[#allocation2 + $0x50] sm:$0xff]
        %v5112 = vld [vmem:[#allocation2 + $0x58] sm:$0xff]
        %v5113 = vld [vmem:[#allocation2 + $0x60] sm:$0xff]
        %v5114 = vld [vmem:[#allocation2 + $0x68] sm:$0xff]
        %v5115 = vld [vmem:[#allocation2 + $0x70] sm:$0xff]
        %v5116 = vld [vmem:[#allocation2 + $0x78] sm:$0xff]
        %v5117 = vld [vmem:[#allocation2 + $0x80] sm:$0xff]
        %v5118 = vld [vmem:[#allocation2 + $0x88] sm:$0xff]
        %v5119 = vld [vmem:[#allocation2 + $0x90] sm:$0xff]
        %v5120 = vld [vmem:[#allocation2 + $0x98] sm:$0xff]
        %v5121 = vld [vmem:[#allocation2 + $0xa0] sm:$0xff]
        %v5122 = vld [vmem:[#allocation2 + $0xa8] sm:$0xff]
        %v5123 = vld [vmem:[#allocation2 + $0xb0] sm:$0xff]
        %v5124 = vld [vmem:[#allocation2 + $0xb8] sm:$0xff]
        %v5125 = vld [vmem:[#allocation2 + $0xc0] sm:$0xff]
        %v5126 = vld [vmem:[#allocation2 + $0xc8] sm:$0xff]
        %v5127 = vld [vmem:[#allocation2 + $0xd0] sm:$0xff]
        %v5128 = vld [vmem:[#allocation2 + $0xd8] sm:$0xff]
        %v5129 = vld [vmem:[#allocation2 + $0xe0] sm:$0xff]
        %v5130 = vld [vmem:[#allocation2 + $0xe8] sm:$0xff]
        %v5131 = vld [vmem:[#allocation2 + $0xf0] sm:$0xff]
        %v5132 = vld [vmem:[#allocation2 + $0xf8] sm:$0xff]
        %v5133 = vld [vmem:[#allocation2 + $0x100] sm:$0xff]
        %v5134 = vld [vmem:[#allocation2 + $0x108] sm:$0xff]
        %v5135 = vld [vmem:[#allocation2 + $0x110] sm:$0xff]
        %v5136 = vld [vmem:[#allocation2 + $0x118] sm:$0xff]
        %v5137 = vld [vmem:[#allocation2 + $0x120] sm:$0xff]
        %v5138 = vld [vmem:[#allocation2 + $0x128] sm:$0xff]
        %v5139 = vld [vmem:[#allocation2 + $0x130] sm:$0xff]
        %v5140 = vld [vmem:[#allocation2 + $0x138] sm:$0xff]
        %v5141 = vld [vmem:[#allocation2 + $0x140] sm:$0xff]
        %v5142 = vld [vmem:[#allocation2 + $0x148] sm:$0xff]
        %v5143 = vld [vmem:[#allocation2 + $0x150] sm:$0xff]
        %v5144 = vld [vmem:[#allocation2 + $0x158] sm:$0xff]
        %v5145 = vld [vmem:[#allocation2 + $0x160] sm:$0xff]
        %v5146 = vld [vmem:[#allocation2 + $0x168] sm:$0xff]
        %v5147 = vld [vmem:[#allocation2 + $0x170] sm:$0xff]
        %v5148 = vld [vmem:[#allocation2 + $0x178] sm:$0xff]
        %v5149 = vld [vmem:[#allocation2 + $0x180] sm:$0xff]
        %v5150 = vld [vmem:[#allocation2 + $0x188] sm:$0xff]
        %v5151 = vld [vmem:[#allocation2 + $0x190] sm:$0xff]
        %v5152 = vld [vmem:[#allocation2 + $0x198] sm:$0xff]
        %v5153 = vld [vmem:[#allocation2 + $0x1a0] sm:$0xff]
        %v5154 = vld [vmem:[#allocation2 + $0x1a8] sm:$0xff]
        %v5155 = vld [vmem:[#allocation2 + $0x1b0] sm:$0xff]
        %v5156 = vld [vmem:[#allocation2 + $0x1b8] sm:$0xff]
        %v5157 = vld [vmem:[#allocation2 + $0x1c0] sm:$0xff]
        %v5158 = vld [vmem:[#allocation2 + $0x1c8] sm:$0xff]
        %v5159 = vld [vmem:[#allocation2 + $0x1d0] sm:$0xff]
        %v5160 = vld [vmem:[#allocation2 + $0x1d8] sm:$0xff]
        %v5161 = vld [vmem:[#allocation2 + $0x1e0] sm:$0xff]
        %v5162 = vld [vmem:[#allocation2 + $0x1e8] sm:$0xff]
        %v5163 = vld [vmem:[#allocation2 + $0x1f0] sm:$0xff]
        %v5164 = vld [vmem:[#allocation2 + $0x1f8] sm:$0xff]
        %s5165 = scalar_lea.vmem %s7, 2
        %v5166 = vld [vmem:[%s5165] ss:$8 sm:$0x3]
        %v5168 = vperm.slane %v5166, 0
        %v5169 = vperm.slane %v5166, 1
        %v5172 = vmul.f32 %v5101, %v5168
        %v5173 = vmul.f32 %v5102, %v5169
        %v5174 = vmul.f32 %v5103, %v5168
        %v5175 = vmul.f32 %v5104, %v5169
        %v5176 = vmul.f32 %v5105, %v5168
        %v5177 = vmul.f32 %v5106, %v5169
        %v5178 = vmul.f32 %v5107, %v5168
        %v5179 = vmul.f32 %v5108, %v5169
        %v5180 = vmul.f32 %v5109, %v5168
        %v5181 = vmul.f32 %v5110, %v5169
        %v5182 = vmul.f32 %v5111, %v5168
        %v5183 = vmul.f32 %v5112, %v5169
        %v5184 = vmul.f32 %v5113, %v5168
        %v5185 = vmul.f32 %v5114, %v5169
        %v5186 = vmul.f32 %v5115, %v5168
        %v5187 = vmul.f32 %v5116, %v5169
        %v5188 = vmul.f32 %v5117, %v5168
        %v5189 = vmul.f32 %v5118, %v5169
        %v5190 = vmul.f32 %v5119, %v5168
        %v5191 = vmul.f32 %v5120, %v5169
        %v5192 = vmul.f32 %v5121, %v5168
        %v5193 = vmul.f32 %v5122, %v5169
        %v5194 = vmul.f32 %v5123, %v5168
        %v5195 = vmul.f32 %v5124, %v5169
        %v5196 = vmul.f32 %v5125, %v5168
        %v5197 = vmul.f32 %v5126, %v5169
        %v5198 = vmul.f32 %v5127, %v5168
        %v5199 = vmul.f32 %v5128, %v5169
        %v5200 = vmul.f32 %v5129, %v5168
        %v5201 = vmul.f32 %v5130, %v5169
        %v5202 = vmul.f32 %v5131, %v5168
        %v5203 = vmul.f32 %v5132, %v5169
        %v5204 = vmul.f32 %v5133, %v5168
        %v5205 = vmul.f32 %v5134, %v5169
        %v5206 = vmul.f32 %v5135, %v5168
        %v5207 = vmul.f32 %v5136, %v5169
        %v5208 = vmul.f32 %v5137, %v5168
        %v5209 = vmul.f32 %v5138, %v5169
        %v5210 = vmul.f32 %v5139, %v5168
        %v5211 = vmul.f32 %v5140, %v5169
        %v5212 = vmul.f32 %v5141, %v5168
        %v5213 = vmul.f32 %v5142, %v5169
        %v5214 = vmul.f32 %v5143, %v5168
        %v5215 = vmul.f32 %v5144, %v5169
        %v5216 = vmul.f32 %v5145, %v5168
        %v5217 = vmul.f32 %v5146, %v5169
        %v5218 = vmul.f32 %v5147, %v5168
        %v5219 = vmul.f32 %v5148, %v5169
        %v5220 = vmul.f32 %v5149, %v5168
        %v5221 = vmul.f32 %v5150, %v5169
        %v5222 = vmul.f32 %v5151, %v5168
        %v5223 = vmul.f32 %v5152, %v5169
        %v5224 = vmul.f32 %v5153, %v5168
        %v5225 = vmul.f32 %v5154, %v5169
        %v5226 = vmul.f32 %v5155, %v5168
        %v5227 = vmul.f32 %v5156, %v5169
        %v5228 = vmul.f32 %v5157, %v5168
        %v5229 = vmul.f32 %v5158, %v5169
        %v5230 = vmul.f32 %v5159, %v5168
        %v5231 = vmul.f32 %v5160, %v5169
        %v5232 = vmul.f32 %v5161, %v5168
        %v5233 = vmul.f32 %v5162, %v5169
        %v5234 = vmul.f32 %v5163, %v5168
        %v5235 = vmul.f32 %v5164, %v5169
        %s5236 = scalar_lea.vmem %s8, 2
        %v5237 = vld [vmem:[%s5236] ss:$8 sm:$0x3]
        %v5239 = vperm.slane %v5237, 0
        %v5240 = vperm.slane %v5237, 1
        %v5243 = vadd.f32 %v5172, %v5239
        %v5244 = vadd.f32 %v5173, %v5240
        %v5245 = vadd.f32 %v5174, %v5239
        %v5246 = vadd.f32 %v5175, %v5240
        %v5247 = vadd.f32 %v5176, %v5239
        %v5248 = vadd.f32 %v5177, %v5240
        %v5249 = vadd.f32 %v5178, %v5239
        %v5250 = vadd.f32 %v5179, %v5240
        %v5251 = vadd.f32 %v5180, %v5239
        %v5252 = vadd.f32 %v5181, %v5240
        %v5253 = vadd.f32 %v5182, %v5239
        %v5254 = vadd.f32 %v5183, %v5240
        %v5255 = vadd.f32 %v5184, %v5239
        %v5256 = vadd.f32 %v5185, %v5240
        %v5257 = vadd.f32 %v5186, %v5239
        %v5258 = vadd.f32 %v5187, %v5240
        %v5259 = vadd.f32 %v5188, %v5239
        %v5260 = vadd.f32 %v5189, %v5240
        %v5261 = vadd.f32 %v5190, %v5239
        %v5262 = vadd.f32 %v5191, %v5240
        %v5263 = vadd.f32 %v5192, %v5239
        %v5264 = vadd.f32 %v5193, %v5240
        %v5265 = vadd.f32 %v5194, %v5239
        %v5266 = vadd.f32 %v5195, %v5240
        %v5267 = vadd.f32 %v5196, %v5239
        %v5268 = vadd.f32 %v5197, %v5240
        %v5269 = vadd.f32 %v5198, %v5239
        %v5270 = vadd.f32 %v5199, %v5240
        %v5271 = vadd.f32 %v5200, %v5239
        %v5272 = vadd.f32 %v5201, %v5240
        %v5273 = vadd.f32 %v5202, %v5239
        %v5274 = vadd.f32 %v5203, %v5240
        %v5275 = vadd.f32 %v5204, %v5239
        %v5276 = vadd.f32 %v5205, %v5240
        %v5277 = vadd.f32 %v5206, %v5239
        %v5278 = vadd.f32 %v5207, %v5240
        %v5279 = vadd.f32 %v5208, %v5239
        %v5280 = vadd.f32 %v5209, %v5240
        %v5281 = vadd.f32 %v5210, %v5239
        %v5282 = vadd.f32 %v5211, %v5240
        %v5283 = vadd.f32 %v5212, %v5239
        %v5284 = vadd.f32 %v5213, %v5240
        %v5285 = vadd.f32 %v5214, %v5239
        %v5286 = vadd.f32 %v5215, %v5240
        %v5287 = vadd.f32 %v5216, %v5239
        %v5288 = vadd.f32 %v5217, %v5240
        %v5289 = vadd.f32 %v5218, %v5239
        %v5290 = vadd.f32 %v5219, %v5240
        %v5291 = vadd.f32 %v5220, %v5239
        %v5292 = vadd.f32 %v5221, %v5240
        %v5293 = vadd.f32 %v5222, %v5239
        %v5294 = vadd.f32 %v5223, %v5240
        %v5295 = vadd.f32 %v5224, %v5239
        %v5296 = vadd.f32 %v5225, %v5240
        %v5297 = vadd.f32 %v5226, %v5239
        %v5298 = vadd.f32 %v5227, %v5240
        %v5299 = vadd.f32 %v5228, %v5239
        %v5300 = vadd.f32 %v5229, %v5240
        %v5301 = vadd.f32 %v5230, %v5239
        %v5302 = vadd.f32 %v5231, %v5240
        %v5303 = vadd.f32 %v5232, %v5239
        %v5304 = vadd.f32 %v5233, %v5240
        %v5305 = vadd.f32 %v5234, %v5239
        %v5306 = vadd.f32 %v5235, %v5240
        %v5307 = vmax.f32 %v5243, 0.0
        %v5308 = vmax.f32 %v5244, 0.0
        %v5309 = vmax.f32 %v5245, 0.0
        %v5310 = vmax.f32 %v5246, 0.0
        %v5311 = vmax.f32 %v5247, 0.0
        %v5312 = vmax.f32 %v5248, 0.0
        %v5313 = vmax.f32 %v5249, 0.0
        %v5314 = vmax.f32 %v5250, 0.0
        %v5315 = vmax.f32 %v5251, 0.0
        %v5316 = vmax.f32 %v5252, 0.0
        %v5317 = vmax.f32 %v5253, 0.0
        %v5318 = vmax.f32 %v5254, 0.0
        %v5319 = vmax.f32 %v5255, 0.0
        %v5320 = vmax.f32 %v5256, 0.0
        %v5321 = vmax.f32 %v5257, 0.0
        %v5322 = vmax.f32 %v5258, 0.0
        %v5323 = vmax.f32 %v5259, 0.0
        %v5324 = vmax.f32 %v5260, 0.0
        %v5325 = vmax.f32 %v5261, 0.0
        %v5326 = vmax.f32 %v5262, 0.0
        %v5327 = vmax.f32 %v5263, 0.0
        %v5328 = vmax.f32 %v5264, 0.0
        %v5329 = vmax.f32 %v5265, 0.0
        %v5330 = vmax.f32 %v5266, 0.0
        %v5331 = vmax.f32 %v5267, 0.0
        %v5332 = vmax.f32 %v5268, 0.0
        %v5333 = vmax.f32 %v5269, 0.0
        %v5334 = vmax.f32 %v5270, 0.0
        %v5335 = vmax.f32 %v5271, 0.0
        %v5336 = vmax.f32 %v5272, 0.0
        %v5337 = vmax.f32 %v5273, 0.0
        %v5338 = vmax.f32 %v5274, 0.0
        %v5339 = vmax.f32 %v5275, 0.0
        %v5340 = vmax.f32 %v5276, 0.0
        %v5341 = vmax.f32 %v5277, 0.0
        %v5342 = vmax.f32 %v5278, 0.0
        %v5343 = vmax.f32 %v5279, 0.0
        %v5344 = vmax.f32 %v5280, 0.0
        %v5345 = vmax.f32 %v5281, 0.0
        %v5346 = vmax.f32 %v5282, 0.0
        %v5347 = vmax.f32 %v5283, 0.0
        %v5348 = vmax.f32 %v5284, 0.0
        %v5349 = vmax.f32 %v5285, 0.0
        %v5350 = vmax.f32 %v5286, 0.0
        %v5351 = vmax.f32 %v5287, 0.0
        %v5352 = vmax.f32 %v5288, 0.0
        %v5353 = vmax.f32 %v5289, 0.0
        %v5354 = vmax.f32 %v5290, 0.0
        %v5355 = vmax.f32 %v5291, 0.0
        %v5356 = vmax.f32 %v5292, 0.0
        %v5357 = vmax.f32 %v5293, 0.0
        %v5358 = vmax.f32 %v5294, 0.0
        %v5359 = vmax.f32 %v5295, 0.0
        %v5360 = vmax.f32 %v5296, 0.0
        %v5361 = vmax.f32 %v5297, 0.0
        %v5362 = vmax.f32 %v5298, 0.0
        %v5363 = vmax.f32 %v5299, 0.0
        %v5364 = vmax.f32 %v5300, 0.0
        %v5365 = vmax.f32 %v5301, 0.0
        %v5366 = vmax.f32 %v5302, 0.0
        %v5367 = vmax.f32 %v5303, 0.0
        %v5368 = vmax.f32 %v5304, 0.0
        %v5369 = vmax.f32 %v5305, 0.0
        %v5370 = vmax.f32 %v5306, 0.0
        %v5371 = vld [vmem:[#allocation3] sm:$0xff]
        %v5372 = vld [vmem:[#allocation3 + $0x8] sm:$0xff]
        %v5373 = vld [vmem:[#allocation3 + $0x10] sm:$0xff]
        %v5374 = vld [vmem:[#allocation3 + $0x18] sm:$0xff]
        %v5375 = vld [vmem:[#allocation3 + $0x20] sm:$0xff]
        %v5376 = vld [vmem:[#allocation3 + $0x28] sm:$0xff]
        %v5377 = vld [vmem:[#allocation3 + $0x30] sm:$0xff]
        %v5378 = vld [vmem:[#allocation3 + $0x38] sm:$0xff]
        %v5379 = vld [vmem:[#allocation3 + $0x40] sm:$0xff]
        %v5380 = vld [vmem:[#allocation3 + $0x48] sm:$0xff]
        %v5381 = vld [vmem:[#allocation3 + $0x50] sm:$0xff]
        %v5382 = vld [vmem:[#allocation3 + $0x58] sm:$0xff]
        %v5383 = vld [vmem:[#allocation3 + $0x60] sm:$0xff]
        %v5384 = vld [vmem:[#allocation3 + $0x68] sm:$0xff]
        %v5385 = vld [vmem:[#allocation3 + $0x70] sm:$0xff]
        %v5386 = vld [vmem:[#allocation3 + $0x78] sm:$0xff]
        %v5387 = vld [vmem:[#allocation3 + $0x80] sm:$0xff]
        %v5388 = vld [vmem:[#allocation3 + $0x88] sm:$0xff]
        %v5389 = vld [vmem:[#allocation3 + $0x90] sm:$0xff]
        %v5390 = vld [vmem:[#allocation3 + $0x98] sm:$0xff]
        %v5391 = vld [vmem:[#allocation3 + $0xa0] sm:$0xff]
        %v5392 = vld [vmem:[#allocation3 + $0xa8] sm:$0xff]
        %v5393 = vld [vmem:[#allocation3 + $0xb0] sm:$0xff]
        %v5394 = vld [vmem:[#allocation3 + $0xb8] sm:$0xff]
        %v5395 = vld [vmem:[#allocation3 + $0xc0] sm:$0xff]
        %v5396 = vld [vmem:[#allocation3 + $0xc8] sm:$0xff]
        %v5397 = vld [vmem:[#allocation3 + $0xd0] sm:$0xff]
        %v5398 = vld [vmem:[#allocation3 + $0xd8] sm:$0xff]
        %v5399 = vld [vmem:[#allocation3 + $0xe0] sm:$0xff]
        %v5400 = vld [vmem:[#allocation3 + $0xe8] sm:$0xff]
        %v5401 = vld [vmem:[#allocation3 + $0xf0] sm:$0xff]
        %v5402 = vld [vmem:[#allocation3 + $0xf8] sm:$0xff]
        %v5403 = vld [vmem:[#allocation3 + $0x100] sm:$0xff]
        %v5404 = vld [vmem:[#allocation3 + $0x108] sm:$0xff]
        %v5405 = vld [vmem:[#allocation3 + $0x110] sm:$0xff]
        %v5406 = vld [vmem:[#allocation3 + $0x118] sm:$0xff]
        %v5407 = vld [vmem:[#allocation3 + $0x120] sm:$0xff]
        %v5408 = vld [vmem:[#allocation3 + $0x128] sm:$0xff]
        %v5409 = vld [vmem:[#allocation3 + $0x130] sm:$0xff]
        %v5410 = vld [vmem:[#allocation3 + $0x138] sm:$0xff]
        %v5411 = vld [vmem:[#allocation3 + $0x140] sm:$0xff]
        %v5412 = vld [vmem:[#allocation3 + $0x148] sm:$0xff]
        %v5413 = vld [vmem:[#allocation3 + $0x150] sm:$0xff]
        %v5414 = vld [vmem:[#allocation3 + $0x158] sm:$0xff]
        %v5415 = vld [vmem:[#allocation3 + $0x160] sm:$0xff]
        %v5416 = vld [vmem:[#allocation3 + $0x168] sm:$0xff]
        %v5417 = vld [vmem:[#allocation3 + $0x170] sm:$0xff]
        %v5418 = vld [vmem:[#allocation3 + $0x178] sm:$0xff]
        %v5419 = vld [vmem:[#allocation3 + $0x180] sm:$0xff]
        %v5420 = vld [vmem:[#allocation3 + $0x188] sm:$0xff]
        %v5421 = vld [vmem:[#allocation3 + $0x190] sm:$0xff]
        %v5422 = vld [vmem:[#allocation3 + $0x198] sm:$0xff]
        %v5423 = vld [vmem:[#allocation3 + $0x1a0] sm:$0xff]
        %v5424 = vld [vmem:[#allocation3 + $0x1a8] sm:$0xff]
        %v5425 = vld [vmem:[#allocation3 + $0x1b0] sm:$0xff]
        %v5426 = vld [vmem:[#allocation3 + $0x1b8] sm:$0xff]
        %v5427 = vld [vmem:[#allocation3 + $0x1c0] sm:$0xff]
        %v5428 = vld [vmem:[#allocation3 + $0x1c8] sm:$0xff]
        %v5429 = vld [vmem:[#allocation3 + $0x1d0] sm:$0xff]
        %v5430 = vld [vmem:[#allocation3 + $0x1d8] sm:$0xff]
        %v5431 = vld [vmem:[#allocation3 + $0x1e0] sm:$0xff]
        %v5432 = vld [vmem:[#allocation3 + $0x1e8] sm:$0xff]
        %v5433 = vld [vmem:[#allocation3 + $0x1f0] sm:$0xff]
        %v5434 = vld [vmem:[#allocation3 + $0x1f8] sm:$0xff]
        %v5435 = vpack.c.bf16 %v5309, %v5307
        %v5436 = vpack.c.bf16 %v5310, %v5308
        %v5437 = vpack.c.bf16 %v5313, %v5311
        %v5438 = vpack.c.bf16 %v5314, %v5312
        %v5439 = vpack.c.bf16 %v5317, %v5315
        %v5440 = vpack.c.bf16 %v5318, %v5316
        %v5441 = vpack.c.bf16 %v5321, %v5319
        %v5442 = vpack.c.bf16 %v5322, %v5320
        %v5443 = vpack.c.bf16 %v5325, %v5323
        %v5444 = vpack.c.bf16 %v5326, %v5324
        %v5445 = vpack.c.bf16 %v5329, %v5327
        %v5446 = vpack.c.bf16 %v5330, %v5328
        %v5447 = vpack.c.bf16 %v5333, %v5331
        %v5448 = vpack.c.bf16 %v5334, %v5332
        %v5449 = vpack.c.bf16 %v5337, %v5335
        %v5450 = vpack.c.bf16 %v5338, %v5336
        %v5451 = vpack.c.bf16 %v5341, %v5339
        %v5452 = vpack.c.bf16 %v5342, %v5340
        %v5453 = vpack.c.bf16 %v5345, %v5343
        %v5454 = vpack.c.bf16 %v5346, %v5344
        %v5455 = vpack.c.bf16 %v5349, %v5347
        %v5456 = vpack.c.bf16 %v5350, %v5348
        %v5457 = vpack.c.bf16 %v5353, %v5351
        %v5458 = vpack.c.bf16 %v5354, %v5352
        %v5459 = vpack.c.bf16 %v5357, %v5355
        %v5460 = vpack.c.bf16 %v5358, %v5356
        %v5461 = vpack.c.bf16 %v5361, %v5359
        %v5462 = vpack.c.bf16 %v5362, %v5360
        %v5463 = vpack.c.bf16 %v5365, %v5363
        %v5464 = vpack.c.bf16 %v5366, %v5364
        %v5465 = vpack.c.bf16 %v5369, %v5367
        %v5466 = vpack.c.bf16 %v5370, %v5368
        %s5467 = scalar_lea.vmem [#allocation4], 512
        %v5468 = vld [vmem:[%s5467] sm:$0xff]
        %v5469 = vld [vmem:[%s5467 + $0x8] sm:$0xff]
        %v5470 = vld [vmem:[%s5467 + $0x10] sm:$0xff]
        %v5471 = vld [vmem:[%s5467 + $0x18] sm:$0xff]
        %v5472 = vld [vmem:[%s5467 + $0x20] sm:$0xff]
        %v5473 = vld [vmem:[%s5467 + $0x28] sm:$0xff]
        %v5474 = vld [vmem:[%s5467 + $0x30] sm:$0xff]
        %v5475 = vld [vmem:[%s5467 + $0x38] sm:$0xff]
        %v5476 = vld [vmem:[%s5467 + $0x40] sm:$0xff]
        %v5477 = vld [vmem:[%s5467 + $0x48] sm:$0xff]
        %v5478 = vld [vmem:[%s5467 + $0x50] sm:$0xff]
        %v5479 = vld [vmem:[%s5467 + $0x58] sm:$0xff]
        %v5480 = vld [vmem:[%s5467 + $0x60] sm:$0xff]
        %v5481 = vld [vmem:[%s5467 + $0x68] sm:$0xff]
        %v5482 = vld [vmem:[%s5467 + $0x70] sm:$0xff]
        %v5483 = vld [vmem:[%s5467 + $0x78] sm:$0xff]
        %v5484 = vld [vmem:[%s5467 + $0x80] sm:$0xff]
        %v5485 = vld [vmem:[%s5467 + $0x88] sm:$0xff]
        %v5486 = vld [vmem:[%s5467 + $0x90] sm:$0xff]
        %v5487 = vld [vmem:[%s5467 + $0x98] sm:$0xff]
        %v5488 = vld [vmem:[%s5467 + $0xa0] sm:$0xff]
        %v5489 = vld [vmem:[%s5467 + $0xa8] sm:$0xff]
        %v5490 = vld [vmem:[%s5467 + $0xb0] sm:$0xff]
        %v5491 = vld [vmem:[%s5467 + $0xb8] sm:$0xff]
        %v5492 = vld [vmem:[%s5467 + $0xc0] sm:$0xff]
        %v5493 = vld [vmem:[%s5467 + $0xc8] sm:$0xff]
        %v5494 = vld [vmem:[%s5467 + $0xd0] sm:$0xff]
        %v5495 = vld [vmem:[%s5467 + $0xd8] sm:$0xff]
        %v5496 = vld [vmem:[%s5467 + $0xe0] sm:$0xff]
        %v5497 = vld [vmem:[%s5467 + $0xe8] sm:$0xff]
        %v5498 = vld [vmem:[%s5467 + $0xf0] sm:$0xff]
        %v5499 = vld [vmem:[%s5467 + $0xf8] sm:$0xff]
        %v5532 = vunpack.c.l.b16 %v5468
        %v5533 = vunpack.c.h.b16 %v5468
        %v5534 = vunpack.c.l.b16 %v5469
        %v5535 = vunpack.c.h.b16 %v5469
        %v5536 = vunpack.c.l.b16 %v5470
        %v5537 = vunpack.c.h.b16 %v5470
        %v5538 = vunpack.c.l.b16 %v5471
        %v5539 = vunpack.c.h.b16 %v5471
        %v5540 = vunpack.c.l.b16 %v5472
        %v5541 = vunpack.c.h.b16 %v5472
        %v5542 = vunpack.c.l.b16 %v5473
        %v5543 = vunpack.c.h.b16 %v5473
        %v5544 = vunpack.c.l.b16 %v5474
        %v5545 = vunpack.c.h.b16 %v5474
        %v5546 = vunpack.c.l.b16 %v5475
        %v5547 = vunpack.c.h.b16 %v5475
        %v5548 = vunpack.c.l.b16 %v5476
        %v5549 = vunpack.c.h.b16 %v5476
        %v5550 = vunpack.c.l.b16 %v5477
        %v5551 = vunpack.c.h.b16 %v5477
        %v5552 = vunpack.c.l.b16 %v5478
        %v5553 = vunpack.c.h.b16 %v5478
        %v5554 = vunpack.c.l.b16 %v5479
        %v5555 = vunpack.c.h.b16 %v5479
        %v5556 = vunpack.c.l.b16 %v5480
        %v5557 = vunpack.c.h.b16 %v5480
        %v5558 = vunpack.c.l.b16 %v5481
        %v5559 = vunpack.c.h.b16 %v5481
        %v5560 = vunpack.c.l.b16 %v5482
        %v5561 = vunpack.c.h.b16 %v5482
        %v5562 = vunpack.c.l.b16 %v5483
        %v5563 = vunpack.c.h.b16 %v5483
        %v5564 = vunpack.c.l.b16 %v5484
        %v5565 = vunpack.c.h.b16 %v5484
        %v5566 = vunpack.c.l.b16 %v5485
        %v5567 = vunpack.c.h.b16 %v5485
        %v5568 = vunpack.c.l.b16 %v5486
        %v5569 = vunpack.c.h.b16 %v5486
        %v5570 = vunpack.c.l.b16 %v5487
        %v5571 = vunpack.c.h.b16 %v5487
        %v5572 = vunpack.c.l.b16 %v5488
        %v5573 = vunpack.c.h.b16 %v5488
        %v5574 = vunpack.c.l.b16 %v5489
        %v5575 = vunpack.c.h.b16 %v5489
        %v5576 = vunpack.c.l.b16 %v5490
        %v5577 = vunpack.c.h.b16 %v5490
        %v5578 = vunpack.c.l.b16 %v5491
        %v5579 = vunpack.c.h.b16 %v5491
        %v5580 = vunpack.c.l.b16 %v5492
        %v5581 = vunpack.c.h.b16 %v5492
        %v5582 = vunpack.c.l.b16 %v5493
        %v5583 = vunpack.c.h.b16 %v5493
        %v5584 = vunpack.c.l.b16 %v5494
        %v5585 = vunpack.c.h.b16 %v5494
        %v5586 = vunpack.c.l.b16 %v5495
        %v5587 = vunpack.c.h.b16 %v5495
        %v5588 = vunpack.c.l.b16 %v5496
        %v5589 = vunpack.c.h.b16 %v5496
        %v5590 = vunpack.c.l.b16 %v5497
        %v5591 = vunpack.c.h.b16 %v5497
        %v5592 = vunpack.c.l.b16 %v5498
        %v5593 = vunpack.c.h.b16 %v5498
        %v5594 = vunpack.c.l.b16 %v5499
        %v5595 = vunpack.c.h.b16 %v5499
        %v5596 = vpack.c.b16 %v5534, %v5532
        %v5597 = vpack.c.b16 %v5535, %v5533
        %v5598 = vpack.c.b16 %v5538, %v5536
        %v5599 = vpack.c.b16 %v5539, %v5537
        %v5600 = vpack.c.b16 %v5542, %v5540
        %v5601 = vpack.c.b16 %v5543, %v5541
        %v5602 = vpack.c.b16 %v5546, %v5544
        %v5603 = vpack.c.b16 %v5547, %v5545
        %v5604 = vpack.c.b16 %v5550, %v5548
        %v5605 = vpack.c.b16 %v5551, %v5549
        %v5606 = vpack.c.b16 %v5554, %v5552
        %v5607 = vpack.c.b16 %v5555, %v5553
        %v5608 = vpack.c.b16 %v5558, %v5556
        %v5609 = vpack.c.b16 %v5559, %v5557
        %v5610 = vpack.c.b16 %v5562, %v5560
        %v5611 = vpack.c.b16 %v5563, %v5561
        %v5612 = vpack.c.b16 %v5566, %v5564
        %v5613 = vpack.c.b16 %v5567, %v5565
        %v5614 = vpack.c.b16 %v5570, %v5568
        %v5615 = vpack.c.b16 %v5571, %v5569
        %v5616 = vpack.c.b16 %v5574, %v5572
        %v5617 = vpack.c.b16 %v5575, %v5573
        %v5618 = vpack.c.b16 %v5578, %v5576
        %v5619 = vpack.c.b16 %v5579, %v5577
        %v5620 = vpack.c.b16 %v5582, %v5580
        %v5621 = vpack.c.b16 %v5583, %v5581
        %v5622 = vpack.c.b16 %v5586, %v5584
        %v5623 = vpack.c.b16 %v5587, %v5585
        %v5624 = vpack.c.b16 %v5590, %v5588
        %v5625 = vpack.c.b16 %v5591, %v5589
        %v5626 = vpack.c.b16 %v5594, %v5592
        %v5627 = vpack.c.b16 %v5595, %v5593
        %5660 = vmatpush.bf16.msra.mxu0 %v5610
        %5661 = vmatpush.bf16.msra.mxu0 %v5608
        %5662 = vmatpush.bf16.msra.mxu0 %v5606
        %5663 = vmatpush.bf16.msra.mxu0 %v5604
        %5664 = vmatpush.bf16.msra.mxu0 %v5602
        %5665 = vmatpush.bf16.msra.mxu0 %v5600
        %5666 = vmatpush.bf16.msra.mxu0 %v5598
        %5667 = vmatpush.bf16.msra.mxu0 %v5596
        %5668 = vmatmul.bf16.gmra.mxu0 %v5435
        %v5669 = vpop.f32.mrf.mxu0
        %v5670 = vadd.f32 0.0, %v5669
        %v5671 = vpop.f32.mrf.mxu0
        %v5672 = vadd.f32 0.0, %v5671
        %5673 = vmatmul.bf16.gmra.mxu0 %v5437
        %v5674 = vpop.f32.mrf.mxu0
        %v5675 = vadd.f32 0.0, %v5674
        %v5676 = vpop.f32.mrf.mxu0
        %v5677 = vadd.f32 0.0, %v5676
        %5678 = vmatmul.bf16.gmra.mxu0 %v5439
        %v5679 = vpop.f32.mrf.mxu0
        %v5680 = vadd.f32 0.0, %v5679
        %v5681 = vpop.f32.mrf.mxu0
        %v5682 = vadd.f32 0.0, %v5681
        %5683 = vmatmul.bf16.gmra.mxu0 %v5441
        %v5684 = vpop.f32.mrf.mxu0
        %v5685 = vadd.f32 0.0, %v5684
        %v5686 = vpop.f32.mrf.mxu0
        %v5687 = vadd.f32 0.0, %v5686
        %5688 = vmatmul.bf16.gmra.mxu0 %v5443
        %v5689 = vpop.f32.mrf.mxu0
        %v5690 = vadd.f32 0.0, %v5689
        %v5691 = vpop.f32.mrf.mxu0
        %v5692 = vadd.f32 0.0, %v5691
        %5693 = vmatmul.bf16.gmra.mxu0 %v5445
        %v5694 = vpop.f32.mrf.mxu0
        %v5695 = vadd.f32 0.0, %v5694
        %v5696 = vpop.f32.mrf.mxu0
        %v5697 = vadd.f32 0.0, %v5696
        %5698 = vmatmul.bf16.gmra.mxu0 %v5447
        %v5699 = vpop.f32.mrf.mxu0
        %v5700 = vadd.f32 0.0, %v5699
        %v5701 = vpop.f32.mrf.mxu0
        %v5702 = vadd.f32 0.0, %v5701
        %5703 = vmatmul.bf16.gmra.mxu0 %v5449
        %v5704 = vpop.f32.mrf.mxu0
        %v5705 = vadd.f32 0.0, %v5704
        %v5706 = vpop.f32.mrf.mxu0
        %v5707 = vadd.f32 0.0, %v5706
        %5708 = vmatmul.bf16.gmra.mxu0 %v5451
        %v5709 = vpop.f32.mrf.mxu0
        %v5710 = vadd.f32 0.0, %v5709
        %v5711 = vpop.f32.mrf.mxu0
        %v5712 = vadd.f32 0.0, %v5711
        %5713 = vmatmul.bf16.gmra.mxu0 %v5453
        %v5714 = vpop.f32.mrf.mxu0
        %v5715 = vadd.f32 0.0, %v5714
        %v5716 = vpop.f32.mrf.mxu0
        %v5717 = vadd.f32 0.0, %v5716
        %5718 = vmatmul.bf16.gmra.mxu0 %v5455
        %v5719 = vpop.f32.mrf.mxu0
        %v5720 = vadd.f32 0.0, %v5719
        %v5721 = vpop.f32.mrf.mxu0
        %v5722 = vadd.f32 0.0, %v5721
        %5723 = vmatmul.bf16.gmra.mxu0 %v5457
        %v5724 = vpop.f32.mrf.mxu0
        %v5725 = vadd.f32 0.0, %v5724
        %v5726 = vpop.f32.mrf.mxu0
        %v5727 = vadd.f32 0.0, %v5726
        %5728 = vmatmul.bf16.gmra.mxu0 %v5459
        %v5729 = vpop.f32.mrf.mxu0
        %v5730 = vadd.f32 0.0, %v5729
        %v5731 = vpop.f32.mrf.mxu0
        %v5732 = vadd.f32 0.0, %v5731
        %5733 = vmatmul.bf16.gmra.mxu0 %v5461
        %v5734 = vpop.f32.mrf.mxu0
        %v5735 = vadd.f32 0.0, %v5734
        %v5736 = vpop.f32.mrf.mxu0
        %v5737 = vadd.f32 0.0, %v5736
        %5738 = vmatmul.bf16.gmra.mxu0 %v5463
        %v5739 = vpop.f32.mrf.mxu0
        %v5740 = vadd.f32 0.0, %v5739
        %v5741 = vpop.f32.mrf.mxu0
        %v5742 = vadd.f32 0.0, %v5741
        %5743 = vmatmul.bf16.gmra.mxu0 %v5465
        %v5744 = vpop.f32.mrf.mxu0
        %v5745 = vadd.f32 0.0, %v5744
        %v5746 = vpop.f32.mrf.mxu0
        %v5747 = vadd.f32 0.0, %v5746
        %5748 = vdwg.mxu0
        %5749 = vmatpush.bf16.msra.mxu0 %v5626
        %5750 = vmatpush.bf16.msra.mxu0 %v5624
        %5751 = vmatpush.bf16.msra.mxu0 %v5622
        %5752 = vmatpush.bf16.msra.mxu0 %v5620
        %5753 = vmatpush.bf16.msra.mxu0 %v5618
        %5754 = vmatpush.bf16.msra.mxu0 %v5616
        %5755 = vmatpush.bf16.msra.mxu0 %v5614
        %5756 = vmatpush.bf16.msra.mxu0 %v5612
        %5757 = vmatmul.bf16.gmra.mxu0 %v5436
        %v5758 = vpop.f32.mrf.mxu0
        %v5759 = vadd.f32 %v5670, %v5758
        %v5760 = vpop.f32.mrf.mxu0
        %v5761 = vadd.f32 %v5672, %v5760
        %5762 = vmatmul.bf16.gmra.mxu0 %v5438
        %v5763 = vpop.f32.mrf.mxu0
        %v5764 = vadd.f32 %v5675, %v5763
        %v5765 = vpop.f32.mrf.mxu0
        %v5766 = vadd.f32 %v5677, %v5765
        %5767 = vmatmul.bf16.gmra.mxu0 %v5440
        %v5768 = vpop.f32.mrf.mxu0
        %v5769 = vadd.f32 %v5680, %v5768
        %v5770 = vpop.f32.mrf.mxu0
        %v5771 = vadd.f32 %v5682, %v5770
        %5772 = vmatmul.bf16.gmra.mxu0 %v5442
        %v5773 = vpop.f32.mrf.mxu0
        %v5774 = vadd.f32 %v5685, %v5773
        %v5775 = vpop.f32.mrf.mxu0
        %v5776 = vadd.f32 %v5687, %v5775
        %5777 = vmatmul.bf16.gmra.mxu0 %v5444
        %v5778 = vpop.f32.mrf.mxu0
        %v5779 = vadd.f32 %v5690, %v5778
        %v5780 = vpop.f32.mrf.mxu0
        %v5781 = vadd.f32 %v5692, %v5780
        %5782 = vmatmul.bf16.gmra.mxu0 %v5446
        %v5783 = vpop.f32.mrf.mxu0
        %v5784 = vadd.f32 %v5695, %v5783
        %v5785 = vpop.f32.mrf.mxu0
        %v5786 = vadd.f32 %v5697, %v5785
        %5787 = vmatmul.bf16.gmra.mxu0 %v5448
        %v5788 = vpop.f32.mrf.mxu0
        %v5789 = vadd.f32 %v5700, %v5788
        %v5790 = vpop.f32.mrf.mxu0
        %v5791 = vadd.f32 %v5702, %v5790
        %5792 = vmatmul.bf16.gmra.mxu0 %v5450
        %v5793 = vpop.f32.mrf.mxu0
        %v5794 = vadd.f32 %v5705, %v5793
        %v5795 = vpop.f32.mrf.mxu0
        %v5796 = vadd.f32 %v5707, %v5795
        %5797 = vmatmul.bf16.gmra.mxu0 %v5452
        %v5798 = vpop.f32.mrf.mxu0
        %v5799 = vadd.f32 %v5710, %v5798
        %v5800 = vpop.f32.mrf.mxu0
        %v5801 = vadd.f32 %v5712, %v5800
        %5802 = vmatmul.bf16.gmra.mxu0 %v5454
        %v5803 = vpop.f32.mrf.mxu0
        %v5804 = vadd.f32 %v5715, %v5803
        %v5805 = vpop.f32.mrf.mxu0
        %v5806 = vadd.f32 %v5717, %v5805
        %5807 = vmatmul.bf16.gmra.mxu0 %v5456
        %v5808 = vpop.f32.mrf.mxu0
        %v5809 = vadd.f32 %v5720, %v5808
        %v5810 = vpop.f32.mrf.mxu0
        %v5811 = vadd.f32 %v5722, %v5810
        %5812 = vmatmul.bf16.gmra.mxu0 %v5458
        %v5813 = vpop.f32.mrf.mxu0
        %v5814 = vadd.f32 %v5725, %v5813
        %v5815 = vpop.f32.mrf.mxu0
        %v5816 = vadd.f32 %v5727, %v5815
        %5817 = vmatmul.bf16.gmra.mxu0 %v5460
        %v5818 = vpop.f32.mrf.mxu0
        %v5819 = vadd.f32 %v5730, %v5818
        %v5820 = vpop.f32.mrf.mxu0
        %v5821 = vadd.f32 %v5732, %v5820
        %5822 = vmatmul.bf16.gmra.mxu0 %v5462
        %v5823 = vpop.f32.mrf.mxu0
        %v5824 = vadd.f32 %v5735, %v5823
        %v5825 = vpop.f32.mrf.mxu0
        %v5826 = vadd.f32 %v5737, %v5825
        %5827 = vmatmul.bf16.gmra.mxu0 %v5464
        %v5828 = vpop.f32.mrf.mxu0
        %v5829 = vadd.f32 %v5740, %v5828
        %v5830 = vpop.f32.mrf.mxu0
        %v5831 = vadd.f32 %v5742, %v5830
        %5832 = vmatmul.bf16.gmra.mxu0 %v5466
        %v5833 = vpop.f32.mrf.mxu0
        %v5834 = vadd.f32 %v5745, %v5833
        %v5835 = vpop.f32.mrf.mxu0
        %v5836 = vadd.f32 %v5747, %v5835
        %5837 = vdwg.mxu0
        %5838 = vmatpush.bf16.msra.mxu0 %v5611
        %5839 = vmatpush.bf16.msra.mxu0 %v5609
        %5840 = vmatpush.bf16.msra.mxu0 %v5607
        %5841 = vmatpush.bf16.msra.mxu0 %v5605
        %5842 = vmatpush.bf16.msra.mxu0 %v5603
        %5843 = vmatpush.bf16.msra.mxu0 %v5601
        %5844 = vmatpush.bf16.msra.mxu0 %v5599
        %5845 = vmatpush.bf16.msra.mxu0 %v5597
        %5846 = vmatmul.bf16.gmra.mxu0 %v5435
        %v5847 = vpop.f32.mrf.mxu0
        %v5848 = vadd.f32 0.0, %v5847
        %v5849 = vpop.f32.mrf.mxu0
        %v5850 = vadd.f32 0.0, %v5849
        %5851 = vmatmul.bf16.gmra.mxu0 %v5437
        %v5852 = vpop.f32.mrf.mxu0
        %v5853 = vadd.f32 0.0, %v5852
        %v5854 = vpop.f32.mrf.mxu0
        %v5855 = vadd.f32 0.0, %v5854
        %5856 = vmatmul.bf16.gmra.mxu0 %v5439
        %v5857 = vpop.f32.mrf.mxu0
        %v5858 = vadd.f32 0.0, %v5857
        %v5859 = vpop.f32.mrf.mxu0
        %v5860 = vadd.f32 0.0, %v5859
        %5861 = vmatmul.bf16.gmra.mxu0 %v5441
        %v5862 = vpop.f32.mrf.mxu0
        %v5863 = vadd.f32 0.0, %v5862
        %v5864 = vpop.f32.mrf.mxu0
        %v5865 = vadd.f32 0.0, %v5864
        %5866 = vmatmul.bf16.gmra.mxu0 %v5443
        %v5867 = vpop.f32.mrf.mxu0
        %v5868 = vadd.f32 0.0, %v5867
        %v5869 = vpop.f32.mrf.mxu0
        %v5870 = vadd.f32 0.0, %v5869
        %5871 = vmatmul.bf16.gmra.mxu0 %v5445
        %v5872 = vpop.f32.mrf.mxu0
        %v5873 = vadd.f32 0.0, %v5872
        %v5874 = vpop.f32.mrf.mxu0
        %v5875 = vadd.f32 0.0, %v5874
        %5876 = vmatmul.bf16.gmra.mxu0 %v5447
        %v5877 = vpop.f32.mrf.mxu0
        %v5878 = vadd.f32 0.0, %v5877
        %v5879 = vpop.f32.mrf.mxu0
        %v5880 = vadd.f32 0.0, %v5879
        %5881 = vmatmul.bf16.gmra.mxu0 %v5449
        %v5882 = vpop.f32.mrf.mxu0
        %v5883 = vadd.f32 0.0, %v5882
        %v5884 = vpop.f32.mrf.mxu0
        %v5885 = vadd.f32 0.0, %v5884
        %5886 = vmatmul.bf16.gmra.mxu0 %v5451
        %v5887 = vpop.f32.mrf.mxu0
        %v5888 = vadd.f32 0.0, %v5887
        %v5889 = vpop.f32.mrf.mxu0
        %v5890 = vadd.f32 0.0, %v5889
        %5891 = vmatmul.bf16.gmra.mxu0 %v5453
        %v5892 = vpop.f32.mrf.mxu0
        %v5893 = vadd.f32 0.0, %v5892
        %v5894 = vpop.f32.mrf.mxu0
        %v5895 = vadd.f32 0.0, %v5894
        %5896 = vmatmul.bf16.gmra.mxu0 %v5455
        %v5897 = vpop.f32.mrf.mxu0
        %v5898 = vadd.f32 0.0, %v5897
        %v5899 = vpop.f32.mrf.mxu0
        %v5900 = vadd.f32 0.0, %v5899
        %5901 = vmatmul.bf16.gmra.mxu0 %v5457
        %v5902 = vpop.f32.mrf.mxu0
        %v5903 = vadd.f32 0.0, %v5902
        %v5904 = vpop.f32.mrf.mxu0
        %v5905 = vadd.f32 0.0, %v5904
        %5906 = vmatmul.bf16.gmra.mxu0 %v5459
        %v5907 = vpop.f32.mrf.mxu0
        %v5908 = vadd.f32 0.0, %v5907
        %v5909 = vpop.f32.mrf.mxu0
        %v5910 = vadd.f32 0.0, %v5909
        %5911 = vmatmul.bf16.gmra.mxu0 %v5461
        %v5912 = vpop.f32.mrf.mxu0
        %v5913 = vadd.f32 0.0, %v5912
        %v5914 = vpop.f32.mrf.mxu0
        %v5915 = vadd.f32 0.0, %v5914
        %5916 = vmatmul.bf16.gmra.mxu0 %v5463
        %v5917 = vpop.f32.mrf.mxu0
        %v5918 = vadd.f32 0.0, %v5917
        %v5919 = vpop.f32.mrf.mxu0
        %v5920 = vadd.f32 0.0, %v5919
        %5921 = vmatmul.bf16.gmra.mxu0 %v5465
        %v5922 = vpop.f32.mrf.mxu0
        %v5923 = vadd.f32 0.0, %v5922
        %v5924 = vpop.f32.mrf.mxu0
        %v5925 = vadd.f32 0.0, %v5924
        %5926 = vdwg.mxu0
        %5927 = vmatpush.bf16.msra.mxu0 %v5627
        %5928 = vmatpush.bf16.msra.mxu0 %v5625
        %5929 = vmatpush.bf16.msra.mxu0 %v5623
        %5930 = vmatpush.bf16.msra.mxu0 %v5621
        %5931 = vmatpush.bf16.msra.mxu0 %v5619
        %5932 = vmatpush.bf16.msra.mxu0 %v5617
        %5933 = vmatpush.bf16.msra.mxu0 %v5615
        %5934 = vmatpush.bf16.msra.mxu0 %v5613
        %5935 = vmatmul.bf16.gmra.mxu0 %v5436
        %v5936 = vpop.f32.mrf.mxu0
        %v5937 = vadd.f32 %v5848, %v5936
        %v5938 = vpop.f32.mrf.mxu0
        %v5939 = vadd.f32 %v5850, %v5938
        %5940 = vmatmul.bf16.gmra.mxu0 %v5438
        %v5941 = vpop.f32.mrf.mxu0
        %v5942 = vadd.f32 %v5853, %v5941
        %v5943 = vpop.f32.mrf.mxu0
        %v5944 = vadd.f32 %v5855, %v5943
        %5945 = vmatmul.bf16.gmra.mxu0 %v5440
        %v5946 = vpop.f32.mrf.mxu0
        %v5947 = vadd.f32 %v5858, %v5946
        %v5948 = vpop.f32.mrf.mxu0
        %v5949 = vadd.f32 %v5860, %v5948
        %5950 = vmatmul.bf16.gmra.mxu0 %v5442
        %v5951 = vpop.f32.mrf.mxu0
        %v5952 = vadd.f32 %v5863, %v5951
        %v5953 = vpop.f32.mrf.mxu0
        %v5954 = vadd.f32 %v5865, %v5953
        %5955 = vmatmul.bf16.gmra.mxu0 %v5444
        %v5956 = vpop.f32.mrf.mxu0
        %v5957 = vadd.f32 %v5868, %v5956
        %v5958 = vpop.f32.mrf.mxu0
        %v5959 = vadd.f32 %v5870, %v5958
        %5960 = vmatmul.bf16.gmra.mxu0 %v5446
        %v5961 = vpop.f32.mrf.mxu0
        %v5962 = vadd.f32 %v5873, %v5961
        %v5963 = vpop.f32.mrf.mxu0
        %v5964 = vadd.f32 %v5875, %v5963
        %5965 = vmatmul.bf16.gmra.mxu0 %v5448
        %v5966 = vpop.f32.mrf.mxu0
        %v5967 = vadd.f32 %v5878, %v5966
        %v5968 = vpop.f32.mrf.mxu0
        %v5969 = vadd.f32 %v5880, %v5968
        %5970 = vmatmul.bf16.gmra.mxu0 %v5450
        %v5971 = vpop.f32.mrf.mxu0
        %v5972 = vadd.f32 %v5883, %v5971
        %v5973 = vpop.f32.mrf.mxu0
        %v5974 = vadd.f32 %v5885, %v5973
        %5975 = vmatmul.bf16.gmra.mxu0 %v5452
        %v5976 = vpop.f32.mrf.mxu0
        %v5977 = vadd.f32 %v5888, %v5976
        %v5978 = vpop.f32.mrf.mxu0
        %v5979 = vadd.f32 %v5890, %v5978
        %5980 = vmatmul.bf16.gmra.mxu0 %v5454
        %v5981 = vpop.f32.mrf.mxu0
        %v5982 = vadd.f32 %v5893, %v5981
        %v5983 = vpop.f32.mrf.mxu0
        %v5984 = vadd.f32 %v5895, %v5983
        %5985 = vmatmul.bf16.gmra.mxu0 %v5456
        %v5986 = vpop.f32.mrf.mxu0
        %v5987 = vadd.f32 %v5898, %v5986
        %v5988 = vpop.f32.mrf.mxu0
        %v5989 = vadd.f32 %v5900, %v5988
        %5990 = vmatmul.bf16.gmra.mxu0 %v5458
        %v5991 = vpop.f32.mrf.mxu0
        %v5992 = vadd.f32 %v5903, %v5991
        %v5993 = vpop.f32.mrf.mxu0
        %v5994 = vadd.f32 %v5905, %v5993
        %5995 = vmatmul.bf16.gmra.mxu0 %v5460
        %v5996 = vpop.f32.mrf.mxu0
        %v5997 = vadd.f32 %v5908, %v5996
        %v5998 = vpop.f32.mrf.mxu0
        %v5999 = vadd.f32 %v5910, %v5998
        %6000 = vmatmul.bf16.gmra.mxu0 %v5462
        %v6001 = vpop.f32.mrf.mxu0
        %v6002 = vadd.f32 %v5913, %v6001
        %v6003 = vpop.f32.mrf.mxu0
        %v6004 = vadd.f32 %v5915, %v6003
        %6005 = vmatmul.bf16.gmra.mxu0 %v5464
        %v6006 = vpop.f32.mrf.mxu0
        %v6007 = vadd.f32 %v5918, %v6006
        %v6008 = vpop.f32.mrf.mxu0
        %v6009 = vadd.f32 %v5920, %v6008
        %6010 = vmatmul.bf16.gmra.mxu0 %v5466
        %v6011 = vpop.f32.mrf.mxu0
        %v6012 = vadd.f32 %v5923, %v6011
        %v6013 = vpop.f32.mrf.mxu0
        %v6014 = vadd.f32 %v5925, %v6013
        %6015 = vdwg.mxu0
        %v6016 = vadd.f32 %v5371, %v5759
        %v6017 = vadd.f32 %v5372, %v5937
        %v6018 = vadd.f32 %v5373, %v5761
        %v6019 = vadd.f32 %v5374, %v5939
        %v6020 = vadd.f32 %v5375, %v5764
        %v6021 = vadd.f32 %v5376, %v5942
        %v6022 = vadd.f32 %v5377, %v5766
        %v6023 = vadd.f32 %v5378, %v5944
        %v6024 = vadd.f32 %v5379, %v5769
        %v6025 = vadd.f32 %v5380, %v5947
        %v6026 = vadd.f32 %v5381, %v5771
        %v6027 = vadd.f32 %v5382, %v5949
        %v6028 = vadd.f32 %v5383, %v5774
        %v6029 = vadd.f32 %v5384, %v5952
        %v6030 = vadd.f32 %v5385, %v5776
        %v6031 = vadd.f32 %v5386, %v5954
        %v6032 = vadd.f32 %v5387, %v5779
        %v6033 = vadd.f32 %v5388, %v5957
        %v6034 = vadd.f32 %v5389, %v5781
        %v6035 = vadd.f32 %v5390, %v5959
        %v6036 = vadd.f32 %v5391, %v5784
        %v6037 = vadd.f32 %v5392, %v5962
        %v6038 = vadd.f32 %v5393, %v5786
        %v6039 = vadd.f32 %v5394, %v5964
        %v6040 = vadd.f32 %v5395, %v5789
        %v6041 = vadd.f32 %v5396, %v5967
        %v6042 = vadd.f32 %v5397, %v5791
        %v6043 = vadd.f32 %v5398, %v5969
        %v6044 = vadd.f32 %v5399, %v5794
        %v6045 = vadd.f32 %v5400, %v5972
        %v6046 = vadd.f32 %v5401, %v5796
        %v6047 = vadd.f32 %v5402, %v5974
        %v6048 = vadd.f32 %v5403, %v5799
        %v6049 = vadd.f32 %v5404, %v5977
        %v6050 = vadd.f32 %v5405, %v5801
        %v6051 = vadd.f32 %v5406, %v5979
        %v6052 = vadd.f32 %v5407, %v5804
        %v6053 = vadd.f32 %v5408, %v5982
        %v6054 = vadd.f32 %v5409, %v5806
        %v6055 = vadd.f32 %v5410, %v5984
        %v6056 = vadd.f32 %v5411, %v5809
        %v6057 = vadd.f32 %v5412, %v5987
        %v6058 = vadd.f32 %v5413, %v5811
        %v6059 = vadd.f32 %v5414, %v5989
        %v6060 = vadd.f32 %v5415, %v5814
        %v6061 = vadd.f32 %v5416, %v5992
        %v6062 = vadd.f32 %v5417, %v5816
        %v6063 = vadd.f32 %v5418, %v5994
        %v6064 = vadd.f32 %v5419, %v5819
        %v6065 = vadd.f32 %v5420, %v5997
        %v6066 = vadd.f32 %v5421, %v5821
        %v6067 = vadd.f32 %v5422, %v5999
        %v6068 = vadd.f32 %v5423, %v5824
        %v6069 = vadd.f32 %v5424, %v6002
        %v6070 = vadd.f32 %v5425, %v5826
        %v6071 = vadd.f32 %v5426, %v6004
        %v6072 = vadd.f32 %v5427, %v5829
        %v6073 = vadd.f32 %v5428, %v6007
        %v6074 = vadd.f32 %v5429, %v5831
        %v6075 = vadd.f32 %v5430, %v6009
        %v6076 = vadd.f32 %v5431, %v5834
        %v6077 = vadd.f32 %v5432, %v6012
        %v6078 = vadd.f32 %v5433, %v5836
        %v6079 = vadd.f32 %v5434, %v6014
        %6080 = vst [vmem:[#allocation3] sm:$0xff] %v6016
        %6081 = vst [vmem:[#allocation3 + $0x8] sm:$0xff] %v6017
        %6082 = vst [vmem:[#allocation3 + $0x10] sm:$0xff] %v6018
        %6083 = vst [vmem:[#allocation3 + $0x18] sm:$0xff] %v6019
        %6084 = vst [vmem:[#allocation3 + $0x20] sm:$0xff] %v6020
        %6085 = vst [vmem:[#allocation3 + $0x28] sm:$0xff] %v6021
        %6086 = vst [vmem:[#allocation3 + $0x30] sm:$0xff] %v6022
        %6087 = vst [vmem:[#allocation3 + $0x38] sm:$0xff] %v6023
        %6088 = vst [vmem:[#allocation3 + $0x40] sm:$0xff] %v6024
        %6089 = vst [vmem:[#allocation3 + $0x48] sm:$0xff] %v6025
        %6090 = vst [vmem:[#allocation3 + $0x50] sm:$0xff] %v6026
        %6091 = vst [vmem:[#allocation3 + $0x58] sm:$0xff] %v6027
        %6092 = vst [vmem:[#allocation3 + $0x60] sm:$0xff] %v6028
        %6093 = vst [vmem:[#allocation3 + $0x68] sm:$0xff] %v6029
        %6094 = vst [vmem:[#allocation3 + $0x70] sm:$0xff] %v6030
        %6095 = vst [vmem:[#allocation3 + $0x78] sm:$0xff] %v6031
        %6096 = vst [vmem:[#allocation3 + $0x80] sm:$0xff] %v6032
        %6097 = vst [vmem:[#allocation3 + $0x88] sm:$0xff] %v6033
        %6098 = vst [vmem:[#allocation3 + $0x90] sm:$0xff] %v6034
        %6099 = vst [vmem:[#allocation3 + $0x98] sm:$0xff] %v6035
        %6100 = vst [vmem:[#allocation3 + $0xa0] sm:$0xff] %v6036
        %6101 = vst [vmem:[#allocation3 + $0xa8] sm:$0xff] %v6037
        %6102 = vst [vmem:[#allocation3 + $0xb0] sm:$0xff] %v6038
        %6103 = vst [vmem:[#allocation3 + $0xb8] sm:$0xff] %v6039
        %6104 = vst [vmem:[#allocation3 + $0xc0] sm:$0xff] %v6040
        %6105 = vst [vmem:[#allocation3 + $0xc8] sm:$0xff] %v6041
        %6106 = vst [vmem:[#allocation3 + $0xd0] sm:$0xff] %v6042
        %6107 = vst [vmem:[#allocation3 + $0xd8] sm:$0xff] %v6043
        %6108 = vst [vmem:[#allocation3 + $0xe0] sm:$0xff] %v6044
        %6109 = vst [vmem:[#allocation3 + $0xe8] sm:$0xff] %v6045
        %6110 = vst [vmem:[#allocation3 + $0xf0] sm:$0xff] %v6046
        %6111 = vst [vmem:[#allocation3 + $0xf8] sm:$0xff] %v6047
        %6112 = vst [vmem:[#allocation3 + $0x100] sm:$0xff] %v6048
        %6113 = vst [vmem:[#allocation3 + $0x108] sm:$0xff] %v6049
        %6114 = vst [vmem:[#allocation3 + $0x110] sm:$0xff] %v6050
        %6115 = vst [vmem:[#allocation3 + $0x118] sm:$0xff] %v6051
        %6116 = vst [vmem:[#allocation3 + $0x120] sm:$0xff] %v6052
        %6117 = vst [vmem:[#allocation3 + $0x128] sm:$0xff] %v6053
        %6118 = vst [vmem:[#allocation3 + $0x130] sm:$0xff] %v6054
        %6119 = vst [vmem:[#allocation3 + $0x138] sm:$0xff] %v6055
        %6120 = vst [vmem:[#allocation3 + $0x140] sm:$0xff] %v6056
        %6121 = vst [vmem:[#allocation3 + $0x148] sm:$0xff] %v6057
        %6122 = vst [vmem:[#allocation3 + $0x150] sm:$0xff] %v6058
        %6123 = vst [vmem:[#allocation3 + $0x158] sm:$0xff] %v6059
        %6124 = vst [vmem:[#allocation3 + $0x160] sm:$0xff] %v6060
        %6125 = vst [vmem:[#allocation3 + $0x168] sm:$0xff] %v6061
        %6126 = vst [vmem:[#allocation3 + $0x170] sm:$0xff] %v6062
        %6127 = vst [vmem:[#allocation3 + $0x178] sm:$0xff] %v6063
        %6128 = vst [vmem:[#allocation3 + $0x180] sm:$0xff] %v6064
        %6129 = vst [vmem:[#allocation3 + $0x188] sm:$0xff] %v6065
        %6130 = vst [vmem:[#allocation3 + $0x190] sm:$0xff] %v6066
        %6131 = vst [vmem:[#allocation3 + $0x198] sm:$0xff] %v6067
        %6132 = vst [vmem:[#allocation3 + $0x1a0] sm:$0xff] %v6068
        %6133 = vst [vmem:[#allocation3 + $0x1a8] sm:$0xff] %v6069
        %6134 = vst [vmem:[#allocation3 + $0x1b0] sm:$0xff] %v6070
        %6135 = vst [vmem:[#allocation3 + $0x1b8] sm:$0xff] %v6071
        %6136 = vst [vmem:[#allocation3 + $0x1c0] sm:$0xff] %v6072
        %6137 = vst [vmem:[#allocation3 + $0x1c8] sm:$0xff] %v6073
        %6138 = vst [vmem:[#allocation3 + $0x1d0] sm:$0xff] %v6074
        %6139 = vst [vmem:[#allocation3 + $0x1d8] sm:$0xff] %v6075
        %6140 = vst [vmem:[#allocation3 + $0x1e0] sm:$0xff] %v6076
        %6141 = vst [vmem:[#allocation3 + $0x1e8] sm:$0xff] %v6077
        %6142 = vst [vmem:[#allocation3 + $0x1f0] sm:$0xff] %v6078
        %6143 = vst [vmem:[#allocation3 + $0x1f8] sm:$0xff] %v6079
        %s6144 = scalar_lea.vmem %s4, 32
        %v6145 = vld [vmem:[%s6144] sm:$0xff]
        %v6147 = vunpack.c.l.b16 %v6145
        %v6148 = vunpack.c.h.b16 %v6145
        %v6149 = vpack.c.b16 %v6147, %v6147
        %v6150 = vpack.c.b16 %v6148, %v6148
        %v6152 = vsel %vm570, %v6149, 0
        %v6155 = vsel %vm570, %v6150, 0
        %6157 = vmatpush.bf16.msra.mxu0 0
        %6158 = vmatpush.bf16.msra.mxu0 0
        %6159 = vmatpush.bf16.msra.mxu0 0
        %6160 = vmatpush.bf16.msra.mxu0 0
        %6161 = vmatpush.bf16.msra.mxu0 0
        %6162 = vmatpush.bf16.msra.mxu0 0
        %6163 = vmatpush.bf16.msra.mxu0 0
        %6164 = vmatpush.bf16.msra.mxu0 %v6152
        %6165 = vmatmul.bf16.gmra.mxu0 %v523
        %v6166 = vpop.f32.mrf.mxu0
        %v6167 = vadd.f32 0.0, %v6166
        %v6168 = vpop.f32.mrf.mxu0
        %v6169 = vadd.f32 0.0, %v6168
        %6170 = vmatmul.bf16.gmra.mxu0 %v526
        %v6171 = vpop.f32.mrf.mxu0
        %v6172 = vadd.f32 0.0, %v6171
        %v6173 = vpop.f32.mrf.mxu0
        %v6174 = vadd.f32 0.0, %v6173
        %6175 = vmatmul.bf16.gmra.mxu0 %v529
        %v6176 = vpop.f32.mrf.mxu0
        %v6177 = vadd.f32 0.0, %v6176
        %v6178 = vpop.f32.mrf.mxu0
        %v6179 = vadd.f32 0.0, %v6178
        %6180 = vmatmul.bf16.gmra.mxu0 %v532
        %v6181 = vpop.f32.mrf.mxu0
        %v6182 = vadd.f32 0.0, %v6181
        %v6183 = vpop.f32.mrf.mxu0
        %v6184 = vadd.f32 0.0, %v6183
        %6185 = vmatmul.bf16.gmra.mxu0 %v535
        %v6186 = vpop.f32.mrf.mxu0
        %v6187 = vadd.f32 0.0, %v6186
        %v6188 = vpop.f32.mrf.mxu0
        %v6189 = vadd.f32 0.0, %v6188
        %6190 = vmatmul.bf16.gmra.mxu0 %v538
        %v6191 = vpop.f32.mrf.mxu0
        %v6192 = vadd.f32 0.0, %v6191
        %v6193 = vpop.f32.mrf.mxu0
        %v6194 = vadd.f32 0.0, %v6193
        %6195 = vmatmul.bf16.gmra.mxu0 %v541
        %v6196 = vpop.f32.mrf.mxu0
        %v6197 = vadd.f32 0.0, %v6196
        %v6198 = vpop.f32.mrf.mxu0
        %v6199 = vadd.f32 0.0, %v6198
        %6200 = vmatmul.bf16.gmra.mxu0 %v544
        %v6201 = vpop.f32.mrf.mxu0
        %v6202 = vadd.f32 0.0, %v6201
        %v6203 = vpop.f32.mrf.mxu0
        %v6204 = vadd.f32 0.0, %v6203
        %6205 = vmatmul.bf16.gmra.mxu0 %v547
        %v6206 = vpop.f32.mrf.mxu0
        %v6207 = vadd.f32 0.0, %v6206
        %v6208 = vpop.f32.mrf.mxu0
        %v6209 = vadd.f32 0.0, %v6208
        %6210 = vmatmul.bf16.gmra.mxu0 %v550
        %v6211 = vpop.f32.mrf.mxu0
        %v6212 = vadd.f32 0.0, %v6211
        %v6213 = vpop.f32.mrf.mxu0
        %v6214 = vadd.f32 0.0, %v6213
        %6215 = vmatmul.bf16.gmra.mxu0 %v553
        %v6216 = vpop.f32.mrf.mxu0
        %v6217 = vadd.f32 0.0, %v6216
        %v6218 = vpop.f32.mrf.mxu0
        %v6219 = vadd.f32 0.0, %v6218
        %6220 = vmatmul.bf16.gmra.mxu0 %v556
        %v6221 = vpop.f32.mrf.mxu0
        %v6222 = vadd.f32 0.0, %v6221
        %v6223 = vpop.f32.mrf.mxu0
        %v6224 = vadd.f32 0.0, %v6223
        %6225 = vmatmul.bf16.gmra.mxu0 %v559
        %v6226 = vpop.f32.mrf.mxu0
        %v6227 = vadd.f32 0.0, %v6226
        %v6228 = vpop.f32.mrf.mxu0
        %v6229 = vadd.f32 0.0, %v6228
        %6230 = vmatmul.bf16.gmra.mxu0 %v562
        %v6231 = vpop.f32.mrf.mxu0
        %v6232 = vadd.f32 0.0, %v6231
        %v6233 = vpop.f32.mrf.mxu0
        %v6234 = vadd.f32 0.0, %v6233
        %6235 = vmatmul.bf16.gmra.mxu0 %v565
        %v6236 = vpop.f32.mrf.mxu0
        %v6237 = vadd.f32 0.0, %v6236
        %v6238 = vpop.f32.mrf.mxu0
        %v6239 = vadd.f32 0.0, %v6238
        %6240 = vmatmul.bf16.gmra.mxu0 %v568
        %v6241 = vpop.f32.mrf.mxu0
        %v6242 = vadd.f32 0.0, %v6241
        %v6243 = vpop.f32.mrf.mxu0
        %v6244 = vadd.f32 0.0, %v6243
        %6245 = vdwg.mxu0
        %6246 = vmatpush.bf16.msra.mxu0 0
        %6247 = vmatpush.bf16.msra.mxu0 0
        %6248 = vmatpush.bf16.msra.mxu0 0
        %6249 = vmatpush.bf16.msra.mxu0 0
        %6250 = vmatpush.bf16.msra.mxu0 0
        %6251 = vmatpush.bf16.msra.mxu0 0
        %6252 = vmatpush.bf16.msra.mxu0 0
        %6253 = vmatpush.bf16.msra.mxu0 %v6155
        %6254 = vmatmul.bf16.gmra.mxu0 %v523
        %v6255 = vpop.f32.mrf.mxu0
        %v6256 = vadd.f32 0.0, %v6255
        %v6257 = vpop.f32.mrf.mxu0
        %v6258 = vadd.f32 0.0, %v6257
        %6259 = vmatmul.bf16.gmra.mxu0 %v526
        %v6260 = vpop.f32.mrf.mxu0
        %v6261 = vadd.f32 0.0, %v6260
        %v6262 = vpop.f32.mrf.mxu0
        %v6263 = vadd.f32 0.0, %v6262
        %6264 = vmatmul.bf16.gmra.mxu0 %v529
        %v6265 = vpop.f32.mrf.mxu0
        %v6266 = vadd.f32 0.0, %v6265
        %v6267 = vpop.f32.mrf.mxu0
        %v6268 = vadd.f32 0.0, %v6267
        %6269 = vmatmul.bf16.gmra.mxu0 %v532
        %v6270 = vpop.f32.mrf.mxu0
        %v6271 = vadd.f32 0.0, %v6270
        %v6272 = vpop.f32.mrf.mxu0
        %v6273 = vadd.f32 0.0, %v6272
        %6274 = vmatmul.bf16.gmra.mxu0 %v535
        %v6275 = vpop.f32.mrf.mxu0
        %v6276 = vadd.f32 0.0, %v6275
        %v6277 = vpop.f32.mrf.mxu0
        %v6278 = vadd.f32 0.0, %v6277
        %6279 = vmatmul.bf16.gmra.mxu0 %v538
        %v6280 = vpop.f32.mrf.mxu0
        %v6281 = vadd.f32 0.0, %v6280
        %v6282 = vpop.f32.mrf.mxu0
        %v6283 = vadd.f32 0.0, %v6282
        %6284 = vmatmul.bf16.gmra.mxu0 %v541
        %v6285 = vpop.f32.mrf.mxu0
        %v6286 = vadd.f32 0.0, %v6285
        %v6287 = vpop.f32.mrf.mxu0
        %v6288 = vadd.f32 0.0, %v6287
        %6289 = vmatmul.bf16.gmra.mxu0 %v544
        %v6290 = vpop.f32.mrf.mxu0
        %v6291 = vadd.f32 0.0, %v6290
        %v6292 = vpop.f32.mrf.mxu0
        %v6293 = vadd.f32 0.0, %v6292
        %6294 = vmatmul.bf16.gmra.mxu0 %v547
        %v6295 = vpop.f32.mrf.mxu0
        %v6296 = vadd.f32 0.0, %v6295
        %v6297 = vpop.f32.mrf.mxu0
        %v6298 = vadd.f32 0.0, %v6297
        %6299 = vmatmul.bf16.gmra.mxu0 %v550
        %v6300 = vpop.f32.mrf.mxu0
        %v6301 = vadd.f32 0.0, %v6300
        %v6302 = vpop.f32.mrf.mxu0
        %v6303 = vadd.f32 0.0, %v6302
        %6304 = vmatmul.bf16.gmra.mxu0 %v553
        %v6305 = vpop.f32.mrf.mxu0
        %v6306 = vadd.f32 0.0, %v6305
        %v6307 = vpop.f32.mrf.mxu0
        %v6308 = vadd.f32 0.0, %v6307
        %6309 = vmatmul.bf16.gmra.mxu0 %v556
        %v6310 = vpop.f32.mrf.mxu0
        %v6311 = vadd.f32 0.0, %v6310
        %v6312 = vpop.f32.mrf.mxu0
        %v6313 = vadd.f32 0.0, %v6312
        %6314 = vmatmul.bf16.gmra.mxu0 %v559
        %v6315 = vpop.f32.mrf.mxu0
        %v6316 = vadd.f32 0.0, %v6315
        %v6317 = vpop.f32.mrf.mxu0
        %v6318 = vadd.f32 0.0, %v6317
        %6319 = vmatmul.bf16.gmra.mxu0 %v562
        %v6320 = vpop.f32.mrf.mxu0
        %v6321 = vadd.f32 0.0, %v6320
        %v6322 = vpop.f32.mrf.mxu0
        %v6323 = vadd.f32 0.0, %v6322
        %6324 = vmatmul.bf16.gmra.mxu0 %v565
        %v6325 = vpop.f32.mrf.mxu0
        %v6326 = vadd.f32 0.0, %v6325
        %v6327 = vpop.f32.mrf.mxu0
        %v6328 = vadd.f32 0.0, %v6327
        %6329 = vmatmul.bf16.gmra.mxu0 %v568
        %v6330 = vpop.f32.mrf.mxu0
        %v6331 = vadd.f32 0.0, %v6330
        %v6332 = vpop.f32.mrf.mxu0
        %v6333 = vadd.f32 0.0, %v6332
        %6334 = vdwg.mxu0
        %6335 = vst [vmem:[#allocation2] sm:$0xff] %v6167
        %6336 = vst [vmem:[#allocation2 + $0x8] sm:$0xff] %v6256
        %6337 = vst [vmem:[#allocation2 + $0x10] sm:$0xff] %v6169
        %6338 = vst [vmem:[#allocation2 + $0x18] sm:$0xff] %v6258
        %6339 = vst [vmem:[#allocation2 + $0x20] sm:$0xff] %v6172
        %6340 = vst [vmem:[#allocation2 + $0x28] sm:$0xff] %v6261
        %6341 = vst [vmem:[#allocation2 + $0x30] sm:$0xff] %v6174
        %6342 = vst [vmem:[#allocation2 + $0x38] sm:$0xff] %v6263
        %6343 = vst [vmem:[#allocation2 + $0x40] sm:$0xff] %v6177
        %6344 = vst [vmem:[#allocation2 + $0x48] sm:$0xff] %v6266
        %6345 = vst [vmem:[#allocation2 + $0x50] sm:$0xff] %v6179
        %6346 = vst [vmem:[#allocation2 + $0x58] sm:$0xff] %v6268
        %6347 = vst [vmem:[#allocation2 + $0x60] sm:$0xff] %v6182
        %6348 = vst [vmem:[#allocation2 + $0x68] sm:$0xff] %v6271
        %6349 = vst [vmem:[#allocation2 + $0x70] sm:$0xff] %v6184
        %6350 = vst [vmem:[#allocation2 + $0x78] sm:$0xff] %v6273
        %6351 = vst [vmem:[#allocation2 + $0x80] sm:$0xff] %v6187
        %6352 = vst [vmem:[#allocation2 + $0x88] sm:$0xff] %v6276
        %6353 = vst [vmem:[#allocation2 + $0x90] sm:$0xff] %v6189
        %6354 = vst [vmem:[#allocation2 + $0x98] sm:$0xff] %v6278
        %6355 = vst [vmem:[#allocation2 + $0xa0] sm:$0xff] %v6192
        %6356 = vst [vmem:[#allocation2 + $0xa8] sm:$0xff] %v6281
        %6357 = vst [vmem:[#allocation2 + $0xb0] sm:$0xff] %v6194
        %6358 = vst [vmem:[#allocation2 + $0xb8] sm:$0xff] %v6283
        %6359 = vst [vmem:[#allocation2 + $0xc0] sm:$0xff] %v6197
        %6360 = vst [vmem:[#allocation2 + $0xc8] sm:$0xff] %v6286
        %6361 = vst [vmem:[#allocation2 + $0xd0] sm:$0xff] %v6199
        %6362 = vst [vmem:[#allocation2 + $0xd8] sm:$0xff] %v6288
        %6363 = vst [vmem:[#allocation2 + $0xe0] sm:$0xff] %v6202
        %6364 = vst [vmem:[#allocation2 + $0xe8] sm:$0xff] %v6291
        %6365 = vst [vmem:[#allocation2 + $0xf0] sm:$0xff] %v6204
        %6366 = vst [vmem:[#allocation2 + $0xf8] sm:$0xff] %v6293
        %6367 = vst [vmem:[#allocation2 + $0x100] sm:$0xff] %v6207
        %6368 = vst [vmem:[#allocation2 + $0x108] sm:$0xff] %v6296
        %6369 = vst [vmem:[#allocation2 + $0x110] sm:$0xff] %v6209
        %6370 = vst [vmem:[#allocation2 + $0x118] sm:$0xff] %v6298
        %6371 = vst [vmem:[#allocation2 + $0x120] sm:$0xff] %v6212
        %6372 = vst [vmem:[#allocation2 + $0x128] sm:$0xff] %v6301
        %6373 = vst [vmem:[#allocation2 + $0x130] sm:$0xff] %v6214
        %6374 = vst [vmem:[#allocation2 + $0x138] sm:$0xff] %v6303
        %6375 = vst [vmem:[#allocation2 + $0x140] sm:$0xff] %v6217
        %6376 = vst [vmem:[#allocation2 + $0x148] sm:$0xff] %v6306
        %6377 = vst [vmem:[#allocation2 + $0x150] sm:$0xff] %v6219
        %6378 = vst [vmem:[#allocation2 + $0x158] sm:$0xff] %v6308
        %6379 = vst [vmem:[#allocation2 + $0x160] sm:$0xff] %v6222
        %6380 = vst [vmem:[#allocation2 + $0x168] sm:$0xff] %v6311
        %6381 = vst [vmem:[#allocation2 + $0x170] sm:$0xff] %v6224
        %6382 = vst [vmem:[#allocation2 + $0x178] sm:$0xff] %v6313
        %6383 = vst [vmem:[#allocation2 + $0x180] sm:$0xff] %v6227
        %6384 = vst [vmem:[#allocation2 + $0x188] sm:$0xff] %v6316
        %6385 = vst [vmem:[#allocation2 + $0x190] sm:$0xff] %v6229
        %6386 = vst [vmem:[#allocation2 + $0x198] sm:$0xff] %v6318
        %6387 = vst [vmem:[#allocation2 + $0x1a0] sm:$0xff] %v6232
        %6388 = vst [vmem:[#allocation2 + $0x1a8] sm:$0xff] %v6321
        %6389 = vst [vmem:[#allocation2 + $0x1b0] sm:$0xff] %v6234
        %6390 = vst [vmem:[#allocation2 + $0x1b8] sm:$0xff] %v6323
        %6391 = vst [vmem:[#allocation2 + $0x1c0] sm:$0xff] %v6237
        %6392 = vst [vmem:[#allocation2 + $0x1c8] sm:$0xff] %v6326
        %6393 = vst [vmem:[#allocation2 + $0x1d0] sm:$0xff] %v6239
        %6394 = vst [vmem:[#allocation2 + $0x1d8] sm:$0xff] %v6328
        %6395 = vst [vmem:[#allocation2 + $0x1e0] sm:$0xff] %v6242
        %6396 = vst [vmem:[#allocation2 + $0x1e8] sm:$0xff] %v6331
        %6397 = vst [vmem:[#allocation2 + $0x1f0] sm:$0xff] %v6244
        %6398 = vst [vmem:[#allocation2 + $0x1f8] sm:$0xff] %v6333
        %v6399 = vld [vmem:[#allocation2] sm:$0xff]
        %v6400 = vld [vmem:[#allocation2 + $0x8] sm:$0xff]
        %v6401 = vld [vmem:[#allocation2 + $0x10] sm:$0xff]
        %v6402 = vld [vmem:[#allocation2 + $0x18] sm:$0xff]
        %v6403 = vld [vmem:[#allocation2 + $0x20] sm:$0xff]
        %v6404 = vld [vmem:[#allocation2 + $0x28] sm:$0xff]
        %v6405 = vld [vmem:[#allocation2 + $0x30] sm:$0xff]
        %v6406 = vld [vmem:[#allocation2 + $0x38] sm:$0xff]
        %v6407 = vld [vmem:[#allocation2 + $0x40] sm:$0xff]
        %v6408 = vld [vmem:[#allocation2 + $0x48] sm:$0xff]
        %v6409 = vld [vmem:[#allocation2 + $0x50] sm:$0xff]
        %v6410 = vld [vmem:[#allocation2 + $0x58] sm:$0xff]
        %v6411 = vld [vmem:[#allocation2 + $0x60] sm:$0xff]
        %v6412 = vld [vmem:[#allocation2 + $0x68] sm:$0xff]
        %v6413 = vld [vmem:[#allocation2 + $0x70] sm:$0xff]
        %v6414 = vld [vmem:[#allocation2 + $0x78] sm:$0xff]
        %v6415 = vld [vmem:[#allocation2 + $0x80] sm:$0xff]
        %v6416 = vld [vmem:[#allocation2 + $0x88] sm:$0xff]
        %v6417 = vld [vmem:[#allocation2 + $0x90] sm:$0xff]
        %v6418 = vld [vmem:[#allocation2 + $0x98] sm:$0xff]
        %v6419 = vld [vmem:[#allocation2 + $0xa0] sm:$0xff]
        %v6420 = vld [vmem:[#allocation2 + $0xa8] sm:$0xff]
        %v6421 = vld [vmem:[#allocation2 + $0xb0] sm:$0xff]
        %v6422 = vld [vmem:[#allocation2 + $0xb8] sm:$0xff]
        %v6423 = vld [vmem:[#allocation2 + $0xc0] sm:$0xff]
        %v6424 = vld [vmem:[#allocation2 + $0xc8] sm:$0xff]
        %v6425 = vld [vmem:[#allocation2 + $0xd0] sm:$0xff]
        %v6426 = vld [vmem:[#allocation2 + $0xd8] sm:$0xff]
        %v6427 = vld [vmem:[#allocation2 + $0xe0] sm:$0xff]
        %v6428 = vld [vmem:[#allocation2 + $0xe8] sm:$0xff]
        %v6429 = vld [vmem:[#allocation2 + $0xf0] sm:$0xff]
        %v6430 = vld [vmem:[#allocation2 + $0xf8] sm:$0xff]
        %v6431 = vld [vmem:[#allocation2 + $0x100] sm:$0xff]
        %v6432 = vld [vmem:[#allocation2 + $0x108] sm:$0xff]
        %v6433 = vld [vmem:[#allocation2 + $0x110] sm:$0xff]
        %v6434 = vld [vmem:[#allocation2 + $0x118] sm:$0xff]
        %v6435 = vld [vmem:[#allocation2 + $0x120] sm:$0xff]
        %v6436 = vld [vmem:[#allocation2 + $0x128] sm:$0xff]
        %v6437 = vld [vmem:[#allocation2 + $0x130] sm:$0xff]
        %v6438 = vld [vmem:[#allocation2 + $0x138] sm:$0xff]
        %v6439 = vld [vmem:[#allocation2 + $0x140] sm:$0xff]
        %v6440 = vld [vmem:[#allocation2 + $0x148] sm:$0xff]
        %v6441 = vld [vmem:[#allocation2 + $0x150] sm:$0xff]
        %v6442 = vld [vmem:[#allocation2 + $0x158] sm:$0xff]
        %v6443 = vld [vmem:[#allocation2 + $0x160] sm:$0xff]
        %v6444 = vld [vmem:[#allocation2 + $0x168] sm:$0xff]
        %v6445 = vld [vmem:[#allocation2 + $0x170] sm:$0xff]
        %v6446 = vld [vmem:[#allocation2 + $0x178] sm:$0xff]
        %v6447 = vld [vmem:[#allocation2 + $0x180] sm:$0xff]
        %v6448 = vld [vmem:[#allocation2 + $0x188] sm:$0xff]
        %v6449 = vld [vmem:[#allocation2 + $0x190] sm:$0xff]
        %v6450 = vld [vmem:[#allocation2 + $0x198] sm:$0xff]
        %v6451 = vld [vmem:[#allocation2 + $0x1a0] sm:$0xff]
        %v6452 = vld [vmem:[#allocation2 + $0x1a8] sm:$0xff]
        %v6453 = vld [vmem:[#allocation2 + $0x1b0] sm:$0xff]
        %v6454 = vld [vmem:[#allocation2 + $0x1b8] sm:$0xff]
        %v6455 = vld [vmem:[#allocation2 + $0x1c0] sm:$0xff]
        %v6456 = vld [vmem:[#allocation2 + $0x1c8] sm:$0xff]
        %v6457 = vld [vmem:[#allocation2 + $0x1d0] sm:$0xff]
        %v6458 = vld [vmem:[#allocation2 + $0x1d8] sm:$0xff]
        %v6459 = vld [vmem:[#allocation2 + $0x1e0] sm:$0xff]
        %v6460 = vld [vmem:[#allocation2 + $0x1e8] sm:$0xff]
        %v6461 = vld [vmem:[#allocation2 + $0x1f0] sm:$0xff]
        %v6462 = vld [vmem:[#allocation2 + $0x1f8] sm:$0xff]
        %s6463 = scalar_lea.vmem %s7, 3
        %v6464 = vld [vmem:[%s6463] ss:$8 sm:$0x3]
        %v6466 = vperm.slane %v6464, 0
        %v6467 = vperm.slane %v6464, 1
        %v6470 = vmul.f32 %v6399, %v6466
        %v6471 = vmul.f32 %v6400, %v6467
        %v6472 = vmul.f32 %v6401, %v6466
        %v6473 = vmul.f32 %v6402, %v6467
        %v6474 = vmul.f32 %v6403, %v6466
        %v6475 = vmul.f32 %v6404, %v6467
        %v6476 = vmul.f32 %v6405, %v6466
        %v6477 = vmul.f32 %v6406, %v6467
        %v6478 = vmul.f32 %v6407, %v6466
        %v6479 = vmul.f32 %v6408, %v6467
        %v6480 = vmul.f32 %v6409, %v6466
        %v6481 = vmul.f32 %v6410, %v6467
        %v6482 = vmul.f32 %v6411, %v6466
        %v6483 = vmul.f32 %v6412, %v6467
        %v6484 = vmul.f32 %v6413, %v6466
        %v6485 = vmul.f32 %v6414, %v6467
        %v6486 = vmul.f32 %v6415, %v6466
        %v6487 = vmul.f32 %v6416, %v6467
        %v6488 = vmul.f32 %v6417, %v6466
        %v6489 = vmul.f32 %v6418, %v6467
        %v6490 = vmul.f32 %v6419, %v6466
        %v6491 = vmul.f32 %v6420, %v6467
        %v6492 = vmul.f32 %v6421, %v6466
        %v6493 = vmul.f32 %v6422, %v6467
        %v6494 = vmul.f32 %v6423, %v6466
        %v6495 = vmul.f32 %v6424, %v6467
        %v6496 = vmul.f32 %v6425, %v6466
        %v6497 = vmul.f32 %v6426, %v6467
        %v6498 = vmul.f32 %v6427, %v6466
        %v6499 = vmul.f32 %v6428, %v6467
        %v6500 = vmul.f32 %v6429, %v6466
        %v6501 = vmul.f32 %v6430, %v6467
        %v6502 = vmul.f32 %v6431, %v6466
        %v6503 = vmul.f32 %v6432, %v6467
        %v6504 = vmul.f32 %v6433, %v6466
        %v6505 = vmul.f32 %v6434, %v6467
        %v6506 = vmul.f32 %v6435, %v6466
        %v6507 = vmul.f32 %v6436, %v6467
        %v6508 = vmul.f32 %v6437, %v6466
        %v6509 = vmul.f32 %v6438, %v6467
        %v6510 = vmul.f32 %v6439, %v6466
        %v6511 = vmul.f32 %v6440, %v6467
        %v6512 = vmul.f32 %v6441, %v6466
        %v6513 = vmul.f32 %v6442, %v6467
        %v6514 = vmul.f32 %v6443, %v6466
        %v6515 = vmul.f32 %v6444, %v6467
        %v6516 = vmul.f32 %v6445, %v6466
        %v6517 = vmul.f32 %v6446, %v6467
        %v6518 = vmul.f32 %v6447, %v6466
        %v6519 = vmul.f32 %v6448, %v6467
        %v6520 = vmul.f32 %v6449, %v6466
        %v6521 = vmul.f32 %v6450, %v6467
        %v6522 = vmul.f32 %v6451, %v6466
        %v6523 = vmul.f32 %v6452, %v6467
        %v6524 = vmul.f32 %v6453, %v6466
        %v6525 = vmul.f32 %v6454, %v6467
        %v6526 = vmul.f32 %v6455, %v6466
        %v6527 = vmul.f32 %v6456, %v6467
        %v6528 = vmul.f32 %v6457, %v6466
        %v6529 = vmul.f32 %v6458, %v6467
        %v6530 = vmul.f32 %v6459, %v6466
        %v6531 = vmul.f32 %v6460, %v6467
        %v6532 = vmul.f32 %v6461, %v6466
        %v6533 = vmul.f32 %v6462, %v6467
        %s6534 = scalar_lea.vmem %s8, 3
        %v6535 = vld [vmem:[%s6534] ss:$8 sm:$0x3]
        %v6537 = vperm.slane %v6535, 0
        %v6538 = vperm.slane %v6535, 1
        %v6541 = vadd.f32 %v6470, %v6537
        %v6542 = vadd.f32 %v6471, %v6538
        %v6543 = vadd.f32 %v6472, %v6537
        %v6544 = vadd.f32 %v6473, %v6538
        %v6545 = vadd.f32 %v6474, %v6537
        %v6546 = vadd.f32 %v6475, %v6538
        %v6547 = vadd.f32 %v6476, %v6537
        %v6548 = vadd.f32 %v6477, %v6538
        %v6549 = vadd.f32 %v6478, %v6537
        %v6550 = vadd.f32 %v6479, %v6538
        %v6551 = vadd.f32 %v6480, %v6537
        %v6552 = vadd.f32 %v6481, %v6538
        %v6553 = vadd.f32 %v6482, %v6537
        %v6554 = vadd.f32 %v6483, %v6538
        %v6555 = vadd.f32 %v6484, %v6537
        %v6556 = vadd.f32 %v6485, %v6538
        %v6557 = vadd.f32 %v6486, %v6537
        %v6558 = vadd.f32 %v6487, %v6538
        %v6559 = vadd.f32 %v6488, %v6537
        %v6560 = vadd.f32 %v6489, %v6538
        %v6561 = vadd.f32 %v6490, %v6537
        %v6562 = vadd.f32 %v6491, %v6538
        %v6563 = vadd.f32 %v6492, %v6537
        %v6564 = vadd.f32 %v6493, %v6538
        %v6565 = vadd.f32 %v6494, %v6537
        %v6566 = vadd.f32 %v6495, %v6538
        %v6567 = vadd.f32 %v6496, %v6537
        %v6568 = vadd.f32 %v6497, %v6538
        %v6569 = vadd.f32 %v6498, %v6537
        %v6570 = vadd.f32 %v6499, %v6538
        %v6571 = vadd.f32 %v6500, %v6537
        %v6572 = vadd.f32 %v6501, %v6538
        %v6573 = vadd.f32 %v6502, %v6537
        %v6574 = vadd.f32 %v6503, %v6538
        %v6575 = vadd.f32 %v6504, %v6537
        %v6576 = vadd.f32 %v6505, %v6538
        %v6577 = vadd.f32 %v6506, %v6537
        %v6578 = vadd.f32 %v6507, %v6538
        %v6579 = vadd.f32 %v6508, %v6537
        %v6580 = vadd.f32 %v6509, %v6538
        %v6581 = vadd.f32 %v6510, %v6537
        %v6582 = vadd.f32 %v6511, %v6538
        %v6583 = vadd.f32 %v6512, %v6537
        %v6584 = vadd.f32 %v6513, %v6538
        %v6585 = vadd.f32 %v6514, %v6537
        %v6586 = vadd.f32 %v6515, %v6538
        %v6587 = vadd.f32 %v6516, %v6537
        %v6588 = vadd.f32 %v6517, %v6538
        %v6589 = vadd.f32 %v6518, %v6537
        %v6590 = vadd.f32 %v6519, %v6538
        %v6591 = vadd.f32 %v6520, %v6537
        %v6592 = vadd.f32 %v6521, %v6538
        %v6593 = vadd.f32 %v6522, %v6537
        %v6594 = vadd.f32 %v6523, %v6538
        %v6595 = vadd.f32 %v6524, %v6537
        %v6596 = vadd.f32 %v6525, %v6538
        %v6597 = vadd.f32 %v6526, %v6537
        %v6598 = vadd.f32 %v6527, %v6538
        %v6599 = vadd.f32 %v6528, %v6537
        %v6600 = vadd.f32 %v6529, %v6538
        %v6601 = vadd.f32 %v6530, %v6537
        %v6602 = vadd.f32 %v6531, %v6538
        %v6603 = vadd.f32 %v6532, %v6537
        %v6604 = vadd.f32 %v6533, %v6538
        %v6605 = vmax.f32 %v6541, 0.0
        %v6606 = vmax.f32 %v6542, 0.0
        %v6607 = vmax.f32 %v6543, 0.0
        %v6608 = vmax.f32 %v6544, 0.0
        %v6609 = vmax.f32 %v6545, 0.0
        %v6610 = vmax.f32 %v6546, 0.0
        %v6611 = vmax.f32 %v6547, 0.0
        %v6612 = vmax.f32 %v6548, 0.0
        %v6613 = vmax.f32 %v6549, 0.0
        %v6614 = vmax.f32 %v6550, 0.0
        %v6615 = vmax.f32 %v6551, 0.0
        %v6616 = vmax.f32 %v6552, 0.0
        %v6617 = vmax.f32 %v6553, 0.0
        %v6618 = vmax.f32 %v6554, 0.0
        %v6619 = vmax.f32 %v6555, 0.0
        %v6620 = vmax.f32 %v6556, 0.0
        %v6621 = vmax.f32 %v6557, 0.0
        %v6622 = vmax.f32 %v6558, 0.0
        %v6623 = vmax.f32 %v6559, 0.0
        %v6624 = vmax.f32 %v6560, 0.0
        %v6625 = vmax.f32 %v6561, 0.0
        %v6626 = vmax.f32 %v6562, 0.0
        %v6627 = vmax.f32 %v6563, 0.0
        %v6628 = vmax.f32 %v6564, 0.0
        %v6629 = vmax.f32 %v6565, 0.0
        %v6630 = vmax.f32 %v6566, 0.0
        %v6631 = vmax.f32 %v6567, 0.0
        %v6632 = vmax.f32 %v6568, 0.0
        %v6633 = vmax.f32 %v6569, 0.0
        %v6634 = vmax.f32 %v6570, 0.0
        %v6635 = vmax.f32 %v6571, 0.0
        %v6636 = vmax.f32 %v6572, 0.0
        %v6637 = vmax.f32 %v6573, 0.0
        %v6638 = vmax.f32 %v6574, 0.0
        %v6639 = vmax.f32 %v6575, 0.0
        %v6640 = vmax.f32 %v6576, 0.0
        %v6641 = vmax.f32 %v6577, 0.0
        %v6642 = vmax.f32 %v6578, 0.0
        %v6643 = vmax.f32 %v6579, 0.0
        %v6644 = vmax.f32 %v6580, 0.0
        %v6645 = vmax.f32 %v6581, 0.0
        %v6646 = vmax.f32 %v6582, 0.0
        %v6647 = vmax.f32 %v6583, 0.0
        %v6648 = vmax.f32 %v6584, 0.0
        %v6649 = vmax.f32 %v6585, 0.0
        %v6650 = vmax.f32 %v6586, 0.0
        %v6651 = vmax.f32 %v6587, 0.0
        %v6652 = vmax.f32 %v6588, 0.0
        %v6653 = vmax.f32 %v6589, 0.0
        %v6654 = vmax.f32 %v6590, 0.0
        %v6655 = vmax.f32 %v6591, 0.0
        %v6656 = vmax.f32 %v6592, 0.0
        %v6657 = vmax.f32 %v6593, 0.0
        %v6658 = vmax.f32 %v6594, 0.0
        %v6659 = vmax.f32 %v6595, 0.0
        %v6660 = vmax.f32 %v6596, 0.0
        %v6661 = vmax.f32 %v6597, 0.0
        %v6662 = vmax.f32 %v6598, 0.0
        %v6663 = vmax.f32 %v6599, 0.0
        %v6664 = vmax.f32 %v6600, 0.0
        %v6665 = vmax.f32 %v6601, 0.0
        %v6666 = vmax.f32 %v6602, 0.0
        %v6667 = vmax.f32 %v6603, 0.0
        %v6668 = vmax.f32 %v6604, 0.0
        %v6669 = vld [vmem:[#allocation3] sm:$0xff]
        %v6670 = vld [vmem:[#allocation3 + $0x8] sm:$0xff]
        %v6671 = vld [vmem:[#allocation3 + $0x10] sm:$0xff]
        %v6672 = vld [vmem:[#allocation3 + $0x18] sm:$0xff]
        %v6673 = vld [vmem:[#allocation3 + $0x20] sm:$0xff]
        %v6674 = vld [vmem:[#allocation3 + $0x28] sm:$0xff]
        %v6675 = vld [vmem:[#allocation3 + $0x30] sm:$0xff]
        %v6676 = vld [vmem:[#allocation3 + $0x38] sm:$0xff]
        %v6677 = vld [vmem:[#allocation3 + $0x40] sm:$0xff]
        %v6678 = vld [vmem:[#allocation3 + $0x48] sm:$0xff]
        %v6679 = vld [vmem:[#allocation3 + $0x50] sm:$0xff]
        %v6680 = vld [vmem:[#allocation3 + $0x58] sm:$0xff]
        %v6681 = vld [vmem:[#allocation3 + $0x60] sm:$0xff]
        %v6682 = vld [vmem:[#allocation3 + $0x68] sm:$0xff]
        %v6683 = vld [vmem:[#allocation3 + $0x70] sm:$0xff]
        %v6684 = vld [vmem:[#allocation3 + $0x78] sm:$0xff]
        %v6685 = vld [vmem:[#allocation3 + $0x80] sm:$0xff]
        %v6686 = vld [vmem:[#allocation3 + $0x88] sm:$0xff]
        %v6687 = vld [vmem:[#allocation3 + $0x90] sm:$0xff]
        %v6688 = vld [vmem:[#allocation3 + $0x98] sm:$0xff]
        %v6689 = vld [vmem:[#allocation3 + $0xa0] sm:$0xff]
        %v6690 = vld [vmem:[#allocation3 + $0xa8] sm:$0xff]
        %v6691 = vld [vmem:[#allocation3 + $0xb0] sm:$0xff]
        %v6692 = vld [vmem:[#allocation3 + $0xb8] sm:$0xff]
        %v6693 = vld [vmem:[#allocation3 + $0xc0] sm:$0xff]
        %v6694 = vld [vmem:[#allocation3 + $0xc8] sm:$0xff]
        %v6695 = vld [vmem:[#allocation3 + $0xd0] sm:$0xff]
        %v6696 = vld [vmem:[#allocation3 + $0xd8] sm:$0xff]
        %v6697 = vld [vmem:[#allocation3 + $0xe0] sm:$0xff]
        %v6698 = vld [vmem:[#allocation3 + $0xe8] sm:$0xff]
        %v6699 = vld [vmem:[#allocation3 + $0xf0] sm:$0xff]
        %v6700 = vld [vmem:[#allocation3 + $0xf8] sm:$0xff]
        %v6701 = vld [vmem:[#allocation3 + $0x100] sm:$0xff]
        %v6702 = vld [vmem:[#allocation3 + $0x108] sm:$0xff]
        %v6703 = vld [vmem:[#allocation3 + $0x110] sm:$0xff]
        %v6704 = vld [vmem:[#allocation3 + $0x118] sm:$0xff]
        %v6705 = vld [vmem:[#allocation3 + $0x120] sm:$0xff]
        %v6706 = vld [vmem:[#allocation3 + $0x128] sm:$0xff]
        %v6707 = vld [vmem:[#allocation3 + $0x130] sm:$0xff]
        %v6708 = vld [vmem:[#allocation3 + $0x138] sm:$0xff]
        %v6709 = vld [vmem:[#allocation3 + $0x140] sm:$0xff]
        %v6710 = vld [vmem:[#allocation3 + $0x148] sm:$0xff]
        %v6711 = vld [vmem:[#allocation3 + $0x150] sm:$0xff]
        %v6712 = vld [vmem:[#allocation3 + $0x158] sm:$0xff]
        %v6713 = vld [vmem:[#allocation3 + $0x160] sm:$0xff]
        %v6714 = vld [vmem:[#allocation3 + $0x168] sm:$0xff]
        %v6715 = vld [vmem:[#allocation3 + $0x170] sm:$0xff]
        %v6716 = vld [vmem:[#allocation3 + $0x178] sm:$0xff]
        %v6717 = vld [vmem:[#allocation3 + $0x180] sm:$0xff]
        %v6718 = vld [vmem:[#allocation3 + $0x188] sm:$0xff]
        %v6719 = vld [vmem:[#allocation3 + $0x190] sm:$0xff]
        %v6720 = vld [vmem:[#allocation3 + $0x198] sm:$0xff]
        %v6721 = vld [vmem:[#allocation3 + $0x1a0] sm:$0xff]
        %v6722 = vld [vmem:[#allocation3 + $0x1a8] sm:$0xff]
        %v6723 = vld [vmem:[#allocation3 + $0x1b0] sm:$0xff]
        %v6724 = vld [vmem:[#allocation3 + $0x1b8] sm:$0xff]
        %v6725 = vld [vmem:[#allocation3 + $0x1c0] sm:$0xff]
        %v6726 = vld [vmem:[#allocation3 + $0x1c8] sm:$0xff]
        %v6727 = vld [vmem:[#allocation3 + $0x1d0] sm:$0xff]
        %v6728 = vld [vmem:[#allocation3 + $0x1d8] sm:$0xff]
        %v6729 = vld [vmem:[#allocation3 + $0x1e0] sm:$0xff]
        %v6730 = vld [vmem:[#allocation3 + $0x1e8] sm:$0xff]
        %v6731 = vld [vmem:[#allocation3 + $0x1f0] sm:$0xff]
        %v6732 = vld [vmem:[#allocation3 + $0x1f8] sm:$0xff]
        %v6733 = vpack.c.bf16 %v6607, %v6605
        %v6734 = vpack.c.bf16 %v6608, %v6606
        %v6735 = vpack.c.bf16 %v6611, %v6609
        %v6736 = vpack.c.bf16 %v6612, %v6610
        %v6737 = vpack.c.bf16 %v6615, %v6613
        %v6738 = vpack.c.bf16 %v6616, %v6614
        %v6739 = vpack.c.bf16 %v6619, %v6617
        %v6740 = vpack.c.bf16 %v6620, %v6618
        %v6741 = vpack.c.bf16 %v6623, %v6621
        %v6742 = vpack.c.bf16 %v6624, %v6622
        %v6743 = vpack.c.bf16 %v6627, %v6625
        %v6744 = vpack.c.bf16 %v6628, %v6626
        %v6745 = vpack.c.bf16 %v6631, %v6629
        %v6746 = vpack.c.bf16 %v6632, %v6630
        %v6747 = vpack.c.bf16 %v6635, %v6633
        %v6748 = vpack.c.bf16 %v6636, %v6634
        %v6749 = vpack.c.bf16 %v6639, %v6637
        %v6750 = vpack.c.bf16 %v6640, %v6638
        %v6751 = vpack.c.bf16 %v6643, %v6641
        %v6752 = vpack.c.bf16 %v6644, %v6642
        %v6753 = vpack.c.bf16 %v6647, %v6645
        %v6754 = vpack.c.bf16 %v6648, %v6646
        %v6755 = vpack.c.bf16 %v6651, %v6649
        %v6756 = vpack.c.bf16 %v6652, %v6650
        %v6757 = vpack.c.bf16 %v6655, %v6653
        %v6758 = vpack.c.bf16 %v6656, %v6654
        %v6759 = vpack.c.bf16 %v6659, %v6657
        %v6760 = vpack.c.bf16 %v6660, %v6658
        %v6761 = vpack.c.bf16 %v6663, %v6661
        %v6762 = vpack.c.bf16 %v6664, %v6662
        %v6763 = vpack.c.bf16 %v6667, %v6665
        %v6764 = vpack.c.bf16 %v6668, %v6666
        %s6765 = scalar_lea.vmem [#allocation4], 768
        %v6766 = vld [vmem:[%s6765] sm:$0xff]
        %v6767 = vld [vmem:[%s6765 + $0x8] sm:$0xff]
        %v6768 = vld [vmem:[%s6765 + $0x10] sm:$0xff]
        %v6769 = vld [vmem:[%s6765 + $0x18] sm:$0xff]
        %v6770 = vld [vmem:[%s6765 + $0x20] sm:$0xff]
        %v6771 = vld [vmem:[%s6765 + $0x28] sm:$0xff]
        %v6772 = vld [vmem:[%s6765 + $0x30] sm:$0xff]
        %v6773 = vld [vmem:[%s6765 + $0x38] sm:$0xff]
        %v6774 = vld [vmem:[%s6765 + $0x40] sm:$0xff]
        %v6775 = vld [vmem:[%s6765 + $0x48] sm:$0xff]
        %v6776 = vld [vmem:[%s6765 + $0x50] sm:$0xff]
        %v6777 = vld [vmem:[%s6765 + $0x58] sm:$0xff]
        %v6778 = vld [vmem:[%s6765 + $0x60] sm:$0xff]
        %v6779 = vld [vmem:[%s6765 + $0x68] sm:$0xff]
        %v6780 = vld [vmem:[%s6765 + $0x70] sm:$0xff]
        %v6781 = vld [vmem:[%s6765 + $0x78] sm:$0xff]
        %v6782 = vld [vmem:[%s6765 + $0x80] sm:$0xff]
        %v6783 = vld [vmem:[%s6765 + $0x88] sm:$0xff]
        %v6784 = vld [vmem:[%s6765 + $0x90] sm:$0xff]
        %v6785 = vld [vmem:[%s6765 + $0x98] sm:$0xff]
        %v6786 = vld [vmem:[%s6765 + $0xa0] sm:$0xff]
        %v6787 = vld [vmem:[%s6765 + $0xa8] sm:$0xff]
        %v6788 = vld [vmem:[%s6765 + $0xb0] sm:$0xff]
        %v6789 = vld [vmem:[%s6765 + $0xb8] sm:$0xff]
        %v6790 = vld [vmem:[%s6765 + $0xc0] sm:$0xff]
        %v6791 = vld [vmem:[%s6765 + $0xc8] sm:$0xff]
        %v6792 = vld [vmem:[%s6765 + $0xd0] sm:$0xff]
        %v6793 = vld [vmem:[%s6765 + $0xd8] sm:$0xff]
        %v6794 = vld [vmem:[%s6765 + $0xe0] sm:$0xff]
        %v6795 = vld [vmem:[%s6765 + $0xe8] sm:$0xff]
        %v6796 = vld [vmem:[%s6765 + $0xf0] sm:$0xff]
        %v6797 = vld [vmem:[%s6765 + $0xf8] sm:$0xff]
        %v6830 = vunpack.c.l.b16 %v6766
        %v6831 = vunpack.c.h.b16 %v6766
        %v6832 = vunpack.c.l.b16 %v6767
        %v6833 = vunpack.c.h.b16 %v6767
        %v6834 = vunpack.c.l.b16 %v6768
        %v6835 = vunpack.c.h.b16 %v6768
        %v6836 = vunpack.c.l.b16 %v6769
        %v6837 = vunpack.c.h.b16 %v6769
        %v6838 = vunpack.c.l.b16 %v6770
        %v6839 = vunpack.c.h.b16 %v6770
        %v6840 = vunpack.c.l.b16 %v6771
        %v6841 = vunpack.c.h.b16 %v6771
        %v6842 = vunpack.c.l.b16 %v6772
        %v6843 = vunpack.c.h.b16 %v6772
        %v6844 = vunpack.c.l.b16 %v6773
        %v6845 = vunpack.c.h.b16 %v6773
        %v6846 = vunpack.c.l.b16 %v6774
        %v6847 = vunpack.c.h.b16 %v6774
        %v6848 = vunpack.c.l.b16 %v6775
        %v6849 = vunpack.c.h.b16 %v6775
        %v6850 = vunpack.c.l.b16 %v6776
        %v6851 = vunpack.c.h.b16 %v6776
        %v6852 = vunpack.c.l.b16 %v6777
        %v6853 = vunpack.c.h.b16 %v6777
        %v6854 = vunpack.c.l.b16 %v6778
        %v6855 = vunpack.c.h.b16 %v6778
        %v6856 = vunpack.c.l.b16 %v6779
        %v6857 = vunpack.c.h.b16 %v6779
        %v6858 = vunpack.c.l.b16 %v6780
        %v6859 = vunpack.c.h.b16 %v6780
        %v6860 = vunpack.c.l.b16 %v6781
        %v6861 = vunpack.c.h.b16 %v6781
        %v6862 = vunpack.c.l.b16 %v6782
        %v6863 = vunpack.c.h.b16 %v6782
        %v6864 = vunpack.c.l.b16 %v6783
        %v6865 = vunpack.c.h.b16 %v6783
        %v6866 = vunpack.c.l.b16 %v6784
        %v6867 = vunpack.c.h.b16 %v6784
        %v6868 = vunpack.c.l.b16 %v6785
        %v6869 = vunpack.c.h.b16 %v6785
        %v6870 = vunpack.c.l.b16 %v6786
        %v6871 = vunpack.c.h.b16 %v6786
        %v6872 = vunpack.c.l.b16 %v6787
        %v6873 = vunpack.c.h.b16 %v6787
        %v6874 = vunpack.c.l.b16 %v6788
        %v6875 = vunpack.c.h.b16 %v6788
        %v6876 = vunpack.c.l.b16 %v6789
        %v6877 = vunpack.c.h.b16 %v6789
        %v6878 = vunpack.c.l.b16 %v6790
        %v6879 = vunpack.c.h.b16 %v6790
        %v6880 = vunpack.c.l.b16 %v6791
        %v6881 = vunpack.c.h.b16 %v6791
        %v6882 = vunpack.c.l.b16 %v6792
        %v6883 = vunpack.c.h.b16 %v6792
        %v6884 = vunpack.c.l.b16 %v6793
        %v6885 = vunpack.c.h.b16 %v6793
        %v6886 = vunpack.c.l.b16 %v6794
        %v6887 = vunpack.c.h.b16 %v6794
        %v6888 = vunpack.c.l.b16 %v6795
        %v6889 = vunpack.c.h.b16 %v6795
        %v6890 = vunpack.c.l.b16 %v6796
        %v6891 = vunpack.c.h.b16 %v6796
        %v6892 = vunpack.c.l.b16 %v6797
        %v6893 = vunpack.c.h.b16 %v6797
        %v6894 = vpack.c.b16 %v6832, %v6830
        %v6895 = vpack.c.b16 %v6833, %v6831
        %v6896 = vpack.c.b16 %v6836, %v6834
        %v6897 = vpack.c.b16 %v6837, %v6835
        %v6898 = vpack.c.b16 %v6840, %v6838
        %v6899 = vpack.c.b16 %v6841, %v6839
        %v6900 = vpack.c.b16 %v6844, %v6842
        %v6901 = vpack.c.b16 %v6845, %v6843
        %v6902 = vpack.c.b16 %v6848, %v6846
        %v6903 = vpack.c.b16 %v6849, %v6847
        %v6904 = vpack.c.b16 %v6852, %v6850
        %v6905 = vpack.c.b16 %v6853, %v6851
        %v6906 = vpack.c.b16 %v6856, %v6854
        %v6907 = vpack.c.b16 %v6857, %v6855
        %v6908 = vpack.c.b16 %v6860, %v6858
        %v6909 = vpack.c.b16 %v6861, %v6859
        %v6910 = vpack.c.b16 %v6864, %v6862
        %v6911 = vpack.c.b16 %v6865, %v6863
        %v6912 = vpack.c.b16 %v6868, %v6866
        %v6913 = vpack.c.b16 %v6869, %v6867
        %v6914 = vpack.c.b16 %v6872, %v6870
        %v6915 = vpack.c.b16 %v6873, %v6871
        %v6916 = vpack.c.b16 %v6876, %v6874
        %v6917 = vpack.c.b16 %v6877, %v6875
        %v6918 = vpack.c.b16 %v6880, %v6878
        %v6919 = vpack.c.b16 %v6881, %v6879
        %v6920 = vpack.c.b16 %v6884, %v6882
        %v6921 = vpack.c.b16 %v6885, %v6883
        %v6922 = vpack.c.b16 %v6888, %v6886
        %v6923 = vpack.c.b16 %v6889, %v6887
        %v6924 = vpack.c.b16 %v6892, %v6890
        %v6925 = vpack.c.b16 %v6893, %v6891
        %6958 = vmatpush.bf16.msra.mxu0 %v6908
        %6959 = vmatpush.bf16.msra.mxu0 %v6906
        %6960 = vmatpush.bf16.msra.mxu0 %v6904
        %6961 = vmatpush.bf16.msra.mxu0 %v6902
        %6962 = vmatpush.bf16.msra.mxu0 %v6900
        %6963 = vmatpush.bf16.msra.mxu0 %v6898
        %6964 = vmatpush.bf16.msra.mxu0 %v6896
        %6965 = vmatpush.bf16.msra.mxu0 %v6894
        %6966 = vmatmul.bf16.gmra.mxu0 %v6733
        %v6967 = vpop.f32.mrf.mxu0
        %v6968 = vadd.f32 0.0, %v6967
        %v6969 = vpop.f32.mrf.mxu0
        %v6970 = vadd.f32 0.0, %v6969
        %6971 = vmatmul.bf16.gmra.mxu0 %v6735
        %v6972 = vpop.f32.mrf.mxu0
        %v6973 = vadd.f32 0.0, %v6972
        %v6974 = vpop.f32.mrf.mxu0
        %v6975 = vadd.f32 0.0, %v6974
        %6976 = vmatmul.bf16.gmra.mxu0 %v6737
        %v6977 = vpop.f32.mrf.mxu0
        %v6978 = vadd.f32 0.0, %v6977
        %v6979 = vpop.f32.mrf.mxu0
        %v6980 = vadd.f32 0.0, %v6979
        %6981 = vmatmul.bf16.gmra.mxu0 %v6739
        %v6982 = vpop.f32.mrf.mxu0
        %v6983 = vadd.f32 0.0, %v6982
        %v6984 = vpop.f32.mrf.mxu0
        %v6985 = vadd.f32 0.0, %v6984
        %6986 = vmatmul.bf16.gmra.mxu0 %v6741
        %v6987 = vpop.f32.mrf.mxu0
        %v6988 = vadd.f32 0.0, %v6987
        %v6989 = vpop.f32.mrf.mxu0
        %v6990 = vadd.f32 0.0, %v6989
        %6991 = vmatmul.bf16.gmra.mxu0 %v6743
        %v6992 = vpop.f32.mrf.mxu0
        %v6993 = vadd.f32 0.0, %v6992
        %v6994 = vpop.f32.mrf.mxu0
        %v6995 = vadd.f32 0.0, %v6994
        %6996 = vmatmul.bf16.gmra.mxu0 %v6745
        %v6997 = vpop.f32.mrf.mxu0
        %v6998 = vadd.f32 0.0, %v6997
        %v6999 = vpop.f32.mrf.mxu0
        %v7000 = vadd.f32 0.0, %v6999
        %7001 = vmatmul.bf16.gmra.mxu0 %v6747
        %v7002 = vpop.f32.mrf.mxu0
        %v7003 = vadd.f32 0.0, %v7002
        %v7004 = vpop.f32.mrf.mxu0
        %v7005 = vadd.f32 0.0, %v7004
        %7006 = vmatmul.bf16.gmra.mxu0 %v6749
        %v7007 = vpop.f32.mrf.mxu0
        %v7008 = vadd.f32 0.0, %v7007
        %v7009 = vpop.f32.mrf.mxu0
        %v7010 = vadd.f32 0.0, %v7009
        %7011 = vmatmul.bf16.gmra.mxu0 %v6751
        %v7012 = vpop.f32.mrf.mxu0
        %v7013 = vadd.f32 0.0, %v7012
        %v7014 = vpop.f32.mrf.mxu0
        %v7015 = vadd.f32 0.0, %v7014
        %7016 = vmatmul.bf16.gmra.mxu0 %v6753
        %v7017 = vpop.f32.mrf.mxu0
        %v7018 = vadd.f32 0.0, %v7017
        %v7019 = vpop.f32.mrf.mxu0
        %v7020 = vadd.f32 0.0, %v7019
        %7021 = vmatmul.bf16.gmra.mxu0 %v6755
        %v7022 = vpop.f32.mrf.mxu0
        %v7023 = vadd.f32 0.0, %v7022
        %v7024 = vpop.f32.mrf.mxu0
        %v7025 = vadd.f32 0.0, %v7024
        %7026 = vmatmul.bf16.gmra.mxu0 %v6757
        %v7027 = vpop.f32.mrf.mxu0
        %v7028 = vadd.f32 0.0, %v7027
        %v7029 = vpop.f32.mrf.mxu0
        %v7030 = vadd.f32 0.0, %v7029
        %7031 = vmatmul.bf16.gmra.mxu0 %v6759
        %v7032 = vpop.f32.mrf.mxu0
        %v7033 = vadd.f32 0.0, %v7032
        %v7034 = vpop.f32.mrf.mxu0
        %v7035 = vadd.f32 0.0, %v7034
        %7036 = vmatmul.bf16.gmra.mxu0 %v6761
        %v7037 = vpop.f32.mrf.mxu0
        %v7038 = vadd.f32 0.0, %v7037
        %v7039 = vpop.f32.mrf.mxu0
        %v7040 = vadd.f32 0.0, %v7039
        %7041 = vmatmul.bf16.gmra.mxu0 %v6763
        %v7042 = vpop.f32.mrf.mxu0
        %v7043 = vadd.f32 0.0, %v7042
        %v7044 = vpop.f32.mrf.mxu0
        %v7045 = vadd.f32 0.0, %v7044
        %7046 = vdwg.mxu0
        %7047 = vmatpush.bf16.msra.mxu0 %v6924
        %7048 = vmatpush.bf16.msra.mxu0 %v6922
        %7049 = vmatpush.bf16.msra.mxu0 %v6920
        %7050 = vmatpush.bf16.msra.mxu0 %v6918
        %7051 = vmatpush.bf16.msra.mxu0 %v6916
        %7052 = vmatpush.bf16.msra.mxu0 %v6914
        %7053 = vmatpush.bf16.msra.mxu0 %v6912
        %7054 = vmatpush.bf16.msra.mxu0 %v6910
        %7055 = vmatmul.bf16.gmra.mxu0 %v6734
        %v7056 = vpop.f32.mrf.mxu0
        %v7057 = vadd.f32 %v6968, %v7056
        %v7058 = vpop.f32.mrf.mxu0
        %v7059 = vadd.f32 %v6970, %v7058
        %7060 = vmatmul.bf16.gmra.mxu0 %v6736
        %v7061 = vpop.f32.mrf.mxu0
        %v7062 = vadd.f32 %v6973, %v7061
        %v7063 = vpop.f32.mrf.mxu0
        %v7064 = vadd.f32 %v6975, %v7063
        %7065 = vmatmul.bf16.gmra.mxu0 %v6738
        %v7066 = vpop.f32.mrf.mxu0
        %v7067 = vadd.f32 %v6978, %v7066
        %v7068 = vpop.f32.mrf.mxu0
        %v7069 = vadd.f32 %v6980, %v7068
        %7070 = vmatmul.bf16.gmra.mxu0 %v6740
        %v7071 = vpop.f32.mrf.mxu0
        %v7072 = vadd.f32 %v6983, %v7071
        %v7073 = vpop.f32.mrf.mxu0
        %v7074 = vadd.f32 %v6985, %v7073
        %7075 = vmatmul.bf16.gmra.mxu0 %v6742
        %v7076 = vpop.f32.mrf.mxu0
        %v7077 = vadd.f32 %v6988, %v7076
        %v7078 = vpop.f32.mrf.mxu0
        %v7079 = vadd.f32 %v6990, %v7078
        %7080 = vmatmul.bf16.gmra.mxu0 %v6744
        %v7081 = vpop.f32.mrf.mxu0
        %v7082 = vadd.f32 %v6993, %v7081
        %v7083 = vpop.f32.mrf.mxu0
        %v7084 = vadd.f32 %v6995, %v7083
        %7085 = vmatmul.bf16.gmra.mxu0 %v6746
        %v7086 = vpop.f32.mrf.mxu0
        %v7087 = vadd.f32 %v6998, %v7086
        %v7088 = vpop.f32.mrf.mxu0
        %v7089 = vadd.f32 %v7000, %v7088
        %7090 = vmatmul.bf16.gmra.mxu0 %v6748
        %v7091 = vpop.f32.mrf.mxu0
        %v7092 = vadd.f32 %v7003, %v7091
        %v7093 = vpop.f32.mrf.mxu0
        %v7094 = vadd.f32 %v7005, %v7093
        %7095 = vmatmul.bf16.gmra.mxu0 %v6750
        %v7096 = vpop.f32.mrf.mxu0
        %v7097 = vadd.f32 %v7008, %v7096
        %v7098 = vpop.f32.mrf.mxu0
        %v7099 = vadd.f32 %v7010, %v7098
        %7100 = vmatmul.bf16.gmra.mxu0 %v6752
        %v7101 = vpop.f32.mrf.mxu0
        %v7102 = vadd.f32 %v7013, %v7101
        %v7103 = vpop.f32.mrf.mxu0
        %v7104 = vadd.f32 %v7015, %v7103
        %7105 = vmatmul.bf16.gmra.mxu0 %v6754
        %v7106 = vpop.f32.mrf.mxu0
        %v7107 = vadd.f32 %v7018, %v7106
        %v7108 = vpop.f32.mrf.mxu0
        %v7109 = vadd.f32 %v7020, %v7108
        %7110 = vmatmul.bf16.gmra.mxu0 %v6756
        %v7111 = vpop.f32.mrf.mxu0
        %v7112 = vadd.f32 %v7023, %v7111
        %v7113 = vpop.f32.mrf.mxu0
        %v7114 = vadd.f32 %v7025, %v7113
        %7115 = vmatmul.bf16.gmra.mxu0 %v6758
        %v7116 = vpop.f32.mrf.mxu0
        %v7117 = vadd.f32 %v7028, %v7116
        %v7118 = vpop.f32.mrf.mxu0
        %v7119 = vadd.f32 %v7030, %v7118
        %7120 = vmatmul.bf16.gmra.mxu0 %v6760
        %v7121 = vpop.f32.mrf.mxu0
        %v7122 = vadd.f32 %v7033, %v7121
        %v7123 = vpop.f32.mrf.mxu0
        %v7124 = vadd.f32 %v7035, %v7123
        %7125 = vmatmul.bf16.gmra.mxu0 %v6762
        %v7126 = vpop.f32.mrf.mxu0
        %v7127 = vadd.f32 %v7038, %v7126
        %v7128 = vpop.f32.mrf.mxu0
        %v7129 = vadd.f32 %v7040, %v7128
        %7130 = vmatmul.bf16.gmra.mxu0 %v6764
        %v7131 = vpop.f32.mrf.mxu0
        %v7132 = vadd.f32 %v7043, %v7131
        %v7133 = vpop.f32.mrf.mxu0
        %v7134 = vadd.f32 %v7045, %v7133
        %7135 = vdwg.mxu0
        %7136 = vmatpush.bf16.msra.mxu0 %v6909
        %7137 = vmatpush.bf16.msra.mxu0 %v6907
        %7138 = vmatpush.bf16.msra.mxu0 %v6905
        %7139 = vmatpush.bf16.msra.mxu0 %v6903
        %7140 = vmatpush.bf16.msra.mxu0 %v6901
        %7141 = vmatpush.bf16.msra.mxu0 %v6899
        %7142 = vmatpush.bf16.msra.mxu0 %v6897
        %7143 = vmatpush.bf16.msra.mxu0 %v6895
        %7144 = vmatmul.bf16.gmra.mxu0 %v6733
        %v7145 = vpop.f32.mrf.mxu0
        %v7146 = vadd.f32 0.0, %v7145
        %v7147 = vpop.f32.mrf.mxu0
        %v7148 = vadd.f32 0.0, %v7147
        %7149 = vmatmul.bf16.gmra.mxu0 %v6735
        %v7150 = vpop.f32.mrf.mxu0
        %v7151 = vadd.f32 0.0, %v7150
        %v7152 = vpop.f32.mrf.mxu0
        %v7153 = vadd.f32 0.0, %v7152
        %7154 = vmatmul.bf16.gmra.mxu0 %v6737
        %v7155 = vpop.f32.mrf.mxu0
        %v7156 = vadd.f32 0.0, %v7155
        %v7157 = vpop.f32.mrf.mxu0
        %v7158 = vadd.f32 0.0, %v7157
        %7159 = vmatmul.bf16.gmra.mxu0 %v6739
        %v7160 = vpop.f32.mrf.mxu0
        %v7161 = vadd.f32 0.0, %v7160
        %v7162 = vpop.f32.mrf.mxu0
        %v7163 = vadd.f32 0.0, %v7162
        %7164 = vmatmul.bf16.gmra.mxu0 %v6741
        %v7165 = vpop.f32.mrf.mxu0
        %v7166 = vadd.f32 0.0, %v7165
        %v7167 = vpop.f32.mrf.mxu0
        %v7168 = vadd.f32 0.0, %v7167
        %7169 = vmatmul.bf16.gmra.mxu0 %v6743
        %v7170 = vpop.f32.mrf.mxu0
        %v7171 = vadd.f32 0.0, %v7170
        %v7172 = vpop.f32.mrf.mxu0
        %v7173 = vadd.f32 0.0, %v7172
        %7174 = vmatmul.bf16.gmra.mxu0 %v6745
        %v7175 = vpop.f32.mrf.mxu0
        %v7176 = vadd.f32 0.0, %v7175
        %v7177 = vpop.f32.mrf.mxu0
        %v7178 = vadd.f32 0.0, %v7177
        %7179 = vmatmul.bf16.gmra.mxu0 %v6747
        %v7180 = vpop.f32.mrf.mxu0
        %v7181 = vadd.f32 0.0, %v7180
        %v7182 = vpop.f32.mrf.mxu0
        %v7183 = vadd.f32 0.0, %v7182
        %7184 = vmatmul.bf16.gmra.mxu0 %v6749
        %v7185 = vpop.f32.mrf.mxu0
        %v7186 = vadd.f32 0.0, %v7185
        %v7187 = vpop.f32.mrf.mxu0
        %v7188 = vadd.f32 0.0, %v7187
        %7189 = vmatmul.bf16.gmra.mxu0 %v6751
        %v7190 = vpop.f32.mrf.mxu0
        %v7191 = vadd.f32 0.0, %v7190
        %v7192 = vpop.f32.mrf.mxu0
        %v7193 = vadd.f32 0.0, %v7192
        %7194 = vmatmul.bf16.gmra.mxu0 %v6753
        %v7195 = vpop.f32.mrf.mxu0
        %v7196 = vadd.f32 0.0, %v7195
        %v7197 = vpop.f32.mrf.mxu0
        %v7198 = vadd.f32 0.0, %v7197
        %7199 = vmatmul.bf16.gmra.mxu0 %v6755
        %v7200 = vpop.f32.mrf.mxu0
        %v7201 = vadd.f32 0.0, %v7200
        %v7202 = vpop.f32.mrf.mxu0
        %v7203 = vadd.f32 0.0, %v7202
        %7204 = vmatmul.bf16.gmra.mxu0 %v6757
        %v7205 = vpop.f32.mrf.mxu0
        %v7206 = vadd.f32 0.0, %v7205
        %v7207 = vpop.f32.mrf.mxu0
        %v7208 = vadd.f32 0.0, %v7207
        %7209 = vmatmul.bf16.gmra.mxu0 %v6759
        %v7210 = vpop.f32.mrf.mxu0
        %v7211 = vadd.f32 0.0, %v7210
        %v7212 = vpop.f32.mrf.mxu0
        %v7213 = vadd.f32 0.0, %v7212
        %7214 = vmatmul.bf16.gmra.mxu0 %v6761
        %v7215 = vpop.f32.mrf.mxu0
        %v7216 = vadd.f32 0.0, %v7215
        %v7217 = vpop.f32.mrf.mxu0
        %v7218 = vadd.f32 0.0, %v7217
        %7219 = vmatmul.bf16.gmra.mxu0 %v6763
        %v7220 = vpop.f32.mrf.mxu0
        %v7221 = vadd.f32 0.0, %v7220
        %v7222 = vpop.f32.mrf.mxu0
        %v7223 = vadd.f32 0.0, %v7222
        %7224 = vdwg.mxu0
        %7225 = vmatpush.bf16.msra.mxu0 %v6925
        %7226 = vmatpush.bf16.msra.mxu0 %v6923
        %7227 = vmatpush.bf16.msra.mxu0 %v6921
        %7228 = vmatpush.bf16.msra.mxu0 %v6919
        %7229 = vmatpush.bf16.msra.mxu0 %v6917
        %7230 = vmatpush.bf16.msra.mxu0 %v6915
        %7231 = vmatpush.bf16.msra.mxu0 %v6913
        %7232 = vmatpush.bf16.msra.mxu0 %v6911
        %7233 = vmatmul.bf16.gmra.mxu0 %v6734
        %v7234 = vpop.f32.mrf.mxu0
        %v7235 = vadd.f32 %v7146, %v7234
        %v7236 = vpop.f32.mrf.mxu0
        %v7237 = vadd.f32 %v7148, %v7236
        %7238 = vmatmul.bf16.gmra.mxu0 %v6736
        %v7239 = vpop.f32.mrf.mxu0
        %v7240 = vadd.f32 %v7151, %v7239
        %v7241 = vpop.f32.mrf.mxu0
        %v7242 = vadd.f32 %v7153, %v7241
        %7243 = vmatmul.bf16.gmra.mxu0 %v6738
        %v7244 = vpop.f32.mrf.mxu0
        %v7245 = vadd.f32 %v7156, %v7244
        %v7246 = vpop.f32.mrf.mxu0
        %v7247 = vadd.f32 %v7158, %v7246
        %7248 = vmatmul.bf16.gmra.mxu0 %v6740
        %v7249 = vpop.f32.mrf.mxu0
        %v7250 = vadd.f32 %v7161, %v7249
        %v7251 = vpop.f32.mrf.mxu0
        %v7252 = vadd.f32 %v7163, %v7251
        %7253 = vmatmul.bf16.gmra.mxu0 %v6742
        %v7254 = vpop.f32.mrf.mxu0
        %v7255 = vadd.f32 %v7166, %v7254
        %v7256 = vpop.f32.mrf.mxu0
        %v7257 = vadd.f32 %v7168, %v7256
        %7258 = vmatmul.bf16.gmra.mxu0 %v6744
        %v7259 = vpop.f32.mrf.mxu0
        %v7260 = vadd.f32 %v7171, %v7259
        %v7261 = vpop.f32.mrf.mxu0
        %v7262 = vadd.f32 %v7173, %v7261
        %7263 = vmatmul.bf16.gmra.mxu0 %v6746
        %v7264 = vpop.f32.mrf.mxu0
        %v7265 = vadd.f32 %v7176, %v7264
        %v7266 = vpop.f32.mrf.mxu0
        %v7267 = vadd.f32 %v7178, %v7266
        %7268 = vmatmul.bf16.gmra.mxu0 %v6748
        %v7269 = vpop.f32.mrf.mxu0
        %v7270 = vadd.f32 %v7181, %v7269
        %v7271 = vpop.f32.mrf.mxu0
        %v7272 = vadd.f32 %v7183, %v7271
        %7273 = vmatmul.bf16.gmra.mxu0 %v6750
        %v7274 = vpop.f32.mrf.mxu0
        %v7275 = vadd.f32 %v7186, %v7274
        %v7276 = vpop.f32.mrf.mxu0
        %v7277 = vadd.f32 %v7188, %v7276
        %7278 = vmatmul.bf16.gmra.mxu0 %v6752
        %v7279 = vpop.f32.mrf.mxu0
        %v7280 = vadd.f32 %v7191, %v7279
        %v7281 = vpop.f32.mrf.mxu0
        %v7282 = vadd.f32 %v7193, %v7281
        %7283 = vmatmul.bf16.gmra.mxu0 %v6754
        %v7284 = vpop.f32.mrf.mxu0
        %v7285 = vadd.f32 %v7196, %v7284
        %v7286 = vpop.f32.mrf.mxu0
        %v7287 = vadd.f32 %v7198, %v7286
        %7288 = vmatmul.bf16.gmra.mxu0 %v6756
        %v7289 = vpop.f32.mrf.mxu0
        %v7290 = vadd.f32 %v7201, %v7289
        %v7291 = vpop.f32.mrf.mxu0
        %v7292 = vadd.f32 %v7203, %v7291
        %7293 = vmatmul.bf16.gmra.mxu0 %v6758
        %v7294 = vpop.f32.mrf.mxu0
        %v7295 = vadd.f32 %v7206, %v7294
        %v7296 = vpop.f32.mrf.mxu0
        %v7297 = vadd.f32 %v7208, %v7296
        %7298 = vmatmul.bf16.gmra.mxu0 %v6760
        %v7299 = vpop.f32.mrf.mxu0
        %v7300 = vadd.f32 %v7211, %v7299
        %v7301 = vpop.f32.mrf.mxu0
        %v7302 = vadd.f32 %v7213, %v7301
        %7303 = vmatmul.bf16.gmra.mxu0 %v6762
        %v7304 = vpop.f32.mrf.mxu0
        %v7305 = vadd.f32 %v7216, %v7304
        %v7306 = vpop.f32.mrf.mxu0
        %v7307 = vadd.f32 %v7218, %v7306
        %7308 = vmatmul.bf16.gmra.mxu0 %v6764
        %v7309 = vpop.f32.mrf.mxu0
        %v7310 = vadd.f32 %v7221, %v7309
        %v7311 = vpop.f32.mrf.mxu0
        %v7312 = vadd.f32 %v7223, %v7311
        %7313 = vdwg.mxu0
        %v7314 = vadd.f32 %v6669, %v7057
        %v7315 = vadd.f32 %v6670, %v7235
        %v7316 = vadd.f32 %v6671, %v7059
        %v7317 = vadd.f32 %v6672, %v7237
        %v7318 = vadd.f32 %v6673, %v7062
        %v7319 = vadd.f32 %v6674, %v7240
        %v7320 = vadd.f32 %v6675, %v7064
        %v7321 = vadd.f32 %v6676, %v7242
        %v7322 = vadd.f32 %v6677, %v7067
        %v7323 = vadd.f32 %v6678, %v7245
        %v7324 = vadd.f32 %v6679, %v7069
        %v7325 = vadd.f32 %v6680, %v7247
        %v7326 = vadd.f32 %v6681, %v7072
        %v7327 = vadd.f32 %v6682, %v7250
        %v7328 = vadd.f32 %v6683, %v7074
        %v7329 = vadd.f32 %v6684, %v7252
        %v7330 = vadd.f32 %v6685, %v7077
        %v7331 = vadd.f32 %v6686, %v7255
        %v7332 = vadd.f32 %v6687, %v7079
        %v7333 = vadd.f32 %v6688, %v7257
        %v7334 = vadd.f32 %v6689, %v7082
        %v7335 = vadd.f32 %v6690, %v7260
        %v7336 = vadd.f32 %v6691, %v7084
        %v7337 = vadd.f32 %v6692, %v7262
        %v7338 = vadd.f32 %v6693, %v7087
        %v7339 = vadd.f32 %v6694, %v7265
        %v7340 = vadd.f32 %v6695, %v7089
        %v7341 = vadd.f32 %v6696, %v7267
        %v7342 = vadd.f32 %v6697, %v7092
        %v7343 = vadd.f32 %v6698, %v7270
        %v7344 = vadd.f32 %v6699, %v7094
        %v7345 = vadd.f32 %v6700, %v7272
        %v7346 = vadd.f32 %v6701, %v7097
        %v7347 = vadd.f32 %v6702, %v7275
        %v7348 = vadd.f32 %v6703, %v7099
        %v7349 = vadd.f32 %v6704, %v7277
        %v7350 = vadd.f32 %v6705, %v7102
        %v7351 = vadd.f32 %v6706, %v7280
        %v7352 = vadd.f32 %v6707, %v7104
        %v7353 = vadd.f32 %v6708, %v7282
        %v7354 = vadd.f32 %v6709, %v7107
        %v7355 = vadd.f32 %v6710, %v7285
        %v7356 = vadd.f32 %v6711, %v7109
        %v7357 = vadd.f32 %v6712, %v7287
        %v7358 = vadd.f32 %v6713, %v7112
        %v7359 = vadd.f32 %v6714, %v7290
        %v7360 = vadd.f32 %v6715, %v7114
        %v7361 = vadd.f32 %v6716, %v7292
        %v7362 = vadd.f32 %v6717, %v7117
        %v7363 = vadd.f32 %v6718, %v7295
        %v7364 = vadd.f32 %v6719, %v7119
        %v7365 = vadd.f32 %v6720, %v7297
        %v7366 = vadd.f32 %v6721, %v7122
        %v7367 = vadd.f32 %v6722, %v7300
        %v7368 = vadd.f32 %v6723, %v7124
        %v7369 = vadd.f32 %v6724, %v7302
        %v7370 = vadd.f32 %v6725, %v7127
        %v7371 = vadd.f32 %v6726, %v7305
        %v7372 = vadd.f32 %v6727, %v7129
        %v7373 = vadd.f32 %v6728, %v7307
        %v7374 = vadd.f32 %v6729, %v7132
        %v7375 = vadd.f32 %v6730, %v7310
        %v7376 = vadd.f32 %v6731, %v7134
        %v7377 = vadd.f32 %v6732, %v7312
        %7378 = vst [vmem:[#allocation3] sm:$0xff] %v7314
        %7379 = vst [vmem:[#allocation3 + $0x8] sm:$0xff] %v7315
        %7380 = vst [vmem:[#allocation3 + $0x10] sm:$0xff] %v7316
        %7381 = vst [vmem:[#allocation3 + $0x18] sm:$0xff] %v7317
        %7382 = vst [vmem:[#allocation3 + $0x20] sm:$0xff] %v7318
        %7383 = vst [vmem:[#allocation3 + $0x28] sm:$0xff] %v7319
        %7384 = vst [vmem:[#allocation3 + $0x30] sm:$0xff] %v7320
        %7385 = vst [vmem:[#allocation3 + $0x38] sm:$0xff] %v7321
        %7386 = vst [vmem:[#allocation3 + $0x40] sm:$0xff] %v7322
        %7387 = vst [vmem:[#allocation3 + $0x48] sm:$0xff] %v7323
        %7388 = vst [vmem:[#allocation3 + $0x50] sm:$0xff] %v7324
        %7389 = vst [vmem:[#allocation3 + $0x58] sm:$0xff] %v7325
        %7390 = vst [vmem:[#allocation3 + $0x60] sm:$0xff] %v7326
        %7391 = vst [vmem:[#allocation3 + $0x68] sm:$0xff] %v7327
        %7392 = vst [vmem:[#allocation3 + $0x70] sm:$0xff] %v7328
        %7393 = vst [vmem:[#allocation3 + $0x78] sm:$0xff] %v7329
        %7394 = vst [vmem:[#allocation3 + $0x80] sm:$0xff] %v7330
        %7395 = vst [vmem:[#allocation3 + $0x88] sm:$0xff] %v7331
        %7396 = vst [vmem:[#allocation3 + $0x90] sm:$0xff] %v7332
        %7397 = vst [vmem:[#allocation3 + $0x98] sm:$0xff] %v7333
        %7398 = vst [vmem:[#allocation3 + $0xa0] sm:$0xff] %v7334
        %7399 = vst [vmem:[#allocation3 + $0xa8] sm:$0xff] %v7335
        %7400 = vst [vmem:[#allocation3 + $0xb0] sm:$0xff] %v7336
        %7401 = vst [vmem:[#allocation3 + $0xb8] sm:$0xff] %v7337
        %7402 = vst [vmem:[#allocation3 + $0xc0] sm:$0xff] %v7338
        %7403 = vst [vmem:[#allocation3 + $0xc8] sm:$0xff] %v7339
        %7404 = vst [vmem:[#allocation3 + $0xd0] sm:$0xff] %v7340
        %7405 = vst [vmem:[#allocation3 + $0xd8] sm:$0xff] %v7341
        %7406 = vst [vmem:[#allocation3 + $0xe0] sm:$0xff] %v7342
        %7407 = vst [vmem:[#allocation3 + $0xe8] sm:$0xff] %v7343
        %7408 = vst [vmem:[#allocation3 + $0xf0] sm:$0xff] %v7344
        %7409 = vst [vmem:[#allocation3 + $0xf8] sm:$0xff] %v7345
        %7410 = vst [vmem:[#allocation3 + $0x100] sm:$0xff] %v7346
        %7411 = vst [vmem:[#allocation3 + $0x108] sm:$0xff] %v7347
        %7412 = vst [vmem:[#allocation3 + $0x110] sm:$0xff] %v7348
        %7413 = vst [vmem:[#allocation3 + $0x118] sm:$0xff] %v7349
        %7414 = vst [vmem:[#allocation3 + $0x120] sm:$0xff] %v7350
        %7415 = vst [vmem:[#allocation3 + $0x128] sm:$0xff] %v7351
        %7416 = vst [vmem:[#allocation3 + $0x130] sm:$0xff] %v7352
        %7417 = vst [vmem:[#allocation3 + $0x138] sm:$0xff] %v7353
        %7418 = vst [vmem:[#allocation3 + $0x140] sm:$0xff] %v7354
        %7419 = vst [vmem:[#allocation3 + $0x148] sm:$0xff] %v7355
        %7420 = vst [vmem:[#allocation3 + $0x150] sm:$0xff] %v7356
        %7421 = vst [vmem:[#allocation3 + $0x158] sm:$0xff] %v7357
        %7422 = vst [vmem:[#allocation3 + $0x160] sm:$0xff] %v7358
        %7423 = vst [vmem:[#allocation3 + $0x168] sm:$0xff] %v7359
        %7424 = vst [vmem:[#allocation3 + $0x170] sm:$0xff] %v7360
        %7425 = vst [vmem:[#allocation3 + $0x178] sm:$0xff] %v7361
        %7426 = vst [vmem:[#allocation3 + $0x180] sm:$0xff] %v7362
        %7427 = vst [vmem:[#allocation3 + $0x188] sm:$0xff] %v7363
        %7428 = vst [vmem:[#allocation3 + $0x190] sm:$0xff] %v7364
        %7429 = vst [vmem:[#allocation3 + $0x198] sm:$0xff] %v7365
        %7430 = vst [vmem:[#allocation3 + $0x1a0] sm:$0xff] %v7366
        %7431 = vst [vmem:[#allocation3 + $0x1a8] sm:$0xff] %v7367
        %7432 = vst [vmem:[#allocation3 + $0x1b0] sm:$0xff] %v7368
        %7433 = vst [vmem:[#allocation3 + $0x1b8] sm:$0xff] %v7369
        %7434 = vst [vmem:[#allocation3 + $0x1c0] sm:$0xff] %v7370
        %7435 = vst [vmem:[#allocation3 + $0x1c8] sm:$0xff] %v7371
        %7436 = vst [vmem:[#allocation3 + $0x1d0] sm:$0xff] %v7372
        %7437 = vst [vmem:[#allocation3 + $0x1d8] sm:$0xff] %v7373
        %7438 = vst [vmem:[#allocation3 + $0x1e0] sm:$0xff] %v7374
        %7439 = vst [vmem:[#allocation3 + $0x1e8] sm:$0xff] %v7375
        %7440 = vst [vmem:[#allocation3 + $0x1f0] sm:$0xff] %v7376
        %7441 = vst [vmem:[#allocation3 + $0x1f8] sm:$0xff] %v7377
        %v7442 = vunpack.c.l.bf16 %v403
        %v7443 = vunpack.c.l.bf16 %v404
        %v7444 = vunpack.c.l.bf16 %v405
        %v7445 = vunpack.c.l.bf16 %v406
        %v7446 = vunpack.c.l.bf16 %v407
        %v7447 = vunpack.c.l.bf16 %v408
        %v7448 = vunpack.c.l.bf16 %v409
        %v7449 = vunpack.c.l.bf16 %v410
        %v7450 = vunpack.c.l.bf16 %v411
        %v7451 = vunpack.c.l.bf16 %v412
        %v7452 = vunpack.c.l.bf16 %v413
        %v7453 = vunpack.c.l.bf16 %v414
        %v7454 = vunpack.c.l.bf16 %v415
        %v7455 = vunpack.c.l.bf16 %v416
        %v7456 = vunpack.c.l.bf16 %v417
        %v7457 = vunpack.c.l.bf16 %v418
        %v7458 = vunpack.c.l.bf16 %v419
        %v7459 = vunpack.c.l.bf16 %v420
        %v7460 = vunpack.c.l.bf16 %v421
        %v7461 = vunpack.c.l.bf16 %v422
        %v7462 = vunpack.c.l.bf16 %v423
        %v7463 = vunpack.c.l.bf16 %v424
        %v7464 = vunpack.c.l.bf16 %v425
        %v7465 = vunpack.c.l.bf16 %v426
        %v7466 = vunpack.c.l.bf16 %v427
        %v7467 = vunpack.c.l.bf16 %v428
        %v7468 = vunpack.c.l.bf16 %v429
        %v7469 = vunpack.c.l.bf16 %v430
        %v7470 = vunpack.c.l.bf16 %v431
        %v7471 = vunpack.c.l.bf16 %v432
        %v7472 = vunpack.c.l.bf16 %v433
        %v7473 = vunpack.c.l.bf16 %v434
        %v7474 = vsel %vm521, %v7442, 0.0
        %v7475 = vsel %vm521, %v7443, 0.0
        %v7476 = vadd.f32 %v7474, %v7475
        %v7477 = vsel %vm521, %v7444, 0.0
        %v7478 = vadd.f32 %v7476, %v7477
        %v7479 = vsel %vm521, %v7445, 0.0
        %v7480 = vadd.f32 %v7478, %v7479
        %v7481 = vsel %vm521, %v7446, 0.0
        %v7482 = vadd.f32 %v7480, %v7481
        %v7483 = vsel %vm521, %v7447, 0.0
        %v7484 = vadd.f32 %v7482, %v7483
        %v7485 = vsel %vm521, %v7448, 0.0
        %v7486 = vadd.f32 %v7484, %v7485
        %v7487 = vsel %vm521, %v7449, 0.0
        %v7488 = vadd.f32 %v7486, %v7487
        %v7489 = vsel %vm521, %v7450, 0.0
        %v7490 = vadd.f32 %v7488, %v7489
        %v7491 = vsel %vm521, %v7451, 0.0
        %v7492 = vadd.f32 %v7490, %v7491
        %v7493 = vsel %vm521, %v7452, 0.0
        %v7494 = vadd.f32 %v7492, %v7493
        %v7495 = vsel %vm521, %v7453, 0.0
        %v7496 = vadd.f32 %v7494, %v7495
        %v7497 = vsel %vm521, %v7454, 0.0
        %v7498 = vadd.f32 %v7496, %v7497
        %v7499 = vsel %vm521, %v7455, 0.0
        %v7500 = vadd.f32 %v7498, %v7499
        %v7501 = vsel %vm521, %v7456, 0.0
        %v7502 = vadd.f32 %v7500, %v7501
        %v7503 = vsel %vm521, %v7457, 0.0
        %v7504 = vadd.f32 %v7502, %v7503
        %v7505 = vsel %vm521, %v7458, 0.0
        %v7506 = vadd.f32 %v7504, %v7505
        %v7507 = vsel %vm521, %v7459, 0.0
        %v7508 = vadd.f32 %v7506, %v7507
        %v7509 = vsel %vm521, %v7460, 0.0
        %v7510 = vadd.f32 %v7508, %v7509
        %v7511 = vsel %vm521, %v7461, 0.0
        %v7512 = vadd.f32 %v7510, %v7511
        %v7513 = vsel %vm521, %v7462, 0.0
        %v7514 = vadd.f32 %v7512, %v7513
        %v7515 = vsel %vm521, %v7463, 0.0
        %v7516 = vadd.f32 %v7514, %v7515
        %v7517 = vsel %vm521, %v7464, 0.0
        %v7518 = vadd.f32 %v7516, %v7517
        %v7519 = vsel %vm521, %v7465, 0.0
        %v7520 = vadd.f32 %v7518, %v7519
        %v7521 = vsel %vm521, %v7466, 0.0
        %v7522 = vadd.f32 %v7520, %v7521
        %v7523 = vsel %vm521, %v7467, 0.0
        %v7524 = vadd.f32 %v7522, %v7523
        %v7525 = vsel %vm521, %v7468, 0.0
        %v7526 = vadd.f32 %v7524, %v7525
        %v7527 = vsel %vm521, %v7469, 0.0
        %v7528 = vadd.f32 %v7526, %v7527
        %v7529 = vsel %vm521, %v7470, 0.0
        %v7530 = vadd.f32 %v7528, %v7529
        %v7531 = vsel %vm521, %v7471, 0.0
        %v7532 = vadd.f32 %v7530, %v7531
        %v7533 = vsel %vm521, %v7472, 0.0
        %v7534 = vadd.f32 %v7532, %v7533
        %v7535 = vsel %vm521, %v7473, 0.0
        %v7536 = vadd.f32 %v7534, %v7535
        %v7537 = vrot.slane %v7536, 4
        %v7538 = vadd.f32 %v7536, %v7537
        %v7539 = vrot.slane %v7538, 2
        %v7540 = vadd.f32 %v7538, %v7539
        %v7541 = vrot.slane %v7540, 1
        %v7542 = vadd.f32 %v7540, %v7541
        %v7543 = vmul.f32 %v7542, 0.00390625
        %v7544 = vpack.c.bf16 %v7543, %v7543
        %v7545 = vld [vmem:[%s5] sm:$0xff]
        %v7547 = vunpack.c.l.b16 %v7545
        %v7548 = vunpack.c.h.b16 %v7545
        %v7549 = vpack.c.b16 %v7547, %v7547
        %v7550 = vpack.c.b16 %v7548, %v7548
        %v7552 = vsel %vm521, %v7544, 0
        %v7555 = vsel %vm570, %v7549, 0
        %v7558 = vsel %vm570, %v7550, 0
        %7560 = vmatpush.bf16.msra.mxu0 0
        %7561 = vmatpush.bf16.msra.mxu0 0
        %7562 = vmatpush.bf16.msra.mxu0 0
        %7563 = vmatpush.bf16.msra.mxu0 0
        %7564 = vmatpush.bf16.msra.mxu0 0
        %7565 = vmatpush.bf16.msra.mxu0 0
        %7566 = vmatpush.bf16.msra.mxu0 0
        %7567 = vmatpush.bf16.msra.mxu0 %v7555
        %7568 = vmatmul.bf16.gmra.mxu0 %v7552
        %v7569 = vpop.f32.mrf.mxu0
        %v7570 = vadd.f32 0.0, %v7569
        %v7571 = vpop.f32.mrf.mxu0
        %7572 = vdwg.mxu0
        %7573 = vmatpush.bf16.msra.mxu0 0
        %7574 = vmatpush.bf16.msra.mxu0 0
        %7575 = vmatpush.bf16.msra.mxu0 0
        %7576 = vmatpush.bf16.msra.mxu0 0
        %7577 = vmatpush.bf16.msra.mxu0 0
        %7578 = vmatpush.bf16.msra.mxu0 0
        %7579 = vmatpush.bf16.msra.mxu0 0
        %7580 = vmatpush.bf16.msra.mxu0 %v7558
        %7581 = vmatmul.bf16.gmra.mxu0 %v7552
        %v7582 = vpop.f32.mrf.mxu0
        %v7583 = vadd.f32 0.0, %v7582
        %v7584 = vpop.f32.mrf.mxu0
        %7585 = vdwg.mxu0
        %s7586 = scalar_lea.vmem %s7, 4
        %v7587 = vld [vmem:[%s7586] ss:$8 sm:$0x3]
        %v7589 = vperm.slane %v7587, 0
        %v7590 = vperm.slane %v7587, 1
        %v7593 = vmul.f32 %v7570, %v7589
        %v7594 = vmul.f32 %v7583, %v7590
        %s7595 = scalar_lea.vmem %s8, 4
        %v7596 = vld [vmem:[%s7595] ss:$8 sm:$0x3]
        %v7598 = vperm.slane %v7596, 0
        %v7599 = vperm.slane %v7596, 1
        %v7602 = vadd.f32 %v7593, %v7598
        %v7603 = vadd.f32 %v7594, %v7599
        %v7604 = vmax.f32 %v7602, 0.0
        %v7605 = vmax.f32 %v7603, 0.0
        %v7606 = vpack.c.bf16 %v7604, %v7604
        %v7607 = vpack.c.bf16 %v7605, %v7605
        %s7608 = scalar_lea.vmem [#allocation4], 1024
        %v7609 = vld [vmem:[%s7608] sm:$0xff]
        %v7610 = vld [vmem:[%s7608 + $0x8] sm:$0xff]
        %v7611 = vld [vmem:[%s7608 + $0x10] sm:$0xff]
        %v7612 = vld [vmem:[%s7608 + $0x18] sm:$0xff]
        %v7613 = vld [vmem:[%s7608 + $0x20] sm:$0xff]
        %v7614 = vld [vmem:[%s7608 + $0x28] sm:$0xff]
        %v7615 = vld [vmem:[%s7608 + $0x30] sm:$0xff]
        %v7616 = vld [vmem:[%s7608 + $0x38] sm:$0xff]
        %v7617 = vld [vmem:[%s7608 + $0x40] sm:$0xff]
        %v7618 = vld [vmem:[%s7608 + $0x48] sm:$0xff]
        %v7619 = vld [vmem:[%s7608 + $0x50] sm:$0xff]
        %v7620 = vld [vmem:[%s7608 + $0x58] sm:$0xff]
        %v7621 = vld [vmem:[%s7608 + $0x60] sm:$0xff]
        %v7622 = vld [vmem:[%s7608 + $0x68] sm:$0xff]
        %v7623 = vld [vmem:[%s7608 + $0x70] sm:$0xff]
        %v7624 = vld [vmem:[%s7608 + $0x78] sm:$0xff]
        %v7625 = vld [vmem:[%s7608 + $0x80] sm:$0xff]
        %v7626 = vld [vmem:[%s7608 + $0x88] sm:$0xff]
        %v7627 = vld [vmem:[%s7608 + $0x90] sm:$0xff]
        %v7628 = vld [vmem:[%s7608 + $0x98] sm:$0xff]
        %v7629 = vld [vmem:[%s7608 + $0xa0] sm:$0xff]
        %v7630 = vld [vmem:[%s7608 + $0xa8] sm:$0xff]
        %v7631 = vld [vmem:[%s7608 + $0xb0] sm:$0xff]
        %v7632 = vld [vmem:[%s7608 + $0xb8] sm:$0xff]
        %v7633 = vld [vmem:[%s7608 + $0xc0] sm:$0xff]
        %v7634 = vld [vmem:[%s7608 + $0xc8] sm:$0xff]
        %v7635 = vld [vmem:[%s7608 + $0xd0] sm:$0xff]
        %v7636 = vld [vmem:[%s7608 + $0xd8] sm:$0xff]
        %v7637 = vld [vmem:[%s7608 + $0xe0] sm:$0xff]
        %v7638 = vld [vmem:[%s7608 + $0xe8] sm:$0xff]
        %v7639 = vld [vmem:[%s7608 + $0xf0] sm:$0xff]
        %v7640 = vld [vmem:[%s7608 + $0xf8] sm:$0xff]
        %v7673 = vunpack.c.l.b16 %v7609
        %v7674 = vunpack.c.h.b16 %v7609
        %v7675 = vunpack.c.l.b16 %v7610
        %v7676 = vunpack.c.h.b16 %v7610
        %v7677 = vunpack.c.l.b16 %v7611
        %v7678 = vunpack.c.h.b16 %v7611
        %v7679 = vunpack.c.l.b16 %v7612
        %v7680 = vunpack.c.h.b16 %v7612
        %v7681 = vunpack.c.l.b16 %v7613
        %v7682 = vunpack.c.h.b16 %v7613
        %v7683 = vunpack.c.l.b16 %v7614
        %v7684 = vunpack.c.h.b16 %v7614
        %v7685 = vunpack.c.l.b16 %v7615
        %v7686 = vunpack.c.h.b16 %v7615
        %v7687 = vunpack.c.l.b16 %v7616
        %v7688 = vunpack.c.h.b16 %v7616
        %v7689 = vunpack.c.l.b16 %v7617
        %v7690 = vunpack.c.h.b16 %v7617
        %v7691 = vunpack.c.l.b16 %v7618
        %v7692 = vunpack.c.h.b16 %v7618
        %v7693 = vunpack.c.l.b16 %v7619
        %v7694 = vunpack.c.h.b16 %v7619
        %v7695 = vunpack.c.l.b16 %v7620
        %v7696 = vunpack.c.h.b16 %v7620
        %v7697 = vunpack.c.l.b16 %v7621
        %v7698 = vunpack.c.h.b16 %v7621
        %v7699 = vunpack.c.l.b16 %v7622
        %v7700 = vunpack.c.h.b16 %v7622
        %v7701 = vunpack.c.l.b16 %v7623
        %v7702 = vunpack.c.h.b16 %v7623
        %v7703 = vunpack.c.l.b16 %v7624
        %v7704 = vunpack.c.h.b16 %v7624
        %v7705 = vunpack.c.l.b16 %v7625
        %v7706 = vunpack.c.h.b16 %v7625
        %v7707 = vunpack.c.l.b16 %v7626
        %v7708 = vunpack.c.h.b16 %v7626
        %v7709 = vunpack.c.l.b16 %v7627
        %v7710 = vunpack.c.h.b16 %v7627
        %v7711 = vunpack.c.l.b16 %v7628
        %v7712 = vunpack.c.h.b16 %v7628
        %v7713 = vunpack.c.l.b16 %v7629
        %v7714 = vunpack.c.h.b16 %v7629
        %v7715 = vunpack.c.l.b16 %v7630
        %v7716 = vunpack.c.h.b16 %v7630
        %v7717 = vunpack.c.l.b16 %v7631
        %v7718 = vunpack.c.h.b16 %v7631
        %v7719 = vunpack.c.l.b16 %v7632
        %v7720 = vunpack.c.h.b16 %v7632
        %v7721 = vunpack.c.l.b16 %v7633
        %v7722 = vunpack.c.h.b16 %v7633
        %v7723 = vunpack.c.l.b16 %v7634
        %v7724 = vunpack.c.h.b16 %v7634
        %v7725 = vunpack.c.l.b16 %v7635
        %v7726 = vunpack.c.h.b16 %v7635
        %v7727 = vunpack.c.l.b16 %v7636
        %v7728 = vunpack.c.h.b16 %v7636
        %v7729 = vunpack.c.l.b16 %v7637
        %v7730 = vunpack.c.h.b16 %v7637
        %v7731 = vunpack.c.l.b16 %v7638
        %v7732 = vunpack.c.h.b16 %v7638
        %v7733 = vunpack.c.l.b16 %v7639
        %v7734 = vunpack.c.h.b16 %v7639
        %v7735 = vunpack.c.l.b16 %v7640
        %v7736 = vunpack.c.h.b16 %v7640
        %v7737 = vpack.c.b16 %v7675, %v7673
        %v7738 = vpack.c.b16 %v7676, %v7674
        %v7739 = vpack.c.b16 %v7679, %v7677
        %v7740 = vpack.c.b16 %v7680, %v7678
        %v7741 = vpack.c.b16 %v7683, %v7681
        %v7742 = vpack.c.b16 %v7684, %v7682
        %v7743 = vpack.c.b16 %v7687, %v7685
        %v7744 = vpack.c.b16 %v7688, %v7686
        %v7745 = vpack.c.b16 %v7691, %v7689
        %v7746 = vpack.c.b16 %v7692, %v7690
        %v7747 = vpack.c.b16 %v7695, %v7693
        %v7748 = vpack.c.b16 %v7696, %v7694
        %v7749 = vpack.c.b16 %v7699, %v7697
        %v7750 = vpack.c.b16 %v7700, %v7698
        %v7751 = vpack.c.b16 %v7703, %v7701
        %v7752 = vpack.c.b16 %v7704, %v7702
        %v7753 = vpack.c.b16 %v7707, %v7705
        %v7754 = vpack.c.b16 %v7708, %v7706
        %v7755 = vpack.c.b16 %v7711, %v7709
        %v7756 = vpack.c.b16 %v7712, %v7710
        %v7757 = vpack.c.b16 %v7715, %v7713
        %v7758 = vpack.c.b16 %v7716, %v7714
        %v7759 = vpack.c.b16 %v7719, %v7717
        %v7760 = vpack.c.b16 %v7720, %v7718
        %v7761 = vpack.c.b16 %v7723, %v7721
        %v7762 = vpack.c.b16 %v7724, %v7722
        %v7763 = vpack.c.b16 %v7727, %v7725
        %v7764 = vpack.c.b16 %v7728, %v7726
        %v7765 = vpack.c.b16 %v7731, %v7729
        %v7766 = vpack.c.b16 %v7732, %v7730
        %v7767 = vpack.c.b16 %v7735, %v7733
        %v7768 = vpack.c.b16 %v7736, %v7734
        %7801 = vmatpush.bf16.msra.mxu0 %v7751
        %7802 = vmatpush.bf16.msra.mxu0 %v7749
        %7803 = vmatpush.bf16.msra.mxu0 %v7747
        %7804 = vmatpush.bf16.msra.mxu0 %v7745
        %7805 = vmatpush.bf16.msra.mxu0 %v7743
        %7806 = vmatpush.bf16.msra.mxu0 %v7741
        %7807 = vmatpush.bf16.msra.mxu0 %v7739
        %7808 = vmatpush.bf16.msra.mxu0 %v7737
        %7809 = vmatmul.bf16.gmra.mxu0 %v7606
        %v7810 = vpop.f32.mrf.mxu0
        %v7811 = vadd.f32 0.0, %v7810
        %v7812 = vpop.f32.mrf.mxu0
        %7813 = vdwg.mxu0
        %7814 = vmatpush.bf16.msra.mxu0 %v7767
        %7815 = vmatpush.bf16.msra.mxu0 %v7765
        %7816 = vmatpush.bf16.msra.mxu0 %v7763
        %7817 = vmatpush.bf16.msra.mxu0 %v7761
        %7818 = vmatpush.bf16.msra.mxu0 %v7759
        %7819 = vmatpush.bf16.msra.mxu0 %v7757
        %7820 = vmatpush.bf16.msra.mxu0 %v7755
        %7821 = vmatpush.bf16.msra.mxu0 %v7753
        %7822 = vmatmul.bf16.gmra.mxu0 %v7607
        %v7823 = vpop.f32.mrf.mxu0
        %v7824 = vadd.f32 %v7811, %v7823
        %v7825 = vpop.f32.mrf.mxu0
        %7826 = vdwg.mxu0
        %7827 = vmatpush.bf16.msra.mxu0 %v7752
        %7828 = vmatpush.bf16.msra.mxu0 %v7750
        %7829 = vmatpush.bf16.msra.mxu0 %v7748
        %7830 = vmatpush.bf16.msra.mxu0 %v7746
        %7831 = vmatpush.bf16.msra.mxu0 %v7744
        %7832 = vmatpush.bf16.msra.mxu0 %v7742
        %7833 = vmatpush.bf16.msra.mxu0 %v7740
        %7834 = vmatpush.bf16.msra.mxu0 %v7738
        %7835 = vmatmul.bf16.gmra.mxu0 %v7606
        %v7836 = vpop.f32.mrf.mxu0
        %v7837 = vadd.f32 0.0, %v7836
        %v7838 = vpop.f32.mrf.mxu0
        %7839 = vdwg.mxu0
        %7840 = vmatpush.bf16.msra.mxu0 %v7768
        %7841 = vmatpush.bf16.msra.mxu0 %v7766
        %7842 = vmatpush.bf16.msra.mxu0 %v7764
        %7843 = vmatpush.bf16.msra.mxu0 %v7762
        %7844 = vmatpush.bf16.msra.mxu0 %v7760
        %7845 = vmatpush.bf16.msra.mxu0 %v7758
        %7846 = vmatpush.bf16.msra.mxu0 %v7756
        %7847 = vmatpush.bf16.msra.mxu0 %v7754
        %7848 = vmatmul.bf16.gmra.mxu0 %v7607
        %v7849 = vpop.f32.mrf.mxu0
        %v7850 = vadd.f32 %v7837, %v7849
        %v7851 = vpop.f32.mrf.mxu0
        %7852 = vdwg.mxu0
        %v7853 = vld [vmem:[%s9] sm:$0x3]
        %v7855 = vperm.slane %v7853, 0
        %v7856 = vperm.slane %v7853, 1
        %v7859 = vmul.f32 %v7824, %v7855
        %v7860 = vmul.f32 %v7850, %v7856
        %v7861 = vld [vmem:[%s10] sm:$0x3]
        %v7863 = vperm.slane %v7861, 0
        %v7864 = vperm.slane %v7861, 1
        %v7867 = vadd.f32 %v7859, %v7863
        %v7868 = vadd.f32 %v7860, %v7864
        %v7869 = vld [vmem:[#allocation3] sm:$0xff]
        %v7870 = vld [vmem:[#allocation3 + $0x8] sm:$0xff]
        %v7871 = vld [vmem:[#allocation3 + $0x10] sm:$0xff]
        %v7872 = vld [vmem:[#allocation3 + $0x18] sm:$0xff]
        %v7873 = vld [vmem:[#allocation3 + $0x20] sm:$0xff]
        %v7874 = vld [vmem:[#allocation3 + $0x28] sm:$0xff]
        %v7875 = vld [vmem:[#allocation3 + $0x30] sm:$0xff]
        %v7876 = vld [vmem:[#allocation3 + $0x38] sm:$0xff]
        %v7877 = vld [vmem:[#allocation3 + $0x40] sm:$0xff]
        %v7878 = vld [vmem:[#allocation3 + $0x48] sm:$0xff]
        %v7879 = vld [vmem:[#allocation3 + $0x50] sm:$0xff]
        %v7880 = vld [vmem:[#allocation3 + $0x58] sm:$0xff]
        %v7881 = vld [vmem:[#allocation3 + $0x60] sm:$0xff]
        %v7882 = vld [vmem:[#allocation3 + $0x68] sm:$0xff]
        %v7883 = vld [vmem:[#allocation3 + $0x70] sm:$0xff]
        %v7884 = vld [vmem:[#allocation3 + $0x78] sm:$0xff]
        %v7885 = vld [vmem:[#allocation3 + $0x80] sm:$0xff]
        %v7886 = vld [vmem:[#allocation3 + $0x88] sm:$0xff]
        %v7887 = vld [vmem:[#allocation3 + $0x90] sm:$0xff]
        %v7888 = vld [vmem:[#allocation3 + $0x98] sm:$0xff]
        %v7889 = vld [vmem:[#allocation3 + $0xa0] sm:$0xff]
        %v7890 = vld [vmem:[#allocation3 + $0xa8] sm:$0xff]
        %v7891 = vld [vmem:[#allocation3 + $0xb0] sm:$0xff]
        %v7892 = vld [vmem:[#allocation3 + $0xb8] sm:$0xff]
        %v7893 = vld [vmem:[#allocation3 + $0xc0] sm:$0xff]
        %v7894 = vld [vmem:[#allocation3 + $0xc8] sm:$0xff]
        %v7895 = vld [vmem:[#allocation3 + $0xd0] sm:$0xff]
        %v7896 = vld [vmem:[#allocation3 + $0xd8] sm:$0xff]
        %v7897 = vld [vmem:[#allocation3 + $0xe0] sm:$0xff]
        %v7898 = vld [vmem:[#allocation3 + $0xe8] sm:$0xff]
        %v7899 = vld [vmem:[#allocation3 + $0xf0] sm:$0xff]
        %v7900 = vld [vmem:[#allocation3 + $0xf8] sm:$0xff]
        %v7901 = vld [vmem:[#allocation3 + $0x100] sm:$0xff]
        %v7902 = vld [vmem:[#allocation3 + $0x108] sm:$0xff]
        %v7903 = vld [vmem:[#allocation3 + $0x110] sm:$0xff]
        %v7904 = vld [vmem:[#allocation3 + $0x118] sm:$0xff]
        %v7905 = vld [vmem:[#allocation3 + $0x120] sm:$0xff]
        %v7906 = vld [vmem:[#allocation3 + $0x128] sm:$0xff]
        %v7907 = vld [vmem:[#allocation3 + $0x130] sm:$0xff]
        %v7908 = vld [vmem:[#allocation3 + $0x138] sm:$0xff]
        %v7909 = vld [vmem:[#allocation3 + $0x140] sm:$0xff]
        %v7910 = vld [vmem:[#allocation3 + $0x148] sm:$0xff]
        %v7911 = vld [vmem:[#allocation3 + $0x150] sm:$0xff]
        %v7912 = vld [vmem:[#allocation3 + $0x158] sm:$0xff]
        %v7913 = vld [vmem:[#allocation3 + $0x160] sm:$0xff]
        %v7914 = vld [vmem:[#allocation3 + $0x168] sm:$0xff]
        %v7915 = vld [vmem:[#allocation3 + $0x170] sm:$0xff]
        %v7916 = vld [vmem:[#allocation3 + $0x178] sm:$0xff]
        %v7917 = vld [vmem:[#allocation3 + $0x180] sm:$0xff]
        %v7918 = vld [vmem:[#allocation3 + $0x188] sm:$0xff]
        %v7919 = vld [vmem:[#allocation3 + $0x190] sm:$0xff]
        %v7920 = vld [vmem:[#allocation3 + $0x198] sm:$0xff]
        %v7921 = vld [vmem:[#allocation3 + $0x1a0] sm:$0xff]
        %v7922 = vld [vmem:[#allocation3 + $0x1a8] sm:$0xff]
        %v7923 = vld [vmem:[#allocation3 + $0x1b0] sm:$0xff]
        %v7924 = vld [vmem:[#allocation3 + $0x1b8] sm:$0xff]
        %v7925 = vld [vmem:[#allocation3 + $0x1c0] sm:$0xff]
        %v7926 = vld [vmem:[#allocation3 + $0x1c8] sm:$0xff]
        %v7927 = vld [vmem:[#allocation3 + $0x1d0] sm:$0xff]
        %v7928 = vld [vmem:[#allocation3 + $0x1d8] sm:$0xff]
        %v7929 = vld [vmem:[#allocation3 + $0x1e0] sm:$0xff]
        %v7930 = vld [vmem:[#allocation3 + $0x1e8] sm:$0xff]
        %v7931 = vld [vmem:[#allocation3 + $0x1f0] sm:$0xff]
        %v7932 = vld [vmem:[#allocation3 + $0x1f8] sm:$0xff]
        %v7933 = vmul.f32 %v7869, %v7855
        %v7934 = vmul.f32 %v7870, %v7856
        %v7935 = vmul.f32 %v7871, %v7855
        %v7936 = vmul.f32 %v7872, %v7856
        %v7937 = vmul.f32 %v7873, %v7855
        %v7938 = vmul.f32 %v7874, %v7856
        %v7939 = vmul.f32 %v7875, %v7855
        %v7940 = vmul.f32 %v7876, %v7856
        %v7941 = vmul.f32 %v7877, %v7855
        %v7942 = vmul.f32 %v7878, %v7856
        %v7943 = vmul.f32 %v7879, %v7855
        %v7944 = vmul.f32 %v7880, %v7856
        %v7945 = vmul.f32 %v7881, %v7855
        %v7946 = vmul.f32 %v7882, %v7856
        %v7947 = vmul.f32 %v7883, %v7855
        %v7948 = vmul.f32 %v7884, %v7856
        %v7949 = vmul.f32 %v7885, %v7855
        %v7950 = vmul.f32 %v7886, %v7856
        %v7951 = vmul.f32 %v7887, %v7855
        %v7952 = vmul.f32 %v7888, %v7856
        %v7953 = vmul.f32 %v7889, %v7855
        %v7954 = vmul.f32 %v7890, %v7856
        %v7955 = vmul.f32 %v7891, %v7855
        %v7956 = vmul.f32 %v7892, %v7856
        %v7957 = vmul.f32 %v7893, %v7855
        %v7958 = vmul.f32 %v7894, %v7856
        %v7959 = vmul.f32 %v7895, %v7855
        %v7960 = vmul.f32 %v7896, %v7856
        %v7961 = vmul.f32 %v7897, %v7855
        %v7962 = vmul.f32 %v7898, %v7856
        %v7963 = vmul.f32 %v7899, %v7855
        %v7964 = vmul.f32 %v7900, %v7856
        %v7965 = vmul.f32 %v7901, %v7855
        %v7966 = vmul.f32 %v7902, %v7856
        %v7967 = vmul.f32 %v7903, %v7855
        %v7968 = vmul.f32 %v7904, %v7856
        %v7969 = vmul.f32 %v7905, %v7855
        %v7970 = vmul.f32 %v7906, %v7856
        %v7971 = vmul.f32 %v7907, %v7855
        %v7972 = vmul.f32 %v7908, %v7856
        %v7973 = vmul.f32 %v7909, %v7855
        %v7974 = vmul.f32 %v7910, %v7856
        %v7975 = vmul.f32 %v7911, %v7855
        %v7976 = vmul.f32 %v7912, %v7856
        %v7977 = vmul.f32 %v7913, %v7855
        %v7978 = vmul.f32 %v7914, %v7856
        %v7979 = vmul.f32 %v7915, %v7855
        %v7980 = vmul.f32 %v7916, %v7856
        %v7981 = vmul.f32 %v7917, %v7855
        %v7982 = vmul.f32 %v7918, %v7856
        %v7983 = vmul.f32 %v7919, %v7855
        %v7984 = vmul.f32 %v7920, %v7856
        %v7985 = vmul.f32 %v7921, %v7855
        %v7986 = vmul.f32 %v7922, %v7856
        %v7987 = vmul.f32 %v7923, %v7855
        %v7988 = vmul.f32 %v7924, %v7856
        %v7989 = vmul.f32 %v7925, %v7855
        %v7990 = vmul.f32 %v7926, %v7856
        %v7991 = vmul.f32 %v7927, %v7855
        %v7992 = vmul.f32 %v7928, %v7856
        %v7993 = vmul.f32 %v7929, %v7855
        %v7994 = vmul.f32 %v7930, %v7856
        %v7995 = vmul.f32 %v7931, %v7855
        %v7996 = vmul.f32 %v7932, %v7856
        %v7997 = vperm.slane %v7867, 0
        %v7998 = vperm.slane %v7868, 0
        %v7999 = vadd.f32 %v7933, %v7997
        %v8000 = vadd.f32 %v7934, %v7998
        %v8001 = vadd.f32 %v7935, %v7997
        %v8002 = vadd.f32 %v7936, %v7998
        %v8003 = vadd.f32 %v7937, %v7997
        %v8004 = vadd.f32 %v7938, %v7998
        %v8005 = vadd.f32 %v7939, %v7997
        %v8006 = vadd.f32 %v7940, %v7998
        %v8007 = vadd.f32 %v7941, %v7997
        %v8008 = vadd.f32 %v7942, %v7998
        %v8009 = vadd.f32 %v7943, %v7997
        %v8010 = vadd.f32 %v7944, %v7998
        %v8011 = vadd.f32 %v7945, %v7997
        %v8012 = vadd.f32 %v7946, %v7998
        %v8013 = vadd.f32 %v7947, %v7997
        %v8014 = vadd.f32 %v7948, %v7998
        %v8015 = vadd.f32 %v7949, %v7997
        %v8016 = vadd.f32 %v7950, %v7998
        %v8017 = vadd.f32 %v7951, %v7997
        %v8018 = vadd.f32 %v7952, %v7998
        %v8019 = vadd.f32 %v7953, %v7997
        %v8020 = vadd.f32 %v7954, %v7998
        %v8021 = vadd.f32 %v7955, %v7997
        %v8022 = vadd.f32 %v7956, %v7998
        %v8023 = vadd.f32 %v7957, %v7997
        %v8024 = vadd.f32 %v7958, %v7998
        %v8025 = vadd.f32 %v7959, %v7997
        %v8026 = vadd.f32 %v7960, %v7998
        %v8027 = vadd.f32 %v7961, %v7997
        %v8028 = vadd.f32 %v7962, %v7998
        %v8029 = vadd.f32 %v7963, %v7997
        %v8030 = vadd.f32 %v7964, %v7998
        %v8031 = vadd.f32 %v7965, %v7997
        %v8032 = vadd.f32 %v7966, %v7998
        %v8033 = vadd.f32 %v7967, %v7997
        %v8034 = vadd.f32 %v7968, %v7998
        %v8035 = vadd.f32 %v7969, %v7997
        %v8036 = vadd.f32 %v7970, %v7998
        %v8037 = vadd.f32 %v7971, %v7997
        %v8038 = vadd.f32 %v7972, %v7998
        %v8039 = vadd.f32 %v7973, %v7997
        %v8040 = vadd.f32 %v7974, %v7998
        %v8041 = vadd.f32 %v7975, %v7997
        %v8042 = vadd.f32 %v7976, %v7998
        %v8043 = vadd.f32 %v7977, %v7997
        %v8044 = vadd.f32 %v7978, %v7998
        %v8045 = vadd.f32 %v7979, %v7997
        %v8046 = vadd.f32 %v7980, %v7998
        %v8047 = vadd.f32 %v7981, %v7997
        %v8048 = vadd.f32 %v7982, %v7998
        %v8049 = vadd.f32 %v7983, %v7997
        %v8050 = vadd.f32 %v7984, %v7998
        %v8051 = vadd.f32 %v7985, %v7997
        %v8052 = vadd.f32 %v7986, %v7998
        %v8053 = vadd.f32 %v7987, %v7997
        %v8054 = vadd.f32 %v7988, %v7998
        %v8055 = vadd.f32 %v7989, %v7997
        %v8056 = vadd.f32 %v7990, %v7998
        %v8057 = vadd.f32 %v7991, %v7997
        %v8058 = vadd.f32 %v7992, %v7998
        %v8059 = vadd.f32 %v7993, %v7997
        %v8060 = vadd.f32 %v7994, %v7998
        %v8061 = vadd.f32 %v7995, %v7997
        %v8062 = vadd.f32 %v7996, %v7998
        %v8063 = vmax.f32 %v7999, 0.0
        %v8064 = vmax.f32 %v8000, 0.0
        %v8065 = vmax.f32 %v8001, 0.0
        %v8066 = vmax.f32 %v8002, 0.0
        %v8067 = vmax.f32 %v8003, 0.0
        %v8068 = vmax.f32 %v8004, 0.0
        %v8069 = vmax.f32 %v8005, 0.0
        %v8070 = vmax.f32 %v8006, 0.0
        %v8071 = vmax.f32 %v8007, 0.0
        %v8072 = vmax.f32 %v8008, 0.0
        %v8073 = vmax.f32 %v8009, 0.0
        %v8074 = vmax.f32 %v8010, 0.0
        %v8075 = vmax.f32 %v8011, 0.0
        %v8076 = vmax.f32 %v8012, 0.0
        %v8077 = vmax.f32 %v8013, 0.0
        %v8078 = vmax.f32 %v8014, 0.0
        %v8079 = vmax.f32 %v8015, 0.0
        %v8080 = vmax.f32 %v8016, 0.0
        %v8081 = vmax.f32 %v8017, 0.0
        %v8082 = vmax.f32 %v8018, 0.0
        %v8083 = vmax.f32 %v8019, 0.0
        %v8084 = vmax.f32 %v8020, 0.0
        %v8085 = vmax.f32 %v8021, 0.0
        %v8086 = vmax.f32 %v8022, 0.0
        %v8087 = vmax.f32 %v8023, 0.0
        %v8088 = vmax.f32 %v8024, 0.0
        %v8089 = vmax.f32 %v8025, 0.0
        %v8090 = vmax.f32 %v8026, 0.0
        %v8091 = vmax.f32 %v8027, 0.0
        %v8092 = vmax.f32 %v8028, 0.0
        %v8093 = vmax.f32 %v8029, 0.0
        %v8094 = vmax.f32 %v8030, 0.0
        %v8095 = vmax.f32 %v8031, 0.0
        %v8096 = vmax.f32 %v8032, 0.0
        %v8097 = vmax.f32 %v8033, 0.0
        %v8098 = vmax.f32 %v8034, 0.0
        %v8099 = vmax.f32 %v8035, 0.0
        %v8100 = vmax.f32 %v8036, 0.0
        %v8101 = vmax.f32 %v8037, 0.0
        %v8102 = vmax.f32 %v8038, 0.0
        %v8103 = vmax.f32 %v8039, 0.0
        %v8104 = vmax.f32 %v8040, 0.0
        %v8105 = vmax.f32 %v8041, 0.0
        %v8106 = vmax.f32 %v8042, 0.0
        %v8107 = vmax.f32 %v8043, 0.0
        %v8108 = vmax.f32 %v8044, 0.0
        %v8109 = vmax.f32 %v8045, 0.0
        %v8110 = vmax.f32 %v8046, 0.0
        %v8111 = vmax.f32 %v8047, 0.0
        %v8112 = vmax.f32 %v8048, 0.0
        %v8113 = vmax.f32 %v8049, 0.0
        %v8114 = vmax.f32 %v8050, 0.0
        %v8115 = vmax.f32 %v8051, 0.0
        %v8116 = vmax.f32 %v8052, 0.0
        %v8117 = vmax.f32 %v8053, 0.0
        %v8118 = vmax.f32 %v8054, 0.0
        %v8119 = vmax.f32 %v8055, 0.0
        %v8120 = vmax.f32 %v8056, 0.0
        %v8121 = vmax.f32 %v8057, 0.0
        %v8122 = vmax.f32 %v8058, 0.0
        %v8123 = vmax.f32 %v8059, 0.0
        %v8124 = vmax.f32 %v8060, 0.0
        %v8125 = vmax.f32 %v8061, 0.0
        %v8126 = vmax.f32 %v8062, 0.0
        %v8127 = vpack.c.bf16 %v8064, %v8063
        %v8128 = vpack.c.bf16 %v8066, %v8065
        %v8129 = vpack.c.bf16 %v8068, %v8067
        %v8130 = vpack.c.bf16 %v8070, %v8069
        %v8131 = vpack.c.bf16 %v8072, %v8071
        %v8132 = vpack.c.bf16 %v8074, %v8073
        %v8133 = vpack.c.bf16 %v8076, %v8075
        %v8134 = vpack.c.bf16 %v8078, %v8077
        %v8135 = vpack.c.bf16 %v8080, %v8079
        %v8136 = vpack.c.bf16 %v8082, %v8081
        %v8137 = vpack.c.bf16 %v8084, %v8083
        %v8138 = vpack.c.bf16 %v8086, %v8085
        %v8139 = vpack.c.bf16 %v8088, %v8087
        %v8140 = vpack.c.bf16 %v8090, %v8089
        %v8141 = vpack.c.bf16 %v8092, %v8091
        %v8142 = vpack.c.bf16 %v8094, %v8093
        %v8143 = vpack.c.bf16 %v8096, %v8095
        %v8144 = vpack.c.bf16 %v8098, %v8097
        %v8145 = vpack.c.bf16 %v8100, %v8099
        %v8146 = vpack.c.bf16 %v8102, %v8101
        %v8147 = vpack.c.bf16 %v8104, %v8103
        %v8148 = vpack.c.bf16 %v8106, %v8105
        %v8149 = vpack.c.bf16 %v8108, %v8107
        %v8150 = vpack.c.bf16 %v8110, %v8109
        %v8151 = vpack.c.bf16 %v8112, %v8111
        %v8152 = vpack.c.bf16 %v8114, %v8113
        %v8153 = vpack.c.bf16 %v8116, %v8115
        %v8154 = vpack.c.bf16 %v8118, %v8117
        %v8155 = vpack.c.bf16 %v8120, %v8119
        %v8156 = vpack.c.bf16 %v8122, %v8121
        %v8157 = vpack.c.bf16 %v8124, %v8123
        %v8158 = vpack.c.bf16 %v8126, %v8125
        %8159 = vst [vmem:[%s396] sm:$0xff] %v8127
        %8160 = vst [vmem:[%s396 + $0x8] sm:$0xff] %v8128
        %8161 = vst [vmem:[%s396 + $0x10] sm:$0xff] %v8129
        %8162 = vst [vmem:[%s396 + $0x18] sm:$0xff] %v8130
        %8163 = vst [vmem:[%s396 + $0x20] sm:$0xff] %v8131
        %8164 = vst [vmem:[%s396 + $0x28] sm:$0xff] %v8132
        %8165 = vst [vmem:[%s396 + $0x30] sm:$0xff] %v8133
        %8166 = vst [vmem:[%s396 + $0x38] sm:$0xff] %v8134
        %8167 = vst [vmem:[%s396 + $0x40] sm:$0xff] %v8135
        %8168 = vst [vmem:[%s396 + $0x48] sm:$0xff] %v8136
        %8169 = vst [vmem:[%s396 + $0x50] sm:$0xff] %v8137
        %8170 = vst [vmem:[%s396 + $0x58] sm:$0xff] %v8138
        %8171 = vst [vmem:[%s396 + $0x60] sm:$0xff] %v8139
        %8172 = vst [vmem:[%s396 + $0x68] sm:$0xff] %v8140
        %8173 = vst [vmem:[%s396 + $0x70] sm:$0xff] %v8141
        %8174 = vst [vmem:[%s396 + $0x78] sm:$0xff] %v8142
        %8175 = vst [vmem:[%s396 + $0x80] sm:$0xff] %v8143
        %8176 = vst [vmem:[%s396 + $0x88] sm:$0xff] %v8144
        %8177 = vst [vmem:[%s396 + $0x90] sm:$0xff] %v8145
        %8178 = vst [vmem:[%s396 + $0x98] sm:$0xff] %v8146
        %8179 = vst [vmem:[%s396 + $0xa0] sm:$0xff] %v8147
        %8180 = vst [vmem:[%s396 + $0xa8] sm:$0xff] %v8148
        %8181 = vst [vmem:[%s396 + $0xb0] sm:$0xff] %v8149
        %8182 = vst [vmem:[%s396 + $0xb8] sm:$0xff] %v8150
        %8183 = vst [vmem:[%s396 + $0xc0] sm:$0xff] %v8151
        %8184 = vst [vmem:[%s396 + $0xc8] sm:$0xff] %v8152
        %8185 = vst [vmem:[%s396 + $0xd0] sm:$0xff] %v8153
        %8186 = vst [vmem:[%s396 + $0xd8] sm:$0xff] %v8154
        %8187 = vst [vmem:[%s396 + $0xe0] sm:$0xff] %v8155
        %8188 = vst [vmem:[%s396 + $0xe8] sm:$0xff] %v8156
        %8189 = vst [vmem:[%s396 + $0xf0] sm:$0xff] %v8157
        %8190 = vst [vmem:[%s396 + $0xf8] sm:$0xff] %v8158
        %s8191 = sand.u32 %s270, 1
        %s8192 = scalar_lea.sflag [#allocation6], %s8191
        %s8193 = sand.u32 %s270, 1
        %s8194 = smul.addr %s8193, 256
        %s8195 = scalar_lea.vmem [#allocation7], %s8194
        // Predicated region
        $region69: #{tpu_custom_call.1} parent=63 // pred_check
          %p8196 = pneg %p280
        $region70: #{tpu_custom_call.1} parent=63 // pred_check_branch
          %8198 = sbr.rel (%p8196) target = $region72
        $region71: #{tpu_custom_call.1} parent=63 // pred_region
          %8200 = vsyncadd %s8192, 0
          %s8201 = smul.addr %s26, 64
          %s8202 = smul.addr %s8201, 4
          %s8203 = scalar_lea.hbm %s11, %s8202
          %s8204 = sshll.u32 %s8195, 4
          %s8205 = int_to_ptr.vmem [resolvable:$true] %s8204
          %s8206 = sshll.u32 %s8203, 4
          %s8207 = int_to_ptr.hbm [resolvable:$true] %s8206
          %8212 = dma.vmem_to_hbm [thread:$0]  %s8205, 4096, %s8207, %s8192, 128, 128, 8
        $region72: #{tpu_custom_call.1} parent=63 // pred_fallthru
          _
      $region64: #{tpu_custom_call.1} parent=5 // pred_fallthru
        _
      %p8213 = scmp.le.s32.totalorder 2, %s21
      // Predicated region
      $region73: #{tpu_custom_call.1} parent=5 // pred_check
        %p8214 = pneg %p8213
      $region74: #{tpu_custom_call.1} parent=5 // pred_check_branch
        %8216 = sbr.rel (%p8214) target = $region76
      $region75: #{tpu_custom_call.1} parent=5 // pred_region
        %s8217 = ssub.s32 %s21, 2
        // Predicated region
        $region77: #{tpu_custom_call.1} parent=75 // pred_check
          %p8218 = pneg %p286
        $region78: #{tpu_custom_call.1} parent=75 // pred_check_branch
          %8220 = sbr.rel (%p8218) target = $region80
        $region79: #{tpu_custom_call.1} parent=75 // pred_region
          %s8221 = sand.u32 %s271, 1
          %s8222 = scalar_lea.sflag [#allocation6], %s8221
          %s8223 = sand.u32 %s271, 1
          %s8224 = smul.addr %s8223, 256
          %s8225 = scalar_lea.vmem [#allocation7], %s8224
          %8227 = dma.done %s8222, 4096
        $region80: #{tpu_custom_call.1} parent=75 // pred_fallthru
          _
      $region76: #{tpu_custom_call.1} parent=5 // pred_fallthru
        _
    $region6: #{tpu_custom_call.1} parent=1 // loop_footer
      %s25 = sadd.s32 1, %s21
    $region7: #{tpu_custom_call.1} parent=1 // loop_footer_branch
      %20 = sbr.rel target = $region3
    $region8: #{tpu_custom_call.1} parent=1 // loop_exit
      _
    %8228 = vsyncpa [#allocation5], 1
    %s8229 = scalar_lea.sflag [#allocation5], 1
    %8230 = vsyncpa %s8229, 1
    %8231 = vsyncpa [#allocation6], 1
    %s8232 = scalar_lea.sflag [#allocation6], 1
    %8233 = vsyncpa %s8232, 1

</llo_original>
